<compile_context>
chip_gen: v7x
topology: tpu7x:2x2x1
jax: 0.10.0
libtpu: 0.0.40
codegen_flags: <defaults>
</compile_context>

<pallas_src>
import functools

import jax
import jax.numpy as jnp
from jax.experimental import pallas as pl
from jax.experimental.pallas import tpu as pltpu


# --------------------------- in-kernel helpers ------------------------------

def _dot(a, b):
    return jnp.dot(a, b, preferred_element_type=jnp.float32)


def _leaky(x, slope):
    return jnp.where(x > 0, x, slope * x)


def _dwconv_rows(x, padmat, w, b, neg_slope=None):
    """Depthwise conv along rows (per-channel taps broadcast over lanes).

    x: (R, L) activation, padmat: (R+2p, R) zero-pad matrix,
    w: (K, L) lane-broadcast tap weights, b: (1, L) lane-broadcast bias.
    """
    R = x.shape[0]
    K = w.shape[0]
    xp = _dot(padmat, x)                       # zero-padded rows
    acc = jnp.zeros_like(x)
    for k in range(K):
        acc = acc + xp[k:k + R, :] * w[k:k + 1, :]
    acc = acc + b
    if neg_slope is not None:
        acc = _leaky(acc, neg_slope)
    return acc


# ------------------------------ fused kernel --------------------------------

def _fused_forward_kernel(names, dims, *refs):
    C, T, N, L, NUM_CLASS = dims
    CN = C * N

    x_ref = refs[0]
    o_ref = refs[-1]
    p = dict(zip(names, refs[1:-1]))

    # ---- instance norm over T (biased var, eps inside sqrt) ----
    x = x_ref[0]                                      # (T, N)
    mean = jnp.mean(x, axis=0, keepdims=True)         # (1, N)
    xc = x - mean
    var = jnp.mean(xc * xc, axis=0, keepdims=True)
    std = jnp.sqrt(var + 1e-5)
    xn = xc / std

    # ---- conv1: Conv2d(1, C, (7,1), pad=(3,0)) -> (T, C*N) ----
    xp = _dot(p["pad_t3"][...], xn)                   # (T+6, N)
    h = jnp.zeros((T, CN), jnp.float32)
    for k in range(7):
        h = h + _dot(xp[k:k + T, :], p["conv1_m"][k])
    h = h + p["conv1_b"][...]                         # lane index = c*N + n

    for l in range(L):
        # ============================ FTIM ============================
        xres = h
        real = _dot(p["rt_r"][...], h)                # rfft over T -> (F, CN)
        imag = _dot(p["rt_i"][...], h)
        # FreBlockSpa: dw(3,1)+b -> LeakyReLU(0.1) -> dw(7,1)+b
        real = _dwconv_rows(real, p["pad_f1"][...],
                            p["spa_r_w3"][l], p["spa_r_b3"][l], 0.1)
        real = _dwconv_rows(real, p["pad_f3"][...],
                            p["spa_r_w7"][l], p["spa_r_b7"][l], None)
        imag = _dwconv_rows(imag, p["pad_f1"][...],
                            p["spa_i_w3"][l], p["spa_i_b3"][l], 0.1)
        imag = _dwconv_rows(imag, p["pad_f3"][...],
                            p["spa_i_w7"][l], p["spa_i_b7"][l], None)
        xs = _dot(p["it_r"][...], real) + _dot(p["it_i"][...], imag)  # irfft T
        # frequency_spatial: full Conv2d(C, C, (3,1), pad=(1,0))
        xsp = _dot(p["pad_t1"][...], xs)              # (T+2, CN)
        acc = jnp.zeros((T, CN), jnp.float32)
        for k in range(3):
            acc = acc + _dot(xsp[k:k + T, :], p["fs3_m"][l, k])
        h = acc + p["fs3_b"][l] + xres

        # ============================ FVIM ============================
        xres = h
        realv = _dot(h, p["rn_r"][...])               # rfft over N -> (T, C*F2)
        imagv = _dot(h, p["rn_i"][...])

        def _cha(y, m1, b1, m3, b3):
            y = _leaky(_dot(y, m1) + b1, 0.1)         # 1x1 conv + LeakyReLU
            return _dot(y, m3) + b3                   # (1,3) conv

        realv = _cha(realv, p["cha_r_m1"][l], p["cha_r_b1"][l],
                     p["cha_r_m3"][l], p["cha_r_b3"][l])
        imagv = _cha(imagv, p["cha_i_m1"][l], p["cha_i_b1"][l],
                     p["cha_i_m3"][l], p["cha_i_b3"][l])
        xs = _dot(realv, p["in_r"][...]) + _dot(imagv, p["in_i"][...])  # irfft N
        xs = _dot(xs, p["fvim_m"][l]) + p["fvim_b"][l]  # 1x1 frequency_spatial
        h = xs + xres

    # ---- head: fc = Linear(N*C, 1024) -> ReLU -> Linear(1024, N) ----
    hfc = jnp.maximum(_dot(h, p["fc_w1"][...]) + p["fc_b1"][...], 0.0)
    dec = _dot(hfc, p["fc_w2"][...]) + p["fc_b2"][...]        # (T, N)
    dec = dec * std + mean                                    # de-normalize

    # ---- fc1: Linear(T*N, num_class) on dec flattened as t*N+n ----
    q = jnp.zeros((T, NUM_CLASS), jnp.float32)
    for n in range(N):
        q = q + dec[:, n:n + 1] * p["fc1_w"][n]               # (T,1)*(T,nc)
    out = jnp.sum(q, axis=0, keepdims=True) + p["fc1_b"][...]
    o_ref[0] = out


# ------------------------------- parameters ---------------------------------

def make_params(key, C, T, N, e_layers, num_class, hidden=1024):
    """Raw weights follow the PyTorch shapes; they are repacked once here into
    lane-dense block matrices / broadcast rows for the fused kernel."""
    F = T // 2 + 1
    F2 = N // 2 + 1
    CN = C * N
    keys = iter(jax.random.split(key, 512))

    def w(shape, scale=0.1):
        return scale * jax.random.normal(next(keys), shape, jnp.float32)

    eye_n = jnp.eye(N, dtype=jnp.float32)
    eye_f2 = jnp.eye(F2, dtype=jnp.float32)
    eye_c = jnp.eye(C, dtype=jnp.float32)

    def pad_matrix(rows, padding):   # (rows+2p, rows) zero-pad-along-rows map
        return jnp.eye(rows + 2 * padding, rows, k=-padding, dtype=jnp.float32)

    def bcast(v, rep):               # (C,) -> (1, C*rep) lane-broadcast row
        return jnp.repeat(v, rep)[None, :]

    p = {}
    p["pad_t3"] = pad_matrix(T, 3)   # conv1 (7,1)
    p["pad_t1"] = pad_matrix(T, 1)   # FTIM frequency_spatial (3,1)
    p["pad_f1"] = pad_matrix(F, 1)   # FreBlockSpa (3,1)
    p["pad_f3"] = pad_matrix(F, 3)   # FreBlockSpa (7,1)

    # DFT / inverse-DFT matrices implementing torch.fft.rfft/irfft(norm='ortho')
    mt = jnp.fft.rfft(jnp.eye(T, dtype=jnp.float32), axis=0, norm="ortho")
    p["rt_r"] = mt.real.astype(jnp.float32)                       # (F, T)
    p["rt_i"] = mt.imag.astype(jnp.float32)
    p["it_r"] = jnp.fft.irfft(jnp.eye(F, dtype=jnp.complex64),
                              n=T, axis=0, norm="ortho").astype(jnp.float32)
    p["it_i"] = jnp.fft.irfft(1j * jnp.eye(F, dtype=jnp.complex64),
                              n=T, axis=0, norm="ortho").astype(jnp.float32)
    mn = jnp.fft.rfft(jnp.eye(N, dtype=jnp.float32), axis=0, norm="ortho")
    irn_r = jnp.fft.irfft(jnp.eye(F2, dtype=jnp.complex64),
                          n=N, axis=0, norm="ortho")               # (N, F2)
    irn_i = jnp.fft.irfft(1j * jnp.eye(F2, dtype=jnp.complex64),
                          n=N, axis=0, norm="ortho")
    # block-diagonal (per-channel) versions acting on the (c*N+n) lane axis
    p["rn_r"] = jnp.kron(eye_c, mn.real.T).astype(jnp.float32)     # (CN, C*F2)
    p["rn_i"] = jnp.kron(eye_c, mn.imag.T).astype(jnp.float32)
    p["in_r"] = jnp.kron(eye_c, irn_r.T).astype(jnp.float32)       # (C*F2, CN)
    p["in_i"] = jnp.kron(eye_c, irn_i.T).astype(jnp.float32)

    # conv1: Conv2d(1, C, (7,1), pad=(3,0))
    conv1_w, conv1_b = w((C, 7)), w((C,))
    p["conv1_m"] = jnp.stack(
        [jnp.kron(conv1_w[:, k][None, :], eye_n) for k in range(7)], axis=0)
    p["conv1_b"] = bcast(conv1_b, N)

    per = {name: [] for name in (
        "spa_r_w3", "spa_r_b3", "spa_r_w7", "spa_r_b7",
        "spa_i_w3", "spa_i_b3", "spa_i_w7", "spa_i_b7",
        "fs3_m", "fs3_b",
        "cha_r_m1", "cha_r_b1", "cha_r_m3", "cha_r_b3",
        "cha_i_m1", "cha_i_b1", "cha_i_m3", "cha_i_b3",
        "fvim_m", "fvim_b")}

    for _ in range(e_layers):
        # FreBlockSpa: depthwise (3,1) -> LeakyReLU(0.1) -> depthwise (7,1)
        for pre in ("r", "i"):
            w3, b3 = w((C, 3)), w((C,))
            w7, b7 = w((C, 7)), w((C,))
            per[f"spa_{pre}_w3"].append(jnp.repeat(w3.T, N, axis=1))   # (3, CN)
            per[f"spa_{pre}_b3"].append(bcast(b3, N))
            per[f"spa_{pre}_w7"].append(jnp.repeat(w7.T, N, axis=1))   # (7, CN)
            per[f"spa_{pre}_b7"].append(bcast(b7, N))
        # FTIM frequency_spatial: Conv2d(C, C, (3,1), pad=(1,0))
        fsw, fsb = w((C, C, 3)), w((C,))
        per["fs3_m"].append(jnp.stack(
            [jnp.kron(fsw[:, :, k].T, eye_n) for k in range(3)], axis=0))
        per["fs3_b"].append(bcast(fsb, N))
        # FreBlockCha: 1x1 -> LeakyReLU(0.1) -> (1,3); lanes are c*F2+f
        for pre in ("r", "i"):
            w1, b1 = w((C, C)), w((C,))
            w3c, b3c = w((C, C, 3)), w((C,))
            m3 = sum(jnp.kron(w3c[:, :, k].T,
                              jnp.eye(F2, k=1 - k, dtype=jnp.float32))
                     for k in range(3))
            per[f"cha_{pre}_m1"].append(jnp.kron(w1.T, eye_f2))
            per[f"cha_{pre}_b1"].append(bcast(b1, F2))
            per[f"cha_{pre}_m3"].append(m3)
            per[f"cha_{pre}_b3"].append(bcast(b3c, F2))
        # FVIM frequency_spatial: Conv2d(C, C, 1)
        fvw, fvb = w((C, C)), w((C,))
        per["fvim_m"].append(jnp.kron(fvw.T, eye_n))
        per["fvim_b"].append(bcast(fvb, N))

    for name, vals in per.items():
        p[name] = jnp.stack(vals, axis=0)

    # head: fc = Linear(N*C, hidden) -> ReLU -> Linear(hidden, N)
    fc_w1, fc_b1 = w((hidden, N * C)), w((hidden,))
    fc_w2, fc_b2 = w((N, hidden)), w((N,))
    # torch flattens permute(0,2,3,1) as lane index n*C+c; re-index to c*N+n
    p["fc_w1"] = fc_w1.reshape(hidden, N, C).transpose(2, 1, 0).reshape(CN, hidden)
    p["fc_b1"] = fc_b1[None, :]
    p["fc_w2"] = fc_w2.T
    p["fc_b2"] = fc_b2[None, :]
    # fc1 = Linear(T*N, num_class) on dec flattened as t*N+n
    fc1_w, fc1_b = w((num_class, T * N)), w((num_class,))
    p["fc1_w"] = fc1_w.reshape(num_class, T, N).transpose(2, 1, 0)   # (N, T, nc)
    p["fc1_b"] = fc1_b[None, :]

    # NOTE: self.linear, conv2, conv, end_conv and the *.cat convs exist in the
    # PyTorch __init__ but are never used by forward(), so they are omitted.
    return p


# ------------------------------- forward ------------------------------------

def _zero_index_map(ndim, b):
    return (0,) * ndim


def forward(params, x_enc, padding_mask=None):
    """Fused ADPNet forward.  padding_mask is unused by the reference model."""
    del padding_mask
    x_enc = x_enc.astype(jnp.float32)
    B, T, N = x_enc.shape
    CN = params["conv1_b"].shape[1]
    C = CN // N
    L = params["fs3_m"].shape[0]
    num_class = params["fc1_b"].shape[1]

    names = tuple(params.keys())
    arrays = [params[k] for k in names]

    in_specs = [pl.BlockSpec((1, T, N), lambda b: (b, 0, 0))]
    for a in arrays:   # weights: full-extent blocks, resident across grid steps
        in_specs.append(
            pl.BlockSpec(a.shape, functools.partial(_zero_index_map, a.ndim)))

    kernel = functools.partial(_fused_forward_kernel, names,
                               (C, T, N, L, num_class))
    out = pl.pallas_call(
        kernel,
        out_shape=jax.ShapeDtypeStruct((B, 1, num_class), jnp.float32),
        grid=(B,),
        in_specs=in_specs,
        out_specs=pl.BlockSpec((1, 1, num_class), lambda b: (b, 0, 0)),
        compiler_params=pltpu.CompilerParams(
            dimension_semantics=("parallel",)),
    )(x_enc, *arrays)
    return out[:, 0, :]


# --------------------------------- main --------------------------------------

if __name__ == "__main__":
    # small config: d_model=16, seq_len=16, enc_in=8, e_layers=2, num_class=4
    B, T, N, C, E_LAYERS, NUM_CLASS = 2, 16, 8, 16, 2, 4
    key = jax.random.PRNGKey(0)
    pkey, xkey = jax.random.split(key)
    params = make_params(pkey, C, T, N, E_LAYERS, NUM_CLASS)
    x_enc = jax.random.normal(xkey, (B, T, N), jnp.float32)
    padding_mask = jnp.ones((B, T), jnp.float32)

    fwd = jax.jit(forward)
    out = fwd(params, x_enc, padding_mask)
    out = jax.block_until_ready(out)
    assert out.shape == (B, NUM_CLASS) and out.dtype == jnp.float32
    assert bool(jnp.all(jnp.isfinite(out)))
    print("KERNEL_OK")
</pallas_src>

<mosaic_0001>
module attributes {stable_mosaic.version = 11 : i64} {
  func.func @_fused_forward_kernel(%arg0: i32, %arg1: memref<1x16x8xf32, #tpu.memory_space<vmem>>, %arg2: memref<2x1x80xf32, #tpu.memory_space<vmem>>, %arg3: memref<2x1x80xf32, #tpu.memory_space<vmem>>, %arg4: memref<2x80x80xf32, #tpu.memory_space<vmem>>, %arg5: memref<2x80x80xf32, #tpu.memory_space<vmem>>, %arg6: memref<2x1x80xf32, #tpu.memory_space<vmem>>, %arg7: memref<2x1x80xf32, #tpu.memory_space<vmem>>, %arg8: memref<2x80x80xf32, #tpu.memory_space<vmem>>, %arg9: memref<2x80x80xf32, #tpu.memory_space<vmem>>, %arg10: memref<1x128xf32, #tpu.memory_space<vmem>>, %arg11: memref<7x8x128xf32, #tpu.memory_space<vmem>>, %arg12: memref<1x4xf32, #tpu.memory_space<vmem>>, %arg13: memref<8x16x4xf32, #tpu.memory_space<vmem>>, %arg14: memref<1x1024xf32, #tpu.memory_space<vmem>>, %arg15: memref<1x8xf32, #tpu.memory_space<vmem>>, %arg16: memref<128x1024xf32, #tpu.memory_space<vmem>>, %arg17: memref<1024x8xf32, #tpu.memory_space<vmem>>, %arg18: memref<2x1x128xf32, #tpu.memory_space<vmem>>, %arg19: memref<2x3x128x128xf32, #tpu.memory_space<vmem>>, %arg20: memref<2x1x128xf32, #tpu.memory_space<vmem>>, %arg21: memref<2x128x128xf32, #tpu.memory_space<vmem>>, %arg22: memref<80x128xf32, #tpu.memory_space<vmem>>, %arg23: memref<80x128xf32, #tpu.memory_space<vmem>>, %arg24: memref<16x9xf32, #tpu.memory_space<vmem>>, %arg25: memref<16x9xf32, #tpu.memory_space<vmem>>, %arg26: memref<11x9xf32, #tpu.memory_space<vmem>>, %arg27: memref<15x9xf32, #tpu.memory_space<vmem>>, %arg28: memref<18x16xf32, #tpu.memory_space<vmem>>, %arg29: memref<22x16xf32, #tpu.memory_space<vmem>>, %arg30: memref<128x80xf32, #tpu.memory_space<vmem>>, %arg31: memref<128x80xf32, #tpu.memory_space<vmem>>, %arg32: memref<9x16xf32, #tpu.memory_space<vmem>>, %arg33: memref<9x16xf32, #tpu.memory_space<vmem>>, %arg34: memref<2x1x128xf32, #tpu.memory_space<vmem>>, %arg35: memref<2x1x128xf32, #tpu.memory_space<vmem>>, %arg36: memref<2x3x128xf32, #tpu.memory_space<vmem>>, %arg37: memref<2x7x128xf32, #tpu.memory_space<vmem>>, %arg38: memref<2x1x128xf32, #tpu.memory_space<vmem>>, %arg39: memref<2x1x128xf32, #tpu.memory_space<vmem>>, %arg40: memref<2x3x128xf32, #tpu.memory_space<vmem>>, %arg41: memref<2x7x128xf32, #tpu.memory_space<vmem>>, %arg42: memref<1x1x4xf32, #tpu.memory_space<vmem>>) attributes {dimension_semantics = [#tpu.dimension_semantics<parallel>], iteration_bounds = array<i64: 2>, scalar_prefetch = 0 : i64, scratch_operands = 0 : i64, tpu.core_type = #tpu.core_type<tc>, window_params = [{transform_indices = @transform_0, window_bounds = array<i64: 1, 16, 8>}, {pipeline_mode = #tpu.pipeline_mode<synchronous>, transform_indices = @transform_1, window_bounds = array<i64: 2, 1, 80>}, {pipeline_mode = #tpu.pipeline_mode<synchronous>, transform_indices = @transform_2, window_bounds = array<i64: 2, 1, 80>}, {pipeline_mode = #tpu.pipeline_mode<synchronous>, transform_indices = @transform_3, window_bounds = array<i64: 2, 80, 80>}, {pipeline_mode = #tpu.pipeline_mode<synchronous>, transform_indices = @transform_4, window_bounds = array<i64: 2, 80, 80>}, {pipeline_mode = #tpu.pipeline_mode<synchronous>, transform_indices = @transform_5, window_bounds = array<i64: 2, 1, 80>}, {pipeline_mode = #tpu.pipeline_mode<synchronous>, transform_indices = @transform_6, window_bounds = array<i64: 2, 1, 80>}, {pipeline_mode = #tpu.pipeline_mode<synchronous>, transform_indices = @transform_7, window_bounds = array<i64: 2, 80, 80>}, {pipeline_mode = #tpu.pipeline_mode<synchronous>, transform_indices = @transform_8, window_bounds = array<i64: 2, 80, 80>}, {pipeline_mode = #tpu.pipeline_mode<synchronous>, transform_indices = @transform_9, window_bounds = array<i64: 1, 128>}, {pipeline_mode = #tpu.pipeline_mode<synchronous>, transform_indices = @transform_10, window_bounds = array<i64: 7, 8, 128>}, {pipeline_mode = #tpu.pipeline_mode<synchronous>, transform_indices = @transform_11, window_bounds = array<i64: 1, 4>}, {pipeline_mode = #tpu.pipeline_mode<synchronous>, transform_indices = @transform_12, window_bounds = array<i64: 8, 16, 4>}, {pipeline_mode = #tpu.pipeline_mode<synchronous>, transform_indices = @transform_13, window_bounds = array<i64: 1, 1024>}, {pipeline_mode = #tpu.pipeline_mode<synchronous>, transform_indices = @transform_14, window_bounds = array<i64: 1, 8>}, {pipeline_mode = #tpu.pipeline_mode<synchronous>, transform_indices = @transform_15, window_bounds = array<i64: 128, 1024>}, {pipeline_mode = #tpu.pipeline_mode<synchronous>, transform_indices = @transform_16, window_bounds = array<i64: 1024, 8>}, {pipeline_mode = #tpu.pipeline_mode<synchronous>, transform_indices = @transform_17, window_bounds = array<i64: 2, 1, 128>}, {pipeline_mode = #tpu.pipeline_mode<synchronous>, transform_indices = @transform_18, window_bounds = array<i64: 2, 3, 128, 128>}, {pipeline_mode = #tpu.pipeline_mode<synchronous>, transform_indices = @transform_19, window_bounds = array<i64: 2, 1, 128>}, {pipeline_mode = #tpu.pipeline_mode<synchronous>, transform_indices = @transform_20, window_bounds = array<i64: 2, 128, 128>}, {pipeline_mode = #tpu.pipeline_mode<synchronous>, transform_indices = @transform_21, window_bounds = array<i64: 80, 128>}, {pipeline_mode = #tpu.pipeline_mode<synchronous>, transform_indices = @transform_22, window_bounds = array<i64: 80, 128>}, {pipeline_mode = #tpu.pipeline_mode<synchronous>, transform_indices = @transform_23, window_bounds = array<i64: 16, 9>}, {pipeline_mode = #tpu.pipeline_mode<synchronous>, transform_indices = @transform_24, window_bounds = array<i64: 16, 9>}, {pipeline_mode = #tpu.pipeline_mode<synchronous>, transform_indices = @transform_25, window_bounds = array<i64: 11, 9>}, {pipeline_mode = #tpu.pipeline_mode<synchronous>, transform_indices = @transform_26, window_bounds = array<i64: 15, 9>}, {pipeline_mode = #tpu.pipeline_mode<synchronous>, transform_indices = @transform_27, window_bounds = array<i64: 18, 16>}, {pipeline_mode = #tpu.pipeline_mode<synchronous>, transform_indices = @transform_28, window_bounds = array<i64: 22, 16>}, {pipeline_mode = #tpu.pipeline_mode<synchronous>, transform_indices = @transform_29, window_bounds = array<i64: 128, 80>}, {pipeline_mode = #tpu.pipeline_mode<synchronous>, transform_indices = @transform_30, window_bounds = array<i64: 128, 80>}, {pipeline_mode = #tpu.pipeline_mode<synchronous>, transform_indices = @transform_31, window_bounds = array<i64: 9, 16>}, {pipeline_mode = #tpu.pipeline_mode<synchronous>, transform_indices = @transform_32, window_bounds = array<i64: 9, 16>}, {pipeline_mode = #tpu.pipeline_mode<synchronous>, transform_indices = @transform_33, window_bounds = array<i64: 2, 1, 128>}, {pipeline_mode = #tpu.pipeline_mode<synchronous>, transform_indices = @transform_34, window_bounds = array<i64: 2, 1, 128>}, {pipeline_mode = #tpu.pipeline_mode<synchronous>, transform_indices = @transform_35, window_bounds = array<i64: 2, 3, 128>}, {pipeline_mode = #tpu.pipeline_mode<synchronous>, transform_indices = @transform_36, window_bounds = array<i64: 2, 7, 128>}, {pipeline_mode = #tpu.pipeline_mode<synchronous>, transform_indices = @transform_37, window_bounds = array<i64: 2, 1, 128>}, {pipeline_mode = #tpu.pipeline_mode<synchronous>, transform_indices = @transform_38, window_bounds = array<i64: 2, 1, 128>}, {pipeline_mode = #tpu.pipeline_mode<synchronous>, transform_indices = @transform_39, window_bounds = array<i64: 2, 3, 128>}, {pipeline_mode = #tpu.pipeline_mode<synchronous>, transform_indices = @transform_40, window_bounds = array<i64: 2, 7, 128>}, {transform_indices = @transform_41, window_bounds = array<i64: 1, 1, 4>}]} {
    %c0 = arith.constant 0 : index
    %c0_0 = arith.constant 0 : index
    %c0_1 = arith.constant 0 : index
    %0 = vector.load %arg1[%c0, %c0_0, %c0_1] : memref<1x16x8xf32, #tpu.memory_space<vmem>>, vector<1x16x8xf32>
    %1 = vector.shape_cast %0 : vector<1x16x8xf32> to vector<16x8xf32>
    %cst = arith.constant dense<0.000000e+00> : vector<8xf32>
    %2 = vector.multi_reduction <add>, %1, %cst [0] : vector<16x8xf32> to vector<8xf32>
    %3 = vector.shape_cast %2 : vector<8xf32> to vector<1x8xf32>
    %cst_2 = arith.constant 1.600000e+01 : f32
    %4 = vector.broadcast %cst_2 : f32 to vector<1x8xf32>
    %5 = arith.divf %3, %4 : vector<1x8xf32>
    %6 = vector.broadcast %5 : vector<1x8xf32> to vector<16x8xf32>
    %7 = arith.subf %1, %6 : vector<16x8xf32>
    %8 = arith.mulf %7, %7 : vector<16x8xf32>
    %cst_3 = arith.constant dense<0.000000e+00> : vector<8xf32>
    %9 = vector.multi_reduction <add>, %8, %cst_3 [0] : vector<16x8xf32> to vector<8xf32>
    %10 = vector.shape_cast %9 : vector<8xf32> to vector<1x8xf32>
    %cst_4 = arith.constant 1.600000e+01 : f32
    %11 = vector.broadcast %cst_4 : f32 to vector<1x8xf32>
    %12 = arith.divf %10, %11 : vector<1x8xf32>
    %cst_5 = arith.constant 9.99999974E-6 : f32
    %13 = vector.broadcast %cst_5 : f32 to vector<1x8xf32>
    %14 = arith.addf %12, %13 : vector<1x8xf32>
    %15 = math.sqrt %14 : vector<1x8xf32>
    %16 = vector.broadcast %15 : vector<1x8xf32> to vector<16x8xf32>
    %17 = arith.divf %7, %16 : vector<16x8xf32>
    %c0_6 = arith.constant 0 : index
    %c0_7 = arith.constant 0 : index
    %18 = vector.load %arg29[%c0_6, %c0_7] : memref<22x16xf32, #tpu.memory_space<vmem>>, vector<22x16xf32>
    %cst_8 = arith.constant dense<0.000000e+00> : vector<22x8xf32>
    %19 = tpu.matmul %18, %17, %cst_8 {dimension_numbers = #tpu.dot_dimension_numbers<[1], [0], [0], [1], [0, 0, 1, 1], [], []>} : vector<22x16xf32>, vector<16x8xf32>, vector<22x8xf32> -> vector<22x8xf32>
    %cst_9 = arith.constant 0.000000e+00 : f32
    %20 = vector.broadcast %cst_9 : f32 to vector<16x128xf32>
    %21 = vector.extract_strided_slice %19 {offsets = [0, 0], sizes = [16, 8], strides = [1, 1]} : vector<22x8xf32> to vector<16x8xf32>
    %c0_10 = arith.constant 0 : index
    %c0_11 = arith.constant 0 : index
    %c0_12 = arith.constant 0 : index
    %22 = vector.load %arg11[%c0_10, %c0_11, %c0_12] : memref<7x8x128xf32, #tpu.memory_space<vmem>>, vector<1x8x128xf32>
    %23 = vector.shape_cast %22 : vector<1x8x128xf32> to vector<8x128xf32>
    %cst_13 = arith.constant dense<0.000000e+00> : vector<16x128xf32>
    %24 = tpu.matmul %21, %23, %cst_13 {dimension_numbers = #tpu.dot_dimension_numbers<[1], [0], [0], [1], [0, 0, 1, 1], [], []>} : vector<16x8xf32>, vector<8x128xf32>, vector<16x128xf32> -> vector<16x128xf32>
    %25 = arith.addf %20, %24 : vector<16x128xf32>
    %26 = vector.extract_strided_slice %19 {offsets = [1, 0], sizes = [16, 8], strides = [1, 1]} : vector<22x8xf32> to vector<16x8xf32>
    %c1 = arith.constant 1 : index
    %c0_14 = arith.constant 0 : index
    %c0_15 = arith.constant 0 : index
    %27 = vector.load %arg11[%c1, %c0_14, %c0_15] : memref<7x8x128xf32, #tpu.memory_space<vmem>>, vector<1x8x128xf32>
    %28 = vector.shape_cast %27 : vector<1x8x128xf32> to vector<8x128xf32>
    %cst_16 = arith.constant dense<0.000000e+00> : vector<16x128xf32>
    %29 = tpu.matmul %26, %28, %cst_16 {dimension_numbers = #tpu.dot_dimension_numbers<[1], [0], [0], [1], [0, 0, 1, 1], [], []>} : vector<16x8xf32>, vector<8x128xf32>, vector<16x128xf32> -> vector<16x128xf32>
    %30 = arith.addf %25, %29 : vector<16x128xf32>
    %31 = vector.extract_strided_slice %19 {offsets = [2, 0], sizes = [16, 8], strides = [1, 1]} : vector<22x8xf32> to vector<16x8xf32>
    %c2 = arith.constant 2 : index
    %c0_17 = arith.constant 0 : index
    %c0_18 = arith.constant 0 : index
    %32 = vector.load %arg11[%c2, %c0_17, %c0_18] : memref<7x8x128xf32, #tpu.memory_space<vmem>>, vector<1x8x128xf32>
    %33 = vector.shape_cast %32 : vector<1x8x128xf32> to vector<8x128xf32>
    %cst_19 = arith.constant dense<0.000000e+00> : vector<16x128xf32>
    %34 = tpu.matmul %31, %33, %cst_19 {dimension_numbers = #tpu.dot_dimension_numbers<[1], [0], [0], [1], [0, 0, 1, 1], [], []>} : vector<16x8xf32>, vector<8x128xf32>, vector<16x128xf32> -> vector<16x128xf32>
    %35 = arith.addf %30, %34 : vector<16x128xf32>
    %36 = vector.extract_strided_slice %19 {offsets = [3, 0], sizes = [16, 8], strides = [1, 1]} : vector<22x8xf32> to vector<16x8xf32>
    %c3 = arith.constant 3 : index
    %c0_20 = arith.constant 0 : index
    %c0_21 = arith.constant 0 : index
    %37 = vector.load %arg11[%c3, %c0_20, %c0_21] : memref<7x8x128xf32, #tpu.memory_space<vmem>>, vector<1x8x128xf32>
    %38 = vector.shape_cast %37 : vector<1x8x128xf32> to vector<8x128xf32>
    %cst_22 = arith.constant dense<0.000000e+00> : vector<16x128xf32>
    %39 = tpu.matmul %36, %38, %cst_22 {dimension_numbers = #tpu.dot_dimension_numbers<[1], [0], [0], [1], [0, 0, 1, 1], [], []>} : vector<16x8xf32>, vector<8x128xf32>, vector<16x128xf32> -> vector<16x128xf32>
    %40 = arith.addf %35, %39 : vector<16x128xf32>
    %41 = vector.extract_strided_slice %19 {offsets = [4, 0], sizes = [16, 8], strides = [1, 1]} : vector<22x8xf32> to vector<16x8xf32>
    %c4 = arith.constant 4 : index
    %c0_23 = arith.constant 0 : index
    %c0_24 = arith.constant 0 : index
    %42 = vector.load %arg11[%c4, %c0_23, %c0_24] : memref<7x8x128xf32, #tpu.memory_space<vmem>>, vector<1x8x128xf32>
    %43 = vector.shape_cast %42 : vector<1x8x128xf32> to vector<8x128xf32>
    %cst_25 = arith.constant dense<0.000000e+00> : vector<16x128xf32>
    %44 = tpu.matmul %41, %43, %cst_25 {dimension_numbers = #tpu.dot_dimension_numbers<[1], [0], [0], [1], [0, 0, 1, 1], [], []>} : vector<16x8xf32>, vector<8x128xf32>, vector<16x128xf32> -> vector<16x128xf32>
    %45 = arith.addf %40, %44 : vector<16x128xf32>
    %46 = vector.extract_strided_slice %19 {offsets = [5, 0], sizes = [16, 8], strides = [1, 1]} : vector<22x8xf32> to vector<16x8xf32>
    %c5 = arith.constant 5 : index
    %c0_26 = arith.constant 0 : index
    %c0_27 = arith.constant 0 : index
    %47 = vector.load %arg11[%c5, %c0_26, %c0_27] : memref<7x8x128xf32, #tpu.memory_space<vmem>>, vector<1x8x128xf32>
    %48 = vector.shape_cast %47 : vector<1x8x128xf32> to vector<8x128xf32>
    %cst_28 = arith.constant dense<0.000000e+00> : vector<16x128xf32>
    %49 = tpu.matmul %46, %48, %cst_28 {dimension_numbers = #tpu.dot_dimension_numbers<[1], [0], [0], [1], [0, 0, 1, 1], [], []>} : vector<16x8xf32>, vector<8x128xf32>, vector<16x128xf32> -> vector<16x128xf32>
    %50 = arith.addf %45, %49 : vector<16x128xf32>
    %51 = vector.extract_strided_slice %19 {offsets = [6, 0], sizes = [16, 8], strides = [1, 1]} : vector<22x8xf32> to vector<16x8xf32>
    %c6 = arith.constant 6 : index
    %c0_29 = arith.constant 0 : index
    %c0_30 = arith.constant 0 : index
    %52 = vector.load %arg11[%c6, %c0_29, %c0_30] : memref<7x8x128xf32, #tpu.memory_space<vmem>>, vector<1x8x128xf32>
    %53 = vector.shape_cast %52 : vector<1x8x128xf32> to vector<8x128xf32>
    %cst_31 = arith.constant dense<0.000000e+00> : vector<16x128xf32>
    %54 = tpu.matmul %51, %53, %cst_31 {dimension_numbers = #tpu.dot_dimension_numbers<[1], [0], [0], [1], [0, 0, 1, 1], [], []>} : vector<16x8xf32>, vector<8x128xf32>, vector<16x128xf32> -> vector<16x128xf32>
    %55 = arith.addf %50, %54 : vector<16x128xf32>
    %c0_32 = arith.constant 0 : index
    %c0_33 = arith.constant 0 : index
    %56 = vector.load %arg10[%c0_32, %c0_33] : memref<1x128xf32, #tpu.memory_space<vmem>>, vector<1x128xf32>
    %57 = vector.broadcast %56 : vector<1x128xf32> to vector<16x128xf32>
    %58 = arith.addf %55, %57 : vector<16x128xf32>
    %c0_34 = arith.constant 0 : index
    %c0_35 = arith.constant 0 : index
    %59 = vector.load %arg33[%c0_34, %c0_35] : memref<9x16xf32, #tpu.memory_space<vmem>>, vector<9x16xf32>
    %cst_36 = arith.constant dense<0.000000e+00> : vector<9x128xf32>
    %60 = tpu.matmul %59, %58, %cst_36 {dimension_numbers = #tpu.dot_dimension_numbers<[1], [0], [0], [1], [0, 0, 1, 1], [], []>} : vector<9x16xf32>, vector<16x128xf32>, vector<9x128xf32> -> vector<9x128xf32>
    %c0_37 = arith.constant 0 : index
    %c0_38 = arith.constant 0 : index
    %61 = vector.load %arg32[%c0_37, %c0_38] : memref<9x16xf32, #tpu.memory_space<vmem>>, vector<9x16xf32>
    %cst_39 = arith.constant dense<0.000000e+00> : vector<9x128xf32>
    %62 = tpu.matmul %61, %58, %cst_39 {dimension_numbers = #tpu.dot_dimension_numbers<[1], [0], [0], [1], [0, 0, 1, 1], [], []>} : vector<9x16xf32>, vector<16x128xf32>, vector<9x128xf32> -> vector<9x128xf32>
    %c0_40 = arith.constant 0 : index
    %c0_41 = arith.constant 0 : index
    %63 = vector.load %arg26[%c0_40, %c0_41] : memref<11x9xf32, #tpu.memory_space<vmem>>, vector<11x9xf32>
    %c0_42 = arith.constant 0 : index
    %c0_43 = arith.constant 0 : index
    %c0_44 = arith.constant 0 : index
    %64 = vector.load %arg40[%c0_42, %c0_43, %c0_44] : memref<2x3x128xf32, #tpu.memory_space<vmem>>, vector<1x3x128xf32>
    %65 = vector.shape_cast %64 : vector<1x3x128xf32> to vector<3x128xf32>
    %c0_45 = arith.constant 0 : index
    %c0_46 = arith.constant 0 : index
    %c0_47 = arith.constant 0 : index
    %66 = vector.load %arg38[%c0_45, %c0_46, %c0_47] : memref<2x1x128xf32, #tpu.memory_space<vmem>>, vector<1x1x128xf32>
    %67 = vector.shape_cast %66 : vector<1x1x128xf32> to vector<1x128xf32>
    %cst_48 = arith.constant dense<0.000000e+00> : vector<11x128xf32>
    %68 = tpu.matmul %63, %60, %cst_48 {dimension_numbers = #tpu.dot_dimension_numbers<[1], [0], [0], [1], [0, 0, 1, 1], [], []>} : vector<11x9xf32>, vector<9x128xf32>, vector<11x128xf32> -> vector<11x128xf32>
    %cst_49 = arith.constant 0.000000e+00 : f32
    %69 = vector.broadcast %cst_49 : f32 to vector<9x128xf32>
    %70 = vector.extract_strided_slice %68 {offsets = [0, 0], sizes = [9, 128], strides = [1, 1]} : vector<11x128xf32> to vector<9x128xf32>
    %71 = vector.extract_strided_slice %65 {offsets = [0, 0], sizes = [1, 128], strides = [1, 1]} : vector<3x128xf32> to vector<1x128xf32>
    %72 = vector.broadcast %71 : vector<1x128xf32> to vector<9x128xf32>
    %73 = arith.mulf %70, %72 : vector<9x128xf32>
    %74 = arith.addf %69, %73 : vector<9x128xf32>
    %75 = vector.extract_strided_slice %68 {offsets = [1, 0], sizes = [9, 128], strides = [1, 1]} : vector<11x128xf32> to vector<9x128xf32>
    %76 = vector.extract_strided_slice %65 {offsets = [1, 0], sizes = [1, 128], strides = [1, 1]} : vector<3x128xf32> to vector<1x128xf32>
    %77 = vector.broadcast %76 : vector<1x128xf32> to vector<9x128xf32>
    %78 = arith.mulf %75, %77 : vector<9x128xf32>
    %79 = arith.addf %74, %78 : vector<9x128xf32>
    %80 = vector.extract_strided_slice %68 {offsets = [2, 0], sizes = [9, 128], strides = [1, 1]} : vector<11x128xf32> to vector<9x128xf32>
    %81 = vector.extract_strided_slice %65 {offsets = [2, 0], sizes = [1, 128], strides = [1, 1]} : vector<3x128xf32> to vector<1x128xf32>
    %82 = vector.broadcast %81 : vector<1x128xf32> to vector<9x128xf32>
    %83 = arith.mulf %80, %82 : vector<9x128xf32>
    %84 = arith.addf %79, %83 : vector<9x128xf32>
    %85 = vector.broadcast %67 : vector<1x128xf32> to vector<9x128xf32>
    %86 = arith.addf %84, %85 : vector<9x128xf32>
    %cst_50 = arith.constant 0.000000e+00 : f32
    %87 = vector.broadcast %cst_50 : f32 to vector<9x128xf32>
    %88 = arith.cmpf ogt, %86, %87 : vector<9x128xf32>
    %cst_51 = arith.constant 1.000000e-01 : f32
    %89 = vector.broadcast %cst_51 : f32 to vector<9x128xf32>
    %90 = arith.mulf %89, %86 : vector<9x128xf32>
    %91 = arith.select %88, %86, %90 : vector<9x128xi1>, vector<9x128xf32>
    %c0_52 = arith.constant 0 : index
    %c0_53 = arith.constant 0 : index
    %92 = vector.load %arg27[%c0_52, %c0_53] : memref<15x9xf32, #tpu.memory_space<vmem>>, vector<15x9xf32>
    %c0_54 = arith.constant 0 : index
    %c0_55 = arith.constant 0 : index
    %c0_56 = arith.constant 0 : index
    %93 = vector.load %arg41[%c0_54, %c0_55, %c0_56] : memref<2x7x128xf32, #tpu.memory_space<vmem>>, vector<1x7x128xf32>
    %94 = vector.shape_cast %93 : vector<1x7x128xf32> to vector<7x128xf32>
    %c0_57 = arith.constant 0 : index
    %c0_58 = arith.constant 0 : index
    %c0_59 = arith.constant 0 : index
    %95 = vector.load %arg39[%c0_57, %c0_58, %c0_59] : memref<2x1x128xf32, #tpu.memory_space<vmem>>, vector<1x1x128xf32>
    %96 = vector.shape_cast %95 : vector<1x1x128xf32> to vector<1x128xf32>
    %cst_60 = arith.constant dense<0.000000e+00> : vector<15x128xf32>
    %97 = tpu.matmul %92, %91, %cst_60 {dimension_numbers = #tpu.dot_dimension_numbers<[1], [0], [0], [1], [0, 0, 1, 1], [], []>} : vector<15x9xf32>, vector<9x128xf32>, vector<15x128xf32> -> vector<15x128xf32>
    %cst_61 = arith.constant 0.000000e+00 : f32
    %98 = vector.broadcast %cst_61 : f32 to vector<9x128xf32>
    %99 = vector.extract_strided_slice %97 {offsets = [0, 0], sizes = [9, 128], strides = [1, 1]} : vector<15x128xf32> to vector<9x128xf32>
    %100 = vector.extract_strided_slice %94 {offsets = [0, 0], sizes = [1, 128], strides = [1, 1]} : vector<7x128xf32> to vector<1x128xf32>
    %101 = vector.broadcast %100 : vector<1x128xf32> to vector<9x128xf32>
    %102 = arith.mulf %99, %101 : vector<9x128xf32>
    %103 = arith.addf %98, %102 : vector<9x128xf32>
    %104 = vector.extract_strided_slice %97 {offsets = [1, 0], sizes = [9, 128], strides = [1, 1]} : vector<15x128xf32> to vector<9x128xf32>
    %105 = vector.extract_strided_slice %94 {offsets = [1, 0], sizes = [1, 128], strides = [1, 1]} : vector<7x128xf32> to vector<1x128xf32>
    %106 = vector.broadcast %105 : vector<1x128xf32> to vector<9x128xf32>
    %107 = arith.mulf %104, %106 : vector<9x128xf32>
    %108 = arith.addf %103, %107 : vector<9x128xf32>
    %109 = vector.extract_strided_slice %97 {offsets = [2, 0], sizes = [9, 128], strides = [1, 1]} : vector<15x128xf32> to vector<9x128xf32>
    %110 = vector.extract_strided_slice %94 {offsets = [2, 0], sizes = [1, 128], strides = [1, 1]} : vector<7x128xf32> to vector<1x128xf32>
    %111 = vector.broadcast %110 : vector<1x128xf32> to vector<9x128xf32>
    %112 = arith.mulf %109, %111 : vector<9x128xf32>
    %113 = arith.addf %108, %112 : vector<9x128xf32>
    %114 = vector.extract_strided_slice %97 {offsets = [3, 0], sizes = [9, 128], strides = [1, 1]} : vector<15x128xf32> to vector<9x128xf32>
    %115 = vector.extract_strided_slice %94 {offsets = [3, 0], sizes = [1, 128], strides = [1, 1]} : vector<7x128xf32> to vector<1x128xf32>
    %116 = vector.broadcast %115 : vector<1x128xf32> to vector<9x128xf32>
    %117 = arith.mulf %114, %116 : vector<9x128xf32>
    %118 = arith.addf %113, %117 : vector<9x128xf32>
    %119 = vector.extract_strided_slice %97 {offsets = [4, 0], sizes = [9, 128], strides = [1, 1]} : vector<15x128xf32> to vector<9x128xf32>
    %120 = vector.extract_strided_slice %94 {offsets = [4, 0], sizes = [1, 128], strides = [1, 1]} : vector<7x128xf32> to vector<1x128xf32>
    %121 = vector.broadcast %120 : vector<1x128xf32> to vector<9x128xf32>
    %122 = arith.mulf %119, %121 : vector<9x128xf32>
    %123 = arith.addf %118, %122 : vector<9x128xf32>
    %124 = vector.extract_strided_slice %97 {offsets = [5, 0], sizes = [9, 128], strides = [1, 1]} : vector<15x128xf32> to vector<9x128xf32>
    %125 = vector.extract_strided_slice %94 {offsets = [5, 0], sizes = [1, 128], strides = [1, 1]} : vector<7x128xf32> to vector<1x128xf32>
    %126 = vector.broadcast %125 : vector<1x128xf32> to vector<9x128xf32>
    %127 = arith.mulf %124, %126 : vector<9x128xf32>
    %128 = arith.addf %123, %127 : vector<9x128xf32>
    %129 = vector.extract_strided_slice %97 {offsets = [6, 0], sizes = [9, 128], strides = [1, 1]} : vector<15x128xf32> to vector<9x128xf32>
    %130 = vector.extract_strided_slice %94 {offsets = [6, 0], sizes = [1, 128], strides = [1, 1]} : vector<7x128xf32> to vector<1x128xf32>
    %131 = vector.broadcast %130 : vector<1x128xf32> to vector<9x128xf32>
    %132 = arith.mulf %129, %131 : vector<9x128xf32>
    %133 = arith.addf %128, %132 : vector<9x128xf32>
    %134 = vector.broadcast %96 : vector<1x128xf32> to vector<9x128xf32>
    %135 = arith.addf %133, %134 : vector<9x128xf32>
    %c0_62 = arith.constant 0 : index
    %c0_63 = arith.constant 0 : index
    %136 = vector.load %arg26[%c0_62, %c0_63] : memref<11x9xf32, #tpu.memory_space<vmem>>, vector<11x9xf32>
    %c0_64 = arith.constant 0 : index
    %c0_65 = arith.constant 0 : index
    %c0_66 = arith.constant 0 : index
    %137 = vector.load %arg36[%c0_64, %c0_65, %c0_66] : memref<2x3x128xf32, #tpu.memory_space<vmem>>, vector<1x3x128xf32>
    %138 = vector.shape_cast %137 : vector<1x3x128xf32> to vector<3x128xf32>
    %c0_67 = arith.constant 0 : index
    %c0_68 = arith.constant 0 : index
    %c0_69 = arith.constant 0 : index
    %139 = vector.load %arg34[%c0_67, %c0_68, %c0_69] : memref<2x1x128xf32, #tpu.memory_space<vmem>>, vector<1x1x128xf32>
    %140 = vector.shape_cast %139 : vector<1x1x128xf32> to vector<1x128xf32>
    %cst_70 = arith.constant dense<0.000000e+00> : vector<11x128xf32>
    %141 = tpu.matmul %136, %62, %cst_70 {dimension_numbers = #tpu.dot_dimension_numbers<[1], [0], [0], [1], [0, 0, 1, 1], [], []>} : vector<11x9xf32>, vector<9x128xf32>, vector<11x128xf32> -> vector<11x128xf32>
    %cst_71 = arith.constant 0.000000e+00 : f32
    %142 = vector.broadcast %cst_71 : f32 to vector<9x128xf32>
    %143 = vector.extract_strided_slice %141 {offsets = [0, 0], sizes = [9, 128], strides = [1, 1]} : vector<11x128xf32> to vector<9x128xf32>
    %144 = vector.extract_strided_slice %138 {offsets = [0, 0], sizes = [1, 128], strides = [1, 1]} : vector<3x128xf32> to vector<1x128xf32>
    %145 = vector.broadcast %144 : vector<1x128xf32> to vector<9x128xf32>
    %146 = arith.mulf %143, %145 : vector<9x128xf32>
    %147 = arith.addf %142, %146 : vector<9x128xf32>
    %148 = vector.extract_strided_slice %141 {offsets = [1, 0], sizes = [9, 128], strides = [1, 1]} : vector<11x128xf32> to vector<9x128xf32>
    %149 = vector.extract_strided_slice %138 {offsets = [1, 0], sizes = [1, 128], strides = [1, 1]} : vector<3x128xf32> to vector<1x128xf32>
    %150 = vector.broadcast %149 : vector<1x128xf32> to vector<9x128xf32>
    %151 = arith.mulf %148, %150 : vector<9x128xf32>
    %152 = arith.addf %147, %151 : vector<9x128xf32>
    %153 = vector.extract_strided_slice %141 {offsets = [2, 0], sizes = [9, 128], strides = [1, 1]} : vector<11x128xf32> to vector<9x128xf32>
    %154 = vector.extract_strided_slice %138 {offsets = [2, 0], sizes = [1, 128], strides = [1, 1]} : vector<3x128xf32> to vector<1x128xf32>
    %155 = vector.broadcast %154 : vector<1x128xf32> to vector<9x128xf32>
    %156 = arith.mulf %153, %155 : vector<9x128xf32>
    %157 = arith.addf %152, %156 : vector<9x128xf32>
    %158 = vector.broadcast %140 : vector<1x128xf32> to vector<9x128xf32>
    %159 = arith.addf %157, %158 : vector<9x128xf32>
    %cst_72 = arith.constant 0.000000e+00 : f32
    %160 = vector.broadcast %cst_72 : f32 to vector<9x128xf32>
    %161 = arith.cmpf ogt, %159, %160 : vector<9x128xf32>
    %cst_73 = arith.constant 1.000000e-01 : f32
    %162 = vector.broadcast %cst_73 : f32 to vector<9x128xf32>
    %163 = arith.mulf %162, %159 : vector<9x128xf32>
    %164 = arith.select %161, %159, %163 : vector<9x128xi1>, vector<9x128xf32>
    %c0_74 = arith.constant 0 : index
    %c0_75 = arith.constant 0 : index
    %165 = vector.load %arg27[%c0_74, %c0_75] : memref<15x9xf32, #tpu.memory_space<vmem>>, vector<15x9xf32>
    %c0_76 = arith.constant 0 : index
    %c0_77 = arith.constant 0 : index
    %c0_78 = arith.constant 0 : index
    %166 = vector.load %arg37[%c0_76, %c0_77, %c0_78] : memref<2x7x128xf32, #tpu.memory_space<vmem>>, vector<1x7x128xf32>
    %167 = vector.shape_cast %166 : vector<1x7x128xf32> to vector<7x128xf32>
    %c0_79 = arith.constant 0 : index
    %c0_80 = arith.constant 0 : index
    %c0_81 = arith.constant 0 : index
    %168 = vector.load %arg35[%c0_79, %c0_80, %c0_81] : memref<2x1x128xf32, #tpu.memory_space<vmem>>, vector<1x1x128xf32>
    %169 = vector.shape_cast %168 : vector<1x1x128xf32> to vector<1x128xf32>
    %cst_82 = arith.constant dense<0.000000e+00> : vector<15x128xf32>
    %170 = tpu.matmul %165, %164, %cst_82 {dimension_numbers = #tpu.dot_dimension_numbers<[1], [0], [0], [1], [0, 0, 1, 1], [], []>} : vector<15x9xf32>, vector<9x128xf32>, vector<15x128xf32> -> vector<15x128xf32>
    %cst_83 = arith.constant 0.000000e+00 : f32
    %171 = vector.broadcast %cst_83 : f32 to vector<9x128xf32>
    %172 = vector.extract_strided_slice %170 {offsets = [0, 0], sizes = [9, 128], strides = [1, 1]} : vector<15x128xf32> to vector<9x128xf32>
    %173 = vector.extract_strided_slice %167 {offsets = [0, 0], sizes = [1, 128], strides = [1, 1]} : vector<7x128xf32> to vector<1x128xf32>
    %174 = vector.broadcast %173 : vector<1x128xf32> to vector<9x128xf32>
    %175 = arith.mulf %172, %174 : vector<9x128xf32>
    %176 = arith.addf %171, %175 : vector<9x128xf32>
    %177 = vector.extract_strided_slice %170 {offsets = [1, 0], sizes = [9, 128], strides = [1, 1]} : vector<15x128xf32> to vector<9x128xf32>
    %178 = vector.extract_strided_slice %167 {offsets = [1, 0], sizes = [1, 128], strides = [1, 1]} : vector<7x128xf32> to vector<1x128xf32>
    %179 = vector.broadcast %178 : vector<1x128xf32> to vector<9x128xf32>
    %180 = arith.mulf %177, %179 : vector<9x128xf32>
    %181 = arith.addf %176, %180 : vector<9x128xf32>
    %182 = vector.extract_strided_slice %170 {offsets = [2, 0], sizes = [9, 128], strides = [1, 1]} : vector<15x128xf32> to vector<9x128xf32>
    %183 = vector.extract_strided_slice %167 {offsets = [2, 0], sizes = [1, 128], strides = [1, 1]} : vector<7x128xf32> to vector<1x128xf32>
    %184 = vector.broadcast %183 : vector<1x128xf32> to vector<9x128xf32>
    %185 = arith.mulf %182, %184 : vector<9x128xf32>
    %186 = arith.addf %181, %185 : vector<9x128xf32>
    %187 = vector.extract_strided_slice %170 {offsets = [3, 0], sizes = [9, 128], strides = [1, 1]} : vector<15x128xf32> to vector<9x128xf32>
    %188 = vector.extract_strided_slice %167 {offsets = [3, 0], sizes = [1, 128], strides = [1, 1]} : vector<7x128xf32> to vector<1x128xf32>
    %189 = vector.broadcast %188 : vector<1x128xf32> to vector<9x128xf32>
    %190 = arith.mulf %187, %189 : vector<9x128xf32>
    %191 = arith.addf %186, %190 : vector<9x128xf32>
    %192 = vector.extract_strided_slice %170 {offsets = [4, 0], sizes = [9, 128], strides = [1, 1]} : vector<15x128xf32> to vector<9x128xf32>
    %193 = vector.extract_strided_slice %167 {offsets = [4, 0], sizes = [1, 128], strides = [1, 1]} : vector<7x128xf32> to vector<1x128xf32>
    %194 = vector.broadcast %193 : vector<1x128xf32> to vector<9x128xf32>
    %195 = arith.mulf %192, %194 : vector<9x128xf32>
    %196 = arith.addf %191, %195 : vector<9x128xf32>
    %197 = vector.extract_strided_slice %170 {offsets = [5, 0], sizes = [9, 128], strides = [1, 1]} : vector<15x128xf32> to vector<9x128xf32>
    %198 = vector.extract_strided_slice %167 {offsets = [5, 0], sizes = [1, 128], strides = [1, 1]} : vector<7x128xf32> to vector<1x128xf32>
    %199 = vector.broadcast %198 : vector<1x128xf32> to vector<9x128xf32>
    %200 = arith.mulf %197, %199 : vector<9x128xf32>
    %201 = arith.addf %196, %200 : vector<9x128xf32>
    %202 = vector.extract_strided_slice %170 {offsets = [6, 0], sizes = [9, 128], strides = [1, 1]} : vector<15x128xf32> to vector<9x128xf32>
    %203 = vector.extract_strided_slice %167 {offsets = [6, 0], sizes = [1, 128], strides = [1, 1]} : vector<7x128xf32> to vector<1x128xf32>
    %204 = vector.broadcast %203 : vector<1x128xf32> to vector<9x128xf32>
    %205 = arith.mulf %202, %204 : vector<9x128xf32>
    %206 = arith.addf %201, %205 : vector<9x128xf32>
    %207 = vector.broadcast %169 : vector<1x128xf32> to vector<9x128xf32>
    %208 = arith.addf %206, %207 : vector<9x128xf32>
    %c0_84 = arith.constant 0 : index
    %c0_85 = arith.constant 0 : index
    %209 = vector.load %arg25[%c0_84, %c0_85] : memref<16x9xf32, #tpu.memory_space<vmem>>, vector<16x9xf32>
    %cst_86 = arith.constant dense<0.000000e+00> : vector<16x128xf32>
    %210 = tpu.matmul %209, %135, %cst_86 {dimension_numbers = #tpu.dot_dimension_numbers<[1], [0], [0], [1], [0, 0, 1, 1], [], []>} : vector<16x9xf32>, vector<9x128xf32>, vector<16x128xf32> -> vector<16x128xf32>
    %c0_87 = arith.constant 0 : index
    %c0_88 = arith.constant 0 : index
    %211 = vector.load %arg24[%c0_87, %c0_88] : memref<16x9xf32, #tpu.memory_space<vmem>>, vector<16x9xf32>
    %cst_89 = arith.constant dense<0.000000e+00> : vector<16x128xf32>
    %212 = tpu.matmul %211, %208, %cst_89 {dimension_numbers = #tpu.dot_dimension_numbers<[1], [0], [0], [1], [0, 0, 1, 1], [], []>} : vector<16x9xf32>, vector<9x128xf32>, vector<16x128xf32> -> vector<16x128xf32>
    %213 = arith.addf %210, %212 : vector<16x128xf32>
    %c0_90 = arith.constant 0 : index
    %c0_91 = arith.constant 0 : index
    %214 = vector.load %arg28[%c0_90, %c0_91] : memref<18x16xf32, #tpu.memory_space<vmem>>, vector<18x16xf32>
    %cst_92 = arith.constant dense<0.000000e+00> : vector<18x128xf32>
    %215 = tpu.matmul %214, %213, %cst_92 {dimension_numbers = #tpu.dot_dimension_numbers<[1], [0], [0], [1], [0, 0, 1, 1], [], []>} : vector<18x16xf32>, vector<16x128xf32>, vector<18x128xf32> -> vector<18x128xf32>
    %cst_93 = arith.constant 0.000000e+00 : f32
    %216 = vector.broadcast %cst_93 : f32 to vector<16x128xf32>
    %217 = vector.extract_strided_slice %215 {offsets = [0, 0], sizes = [16, 128], strides = [1, 1]} : vector<18x128xf32> to vector<16x128xf32>
    %c0_94 = arith.constant 0 : index
    %c0_95 = arith.constant 0 : index
    %c0_96 = arith.constant 0 : index
    %c0_97 = arith.constant 0 : index
    %218 = vector.load %arg19[%c0_94, %c0_95, %c0_96, %c0_97] : memref<2x3x128x128xf32, #tpu.memory_space<vmem>>, vector<1x1x128x128xf32>
    %219 = vector.shape_cast %218 : vector<1x1x128x128xf32> to vector<128x128xf32>
    %cst_98 = arith.constant dense<0.000000e+00> : vector<16x128xf32>
    %220 = tpu.matmul %217, %219, %cst_98 {dimension_numbers = #tpu.dot_dimension_numbers<[1], [0], [0], [1], [0, 0, 1, 1], [], []>} : vector<16x128xf32>, vector<128x128xf32>, vector<16x128xf32> -> vector<16x128xf32>
    %221 = arith.addf %216, %220 : vector<16x128xf32>
    %222 = vector.extract_strided_slice %215 {offsets = [1, 0], sizes = [16, 128], strides = [1, 1]} : vector<18x128xf32> to vector<16x128xf32>
    %c0_99 = arith.constant 0 : index
    %c1_100 = arith.constant 1 : index
    %c0_101 = arith.constant 0 : index
    %c0_102 = arith.constant 0 : index
    %223 = vector.load %arg19[%c0_99, %c1_100, %c0_101, %c0_102] : memref<2x3x128x128xf32, #tpu.memory_space<vmem>>, vector<1x1x128x128xf32>
    %224 = vector.shape_cast %223 : vector<1x1x128x128xf32> to vector<128x128xf32>
    %cst_103 = arith.constant dense<0.000000e+00> : vector<16x128xf32>
    %225 = tpu.matmul %222, %224, %cst_103 {dimension_numbers = #tpu.dot_dimension_numbers<[1], [0], [0], [1], [0, 0, 1, 1], [], []>} : vector<16x128xf32>, vector<128x128xf32>, vector<16x128xf32> -> vector<16x128xf32>
    %226 = arith.addf %221, %225 : vector<16x128xf32>
    %227 = vector.extract_strided_slice %215 {offsets = [2, 0], sizes = [16, 128], strides = [1, 1]} : vector<18x128xf32> to vector<16x128xf32>
    %c0_104 = arith.constant 0 : index
    %c2_105 = arith.constant 2 : index
    %c0_106 = arith.constant 0 : index
    %c0_107 = arith.constant 0 : index
    %228 = vector.load %arg19[%c0_104, %c2_105, %c0_106, %c0_107] : memref<2x3x128x128xf32, #tpu.memory_space<vmem>>, vector<1x1x128x128xf32>
    %229 = vector.shape_cast %228 : vector<1x1x128x128xf32> to vector<128x128xf32>
    %cst_108 = arith.constant dense<0.000000e+00> : vector<16x128xf32>
    %230 = tpu.matmul %227, %229, %cst_108 {dimension_numbers = #tpu.dot_dimension_numbers<[1], [0], [0], [1], [0, 0, 1, 1], [], []>} : vector<16x128xf32>, vector<128x128xf32>, vector<16x128xf32> -> vector<16x128xf32>
    %231 = arith.addf %226, %230 : vector<16x128xf32>
    %c0_109 = arith.constant 0 : index
    %c0_110 = arith.constant 0 : index
    %c0_111 = arith.constant 0 : index
    %232 = vector.load %arg18[%c0_109, %c0_110, %c0_111] : memref<2x1x128xf32, #tpu.memory_space<vmem>>, vector<1x1x128xf32>
    %233 = vector.shape_cast %232 : vector<1x1x128xf32> to vector<1x128xf32>
    %234 = vector.broadcast %233 : vector<1x128xf32> to vector<16x128xf32>
    %235 = arith.addf %231, %234 : vector<16x128xf32>
    %236 = arith.addf %235, %58 : vector<16x128xf32>
    %c0_112 = arith.constant 0 : index
    %c0_113 = arith.constant 0 : index
    %237 = vector.load %arg31[%c0_112, %c0_113] : memref<128x80xf32, #tpu.memory_space<vmem>>, vector<128x80xf32>
    %cst_114 = arith.constant dense<0.000000e+00> : vector<16x80xf32>
    %238 = tpu.matmul %236, %237, %cst_114 {dimension_numbers = #tpu.dot_dimension_numbers<[1], [0], [0], [1], [0, 0, 1, 1], [], []>} : vector<16x128xf32>, vector<128x80xf32>, vector<16x80xf32> -> vector<16x80xf32>
    %c0_115 = arith.constant 0 : index
    %c0_116 = arith.constant 0 : index
    %239 = vector.load %arg30[%c0_115, %c0_116] : memref<128x80xf32, #tpu.memory_space<vmem>>, vector<128x80xf32>
    %cst_117 = arith.constant dense<0.000000e+00> : vector<16x80xf32>
    %240 = tpu.matmul %236, %239, %cst_117 {dimension_numbers = #tpu.dot_dimension_numbers<[1], [0], [0], [1], [0, 0, 1, 1], [], []>} : vector<16x128xf32>, vector<128x80xf32>, vector<16x80xf32> -> vector<16x80xf32>
    %c0_118 = arith.constant 0 : index
    %c0_119 = arith.constant 0 : index
    %c0_120 = arith.constant 0 : index
    %241 = vector.load %arg8[%c0_118, %c0_119, %c0_120] : memref<2x80x80xf32, #tpu.memory_space<vmem>>, vector<1x80x80xf32>
    %242 = vector.shape_cast %241 : vector<1x80x80xf32> to vector<80x80xf32>
    %c0_121 = arith.constant 0 : index
    %c0_122 = arith.constant 0 : index
    %c0_123 = arith.constant 0 : index
    %243 = vector.load %arg6[%c0_121, %c0_122, %c0_123] : memref<2x1x80xf32, #tpu.memory_space<vmem>>, vector<1x1x80xf32>
    %244 = vector.shape_cast %243 : vector<1x1x80xf32> to vector<1x80xf32>
    %c0_124 = arith.constant 0 : index
    %c0_125 = arith.constant 0 : index
    %c0_126 = arith.constant 0 : index
    %245 = vector.load %arg9[%c0_124, %c0_125, %c0_126] : memref<2x80x80xf32, #tpu.memory_space<vmem>>, vector<1x80x80xf32>
    %246 = vector.shape_cast %245 : vector<1x80x80xf32> to vector<80x80xf32>
    %c0_127 = arith.constant 0 : index
    %c0_128 = arith.constant 0 : index
    %c0_129 = arith.constant 0 : index
    %247 = vector.load %arg7[%c0_127, %c0_128, %c0_129] : memref<2x1x80xf32, #tpu.memory_space<vmem>>, vector<1x1x80xf32>
    %248 = vector.shape_cast %247 : vector<1x1x80xf32> to vector<1x80xf32>
    %cst_130 = arith.constant dense<0.000000e+00> : vector<16x80xf32>
    %249 = tpu.matmul %238, %242, %cst_130 {dimension_numbers = #tpu.dot_dimension_numbers<[1], [0], [0], [1], [0, 0, 1, 1], [], []>} : vector<16x80xf32>, vector<80x80xf32>, vector<16x80xf32> -> vector<16x80xf32>
    %250 = vector.broadcast %244 : vector<1x80xf32> to vector<16x80xf32>
    %251 = arith.addf %249, %250 : vector<16x80xf32>
    %cst_131 = arith.constant 0.000000e+00 : f32
    %252 = vector.broadcast %cst_131 : f32 to vector<16x80xf32>
    %253 = arith.cmpf ogt, %251, %252 : vector<16x80xf32>
    %cst_132 = arith.constant 1.000000e-01 : f32
    %254 = vector.broadcast %cst_132 : f32 to vector<16x80xf32>
    %255 = arith.mulf %254, %251 : vector<16x80xf32>
    %256 = arith.select %253, %251, %255 : vector<16x80xi1>, vector<16x80xf32>
    %cst_133 = arith.constant dense<0.000000e+00> : vector<16x80xf32>
    %257 = tpu.matmul %256, %246, %cst_133 {dimension_numbers = #tpu.dot_dimension_numbers<[1], [0], [0], [1], [0, 0, 1, 1], [], []>} : vector<16x80xf32>, vector<80x80xf32>, vector<16x80xf32> -> vector<16x80xf32>
    %258 = vector.broadcast %248 : vector<1x80xf32> to vector<16x80xf32>
    %259 = arith.addf %257, %258 : vector<16x80xf32>
    %c0_134 = arith.constant 0 : index
    %c0_135 = arith.constant 0 : index
    %c0_136 = arith.constant 0 : index
    %260 = vector.load %arg4[%c0_134, %c0_135, %c0_136] : memref<2x80x80xf32, #tpu.memory_space<vmem>>, vector<1x80x80xf32>
    %261 = vector.shape_cast %260 : vector<1x80x80xf32> to vector<80x80xf32>
    %c0_137 = arith.constant 0 : index
    %c0_138 = arith.constant 0 : index
    %c0_139 = arith.constant 0 : index
    %262 = vector.load %arg2[%c0_137, %c0_138, %c0_139] : memref<2x1x80xf32, #tpu.memory_space<vmem>>, vector<1x1x80xf32>
    %263 = vector.shape_cast %262 : vector<1x1x80xf32> to vector<1x80xf32>
    %c0_140 = arith.constant 0 : index
    %c0_141 = arith.constant 0 : index
    %c0_142 = arith.constant 0 : index
    %264 = vector.load %arg5[%c0_140, %c0_141, %c0_142] : memref<2x80x80xf32, #tpu.memory_space<vmem>>, vector<1x80x80xf32>
    %265 = vector.shape_cast %264 : vector<1x80x80xf32> to vector<80x80xf32>
    %c0_143 = arith.constant 0 : index
    %c0_144 = arith.constant 0 : index
    %c0_145 = arith.constant 0 : index
    %266 = vector.load %arg3[%c0_143, %c0_144, %c0_145] : memref<2x1x80xf32, #tpu.memory_space<vmem>>, vector<1x1x80xf32>
    %267 = vector.shape_cast %266 : vector<1x1x80xf32> to vector<1x80xf32>
    %cst_146 = arith.constant dense<0.000000e+00> : vector<16x80xf32>
    %268 = tpu.matmul %240, %261, %cst_146 {dimension_numbers = #tpu.dot_dimension_numbers<[1], [0], [0], [1], [0, 0, 1, 1], [], []>} : vector<16x80xf32>, vector<80x80xf32>, vector<16x80xf32> -> vector<16x80xf32>
    %269 = vector.broadcast %263 : vector<1x80xf32> to vector<16x80xf32>
    %270 = arith.addf %268, %269 : vector<16x80xf32>
    %cst_147 = arith.constant 0.000000e+00 : f32
    %271 = vector.broadcast %cst_147 : f32 to vector<16x80xf32>
    %272 = arith.cmpf ogt, %270, %271 : vector<16x80xf32>
    %cst_148 = arith.constant 1.000000e-01 : f32
    %273 = vector.broadcast %cst_148 : f32 to vector<16x80xf32>
    %274 = arith.mulf %273, %270 : vector<16x80xf32>
    %275 = arith.select %272, %270, %274 : vector<16x80xi1>, vector<16x80xf32>
    %cst_149 = arith.constant dense<0.000000e+00> : vector<16x80xf32>
    %276 = tpu.matmul %275, %265, %cst_149 {dimension_numbers = #tpu.dot_dimension_numbers<[1], [0], [0], [1], [0, 0, 1, 1], [], []>} : vector<16x80xf32>, vector<80x80xf32>, vector<16x80xf32> -> vector<16x80xf32>
    %277 = vector.broadcast %267 : vector<1x80xf32> to vector<16x80xf32>
    %278 = arith.addf %276, %277 : vector<16x80xf32>
    %c0_150 = arith.constant 0 : index
    %c0_151 = arith.constant 0 : index
    %279 = vector.load %arg23[%c0_150, %c0_151] : memref<80x128xf32, #tpu.memory_space<vmem>>, vector<80x128xf32>
    %cst_152 = arith.constant dense<0.000000e+00> : vector<16x128xf32>
    %280 = tpu.matmul %259, %279, %cst_152 {dimension_numbers = #tpu.dot_dimension_numbers<[1], [0], [0], [1], [0, 0, 1, 1], [], []>} : vector<16x80xf32>, vector<80x128xf32>, vector<16x128xf32> -> vector<16x128xf32>
    %c0_153 = arith.constant 0 : index
    %c0_154 = arith.constant 0 : index
    %281 = vector.load %arg22[%c0_153, %c0_154] : memref<80x128xf32, #tpu.memory_space<vmem>>, vector<80x128xf32>
    %cst_155 = arith.constant dense<0.000000e+00> : vector<16x128xf32>
    %282 = tpu.matmul %278, %281, %cst_155 {dimension_numbers = #tpu.dot_dimension_numbers<[1], [0], [0], [1], [0, 0, 1, 1], [], []>} : vector<16x80xf32>, vector<80x128xf32>, vector<16x128xf32> -> vector<16x128xf32>
    %283 = arith.addf %280, %282 : vector<16x128xf32>
    %c0_156 = arith.constant 0 : index
    %c0_157 = arith.constant 0 : index
    %c0_158 = arith.constant 0 : index
    %284 = vector.load %arg21[%c0_156, %c0_157, %c0_158] : memref<2x128x128xf32, #tpu.memory_space<vmem>>, vector<1x128x128xf32>
    %285 = vector.shape_cast %284 : vector<1x128x128xf32> to vector<128x128xf32>
    %cst_159 = arith.constant dense<0.000000e+00> : vector<16x128xf32>
    %286 = tpu.matmul %283, %285, %cst_159 {dimension_numbers = #tpu.dot_dimension_numbers<[1], [0], [0], [1], [0, 0, 1, 1], [], []>} : vector<16x128xf32>, vector<128x128xf32>, vector<16x128xf32> -> vector<16x128xf32>
    %c0_160 = arith.constant 0 : index
    %c0_161 = arith.constant 0 : index
    %c0_162 = arith.constant 0 : index
    %287 = vector.load %arg20[%c0_160, %c0_161, %c0_162] : memref<2x1x128xf32, #tpu.memory_space<vmem>>, vector<1x1x128xf32>
    %288 = vector.shape_cast %287 : vector<1x1x128xf32> to vector<1x128xf32>
    %289 = vector.broadcast %288 : vector<1x128xf32> to vector<16x128xf32>
    %290 = arith.addf %286, %289 : vector<16x128xf32>
    %291 = arith.addf %290, %236 : vector<16x128xf32>
    %c0_163 = arith.constant 0 : index
    %c0_164 = arith.constant 0 : index
    %292 = vector.load %arg33[%c0_163, %c0_164] : memref<9x16xf32, #tpu.memory_space<vmem>>, vector<9x16xf32>
    %cst_165 = arith.constant dense<0.000000e+00> : vector<9x128xf32>
    %293 = tpu.matmul %292, %291, %cst_165 {dimension_numbers = #tpu.dot_dimension_numbers<[1], [0], [0], [1], [0, 0, 1, 1], [], []>} : vector<9x16xf32>, vector<16x128xf32>, vector<9x128xf32> -> vector<9x128xf32>
    %c0_166 = arith.constant 0 : index
    %c0_167 = arith.constant 0 : index
    %294 = vector.load %arg32[%c0_166, %c0_167] : memref<9x16xf32, #tpu.memory_space<vmem>>, vector<9x16xf32>
    %cst_168 = arith.constant dense<0.000000e+00> : vector<9x128xf32>
    %295 = tpu.matmul %294, %291, %cst_168 {dimension_numbers = #tpu.dot_dimension_numbers<[1], [0], [0], [1], [0, 0, 1, 1], [], []>} : vector<9x16xf32>, vector<16x128xf32>, vector<9x128xf32> -> vector<9x128xf32>
    %c0_169 = arith.constant 0 : index
    %c0_170 = arith.constant 0 : index
    %296 = vector.load %arg26[%c0_169, %c0_170] : memref<11x9xf32, #tpu.memory_space<vmem>>, vector<11x9xf32>
    %c1_171 = arith.constant 1 : index
    %c0_172 = arith.constant 0 : index
    %c0_173 = arith.constant 0 : index
    %297 = vector.load %arg40[%c1_171, %c0_172, %c0_173] : memref<2x3x128xf32, #tpu.memory_space<vmem>>, vector<1x3x128xf32>
    %298 = vector.shape_cast %297 : vector<1x3x128xf32> to vector<3x128xf32>
    %c1_174 = arith.constant 1 : index
    %c0_175 = arith.constant 0 : index
    %c0_176 = arith.constant 0 : index
    %299 = vector.load %arg38[%c1_174, %c0_175, %c0_176] : memref<2x1x128xf32, #tpu.memory_space<vmem>>, vector<1x1x128xf32>
    %300 = vector.shape_cast %299 : vector<1x1x128xf32> to vector<1x128xf32>
    %cst_177 = arith.constant dense<0.000000e+00> : vector<11x128xf32>
    %301 = tpu.matmul %296, %293, %cst_177 {dimension_numbers = #tpu.dot_dimension_numbers<[1], [0], [0], [1], [0, 0, 1, 1], [], []>} : vector<11x9xf32>, vector<9x128xf32>, vector<11x128xf32> -> vector<11x128xf32>
    %cst_178 = arith.constant 0.000000e+00 : f32
    %302 = vector.broadcast %cst_178 : f32 to vector<9x128xf32>
    %303 = vector.extract_strided_slice %301 {offsets = [0, 0], sizes = [9, 128], strides = [1, 1]} : vector<11x128xf32> to vector<9x128xf32>
    %304 = vector.extract_strided_slice %298 {offsets = [0, 0], sizes = [1, 128], strides = [1, 1]} : vector<3x128xf32> to vector<1x128xf32>
    %305 = vector.broadcast %304 : vector<1x128xf32> to vector<9x128xf32>
    %306 = arith.mulf %303, %305 : vector<9x128xf32>
    %307 = arith.addf %302, %306 : vector<9x128xf32>
    %308 = vector.extract_strided_slice %301 {offsets = [1, 0], sizes = [9, 128], strides = [1, 1]} : vector<11x128xf32> to vector<9x128xf32>
    %309 = vector.extract_strided_slice %298 {offsets = [1, 0], sizes = [1, 128], strides = [1, 1]} : vector<3x128xf32> to vector<1x128xf32>
    %310 = vector.broadcast %309 : vector<1x128xf32> to vector<9x128xf32>
    %311 = arith.mulf %308, %310 : vector<9x128xf32>
    %312 = arith.addf %307, %311 : vector<9x128xf32>
    %313 = vector.extract_strided_slice %301 {offsets = [2, 0], sizes = [9, 128], strides = [1, 1]} : vector<11x128xf32> to vector<9x128xf32>
    %314 = vector.extract_strided_slice %298 {offsets = [2, 0], sizes = [1, 128], strides = [1, 1]} : vector<3x128xf32> to vector<1x128xf32>
    %315 = vector.broadcast %314 : vector<1x128xf32> to vector<9x128xf32>
    %316 = arith.mulf %313, %315 : vector<9x128xf32>
    %317 = arith.addf %312, %316 : vector<9x128xf32>
    %318 = vector.broadcast %300 : vector<1x128xf32> to vector<9x128xf32>
    %319 = arith.addf %317, %318 : vector<9x128xf32>
    %cst_179 = arith.constant 0.000000e+00 : f32
    %320 = vector.broadcast %cst_179 : f32 to vector<9x128xf32>
    %321 = arith.cmpf ogt, %319, %320 : vector<9x128xf32>
    %cst_180 = arith.constant 1.000000e-01 : f32
    %322 = vector.broadcast %cst_180 : f32 to vector<9x128xf32>
    %323 = arith.mulf %322, %319 : vector<9x128xf32>
    %324 = arith.select %321, %319, %323 : vector<9x128xi1>, vector<9x128xf32>
    %c0_181 = arith.constant 0 : index
    %c0_182 = arith.constant 0 : index
    %325 = vector.load %arg27[%c0_181, %c0_182] : memref<15x9xf32, #tpu.memory_space<vmem>>, vector<15x9xf32>
    %c1_183 = arith.constant 1 : index
    %c0_184 = arith.constant 0 : index
    %c0_185 = arith.constant 0 : index
    %326 = vector.load %arg41[%c1_183, %c0_184, %c0_185] : memref<2x7x128xf32, #tpu.memory_space<vmem>>, vector<1x7x128xf32>
    %327 = vector.shape_cast %326 : vector<1x7x128xf32> to vector<7x128xf32>
    %c1_186 = arith.constant 1 : index
    %c0_187 = arith.constant 0 : index
    %c0_188 = arith.constant 0 : index
    %328 = vector.load %arg39[%c1_186, %c0_187, %c0_188] : memref<2x1x128xf32, #tpu.memory_space<vmem>>, vector<1x1x128xf32>
    %329 = vector.shape_cast %328 : vector<1x1x128xf32> to vector<1x128xf32>
    %cst_189 = arith.constant dense<0.000000e+00> : vector<15x128xf32>
    %330 = tpu.matmul %325, %324, %cst_189 {dimension_numbers = #tpu.dot_dimension_numbers<[1], [0], [0], [1], [0, 0, 1, 1], [], []>} : vector<15x9xf32>, vector<9x128xf32>, vector<15x128xf32> -> vector<15x128xf32>
    %cst_190 = arith.constant 0.000000e+00 : f32
    %331 = vector.broadcast %cst_190 : f32 to vector<9x128xf32>
    %332 = vector.extract_strided_slice %330 {offsets = [0, 0], sizes = [9, 128], strides = [1, 1]} : vector<15x128xf32> to vector<9x128xf32>
    %333 = vector.extract_strided_slice %327 {offsets = [0, 0], sizes = [1, 128], strides = [1, 1]} : vector<7x128xf32> to vector<1x128xf32>
    %334 = vector.broadcast %333 : vector<1x128xf32> to vector<9x128xf32>
    %335 = arith.mulf %332, %334 : vector<9x128xf32>
    %336 = arith.addf %331, %335 : vector<9x128xf32>
    %337 = vector.extract_strided_slice %330 {offsets = [1, 0], sizes = [9, 128], strides = [1, 1]} : vector<15x128xf32> to vector<9x128xf32>
    %338 = vector.extract_strided_slice %327 {offsets = [1, 0], sizes = [1, 128], strides = [1, 1]} : vector<7x128xf32> to vector<1x128xf32>
    %339 = vector.broadcast %338 : vector<1x128xf32> to vector<9x128xf32>
    %340 = arith.mulf %337, %339 : vector<9x128xf32>
    %341 = arith.addf %336, %340 : vector<9x128xf32>
    %342 = vector.extract_strided_slice %330 {offsets = [2, 0], sizes = [9, 128], strides = [1, 1]} : vector<15x128xf32> to vector<9x128xf32>
    %343 = vector.extract_strided_slice %327 {offsets = [2, 0], sizes = [1, 128], strides = [1, 1]} : vector<7x128xf32> to vector<1x128xf32>
    %344 = vector.broadcast %343 : vector<1x128xf32> to vector<9x128xf32>
    %345 = arith.mulf %342, %344 : vector<9x128xf32>
    %346 = arith.addf %341, %345 : vector<9x128xf32>
    %347 = vector.extract_strided_slice %330 {offsets = [3, 0], sizes = [9, 128], strides = [1, 1]} : vector<15x128xf32> to vector<9x128xf32>
    %348 = vector.extract_strided_slice %327 {offsets = [3, 0], sizes = [1, 128], strides = [1, 1]} : vector<7x128xf32> to vector<1x128xf32>
    %349 = vector.broadcast %348 : vector<1x128xf32> to vector<9x128xf32>
    %350 = arith.mulf %347, %349 : vector<9x128xf32>
    %351 = arith.addf %346, %350 : vector<9x128xf32>
    %352 = vector.extract_strided_slice %330 {offsets = [4, 0], sizes = [9, 128], strides = [1, 1]} : vector<15x128xf32> to vector<9x128xf32>
    %353 = vector.extract_strided_slice %327 {offsets = [4, 0], sizes = [1, 128], strides = [1, 1]} : vector<7x128xf32> to vector<1x128xf32>
    %354 = vector.broadcast %353 : vector<1x128xf32> to vector<9x128xf32>
    %355 = arith.mulf %352, %354 : vector<9x128xf32>
    %356 = arith.addf %351, %355 : vector<9x128xf32>
    %357 = vector.extract_strided_slice %330 {offsets = [5, 0], sizes = [9, 128], strides = [1, 1]} : vector<15x128xf32> to vector<9x128xf32>
    %358 = vector.extract_strided_slice %327 {offsets = [5, 0], sizes = [1, 128], strides = [1, 1]} : vector<7x128xf32> to vector<1x128xf32>
    %359 = vector.broadcast %358 : vector<1x128xf32> to vector<9x128xf32>
    %360 = arith.mulf %357, %359 : vector<9x128xf32>
    %361 = arith.addf %356, %360 : vector<9x128xf32>
    %362 = vector.extract_strided_slice %330 {offsets = [6, 0], sizes = [9, 128], strides = [1, 1]} : vector<15x128xf32> to vector<9x128xf32>
    %363 = vector.extract_strided_slice %327 {offsets = [6, 0], sizes = [1, 128], strides = [1, 1]} : vector<7x128xf32> to vector<1x128xf32>
    %364 = vector.broadcast %363 : vector<1x128xf32> to vector<9x128xf32>
    %365 = arith.mulf %362, %364 : vector<9x128xf32>
    %366 = arith.addf %361, %365 : vector<9x128xf32>
    %367 = vector.broadcast %329 : vector<1x128xf32> to vector<9x128xf32>
    %368 = arith.addf %366, %367 : vector<9x128xf32>
    %c0_191 = arith.constant 0 : index
    %c0_192 = arith.constant 0 : index
    %369 = vector.load %arg26[%c0_191, %c0_192] : memref<11x9xf32, #tpu.memory_space<vmem>>, vector<11x9xf32>
    %c1_193 = arith.constant 1 : index
    %c0_194 = arith.constant 0 : index
    %c0_195 = arith.constant 0 : index
    %370 = vector.load %arg36[%c1_193, %c0_194, %c0_195] : memref<2x3x128xf32, #tpu.memory_space<vmem>>, vector<1x3x128xf32>
    %371 = vector.shape_cast %370 : vector<1x3x128xf32> to vector<3x128xf32>
    %c1_196 = arith.constant 1 : index
    %c0_197 = arith.constant 0 : index
    %c0_198 = arith.constant 0 : index
    %372 = vector.load %arg34[%c1_196, %c0_197, %c0_198] : memref<2x1x128xf32, #tpu.memory_space<vmem>>, vector<1x1x128xf32>
    %373 = vector.shape_cast %372 : vector<1x1x128xf32> to vector<1x128xf32>
    %cst_199 = arith.constant dense<0.000000e+00> : vector<11x128xf32>
    %374 = tpu.matmul %369, %295, %cst_199 {dimension_numbers = #tpu.dot_dimension_numbers<[1], [0], [0], [1], [0, 0, 1, 1], [], []>} : vector<11x9xf32>, vector<9x128xf32>, vector<11x128xf32> -> vector<11x128xf32>
    %cst_200 = arith.constant 0.000000e+00 : f32
    %375 = vector.broadcast %cst_200 : f32 to vector<9x128xf32>
    %376 = vector.extract_strided_slice %374 {offsets = [0, 0], sizes = [9, 128], strides = [1, 1]} : vector<11x128xf32> to vector<9x128xf32>
    %377 = vector.extract_strided_slice %371 {offsets = [0, 0], sizes = [1, 128], strides = [1, 1]} : vector<3x128xf32> to vector<1x128xf32>
    %378 = vector.broadcast %377 : vector<1x128xf32> to vector<9x128xf32>
    %379 = arith.mulf %376, %378 : vector<9x128xf32>
    %380 = arith.addf %375, %379 : vector<9x128xf32>
    %381 = vector.extract_strided_slice %374 {offsets = [1, 0], sizes = [9, 128], strides = [1, 1]} : vector<11x128xf32> to vector<9x128xf32>
    %382 = vector.extract_strided_slice %371 {offsets = [1, 0], sizes = [1, 128], strides = [1, 1]} : vector<3x128xf32> to vector<1x128xf32>
    %383 = vector.broadcast %382 : vector<1x128xf32> to vector<9x128xf32>
    %384 = arith.mulf %381, %383 : vector<9x128xf32>
    %385 = arith.addf %380, %384 : vector<9x128xf32>
    %386 = vector.extract_strided_slice %374 {offsets = [2, 0], sizes = [9, 128], strides = [1, 1]} : vector<11x128xf32> to vector<9x128xf32>
    %387 = vector.extract_strided_slice %371 {offsets = [2, 0], sizes = [1, 128], strides = [1, 1]} : vector<3x128xf32> to vector<1x128xf32>
    %388 = vector.broadcast %387 : vector<1x128xf32> to vector<9x128xf32>
    %389 = arith.mulf %386, %388 : vector<9x128xf32>
    %390 = arith.addf %385, %389 : vector<9x128xf32>
    %391 = vector.broadcast %373 : vector<1x128xf32> to vector<9x128xf32>
    %392 = arith.addf %390, %391 : vector<9x128xf32>
    %cst_201 = arith.constant 0.000000e+00 : f32
    %393 = vector.broadcast %cst_201 : f32 to vector<9x128xf32>
    %394 = arith.cmpf ogt, %392, %393 : vector<9x128xf32>
    %cst_202 = arith.constant 1.000000e-01 : f32
    %395 = vector.broadcast %cst_202 : f32 to vector<9x128xf32>
    %396 = arith.mulf %395, %392 : vector<9x128xf32>
    %397 = arith.select %394, %392, %396 : vector<9x128xi1>, vector<9x128xf32>
    %c0_203 = arith.constant 0 : index
    %c0_204 = arith.constant 0 : index
    %398 = vector.load %arg27[%c0_203, %c0_204] : memref<15x9xf32, #tpu.memory_space<vmem>>, vector<15x9xf32>
    %c1_205 = arith.constant 1 : index
    %c0_206 = arith.constant 0 : index
    %c0_207 = arith.constant 0 : index
    %399 = vector.load %arg37[%c1_205, %c0_206, %c0_207] : memref<2x7x128xf32, #tpu.memory_space<vmem>>, vector<1x7x128xf32>
    %400 = vector.shape_cast %399 : vector<1x7x128xf32> to vector<7x128xf32>
    %c1_208 = arith.constant 1 : index
    %c0_209 = arith.constant 0 : index
    %c0_210 = arith.constant 0 : index
    %401 = vector.load %arg35[%c1_208, %c0_209, %c0_210] : memref<2x1x128xf32, #tpu.memory_space<vmem>>, vector<1x1x128xf32>
    %402 = vector.shape_cast %401 : vector<1x1x128xf32> to vector<1x128xf32>
    %cst_211 = arith.constant dense<0.000000e+00> : vector<15x128xf32>
    %403 = tpu.matmul %398, %397, %cst_211 {dimension_numbers = #tpu.dot_dimension_numbers<[1], [0], [0], [1], [0, 0, 1, 1], [], []>} : vector<15x9xf32>, vector<9x128xf32>, vector<15x128xf32> -> vector<15x128xf32>
    %cst_212 = arith.constant 0.000000e+00 : f32
    %404 = vector.broadcast %cst_212 : f32 to vector<9x128xf32>
    %405 = vector.extract_strided_slice %403 {offsets = [0, 0], sizes = [9, 128], strides = [1, 1]} : vector<15x128xf32> to vector<9x128xf32>
    %406 = vector.extract_strided_slice %400 {offsets = [0, 0], sizes = [1, 128], strides = [1, 1]} : vector<7x128xf32> to vector<1x128xf32>
    %407 = vector.broadcast %406 : vector<1x128xf32> to vector<9x128xf32>
    %408 = arith.mulf %405, %407 : vector<9x128xf32>
    %409 = arith.addf %404, %408 : vector<9x128xf32>
    %410 = vector.extract_strided_slice %403 {offsets = [1, 0], sizes = [9, 128], strides = [1, 1]} : vector<15x128xf32> to vector<9x128xf32>
    %411 = vector.extract_strided_slice %400 {offsets = [1, 0], sizes = [1, 128], strides = [1, 1]} : vector<7x128xf32> to vector<1x128xf32>
    %412 = vector.broadcast %411 : vector<1x128xf32> to vector<9x128xf32>
    %413 = arith.mulf %410, %412 : vector<9x128xf32>
    %414 = arith.addf %409, %413 : vector<9x128xf32>
    %415 = vector.extract_strided_slice %403 {offsets = [2, 0], sizes = [9, 128], strides = [1, 1]} : vector<15x128xf32> to vector<9x128xf32>
    %416 = vector.extract_strided_slice %400 {offsets = [2, 0], sizes = [1, 128], strides = [1, 1]} : vector<7x128xf32> to vector<1x128xf32>
    %417 = vector.broadcast %416 : vector<1x128xf32> to vector<9x128xf32>
    %418 = arith.mulf %415, %417 : vector<9x128xf32>
    %419 = arith.addf %414, %418 : vector<9x128xf32>
    %420 = vector.extract_strided_slice %403 {offsets = [3, 0], sizes = [9, 128], strides = [1, 1]} : vector<15x128xf32> to vector<9x128xf32>
    %421 = vector.extract_strided_slice %400 {offsets = [3, 0], sizes = [1, 128], strides = [1, 1]} : vector<7x128xf32> to vector<1x128xf32>
    %422 = vector.broadcast %421 : vector<1x128xf32> to vector<9x128xf32>
    %423 = arith.mulf %420, %422 : vector<9x128xf32>
    %424 = arith.addf %419, %423 : vector<9x128xf32>
    %425 = vector.extract_strided_slice %403 {offsets = [4, 0], sizes = [9, 128], strides = [1, 1]} : vector<15x128xf32> to vector<9x128xf32>
    %426 = vector.extract_strided_slice %400 {offsets = [4, 0], sizes = [1, 128], strides = [1, 1]} : vector<7x128xf32> to vector<1x128xf32>
    %427 = vector.broadcast %426 : vector<1x128xf32> to vector<9x128xf32>
    %428 = arith.mulf %425, %427 : vector<9x128xf32>
    %429 = arith.addf %424, %428 : vector<9x128xf32>
    %430 = vector.extract_strided_slice %403 {offsets = [5, 0], sizes = [9, 128], strides = [1, 1]} : vector<15x128xf32> to vector<9x128xf32>
    %431 = vector.extract_strided_slice %400 {offsets = [5, 0], sizes = [1, 128], strides = [1, 1]} : vector<7x128xf32> to vector<1x128xf32>
    %432 = vector.broadcast %431 : vector<1x128xf32> to vector<9x128xf32>
    %433 = arith.mulf %430, %432 : vector<9x128xf32>
    %434 = arith.addf %429, %433 : vector<9x128xf32>
    %435 = vector.extract_strided_slice %403 {offsets = [6, 0], sizes = [9, 128], strides = [1, 1]} : vector<15x128xf32> to vector<9x128xf32>
    %436 = vector.extract_strided_slice %400 {offsets = [6, 0], sizes = [1, 128], strides = [1, 1]} : vector<7x128xf32> to vector<1x128xf32>
    %437 = vector.broadcast %436 : vector<1x128xf32> to vector<9x128xf32>
    %438 = arith.mulf %435, %437 : vector<9x128xf32>
    %439 = arith.addf %434, %438 : vector<9x128xf32>
    %440 = vector.broadcast %402 : vector<1x128xf32> to vector<9x128xf32>
    %441 = arith.addf %439, %440 : vector<9x128xf32>
    %c0_213 = arith.constant 0 : index
    %c0_214 = arith.constant 0 : index
    %442 = vector.load %arg25[%c0_213, %c0_214] : memref<16x9xf32, #tpu.memory_space<vmem>>, vector<16x9xf32>
    %cst_215 = arith.constant dense<0.000000e+00> : vector<16x128xf32>
    %443 = tpu.matmul %442, %368, %cst_215 {dimension_numbers = #tpu.dot_dimension_numbers<[1], [0], [0], [1], [0, 0, 1, 1], [], []>} : vector<16x9xf32>, vector<9x128xf32>, vector<16x128xf32> -> vector<16x128xf32>
    %c0_216 = arith.constant 0 : index
    %c0_217 = arith.constant 0 : index
    %444 = vector.load %arg24[%c0_216, %c0_217] : memref<16x9xf32, #tpu.memory_space<vmem>>, vector<16x9xf32>
    %cst_218 = arith.constant dense<0.000000e+00> : vector<16x128xf32>
    %445 = tpu.matmul %444, %441, %cst_218 {dimension_numbers = #tpu.dot_dimension_numbers<[1], [0], [0], [1], [0, 0, 1, 1], [], []>} : vector<16x9xf32>, vector<9x128xf32>, vector<16x128xf32> -> vector<16x128xf32>
    %446 = arith.addf %443, %445 : vector<16x128xf32>
    %c0_219 = arith.constant 0 : index
    %c0_220 = arith.constant 0 : index
    %447 = vector.load %arg28[%c0_219, %c0_220] : memref<18x16xf32, #tpu.memory_space<vmem>>, vector<18x16xf32>
    %cst_221 = arith.constant dense<0.000000e+00> : vector<18x128xf32>
    %448 = tpu.matmul %447, %446, %cst_221 {dimension_numbers = #tpu.dot_dimension_numbers<[1], [0], [0], [1], [0, 0, 1, 1], [], []>} : vector<18x16xf32>, vector<16x128xf32>, vector<18x128xf32> -> vector<18x128xf32>
    %cst_222 = arith.constant 0.000000e+00 : f32
    %449 = vector.broadcast %cst_222 : f32 to vector<16x128xf32>
    %450 = vector.extract_strided_slice %448 {offsets = [0, 0], sizes = [16, 128], strides = [1, 1]} : vector<18x128xf32> to vector<16x128xf32>
    %c1_223 = arith.constant 1 : index
    %c0_224 = arith.constant 0 : index
    %c0_225 = arith.constant 0 : index
    %c0_226 = arith.constant 0 : index
    %451 = vector.load %arg19[%c1_223, %c0_224, %c0_225, %c0_226] : memref<2x3x128x128xf32, #tpu.memory_space<vmem>>, vector<1x1x128x128xf32>
    %452 = vector.shape_cast %451 : vector<1x1x128x128xf32> to vector<128x128xf32>
    %cst_227 = arith.constant dense<0.000000e+00> : vector<16x128xf32>
    %453 = tpu.matmul %450, %452, %cst_227 {dimension_numbers = #tpu.dot_dimension_numbers<[1], [0], [0], [1], [0, 0, 1, 1], [], []>} : vector<16x128xf32>, vector<128x128xf32>, vector<16x128xf32> -> vector<16x128xf32>
    %454 = arith.addf %449, %453 : vector<16x128xf32>
    %455 = vector.extract_strided_slice %448 {offsets = [1, 0], sizes = [16, 128], strides = [1, 1]} : vector<18x128xf32> to vector<16x128xf32>
    %c1_228 = arith.constant 1 : index
    %c1_229 = arith.constant 1 : index
    %c0_230 = arith.constant 0 : index
    %c0_231 = arith.constant 0 : index
    %456 = vector.load %arg19[%c1_228, %c1_229, %c0_230, %c0_231] : memref<2x3x128x128xf32, #tpu.memory_space<vmem>>, vector<1x1x128x128xf32>
    %457 = vector.shape_cast %456 : vector<1x1x128x128xf32> to vector<128x128xf32>
    %cst_232 = arith.constant dense<0.000000e+00> : vector<16x128xf32>
    %458 = tpu.matmul %455, %457, %cst_232 {dimension_numbers = #tpu.dot_dimension_numbers<[1], [0], [0], [1], [0, 0, 1, 1], [], []>} : vector<16x128xf32>, vector<128x128xf32>, vector<16x128xf32> -> vector<16x128xf32>
    %459 = arith.addf %454, %458 : vector<16x128xf32>
    %460 = vector.extract_strided_slice %448 {offsets = [2, 0], sizes = [16, 128], strides = [1, 1]} : vector<18x128xf32> to vector<16x128xf32>
    %c1_233 = arith.constant 1 : index
    %c2_234 = arith.constant 2 : index
    %c0_235 = arith.constant 0 : index
    %c0_236 = arith.constant 0 : index
    %461 = vector.load %arg19[%c1_233, %c2_234, %c0_235, %c0_236] : memref<2x3x128x128xf32, #tpu.memory_space<vmem>>, vector<1x1x128x128xf32>
    %462 = vector.shape_cast %461 : vector<1x1x128x128xf32> to vector<128x128xf32>
    %cst_237 = arith.constant dense<0.000000e+00> : vector<16x128xf32>
    %463 = tpu.matmul %460, %462, %cst_237 {dimension_numbers = #tpu.dot_dimension_numbers<[1], [0], [0], [1], [0, 0, 1, 1], [], []>} : vector<16x128xf32>, vector<128x128xf32>, vector<16x128xf32> -> vector<16x128xf32>
    %464 = arith.addf %459, %463 : vector<16x128xf32>
    %c1_238 = arith.constant 1 : index
    %c0_239 = arith.constant 0 : index
    %c0_240 = arith.constant 0 : index
    %465 = vector.load %arg18[%c1_238, %c0_239, %c0_240] : memref<2x1x128xf32, #tpu.memory_space<vmem>>, vector<1x1x128xf32>
    %466 = vector.shape_cast %465 : vector<1x1x128xf32> to vector<1x128xf32>
    %467 = vector.broadcast %466 : vector<1x128xf32> to vector<16x128xf32>
    %468 = arith.addf %464, %467 : vector<16x128xf32>
    %469 = arith.addf %468, %291 : vector<16x128xf32>
    %c0_241 = arith.constant 0 : index
    %c0_242 = arith.constant 0 : index
    %470 = vector.load %arg31[%c0_241, %c0_242] : memref<128x80xf32, #tpu.memory_space<vmem>>, vector<128x80xf32>
    %cst_243 = arith.constant dense<0.000000e+00> : vector<16x80xf32>
    %471 = tpu.matmul %469, %470, %cst_243 {dimension_numbers = #tpu.dot_dimension_numbers<[1], [0], [0], [1], [0, 0, 1, 1], [], []>} : vector<16x128xf32>, vector<128x80xf32>, vector<16x80xf32> -> vector<16x80xf32>
    %c0_244 = arith.constant 0 : index
    %c0_245 = arith.constant 0 : index
    %472 = vector.load %arg30[%c0_244, %c0_245] : memref<128x80xf32, #tpu.memory_space<vmem>>, vector<128x80xf32>
    %cst_246 = arith.constant dense<0.000000e+00> : vector<16x80xf32>
    %473 = tpu.matmul %469, %472, %cst_246 {dimension_numbers = #tpu.dot_dimension_numbers<[1], [0], [0], [1], [0, 0, 1, 1], [], []>} : vector<16x128xf32>, vector<128x80xf32>, vector<16x80xf32> -> vector<16x80xf32>
    %c1_247 = arith.constant 1 : index
    %c0_248 = arith.constant 0 : index
    %c0_249 = arith.constant 0 : index
    %474 = vector.load %arg8[%c1_247, %c0_248, %c0_249] : memref<2x80x80xf32, #tpu.memory_space<vmem>>, vector<1x80x80xf32>
    %475 = vector.shape_cast %474 : vector<1x80x80xf32> to vector<80x80xf32>
    %c1_250 = arith.constant 1 : index
    %c0_251 = arith.constant 0 : index
    %c0_252 = arith.constant 0 : index
    %476 = vector.load %arg6[%c1_250, %c0_251, %c0_252] : memref<2x1x80xf32, #tpu.memory_space<vmem>>, vector<1x1x80xf32>
    %477 = vector.shape_cast %476 : vector<1x1x80xf32> to vector<1x80xf32>
    %c1_253 = arith.constant 1 : index
    %c0_254 = arith.constant 0 : index
    %c0_255 = arith.constant 0 : index
    %478 = vector.load %arg9[%c1_253, %c0_254, %c0_255] : memref<2x80x80xf32, #tpu.memory_space<vmem>>, vector<1x80x80xf32>
    %479 = vector.shape_cast %478 : vector<1x80x80xf32> to vector<80x80xf32>
    %c1_256 = arith.constant 1 : index
    %c0_257 = arith.constant 0 : index
    %c0_258 = arith.constant 0 : index
    %480 = vector.load %arg7[%c1_256, %c0_257, %c0_258] : memref<2x1x80xf32, #tpu.memory_space<vmem>>, vector<1x1x80xf32>
    %481 = vector.shape_cast %480 : vector<1x1x80xf32> to vector<1x80xf32>
    %cst_259 = arith.constant dense<0.000000e+00> : vector<16x80xf32>
    %482 = tpu.matmul %471, %475, %cst_259 {dimension_numbers = #tpu.dot_dimension_numbers<[1], [0], [0], [1], [0, 0, 1, 1], [], []>} : vector<16x80xf32>, vector<80x80xf32>, vector<16x80xf32> -> vector<16x80xf32>
    %483 = vector.broadcast %477 : vector<1x80xf32> to vector<16x80xf32>
    %484 = arith.addf %482, %483 : vector<16x80xf32>
    %cst_260 = arith.constant 0.000000e+00 : f32
    %485 = vector.broadcast %cst_260 : f32 to vector<16x80xf32>
    %486 = arith.cmpf ogt, %484, %485 : vector<16x80xf32>
    %cst_261 = arith.constant 1.000000e-01 : f32
    %487 = vector.broadcast %cst_261 : f32 to vector<16x80xf32>
    %488 = arith.mulf %487, %484 : vector<16x80xf32>
    %489 = arith.select %486, %484, %488 : vector<16x80xi1>, vector<16x80xf32>
    %cst_262 = arith.constant dense<0.000000e+00> : vector<16x80xf32>
    %490 = tpu.matmul %489, %479, %cst_262 {dimension_numbers = #tpu.dot_dimension_numbers<[1], [0], [0], [1], [0, 0, 1, 1], [], []>} : vector<16x80xf32>, vector<80x80xf32>, vector<16x80xf32> -> vector<16x80xf32>
    %491 = vector.broadcast %481 : vector<1x80xf32> to vector<16x80xf32>
    %492 = arith.addf %490, %491 : vector<16x80xf32>
    %c1_263 = arith.constant 1 : index
    %c0_264 = arith.constant 0 : index
    %c0_265 = arith.constant 0 : index
    %493 = vector.load %arg4[%c1_263, %c0_264, %c0_265] : memref<2x80x80xf32, #tpu.memory_space<vmem>>, vector<1x80x80xf32>
    %494 = vector.shape_cast %493 : vector<1x80x80xf32> to vector<80x80xf32>
    %c1_266 = arith.constant 1 : index
    %c0_267 = arith.constant 0 : index
    %c0_268 = arith.constant 0 : index
    %495 = vector.load %arg2[%c1_266, %c0_267, %c0_268] : memref<2x1x80xf32, #tpu.memory_space<vmem>>, vector<1x1x80xf32>
    %496 = vector.shape_cast %495 : vector<1x1x80xf32> to vector<1x80xf32>
    %c1_269 = arith.constant 1 : index
    %c0_270 = arith.constant 0 : index
    %c0_271 = arith.constant 0 : index
    %497 = vector.load %arg5[%c1_269, %c0_270, %c0_271] : memref<2x80x80xf32, #tpu.memory_space<vmem>>, vector<1x80x80xf32>
    %498 = vector.shape_cast %497 : vector<1x80x80xf32> to vector<80x80xf32>
    %c1_272 = arith.constant 1 : index
    %c0_273 = arith.constant 0 : index
    %c0_274 = arith.constant 0 : index
    %499 = vector.load %arg3[%c1_272, %c0_273, %c0_274] : memref<2x1x80xf32, #tpu.memory_space<vmem>>, vector<1x1x80xf32>
    %500 = vector.shape_cast %499 : vector<1x1x80xf32> to vector<1x80xf32>
    %cst_275 = arith.constant dense<0.000000e+00> : vector<16x80xf32>
    %501 = tpu.matmul %473, %494, %cst_275 {dimension_numbers = #tpu.dot_dimension_numbers<[1], [0], [0], [1], [0, 0, 1, 1], [], []>} : vector<16x80xf32>, vector<80x80xf32>, vector<16x80xf32> -> vector<16x80xf32>
    %502 = vector.broadcast %496 : vector<1x80xf32> to vector<16x80xf32>
    %503 = arith.addf %501, %502 : vector<16x80xf32>
    %cst_276 = arith.constant 0.000000e+00 : f32
    %504 = vector.broadcast %cst_276 : f32 to vector<16x80xf32>
    %505 = arith.cmpf ogt, %503, %504 : vector<16x80xf32>
    %cst_277 = arith.constant 1.000000e-01 : f32
    %506 = vector.broadcast %cst_277 : f32 to vector<16x80xf32>
    %507 = arith.mulf %506, %503 : vector<16x80xf32>
    %508 = arith.select %505, %503, %507 : vector<16x80xi1>, vector<16x80xf32>
    %cst_278 = arith.constant dense<0.000000e+00> : vector<16x80xf32>
    %509 = tpu.matmul %508, %498, %cst_278 {dimension_numbers = #tpu.dot_dimension_numbers<[1], [0], [0], [1], [0, 0, 1, 1], [], []>} : vector<16x80xf32>, vector<80x80xf32>, vector<16x80xf32> -> vector<16x80xf32>
    %510 = vector.broadcast %500 : vector<1x80xf32> to vector<16x80xf32>
    %511 = arith.addf %509, %510 : vector<16x80xf32>
    %c0_279 = arith.constant 0 : index
    %c0_280 = arith.constant 0 : index
    %512 = vector.load %arg23[%c0_279, %c0_280] : memref<80x128xf32, #tpu.memory_space<vmem>>, vector<80x128xf32>
    %cst_281 = arith.constant dense<0.000000e+00> : vector<16x128xf32>
    %513 = tpu.matmul %492, %512, %cst_281 {dimension_numbers = #tpu.dot_dimension_numbers<[1], [0], [0], [1], [0, 0, 1, 1], [], []>} : vector<16x80xf32>, vector<80x128xf32>, vector<16x128xf32> -> vector<16x128xf32>
    %c0_282 = arith.constant 0 : index
    %c0_283 = arith.constant 0 : index
    %514 = vector.load %arg22[%c0_282, %c0_283] : memref<80x128xf32, #tpu.memory_space<vmem>>, vector<80x128xf32>
    %cst_284 = arith.constant dense<0.000000e+00> : vector<16x128xf32>
    %515 = tpu.matmul %511, %514, %cst_284 {dimension_numbers = #tpu.dot_dimension_numbers<[1], [0], [0], [1], [0, 0, 1, 1], [], []>} : vector<16x80xf32>, vector<80x128xf32>, vector<16x128xf32> -> vector<16x128xf32>
    %516 = arith.addf %513, %515 : vector<16x128xf32>
    %c1_285 = arith.constant 1 : index
    %c0_286 = arith.constant 0 : index
    %c0_287 = arith.constant 0 : index
    %517 = vector.load %arg21[%c1_285, %c0_286, %c0_287] : memref<2x128x128xf32, #tpu.memory_space<vmem>>, vector<1x128x128xf32>
    %518 = vector.shape_cast %517 : vector<1x128x128xf32> to vector<128x128xf32>
    %cst_288 = arith.constant dense<0.000000e+00> : vector<16x128xf32>
    %519 = tpu.matmul %516, %518, %cst_288 {dimension_numbers = #tpu.dot_dimension_numbers<[1], [0], [0], [1], [0, 0, 1, 1], [], []>} : vector<16x128xf32>, vector<128x128xf32>, vector<16x128xf32> -> vector<16x128xf32>
    %c1_289 = arith.constant 1 : index
    %c0_290 = arith.constant 0 : index
    %c0_291 = arith.constant 0 : index
    %520 = vector.load %arg20[%c1_289, %c0_290, %c0_291] : memref<2x1x128xf32, #tpu.memory_space<vmem>>, vector<1x1x128xf32>
    %521 = vector.shape_cast %520 : vector<1x1x128xf32> to vector<1x128xf32>
    %522 = vector.broadcast %521 : vector<1x128xf32> to vector<16x128xf32>
    %523 = arith.addf %519, %522 : vector<16x128xf32>
    %524 = arith.addf %523, %469 : vector<16x128xf32>
    %c0_292 = arith.constant 0 : index
    %c0_293 = arith.constant 0 : index
    %525 = vector.load %arg16[%c0_292, %c0_293] : memref<128x1024xf32, #tpu.memory_space<vmem>>, vector<128x1024xf32>
    %cst_294 = arith.constant dense<0.000000e+00> : vector<16x1024xf32>
    %526 = tpu.matmul %524, %525, %cst_294 {dimension_numbers = #tpu.dot_dimension_numbers<[1], [0], [0], [1], [0, 0, 1, 1], [], []>} : vector<16x128xf32>, vector<128x1024xf32>, vector<16x1024xf32> -> vector<16x1024xf32>
    %c0_295 = arith.constant 0 : index
    %c0_296 = arith.constant 0 : index
    %527 = vector.load %arg14[%c0_295, %c0_296] : memref<1x1024xf32, #tpu.memory_space<vmem>>, vector<1x1024xf32>
    %528 = vector.broadcast %527 : vector<1x1024xf32> to vector<16x1024xf32>
    %529 = arith.addf %526, %528 : vector<16x1024xf32>
    %cst_297 = arith.constant 0.000000e+00 : f32
    %530 = vector.broadcast %cst_297 : f32 to vector<16x1024xf32>
    %531 = arith.maximumf %529, %530 : vector<16x1024xf32>
    %c0_298 = arith.constant 0 : index
    %c0_299 = arith.constant 0 : index
    %532 = vector.load %arg17[%c0_298, %c0_299] : memref<1024x8xf32, #tpu.memory_space<vmem>>, vector<1024x8xf32>
    %cst_300 = arith.constant dense<0.000000e+00> : vector<16x8xf32>
    %533 = tpu.matmul %531, %532, %cst_300 {dimension_numbers = #tpu.dot_dimension_numbers<[1], [0], [0], [1], [0, 0, 1, 1], [], []>} : vector<16x1024xf32>, vector<1024x8xf32>, vector<16x8xf32> -> vector<16x8xf32>
    %c0_301 = arith.constant 0 : index
    %c0_302 = arith.constant 0 : index
    %534 = vector.load %arg15[%c0_301, %c0_302] : memref<1x8xf32, #tpu.memory_space<vmem>>, vector<1x8xf32>
    %535 = vector.broadcast %534 : vector<1x8xf32> to vector<16x8xf32>
    %536 = arith.addf %533, %535 : vector<16x8xf32>
    %537 = vector.broadcast %15 : vector<1x8xf32> to vector<16x8xf32>
    %538 = arith.mulf %536, %537 : vector<16x8xf32>
    %539 = vector.broadcast %5 : vector<1x8xf32> to vector<16x8xf32>
    %540 = arith.addf %538, %539 : vector<16x8xf32>
    %cst_303 = arith.constant 0.000000e+00 : f32
    %541 = vector.broadcast %cst_303 : f32 to vector<16x4xf32>
    %542 = vector.extract_strided_slice %540 {offsets = [0, 0], sizes = [16, 1], strides = [1, 1]} : vector<16x8xf32> to vector<16x1xf32>
    %c0_304 = arith.constant 0 : index
    %c0_305 = arith.constant 0 : index
    %c0_306 = arith.constant 0 : index
    %543 = vector.load %arg13[%c0_304, %c0_305, %c0_306] : memref<8x16x4xf32, #tpu.memory_space<vmem>>, vector<1x16x4xf32>
    %544 = vector.shape_cast %543 : vector<1x16x4xf32> to vector<16x4xf32>
    %545 = vector.broadcast %542 : vector<16x1xf32> to vector<16x4xf32>
    %546 = arith.mulf %545, %544 : vector<16x4xf32>
    %547 = arith.addf %541, %546 : vector<16x4xf32>
    %548 = vector.extract_strided_slice %540 {offsets = [0, 1], sizes = [16, 1], strides = [1, 1]} : vector<16x8xf32> to vector<16x1xf32>
    %c1_307 = arith.constant 1 : index
    %c0_308 = arith.constant 0 : index
    %c0_309 = arith.constant 0 : index
    %549 = vector.load %arg13[%c1_307, %c0_308, %c0_309] : memref<8x16x4xf32, #tpu.memory_space<vmem>>, vector<1x16x4xf32>
    %550 = vector.shape_cast %549 : vector<1x16x4xf32> to vector<16x4xf32>
    %551 = vector.broadcast %548 : vector<16x1xf32> to vector<16x4xf32>
    %552 = arith.mulf %551, %550 : vector<16x4xf32>
    %553 = arith.addf %547, %552 : vector<16x4xf32>
    %554 = vector.extract_strided_slice %540 {offsets = [0, 2], sizes = [16, 1], strides = [1, 1]} : vector<16x8xf32> to vector<16x1xf32>
    %c2_310 = arith.constant 2 : index
    %c0_311 = arith.constant 0 : index
    %c0_312 = arith.constant 0 : index
    %555 = vector.load %arg13[%c2_310, %c0_311, %c0_312] : memref<8x16x4xf32, #tpu.memory_space<vmem>>, vector<1x16x4xf32>
    %556 = vector.shape_cast %555 : vector<1x16x4xf32> to vector<16x4xf32>
    %557 = vector.broadcast %554 : vector<16x1xf32> to vector<16x4xf32>
    %558 = arith.mulf %557, %556 : vector<16x4xf32>
    %559 = arith.addf %553, %558 : vector<16x4xf32>
    %560 = vector.extract_strided_slice %540 {offsets = [0, 3], sizes = [16, 1], strides = [1, 1]} : vector<16x8xf32> to vector<16x1xf32>
    %c3_313 = arith.constant 3 : index
    %c0_314 = arith.constant 0 : index
    %c0_315 = arith.constant 0 : index
    %561 = vector.load %arg13[%c3_313, %c0_314, %c0_315] : memref<8x16x4xf32, #tpu.memory_space<vmem>>, vector<1x16x4xf32>
    %562 = vector.shape_cast %561 : vector<1x16x4xf32> to vector<16x4xf32>
    %563 = vector.broadcast %560 : vector<16x1xf32> to vector<16x4xf32>
    %564 = arith.mulf %563, %562 : vector<16x4xf32>
    %565 = arith.addf %559, %564 : vector<16x4xf32>
    %566 = vector.extract_strided_slice %540 {offsets = [0, 4], sizes = [16, 1], strides = [1, 1]} : vector<16x8xf32> to vector<16x1xf32>
    %c4_316 = arith.constant 4 : index
    %c0_317 = arith.constant 0 : index
    %c0_318 = arith.constant 0 : index
    %567 = vector.load %arg13[%c4_316, %c0_317, %c0_318] : memref<8x16x4xf32, #tpu.memory_space<vmem>>, vector<1x16x4xf32>
    %568 = vector.shape_cast %567 : vector<1x16x4xf32> to vector<16x4xf32>
    %569 = vector.broadcast %566 : vector<16x1xf32> to vector<16x4xf32>
    %570 = arith.mulf %569, %568 : vector<16x4xf32>
    %571 = arith.addf %565, %570 : vector<16x4xf32>
    %572 = vector.extract_strided_slice %540 {offsets = [0, 5], sizes = [16, 1], strides = [1, 1]} : vector<16x8xf32> to vector<16x1xf32>
    %c5_319 = arith.constant 5 : index
    %c0_320 = arith.constant 0 : index
    %c0_321 = arith.constant 0 : index
    %573 = vector.load %arg13[%c5_319, %c0_320, %c0_321] : memref<8x16x4xf32, #tpu.memory_space<vmem>>, vector<1x16x4xf32>
    %574 = vector.shape_cast %573 : vector<1x16x4xf32> to vector<16x4xf32>
    %575 = vector.broadcast %572 : vector<16x1xf32> to vector<16x4xf32>
    %576 = arith.mulf %575, %574 : vector<16x4xf32>
    %577 = arith.addf %571, %576 : vector<16x4xf32>
    %578 = vector.extract_strided_slice %540 {offsets = [0, 6], sizes = [16, 1], strides = [1, 1]} : vector<16x8xf32> to vector<16x1xf32>
    %c6_322 = arith.constant 6 : index
    %c0_323 = arith.constant 0 : index
    %c0_324 = arith.constant 0 : index
    %579 = vector.load %arg13[%c6_322, %c0_323, %c0_324] : memref<8x16x4xf32, #tpu.memory_space<vmem>>, vector<1x16x4xf32>
    %580 = vector.shape_cast %579 : vector<1x16x4xf32> to vector<16x4xf32>
    %581 = vector.broadcast %578 : vector<16x1xf32> to vector<16x4xf32>
    %582 = arith.mulf %581, %580 : vector<16x4xf32>
    %583 = arith.addf %577, %582 : vector<16x4xf32>
    %584 = vector.extract_strided_slice %540 {offsets = [0, 7], sizes = [16, 1], strides = [1, 1]} : vector<16x8xf32> to vector<16x1xf32>
    %c7 = arith.constant 7 : index
    %c0_325 = arith.constant 0 : index
    %c0_326 = arith.constant 0 : index
    %585 = vector.load %arg13[%c7, %c0_325, %c0_326] : memref<8x16x4xf32, #tpu.memory_space<vmem>>, vector<1x16x4xf32>
    %586 = vector.shape_cast %585 : vector<1x16x4xf32> to vector<16x4xf32>
    %587 = vector.broadcast %584 : vector<16x1xf32> to vector<16x4xf32>
    %588 = arith.mulf %587, %586 : vector<16x4xf32>
    %589 = arith.addf %583, %588 : vector<16x4xf32>
    %cst_327 = arith.constant dense<0.000000e+00> : vector<4xf32>
    %590 = vector.multi_reduction <add>, %589, %cst_327 [0] : vector<16x4xf32> to vector<4xf32>
    %591 = vector.shape_cast %590 : vector<4xf32> to vector<1x4xf32>
    %c0_328 = arith.constant 0 : index
    %c0_329 = arith.constant 0 : index
    %592 = vector.load %arg12[%c0_328, %c0_329] : memref<1x4xf32, #tpu.memory_space<vmem>>, vector<1x4xf32>
    %593 = arith.addf %591, %592 : vector<1x4xf32>
    %c0_330 = arith.constant 0 : index
    %c0_331 = arith.constant 0 : index
    %c0_332 = arith.constant 0 : index
    %594 = vector.load %arg42[%c0_330, %c0_331, %c0_332] : memref<1x1x4xf32, #tpu.memory_space<vmem>>, vector<1x1x4xf32>
    %595 = vector.shape_cast %594 : vector<1x1x4xf32> to vector<1x4xf32>
    %596 = vector.shape_cast %593 : vector<1x4xf32> to vector<1x1x4xf32>
    tpu.vector_store %arg42[%c0_330, %c0_331, %c0_332], %596 {strides = array<i32>} : memref<1x1x4xf32, #tpu.memory_space<vmem>>, vector<1x1x4xf32>,
    return
  }
  func.func @transform_0(%arg0: i32) -> (i32, i32, i32) {
    %c0_i32 = arith.constant 0 : i32
    %c0_i32_0 = arith.constant 0 : i32
    %c0_i32_1 = arith.constant 0 : i32
    return %arg0, %c0_i32, %c0_i32_0 : i32, i32, i32
  }
  func.func @transform_1(%arg0: i32) -> (i32, i32, i32) {
    %c0_i32 = arith.constant 0 : i32
    %c0_i32_0 = arith.constant 0 : i32
    %c0_i32_1 = arith.constant 0 : i32
    %c0_i32_2 = arith.constant 0 : i32
    return %c0_i32, %c0_i32_0, %c0_i32_1 : i32, i32, i32
  }
  func.func @transform_2(%arg0: i32) -> (i32, i32, i32) {
    %c0_i32 = arith.constant 0 : i32
    %c0_i32_0 = arith.constant 0 : i32
    %c0_i32_1 = arith.constant 0 : i32
    %c0_i32_2 = arith.constant 0 : i32
    return %c0_i32, %c0_i32_0, %c0_i32_1 : i32, i32, i32
  }
  func.func @transform_3(%arg0: i32) -> (i32, i32, i32) {
    %c0_i32 = arith.constant 0 : i32
    %c0_i32_0 = arith.constant 0 : i32
    %c0_i32_1 = arith.constant 0 : i32
    %c0_i32_2 = arith.constant 0 : i32
    return %c0_i32, %c0_i32_0, %c0_i32_1 : i32, i32, i32
  }
  func.func @transform_4(%arg0: i32) -> (i32, i32, i32) {
    %c0_i32 = arith.constant 0 : i32
    %c0_i32_0 = arith.constant 0 : i32
    %c0_i32_1 = arith.constant 0 : i32
    %c0_i32_2 = arith.constant 0 : i32
    return %c0_i32, %c0_i32_0, %c0_i32_1 : i32, i32, i32
  }
  func.func @transform_5(%arg0: i32) -> (i32, i32, i32) {
    %c0_i32 = arith.constant 0 : i32
    %c0_i32_0 = arith.constant 0 : i32
    %c0_i32_1 = arith.constant 0 : i32
    %c0_i32_2 = arith.constant 0 : i32
    return %c0_i32, %c0_i32_0, %c0_i32_1 : i32, i32, i32
  }
  func.func @transform_6(%arg0: i32) -> (i32, i32, i32) {
    %c0_i32 = arith.constant 0 : i32
    %c0_i32_0 = arith.constant 0 : i32
    %c0_i32_1 = arith.constant 0 : i32
    %c0_i32_2 = arith.constant 0 : i32
    return %c0_i32, %c0_i32_0, %c0_i32_1 : i32, i32, i32
  }
  func.func @transform_7(%arg0: i32) -> (i32, i32, i32) {
    %c0_i32 = arith.constant 0 : i32
    %c0_i32_0 = arith.constant 0 : i32
    %c0_i32_1 = arith.constant 0 : i32
    %c0_i32_2 = arith.constant 0 : i32
    return %c0_i32, %c0_i32_0, %c0_i32_1 : i32, i32, i32
  }
  func.func @transform_8(%arg0: i32) -> (i32, i32, i32) {
    %c0_i32 = arith.constant 0 : i32
    %c0_i32_0 = arith.constant 0 : i32
    %c0_i32_1 = arith.constant 0 : i32
    %c0_i32_2 = arith.constant 0 : i32
    return %c0_i32, %c0_i32_0, %c0_i32_1 : i32, i32, i32
  }
  func.func @transform_9(%arg0: i32) -> (i32, i32) {
    %c0_i32 = arith.constant 0 : i32
    %c0_i32_0 = arith.constant 0 : i32
    %c0_i32_1 = arith.constant 0 : i32
    return %c0_i32, %c0_i32_0 : i32, i32
  }
  func.func @transform_10(%arg0: i32) -> (i32, i32, i32) {
    %c0_i32 = arith.constant 0 : i32
    %c0_i32_0 = arith.constant 0 : i32
    %c0_i32_1 = arith.constant 0 : i32
    %c0_i32_2 = arith.constant 0 : i32
    return %c0_i32, %c0_i32_0, %c0_i32_1 : i32, i32, i32
  }
  func.func @transform_11(%arg0: i32) -> (i32, i32) {
    %c0_i32 = arith.constant 0 : i32
    %c0_i32_0 = arith.constant 0 : i32
    %c0_i32_1 = arith.constant 0 : i32
    return %c0_i32, %c0_i32_0 : i32, i32
  }
  func.func @transform_12(%arg0: i32) -> (i32, i32, i32) {
    %c0_i32 = arith.constant 0 : i32
    %c0_i32_0 = arith.constant 0 : i32
    %c0_i32_1 = arith.constant 0 : i32
    %c0_i32_2 = arith.constant 0 : i32
    return %c0_i32, %c0_i32_0, %c0_i32_1 : i32, i32, i32
  }
  func.func @transform_13(%arg0: i32) -> (i32, i32) {
    %c0_i32 = arith.constant 0 : i32
    %c0_i32_0 = arith.constant 0 : i32
    %c0_i32_1 = arith.constant 0 : i32
    return %c0_i32, %c0_i32_0 : i32, i32
  }
  func.func @transform_14(%arg0: i32) -> (i32, i32) {
    %c0_i32 = arith.constant 0 : i32
    %c0_i32_0 = arith.constant 0 : i32
    %c0_i32_1 = arith.constant 0 : i32
    return %c0_i32, %c0_i32_0 : i32, i32
  }
  func.func @transform_15(%arg0: i32) -> (i32, i32) {
    %c0_i32 = arith.constant 0 : i32
    %c0_i32_0 = arith.constant 0 : i32
    %c0_i32_1 = arith.constant 0 : i32
    return %c0_i32, %c0_i32_0 : i32, i32
  }
  func.func @transform_16(%arg0: i32) -> (i32, i32) {
    %c0_i32 = arith.constant 0 : i32
    %c0_i32_0 = arith.constant 0 : i32
    %c0_i32_1 = arith.constant 0 : i32
    return %c0_i32, %c0_i32_0 : i32, i32
  }
  func.func @transform_17(%arg0: i32) -> (i32, i32, i32) {
    %c0_i32 = arith.constant 0 : i32
    %c0_i32_0 = arith.constant 0 : i32
    %c0_i32_1 = arith.constant 0 : i32
    %c0_i32_2 = arith.constant 0 : i32
    return %c0_i32, %c0_i32_0, %c0_i32_1 : i32, i32, i32
  }
  func.func @transform_18(%arg0: i32) -> (i32, i32, i32, i32) {
    %c0_i32 = arith.constant 0 : i32
    %c0_i32_0 = arith.constant 0 : i32
    %c0_i32_1 = arith.constant 0 : i32
    %c0_i32_2 = arith.constant 0 : i32
    %c0_i32_3 = arith.constant 0 : i32
    return %c0_i32, %c0_i32_0, %c0_i32_1, %c0_i32_2 : i32, i32, i32, i32
  }
  func.func @transform_19(%arg0: i32) -> (i32, i32, i32) {
    %c0_i32 = arith.constant 0 : i32
    %c0_i32_0 = arith.constant 0 : i32
    %c0_i32_1 = arith.constant 0 : i32
    %c0_i32_2 = arith.constant 0 : i32
    return %c0_i32, %c0_i32_0, %c0_i32_1 : i32, i32, i32
  }
  func.func @transform_20(%arg0: i32) -> (i32, i32, i32) {
    %c0_i32 = arith.constant 0 : i32
    %c0_i32_0 = arith.constant 0 : i32
    %c0_i32_1 = arith.constant 0 : i32
    %c0_i32_2 = arith.constant 0 : i32
    return %c0_i32, %c0_i32_0, %c0_i32_1 : i32, i32, i32
  }
  func.func @transform_21(%arg0: i32) -> (i32, i32) {
    %c0_i32 = arith.constant 0 : i32
    %c0_i32_0 = arith.constant 0 : i32
    %c0_i32_1 = arith.constant 0 : i32
    return %c0_i32, %c0_i32_0 : i32, i32
  }
  func.func @transform_22(%arg0: i32) -> (i32, i32) {
    %c0_i32 = arith.constant 0 : i32
    %c0_i32_0 = arith.constant 0 : i32
    %c0_i32_1 = arith.constant 0 : i32
    return %c0_i32, %c0_i32_0 : i32, i32
  }
  func.func @transform_23(%arg0: i32) -> (i32, i32) {
    %c0_i32 = arith.constant 0 : i32
    %c0_i32_0 = arith.constant 0 : i32
    %c0_i32_1 = arith.constant 0 : i32
    return %c0_i32, %c0_i32_0 : i32, i32
  }
  func.func @transform_24(%arg0: i32) -> (i32, i32) {
    %c0_i32 = arith.constant 0 : i32
    %c0_i32_0 = arith.constant 0 : i32
    %c0_i32_1 = arith.constant 0 : i32
    return %c0_i32, %c0_i32_0 : i32, i32
  }
  func.func @transform_25(%arg0: i32) -> (i32, i32) {
    %c0_i32 = arith.constant 0 : i32
    %c0_i32_0 = arith.constant 0 : i32
    %c0_i32_1 = arith.constant 0 : i32
    return %c0_i32, %c0_i32_0 : i32, i32
  }
  func.func @transform_26(%arg0: i32) -> (i32, i32) {
    %c0_i32 = arith.constant 0 : i32
    %c0_i32_0 = arith.constant 0 : i32
    %c0_i32_1 = arith.constant 0 : i32
    return %c0_i32, %c0_i32_0 : i32, i32
  }
  func.func @transform_27(%arg0: i32) -> (i32, i32) {
    %c0_i32 = arith.constant 0 : i32
    %c0_i32_0 = arith.constant 0 : i32
    %c0_i32_1 = arith.constant 0 : i32
    return %c0_i32, %c0_i32_0 : i32, i32
  }
  func.func @transform_28(%arg0: i32) -> (i32, i32) {
    %c0_i32 = arith.constant 0 : i32
    %c0_i32_0 = arith.constant 0 : i32
    %c0_i32_1 = arith.constant 0 : i32
    return %c0_i32, %c0_i32_0 : i32, i32
  }
  func.func @transform_29(%arg0: i32) -> (i32, i32) {
    %c0_i32 = arith.constant 0 : i32
    %c0_i32_0 = arith.constant 0 : i32
    %c0_i32_1 = arith.constant 0 : i32
    return %c0_i32, %c0_i32_0 : i32, i32
  }
  func.func @transform_30(%arg0: i32) -> (i32, i32) {
    %c0_i32 = arith.constant 0 : i32
    %c0_i32_0 = arith.constant 0 : i32
    %c0_i32_1 = arith.constant 0 : i32
    return %c0_i32, %c0_i32_0 : i32, i32
  }
  func.func @transform_31(%arg0: i32) -> (i32, i32) {
    %c0_i32 = arith.constant 0 : i32
    %c0_i32_0 = arith.constant 0 : i32
    %c0_i32_1 = arith.constant 0 : i32
    return %c0_i32, %c0_i32_0 : i32, i32
  }
  func.func @transform_32(%arg0: i32) -> (i32, i32) {
    %c0_i32 = arith.constant 0 : i32
    %c0_i32_0 = arith.constant 0 : i32
    %c0_i32_1 = arith.constant 0 : i32
    return %c0_i32, %c0_i32_0 : i32, i32
  }
  func.func @transform_33(%arg0: i32) -> (i32, i32, i32) {
    %c0_i32 = arith.constant 0 : i32
    %c0_i32_0 = arith.constant 0 : i32
    %c0_i32_1 = arith.constant 0 : i32
    %c0_i32_2 = arith.constant 0 : i32
    return %c0_i32, %c0_i32_0, %c0_i32_1 : i32, i32, i32
  }
  func.func @transform_34(%arg0: i32) -> (i32, i32, i32) {
    %c0_i32 = arith.constant 0 : i32
    %c0_i32_0 = arith.constant 0 : i32
    %c0_i32_1 = arith.constant 0 : i32
    %c0_i32_2 = arith.constant 0 : i32
    return %c0_i32, %c0_i32_0, %c0_i32_1 : i32, i32, i32
  }
  func.func @transform_35(%arg0: i32) -> (i32, i32, i32) {
    %c0_i32 = arith.constant 0 : i32
    %c0_i32_0 = arith.constant 0 : i32
    %c0_i32_1 = arith.constant 0 : i32
    %c0_i32_2 = arith.constant 0 : i32
    return %c0_i32, %c0_i32_0, %c0_i32_1 : i32, i32, i32
  }
  func.func @transform_36(%arg0: i32) -> (i32, i32, i32) {
    %c0_i32 = arith.constant 0 : i32
    %c0_i32_0 = arith.constant 0 : i32
    %c0_i32_1 = arith.constant 0 : i32
    %c0_i32_2 = arith.constant 0 : i32
    return %c0_i32, %c0_i32_0, %c0_i32_1 : i32, i32, i32
  }
  func.func @transform_37(%arg0: i32) -> (i32, i32, i32) {
    %c0_i32 = arith.constant 0 : i32
    %c0_i32_0 = arith.constant 0 : i32
    %c0_i32_1 = arith.constant 0 : i32
    %c0_i32_2 = arith.constant 0 : i32
    return %c0_i32, %c0_i32_0, %c0_i32_1 : i32, i32, i32
  }
  func.func @transform_38(%arg0: i32) -> (i32, i32, i32) {
    %c0_i32 = arith.constant 0 : i32
    %c0_i32_0 = arith.constant 0 : i32
    %c0_i32_1 = arith.constant 0 : i32
    %c0_i32_2 = arith.constant 0 : i32
    return %c0_i32, %c0_i32_0, %c0_i32_1 : i32, i32, i32
  }
  func.func @transform_39(%arg0: i32) -> (i32, i32, i32) {
    %c0_i32 = arith.constant 0 : i32
    %c0_i32_0 = arith.constant 0 : i32
    %c0_i32_1 = arith.constant 0 : i32
    %c0_i32_2 = arith.constant 0 : i32
    return %c0_i32, %c0_i32_0, %c0_i32_1 : i32, i32, i32
  }
  func.func @transform_40(%arg0: i32) -> (i32, i32, i32) {
    %c0_i32 = arith.constant 0 : i32
    %c0_i32_0 = arith.constant 0 : i32
    %c0_i32_1 = arith.constant 0 : i32
    %c0_i32_2 = arith.constant 0 : i32
    return %c0_i32, %c0_i32_0, %c0_i32_1 : i32, i32, i32
  }
  func.func @transform_41(%arg0: i32) -> (i32, i32, i32) {
    %c0_i32 = arith.constant 0 : i32
    %c0_i32_0 = arith.constant 0 : i32
    %c0_i32_1 = arith.constant 0 : i32
    return %arg0, %c0_i32, %c0_i32_0 : i32, i32, i32
  }
}

</mosaic_0001>

<llo_original>
// kernel: forward.1
$region0: #{forward.1}
  #allocation0 [shape = 'u32[]', space=smem, size = 0x4, offset = 0x4, fixed_abs, tag = 'smem constant byte address 0x4 - core index']
  #allocation1 [shape = 'u32[144,128]{1,0:T(1,128)}', space=vmem, size = 0x12000, scoped, tag = 'internal scratch']
  %s0 = inlined_call_operand.smem [shape: u32[42], index: -1, kind: input, shape index: {}]
  %s1 = sld [smem:[%s0]]
  %s2 = scalar_lea.smem %s0, 1
  %s3 = sld [smem:[%s2]]
  %s4 = scalar_lea.smem %s0, 2
  %s5 = sld [smem:[%s4]]
  %s6 = scalar_lea.smem %s0, 3
  %s7 = sld [smem:[%s6]]
  %s8 = scalar_lea.smem %s0, 4
  %s9 = sld [smem:[%s8]]
  %s10 = scalar_lea.smem %s0, 5
  %s11 = sld [smem:[%s10]]
  %s12 = scalar_lea.smem %s0, 6
  %s13 = sld [smem:[%s12]]
  %s14 = scalar_lea.smem %s0, 7
  %s15 = sld [smem:[%s14]]
  %s16 = scalar_lea.smem %s0, 8
  %s17 = sld [smem:[%s16]]
  %s18 = scalar_lea.smem %s0, 9
  %s19 = sld [smem:[%s18]]
  %s20 = scalar_lea.smem %s0, 10
  %s21 = sld [smem:[%s20]]
  %s22 = scalar_lea.smem %s0, 11
  %s23 = sld [smem:[%s22]]
  %s24 = scalar_lea.smem %s0, 12
  %s25 = sld [smem:[%s24]]
  %s26 = scalar_lea.smem %s0, 13
  %s27 = sld [smem:[%s26]]
  %s28 = scalar_lea.smem %s0, 14
  %s29 = sld [smem:[%s28]]
  %s30 = scalar_lea.smem %s0, 15
  %s31 = sld [smem:[%s30]]
  %s32 = scalar_lea.smem %s0, 16
  %s33 = sld [smem:[%s32]]
  %s34 = scalar_lea.smem %s0, 17
  %s35 = sld [smem:[%s34]]
  %s36 = scalar_lea.smem %s0, 18
  %s37 = sld [smem:[%s36]]
  %s38 = scalar_lea.smem %s0, 19
  %s39 = sld [smem:[%s38]]
  %s40 = scalar_lea.smem %s0, 20
  %s41 = sld [smem:[%s40]]
  %s42 = scalar_lea.smem %s0, 21
  %s43 = sld [smem:[%s42]]
  %s44 = scalar_lea.smem %s0, 22
  %s45 = sld [smem:[%s44]]
  %s46 = scalar_lea.smem %s0, 23
  %s47 = sld [smem:[%s46]]
  %s48 = scalar_lea.smem %s0, 24
  %s49 = sld [smem:[%s48]]
  %s50 = scalar_lea.smem %s0, 25
  %s51 = sld [smem:[%s50]]
  %s52 = scalar_lea.smem %s0, 26
  %s53 = sld [smem:[%s52]]
  %s54 = scalar_lea.smem %s0, 27
  %s55 = sld [smem:[%s54]]
  %s56 = scalar_lea.smem %s0, 28
  %s57 = sld [smem:[%s56]]
  %s58 = scalar_lea.smem %s0, 29
  %s59 = sld [smem:[%s58]]
  %s60 = scalar_lea.smem %s0, 30
  %s61 = sld [smem:[%s60]]
  %s62 = scalar_lea.smem %s0, 31
  %s63 = sld [smem:[%s62]]
  %s64 = scalar_lea.smem %s0, 32
  %s65 = sld [smem:[%s64]]
  %s66 = scalar_lea.smem %s0, 33
  %s67 = sld [smem:[%s66]]
  %s68 = scalar_lea.smem %s0, 34
  %s69 = sld [smem:[%s68]]
  %s70 = scalar_lea.smem %s0, 35
  %s71 = sld [smem:[%s70]]
  %s72 = scalar_lea.smem %s0, 36
  %s73 = sld [smem:[%s72]]
  %s74 = scalar_lea.smem %s0, 37
  %s75 = sld [smem:[%s74]]
  %s76 = scalar_lea.smem %s0, 38
  %s77 = sld [smem:[%s76]]
  %s78 = scalar_lea.smem %s0, 39
  %s79 = sld [smem:[%s78]]
  %s80 = scalar_lea.smem %s0, 40
  %s81 = sld [smem:[%s80]]
  %s82 = scalar_lea.smem %s0, 41
  %s83 = sld [smem:[%s82]]
  %s84 = sld [smem:[#allocation0]]
  $region301: #{forward.1} parent=0
    _
  %s86 = ssub.s32 1, %s84
  %s87 = scalar_select 0, %s86, %s84
  $region1: #{forward.1} parent=0
    #allocation2 [shape = 'u8[1024]{0}', space=vmem, size = 0x400, scoped, tag = 'input window, operand 1, single buffered']
    #allocation3 [shape = 's32[2]{0}', space=sflag, size = 0x8, scoped, tag = 'scoped memory for forward.1']
    #allocation4 [shape = 's32[2]{0}', space=sflag, size = 0x8, scoped, tag = 'scoped memory for forward.1']
    #allocation5 [shape = 'u8[1024]{0}', space=vmem, size = 0x400, scoped, tag = 'input window, operand 2, single buffered']
    #allocation6 [shape = 's32[1]{0}', space=sflag, size = 0x4, scoped, tag = 'scoped memory for forward.1']
    #allocation7 [shape = 'u8[81920]{0}', space=vmem, size = 0x14000, scoped, tag = 'input window, operand 3, single buffered']
    #allocation8 [shape = 'u8[81920]{0}', space=vmem, size = 0x14000, scoped, tag = 'input window, operand 4, single buffered']
    #allocation9 [shape = 's32[1]{0}', space=sflag, size = 0x4, scoped, tag = 'scoped memory for forward.1']
    #allocation10 [shape = 'u8[1024]{0}', space=vmem, size = 0x400, scoped, tag = 'input window, operand 5, single buffered']
    #allocation11 [shape = 'u8[1024]{0}', space=vmem, size = 0x400, scoped, tag = 'input window, operand 6, single buffered']
    #allocation12 [shape = 's32[1]{0}', space=sflag, size = 0x4, scoped, tag = 'scoped memory for forward.1']
    #allocation13 [shape = 'u8[81920]{0}', space=vmem, size = 0x14000, scoped, tag = 'input window, operand 7, single buffered']
    #allocation14 [shape = 'u8[81920]{0}', space=vmem, size = 0x14000, scoped, tag = 'input window, operand 8, single buffered']
    #allocation15 [shape = 's32[1]{0}', space=sflag, size = 0x4, scoped, tag = 'scoped memory for forward.1']
    #allocation16 [shape = 'u8[512]{0}', space=vmem, size = 0x400, scoped, tag = 'input window, operand 9, single buffered']
    #allocation17 [shape = 'u8[28672]{0}', space=vmem, size = 0x7000, scoped, tag = 'input window, operand 10, single buffered']
    #allocation18 [shape = 's32[1]{0}', space=sflag, size = 0x4, scoped, tag = 'scoped memory for forward.1']
    #allocation19 [shape = 'u8[512]{0}', space=vmem, size = 0x400, scoped, tag = 'input window, operand 11, single buffered']
    #allocation20 [shape = 'u8[4096]{0}', space=vmem, size = 0x1000, scoped, tag = 'input window, operand 13, single buffered']
    #allocation21 [shape = 's32[1]{0}', space=sflag, size = 0x4, scoped, tag = 'scoped memory for forward.1']
    #allocation22 [shape = 'u8[512]{0}', space=vmem, size = 0x400, scoped, tag = 'input window, operand 14, single buffered']
    #allocation23 [shape = 'u8[1024]{0}', space=vmem, size = 0x400, scoped, tag = 'input window, operand 17, single buffered']
    #allocation24 [shape = 's32[1]{0}', space=sflag, size = 0x4, scoped, tag = 'scoped memory for forward.1']
    #allocation25 [shape = 'u8[1024]{0}', space=vmem, size = 0x400, scoped, tag = 'input window, operand 19, single buffered']
    #allocation26 [shape = 'u8[131072]{0}', space=vmem, size = 0x20000, scoped, tag = 'input window, operand 20, single buffered']
    #allocation27 [shape = 's32[1]{0}', space=sflag, size = 0x4, scoped, tag = 'scoped memory for forward.1']
    #allocation28 [shape = 'u8[40960]{0}', space=vmem, size = 0xa000, scoped, tag = 'input window, operand 21, single buffered']
    #allocation29 [shape = 'u8[40960]{0}', space=vmem, size = 0xa000, scoped, tag = 'input window, operand 22, single buffered']
    #allocation30 [shape = 's32[1]{0}', space=sflag, size = 0x4, scoped, tag = 'scoped memory for forward.1']
    #allocation31 [shape = 'u8[8192]{0}', space=vmem, size = 0x2000, scoped, tag = 'input window, operand 23, single buffered']
    #allocation32 [shape = 'u8[8192]{0}', space=vmem, size = 0x2000, scoped, tag = 'input window, operand 24, single buffered']
    #allocation33 [shape = 's32[1]{0}', space=sflag, size = 0x4, scoped, tag = 'scoped memory for forward.1']
    #allocation34 [shape = 'u8[8192]{0}', space=vmem, size = 0x2000, scoped, tag = 'input window, operand 26, single buffered']
    #allocation35 [shape = 'u8[8192]{0}', space=vmem, size = 0x2000, scoped, tag = 'input window, operand 32, single buffered']
    #allocation36 [shape = 's32[1]{0}', space=sflag, size = 0x4, scoped, tag = 'scoped memory for forward.1']
    #allocation37 [shape = 'u8[1024]{0}', space=vmem, size = 0x400, scoped, tag = 'input window, operand 33, single buffered']
    #allocation38 [shape = 'u8[1024]{0}', space=vmem, size = 0x400, scoped, tag = 'input window, operand 34, single buffered']
    #allocation39 [shape = 's32[1]{0}', space=sflag, size = 0x4, scoped, tag = 'scoped memory for forward.1']
    #allocation40 [shape = 'u8[1024]{0}', space=vmem, size = 0x400, scoped, tag = 'input window, operand 37, single buffered']
    #allocation41 [shape = 'u8[1024]{0}', space=vmem, size = 0x400, scoped, tag = 'input window, operand 38, single buffered']
    #allocation42 [shape = 's32[1]{0}', space=sflag, size = 0x4, scoped, tag = 'scoped memory for forward.1']
    #allocation43 [shape = 'u8[1024]{0}', space=vmem, size = 0x400, scoped, tag = 'output window, operand 0']
    %88 = vsyncpa [#allocation3], 0
    %89 = vsyncpa [#allocation6], 0
    %90 = vsyncpa [#allocation9], 0
    %91 = vsyncpa [#allocation12], 0
    %92 = vsyncpa [#allocation15], 0
    %93 = vsyncpa [#allocation18], 0
    %94 = vsyncpa [#allocation21], 0
    %95 = vsyncpa [#allocation24], 0
    %96 = vsyncpa [#allocation27], 0
    %97 = vsyncpa [#allocation30], 0
    %98 = vsyncpa [#allocation33], 0
    %99 = vsyncpa [#allocation36], 0
    %100 = vsyncpa [#allocation39], 0
    %101 = vsyncpa [#allocation42], 0
    %102 = vsyncpa [#allocation4], 0
    %s103 = scalar_lea.sflag [#allocation4], 1
    %104 = vsyncpa %s103, 0
    loop: start=0, step=1, limit=4
    $region2: #{forward.1} parent=1 // loop_pre_header
      _
    $region3: #{forward.1} parent=1 // loop_header
      %s106 = sphi 0, %s110
      %p107 = scmp.ge.s32.totalorder %s106, 4
      %s116 = sphi 0, %s118
      %s119 = sphi 0, %s116
      %s120 = sphi 0, %s119
      %s136 = sphi 0, %s120
      %s140 = sphi 0, %s140
      %s142 = sphi 0, %s140
      %s143 = sphi 0, %s142
      %s157 = sphi 0, %s143
      %s161 = sphi 0, %s161
      %s163 = sphi 0, %s161
      %s164 = sphi 0, %s163
      %s178 = sphi 0, %s164
      %s182 = sphi 0, %s182
      %s184 = sphi 0, %s182
      %s185 = sphi 0, %s184
      %s199 = sphi 0, %s185
      %s203 = sphi 0, %s203
      %s205 = sphi 0, %s203
      %s206 = sphi 0, %s205
      %s220 = sphi 0, %s206
      %s224 = sphi 0, %s224
      %s226 = sphi 0, %s224
      %s227 = sphi 0, %s226
      %s241 = sphi 0, %s227
      %s245 = sphi 0, %s245
      %s247 = sphi 0, %s245
      %s248 = sphi 0, %s247
      %s262 = sphi 0, %s248
      %s266 = sphi 0, %s266
      %s268 = sphi 0, %s266
      %s269 = sphi 0, %s268
      %s283 = sphi 0, %s269
      %s287 = sphi 0, %s287
      %s289 = sphi 0, %s287
      %s290 = sphi 0, %s289
      %s304 = sphi 0, %s290
      %s308 = sphi 0, %s308
      %s310 = sphi 0, %s308
      %s311 = sphi 0, %s310
      %s325 = sphi 0, %s311
      %s329 = sphi 0, %s329
      %s331 = sphi 0, %s329
      %s332 = sphi 0, %s331
      %s346 = sphi 0, %s332
      %s350 = sphi 0, %s350
      %s352 = sphi 0, %s350
      %s353 = sphi 0, %s352
      %s367 = sphi 0, %s353
      %s371 = sphi 0, %s371
      %s373 = sphi 0, %s371
      %s374 = sphi 0, %s373
      %s388 = sphi 0, %s374
      %s392 = sphi 0, %s392
      %s394 = sphi 0, %s392
      %s395 = sphi 0, %s394
      %s409 = sphi 0, %s395
      %s413 = sphi 0, %s413
      %s415 = sphi 0, %s413
      %s416 = sphi 0, %s415
      %s430 = sphi 0, %s416
      %s434 = sphi 0, %s434
      %s436 = sphi 0, %s434
      %s437 = sphi 0, %s436
      %s451 = sphi 0, %s437
      %s455 = sphi 0, %s455
      %s457 = sphi 0, %s455
      %s458 = sphi 0, %s457
      %s472 = sphi 0, %s458
      %s476 = sphi 0, %s476
      %s478 = sphi 0, %s476
      %s479 = sphi 0, %s478
      %s493 = sphi 0, %s479
      %s497 = sphi 0, %s497
      %s499 = sphi 0, %s497
      %s500 = sphi 0, %s499
      %s514 = sphi 0, %s500
      %s518 = sphi 0, %s518
      %s520 = sphi 0, %s518
      %s521 = sphi 0, %s520
      %s535 = sphi 0, %s521
      %s539 = sphi 0, %s539
      %s541 = sphi 0, %s539
      %s542 = sphi 0, %s541
      %s556 = sphi 0, %s542
      %s560 = sphi 0, %s560
      %s562 = sphi 0, %s560
      %s563 = sphi 0, %s562
      %s577 = sphi 0, %s563
      %s581 = sphi 0, %s581
      %s583 = sphi 0, %s581
      %s584 = sphi 0, %s583
      %s598 = sphi 0, %s584
      %s602 = sphi 0, %s602
      %s604 = sphi 0, %s602
      %s605 = sphi 0, %s604
      %s619 = sphi 0, %s605
      %s623 = sphi 0, %s623
      %s625 = sphi 0, %s623
      %s626 = sphi 0, %s625
      %s640 = sphi 0, %s626
      %s644 = sphi 0, %s644
      %s646 = sphi 0, %s644
      %s647 = sphi 0, %s646
      %s661 = sphi 0, %s647
      %s665 = sphi 0, %s665
      %s667 = sphi 0, %s665
      %s668 = sphi 0, %s667
      %s682 = sphi 0, %s668
      %s686 = sphi 0, %s686
      %s688 = sphi 0, %s686
      %s689 = sphi 0, %s688
      %s703 = sphi 0, %s689
      %s707 = sphi 0, %s707
      %s709 = sphi 0, %s707
      %s710 = sphi 0, %s709
      %s724 = sphi 0, %s710
      %s728 = sphi 0, %s728
      %s730 = sphi 0, %s728
      %s731 = sphi 0, %s730
      %s745 = sphi 0, %s731
      %s749 = sphi 0, %s749
      %s751 = sphi 0, %s749
      %s752 = sphi 0, %s751
      %s766 = sphi 0, %s752
      %s770 = sphi 0, %s770
      %s772 = sphi 0, %s770
      %s773 = sphi 0, %s772
      %s787 = sphi 0, %s773
      %s791 = sphi 0, %s791
      %s793 = sphi 0, %s791
      %s794 = sphi 0, %s793
      %s808 = sphi 0, %s794
      %s812 = sphi 0, %s812
      %s814 = sphi 0, %s812
      %s815 = sphi 0, %s814
      %s829 = sphi 0, %s815
      %s833 = sphi 0, %s833
      %s835 = sphi 0, %s833
      %s836 = sphi 0, %s835
      %s850 = sphi 0, %s836
      %s854 = sphi 0, %s854
      %s856 = sphi 0, %s854
      %s857 = sphi 0, %s856
      %s871 = sphi 0, %s857
      %s875 = sphi 0, %s875
      %s877 = sphi 0, %s875
      %s878 = sphi 0, %s877
      %s892 = sphi 0, %s878
      %s896 = sphi 0, %s896
      %s898 = sphi 0, %s896
      %s899 = sphi 0, %s898
      %s913 = sphi 0, %s899
      %s917 = sphi 0, %s917
      %s919 = sphi 0, %s917
      %s920 = sphi 0, %s919
      %s934 = sphi 0, %s920
      %s938 = sphi 0, %s938
      %s940 = sphi 0, %s938
      %s941 = sphi 0, %s940
      %s955 = sphi 0, %s941
      %s959 = sphi 0, %s959
      %s961 = sphi 0, %s959
      %s962 = sphi 0, %s961
      %s976 = sphi 0, %s962
      %s982 = sphi 0, %s984
      %s985 = sphi 0, %s982
      %s986 = sphi 0, %s985
      %s1002 = sphi 0, %s986
    $region4: #{forward.1} parent=1 // loop_header_branch
      %109 = sbr.rel (%p107) target = $region8
    $region5: #{forward.1} parent=1 // loop_body
      %s111 = ssub.s32 %s106, 1
      %s112 = ssub.s32 %s106, 2
      %s113 = sadd.s32 %s106, 1
      %s114 = ssub.s32 %s106, %s113
      %p115 = scmp.eq.s32.totalorder %s114, 0
      %s117 = sadd.s32 %s116, 1
      %s118 = scalar_select %p115, %s116, %s117
      %p121 = pneg %p115
      %p122 = scmp.eq.s32.totalorder %s106, 1
      %p123 = por %p121, %p122
      %p124 = scmp.ne.s32.totalorder %s116, %s119
      %p125 = scmp.eq.s32.totalorder %s106, 0
      %p126 = por %p124, %p125
      %p127 = scmp.ne.s32.totalorder %s116, %s119
      %p128 = scmp.eq.s32.totalorder %s111, 1
      %p129 = por %p127, %p128
      %p130 = scmp.ne.s32.totalorder %s119, %s120
      %p131 = scmp.eq.s32.totalorder %s111, 0
      %p132 = por %p130, %p131
      %p133 = scmp.ne.s32.totalorder %s119, %s120
      %p134 = scmp.eq.s32.totalorder %s112, 1
      %p135 = por %p133, %p134
      %p137 = scmp.ne.s32.totalorder %s120, %s136
      %p138 = scmp.eq.s32.totalorder %s112, 0
      %p139 = por %p137, %p138
      %s141 = sadd.s32 %s140, 1
      %p144 = scmp.eq.s32.totalorder %s106, 1
      %p145 = scmp.ne.s32.totalorder %s140, %s142
      %p146 = scmp.eq.s32.totalorder %s106, 0
      %p147 = por %p145, %p146
      %p148 = scmp.ne.s32.totalorder %s140, %s142
      %p149 = scmp.eq.s32.totalorder %s111, 1
      %p150 = por %p148, %p149
      %p151 = scmp.ne.s32.totalorder %s142, %s143
      %p152 = scmp.eq.s32.totalorder %s111, 0
      %p153 = por %p151, %p152
      %p154 = scmp.ne.s32.totalorder %s142, %s143
      %p155 = scmp.eq.s32.totalorder %s112, 1
      %p156 = por %p154, %p155
      %p158 = scmp.ne.s32.totalorder %s143, %s157
      %p159 = scmp.eq.s32.totalorder %s112, 0
      %p160 = por %p158, %p159
      %s162 = sadd.s32 %s161, 1
      %p165 = scmp.eq.s32.totalorder %s106, 1
      %p166 = scmp.ne.s32.totalorder %s161, %s163
      %p167 = scmp.eq.s32.totalorder %s106, 0
      %p168 = por %p166, %p167
      %p169 = scmp.ne.s32.totalorder %s161, %s163
      %p170 = scmp.eq.s32.totalorder %s111, 1
      %p171 = por %p169, %p170
      %p172 = scmp.ne.s32.totalorder %s163, %s164
      %p173 = scmp.eq.s32.totalorder %s111, 0
      %p174 = por %p172, %p173
      %p175 = scmp.ne.s32.totalorder %s163, %s164
      %p176 = scmp.eq.s32.totalorder %s112, 1
      %p177 = por %p175, %p176
      %p179 = scmp.ne.s32.totalorder %s164, %s178
      %p180 = scmp.eq.s32.totalorder %s112, 0
      %p181 = por %p179, %p180
      %s183 = sadd.s32 %s182, 1
      %p186 = scmp.eq.s32.totalorder %s106, 1
      %p187 = scmp.ne.s32.totalorder %s182, %s184
      %p188 = scmp.eq.s32.totalorder %s106, 0
      %p189 = por %p187, %p188
      %p190 = scmp.ne.s32.totalorder %s182, %s184
      %p191 = scmp.eq.s32.totalorder %s111, 1
      %p192 = por %p190, %p191
      %p193 = scmp.ne.s32.totalorder %s184, %s185
      %p194 = scmp.eq.s32.totalorder %s111, 0
      %p195 = por %p193, %p194
      %p196 = scmp.ne.s32.totalorder %s184, %s185
      %p197 = scmp.eq.s32.totalorder %s112, 1
      %p198 = por %p196, %p197
      %p200 = scmp.ne.s32.totalorder %s185, %s199
      %p201 = scmp.eq.s32.totalorder %s112, 0
      %p202 = por %p200, %p201
      %s204 = sadd.s32 %s203, 1
      %p207 = scmp.eq.s32.totalorder %s106, 1
      %p208 = scmp.ne.s32.totalorder %s203, %s205
      %p209 = scmp.eq.s32.totalorder %s106, 0
      %p210 = por %p208, %p209
      %p211 = scmp.ne.s32.totalorder %s203, %s205
      %p212 = scmp.eq.s32.totalorder %s111, 1
      %p213 = por %p211, %p212
      %p214 = scmp.ne.s32.totalorder %s205, %s206
      %p215 = scmp.eq.s32.totalorder %s111, 0
      %p216 = por %p214, %p215
      %p217 = scmp.ne.s32.totalorder %s205, %s206
      %p218 = scmp.eq.s32.totalorder %s112, 1
      %p219 = por %p217, %p218
      %p221 = scmp.ne.s32.totalorder %s206, %s220
      %p222 = scmp.eq.s32.totalorder %s112, 0
      %p223 = por %p221, %p222
      %s225 = sadd.s32 %s224, 1
      %p228 = scmp.eq.s32.totalorder %s106, 1
      %p229 = scmp.ne.s32.totalorder %s224, %s226
      %p230 = scmp.eq.s32.totalorder %s106, 0
      %p231 = por %p229, %p230
      %p232 = scmp.ne.s32.totalorder %s224, %s226
      %p233 = scmp.eq.s32.totalorder %s111, 1
      %p234 = por %p232, %p233
      %p235 = scmp.ne.s32.totalorder %s226, %s227
      %p236 = scmp.eq.s32.totalorder %s111, 0
      %p237 = por %p235, %p236
      %p238 = scmp.ne.s32.totalorder %s226, %s227
      %p239 = scmp.eq.s32.totalorder %s112, 1
      %p240 = por %p238, %p239
      %p242 = scmp.ne.s32.totalorder %s227, %s241
      %p243 = scmp.eq.s32.totalorder %s112, 0
      %p244 = por %p242, %p243
      %s246 = sadd.s32 %s245, 1
      %p249 = scmp.eq.s32.totalorder %s106, 1
      %p250 = scmp.ne.s32.totalorder %s245, %s247
      %p251 = scmp.eq.s32.totalorder %s106, 0
      %p252 = por %p250, %p251
      %p253 = scmp.ne.s32.totalorder %s245, %s247
      %p254 = scmp.eq.s32.totalorder %s111, 1
      %p255 = por %p253, %p254
      %p256 = scmp.ne.s32.totalorder %s247, %s248
      %p257 = scmp.eq.s32.totalorder %s111, 0
      %p258 = por %p256, %p257
      %p259 = scmp.ne.s32.totalorder %s247, %s248
      %p260 = scmp.eq.s32.totalorder %s112, 1
      %p261 = por %p259, %p260
      %p263 = scmp.ne.s32.totalorder %s248, %s262
      %p264 = scmp.eq.s32.totalorder %s112, 0
      %p265 = por %p263, %p264
      %s267 = sadd.s32 %s266, 1
      %p270 = scmp.eq.s32.totalorder %s106, 1
      %p271 = scmp.ne.s32.totalorder %s266, %s268
      %p272 = scmp.eq.s32.totalorder %s106, 0
      %p273 = por %p271, %p272
      %p274 = scmp.ne.s32.totalorder %s266, %s268
      %p275 = scmp.eq.s32.totalorder %s111, 1
      %p276 = por %p274, %p275
      %p277 = scmp.ne.s32.totalorder %s268, %s269
      %p278 = scmp.eq.s32.totalorder %s111, 0
      %p279 = por %p277, %p278
      %p280 = scmp.ne.s32.totalorder %s268, %s269
      %p281 = scmp.eq.s32.totalorder %s112, 1
      %p282 = por %p280, %p281
      %p284 = scmp.ne.s32.totalorder %s269, %s283
      %p285 = scmp.eq.s32.totalorder %s112, 0
      %p286 = por %p284, %p285
      %s288 = sadd.s32 %s287, 1
      %p291 = scmp.eq.s32.totalorder %s106, 1
      %p292 = scmp.ne.s32.totalorder %s287, %s289
      %p293 = scmp.eq.s32.totalorder %s106, 0
      %p294 = por %p292, %p293
      %p295 = scmp.ne.s32.totalorder %s287, %s289
      %p296 = scmp.eq.s32.totalorder %s111, 1
      %p297 = por %p295, %p296
      %p298 = scmp.ne.s32.totalorder %s289, %s290
      %p299 = scmp.eq.s32.totalorder %s111, 0
      %p300 = por %p298, %p299
      %p301 = scmp.ne.s32.totalorder %s289, %s290
      %p302 = scmp.eq.s32.totalorder %s112, 1
      %p303 = por %p301, %p302
      %p305 = scmp.ne.s32.totalorder %s290, %s304
      %p306 = scmp.eq.s32.totalorder %s112, 0
      %p307 = por %p305, %p306
      %s309 = sadd.s32 %s308, 1
      %p312 = scmp.eq.s32.totalorder %s106, 1
      %p313 = scmp.ne.s32.totalorder %s308, %s310
      %p314 = scmp.eq.s32.totalorder %s106, 0
      %p315 = por %p313, %p314
      %p316 = scmp.ne.s32.totalorder %s308, %s310
      %p317 = scmp.eq.s32.totalorder %s111, 1
      %p318 = por %p316, %p317
      %p319 = scmp.ne.s32.totalorder %s310, %s311
      %p320 = scmp.eq.s32.totalorder %s111, 0
      %p321 = por %p319, %p320
      %p322 = scmp.ne.s32.totalorder %s310, %s311
      %p323 = scmp.eq.s32.totalorder %s112, 1
      %p324 = por %p322, %p323
      %p326 = scmp.ne.s32.totalorder %s311, %s325
      %p327 = scmp.eq.s32.totalorder %s112, 0
      %p328 = por %p326, %p327
      %s330 = sadd.s32 %s329, 1
      %p333 = scmp.eq.s32.totalorder %s106, 1
      %p334 = scmp.ne.s32.totalorder %s329, %s331
      %p335 = scmp.eq.s32.totalorder %s106, 0
      %p336 = por %p334, %p335
      %p337 = scmp.ne.s32.totalorder %s329, %s331
      %p338 = scmp.eq.s32.totalorder %s111, 1
      %p339 = por %p337, %p338
      %p340 = scmp.ne.s32.totalorder %s331, %s332
      %p341 = scmp.eq.s32.totalorder %s111, 0
      %p342 = por %p340, %p341
      %p343 = scmp.ne.s32.totalorder %s331, %s332
      %p344 = scmp.eq.s32.totalorder %s112, 1
      %p345 = por %p343, %p344
      %p347 = scmp.ne.s32.totalorder %s332, %s346
      %p348 = scmp.eq.s32.totalorder %s112, 0
      %p349 = por %p347, %p348
      %s351 = sadd.s32 %s350, 1
      %p354 = scmp.eq.s32.totalorder %s106, 1
      %p355 = scmp.ne.s32.totalorder %s350, %s352
      %p356 = scmp.eq.s32.totalorder %s106, 0
      %p357 = por %p355, %p356
      %p358 = scmp.ne.s32.totalorder %s350, %s352
      %p359 = scmp.eq.s32.totalorder %s111, 1
      %p360 = por %p358, %p359
      %p361 = scmp.ne.s32.totalorder %s352, %s353
      %p362 = scmp.eq.s32.totalorder %s111, 0
      %p363 = por %p361, %p362
      %p364 = scmp.ne.s32.totalorder %s352, %s353
      %p365 = scmp.eq.s32.totalorder %s112, 1
      %p366 = por %p364, %p365
      %p368 = scmp.ne.s32.totalorder %s353, %s367
      %p369 = scmp.eq.s32.totalorder %s112, 0
      %p370 = por %p368, %p369
      %s372 = sadd.s32 %s371, 1
      %p375 = scmp.eq.s32.totalorder %s106, 1
      %p376 = scmp.ne.s32.totalorder %s371, %s373
      %p377 = scmp.eq.s32.totalorder %s106, 0
      %p378 = por %p376, %p377
      %p379 = scmp.ne.s32.totalorder %s371, %s373
      %p380 = scmp.eq.s32.totalorder %s111, 1
      %p381 = por %p379, %p380
      %p382 = scmp.ne.s32.totalorder %s373, %s374
      %p383 = scmp.eq.s32.totalorder %s111, 0
      %p384 = por %p382, %p383
      %p385 = scmp.ne.s32.totalorder %s373, %s374
      %p386 = scmp.eq.s32.totalorder %s112, 1
      %p387 = por %p385, %p386
      %p389 = scmp.ne.s32.totalorder %s374, %s388
      %p390 = scmp.eq.s32.totalorder %s112, 0
      %p391 = por %p389, %p390
      %s393 = sadd.s32 %s392, 1
      %p396 = scmp.eq.s32.totalorder %s106, 1
      %p397 = scmp.ne.s32.totalorder %s392, %s394
      %p398 = scmp.eq.s32.totalorder %s106, 0
      %p399 = por %p397, %p398
      %p400 = scmp.ne.s32.totalorder %s392, %s394
      %p401 = scmp.eq.s32.totalorder %s111, 1
      %p402 = por %p400, %p401
      %p403 = scmp.ne.s32.totalorder %s394, %s395
      %p404 = scmp.eq.s32.totalorder %s111, 0
      %p405 = por %p403, %p404
      %p406 = scmp.ne.s32.totalorder %s394, %s395
      %p407 = scmp.eq.s32.totalorder %s112, 1
      %p408 = por %p406, %p407
      %p410 = scmp.ne.s32.totalorder %s395, %s409
      %p411 = scmp.eq.s32.totalorder %s112, 0
      %p412 = por %p410, %p411
      %s414 = sadd.s32 %s413, 1
      %p417 = scmp.eq.s32.totalorder %s106, 1
      %p418 = scmp.ne.s32.totalorder %s413, %s415
      %p419 = scmp.eq.s32.totalorder %s106, 0
      %p420 = por %p418, %p419
      %p421 = scmp.ne.s32.totalorder %s413, %s415
      %p422 = scmp.eq.s32.totalorder %s111, 1
      %p423 = por %p421, %p422
      %p424 = scmp.ne.s32.totalorder %s415, %s416
      %p425 = scmp.eq.s32.totalorder %s111, 0
      %p426 = por %p424, %p425
      %p427 = scmp.ne.s32.totalorder %s415, %s416
      %p428 = scmp.eq.s32.totalorder %s112, 1
      %p429 = por %p427, %p428
      %p431 = scmp.ne.s32.totalorder %s416, %s430
      %p432 = scmp.eq.s32.totalorder %s112, 0
      %p433 = por %p431, %p432
      %s435 = sadd.s32 %s434, 1
      %p438 = scmp.eq.s32.totalorder %s106, 1
      %p439 = scmp.ne.s32.totalorder %s434, %s436
      %p440 = scmp.eq.s32.totalorder %s106, 0
      %p441 = por %p439, %p440
      %p442 = scmp.ne.s32.totalorder %s434, %s436
      %p443 = scmp.eq.s32.totalorder %s111, 1
      %p444 = por %p442, %p443
      %p445 = scmp.ne.s32.totalorder %s436, %s437
      %p446 = scmp.eq.s32.totalorder %s111, 0
      %p447 = por %p445, %p446
      %p448 = scmp.ne.s32.totalorder %s436, %s437
      %p449 = scmp.eq.s32.totalorder %s112, 1
      %p450 = por %p448, %p449
      %p452 = scmp.ne.s32.totalorder %s437, %s451
      %p453 = scmp.eq.s32.totalorder %s112, 0
      %p454 = por %p452, %p453
      %s456 = sadd.s32 %s455, 1
      %p459 = scmp.eq.s32.totalorder %s106, 1
      %p460 = scmp.ne.s32.totalorder %s455, %s457
      %p461 = scmp.eq.s32.totalorder %s106, 0
      %p462 = por %p460, %p461
      %p463 = scmp.ne.s32.totalorder %s455, %s457
      %p464 = scmp.eq.s32.totalorder %s111, 1
      %p465 = por %p463, %p464
      %p466 = scmp.ne.s32.totalorder %s457, %s458
      %p467 = scmp.eq.s32.totalorder %s111, 0
      %p468 = por %p466, %p467
      %p469 = scmp.ne.s32.totalorder %s457, %s458
      %p470 = scmp.eq.s32.totalorder %s112, 1
      %p471 = por %p469, %p470
      %p473 = scmp.ne.s32.totalorder %s458, %s472
      %p474 = scmp.eq.s32.totalorder %s112, 0
      %p475 = por %p473, %p474
      %s477 = sadd.s32 %s476, 1
      %p480 = scmp.eq.s32.totalorder %s106, 1
      %p481 = scmp.ne.s32.totalorder %s476, %s478
      %p482 = scmp.eq.s32.totalorder %s106, 0
      %p483 = por %p481, %p482
      %p484 = scmp.ne.s32.totalorder %s476, %s478
      %p485 = scmp.eq.s32.totalorder %s111, 1
      %p486 = por %p484, %p485
      %p487 = scmp.ne.s32.totalorder %s478, %s479
      %p488 = scmp.eq.s32.totalorder %s111, 0
      %p489 = por %p487, %p488
      %p490 = scmp.ne.s32.totalorder %s478, %s479
      %p491 = scmp.eq.s32.totalorder %s112, 1
      %p492 = por %p490, %p491
      %p494 = scmp.ne.s32.totalorder %s479, %s493
      %p495 = scmp.eq.s32.totalorder %s112, 0
      %p496 = por %p494, %p495
      %s498 = sadd.s32 %s497, 1
      %p501 = scmp.eq.s32.totalorder %s106, 1
      %p502 = scmp.ne.s32.totalorder %s497, %s499
      %p503 = scmp.eq.s32.totalorder %s106, 0
      %p504 = por %p502, %p503
      %p505 = scmp.ne.s32.totalorder %s497, %s499
      %p506 = scmp.eq.s32.totalorder %s111, 1
      %p507 = por %p505, %p506
      %p508 = scmp.ne.s32.totalorder %s499, %s500
      %p509 = scmp.eq.s32.totalorder %s111, 0
      %p510 = por %p508, %p509
      %p511 = scmp.ne.s32.totalorder %s499, %s500
      %p512 = scmp.eq.s32.totalorder %s112, 1
      %p513 = por %p511, %p512
      %p515 = scmp.ne.s32.totalorder %s500, %s514
      %p516 = scmp.eq.s32.totalorder %s112, 0
      %p517 = por %p515, %p516
      %s519 = sadd.s32 %s518, 1
      %p522 = scmp.eq.s32.totalorder %s106, 1
      %p523 = scmp.ne.s32.totalorder %s518, %s520
      %p524 = scmp.eq.s32.totalorder %s106, 0
      %p525 = por %p523, %p524
      %p526 = scmp.ne.s32.totalorder %s518, %s520
      %p527 = scmp.eq.s32.totalorder %s111, 1
      %p528 = por %p526, %p527
      %p529 = scmp.ne.s32.totalorder %s520, %s521
      %p530 = scmp.eq.s32.totalorder %s111, 0
      %p531 = por %p529, %p530
      %p532 = scmp.ne.s32.totalorder %s520, %s521
      %p533 = scmp.eq.s32.totalorder %s112, 1
      %p534 = por %p532, %p533
      %p536 = scmp.ne.s32.totalorder %s521, %s535
      %p537 = scmp.eq.s32.totalorder %s112, 0
      %p538 = por %p536, %p537
      %s540 = sadd.s32 %s539, 1
      %p543 = scmp.eq.s32.totalorder %s106, 1
      %p544 = scmp.ne.s32.totalorder %s539, %s541
      %p545 = scmp.eq.s32.totalorder %s106, 0
      %p546 = por %p544, %p545
      %p547 = scmp.ne.s32.totalorder %s539, %s541
      %p548 = scmp.eq.s32.totalorder %s111, 1
      %p549 = por %p547, %p548
      %p550 = scmp.ne.s32.totalorder %s541, %s542
      %p551 = scmp.eq.s32.totalorder %s111, 0
      %p552 = por %p550, %p551
      %p553 = scmp.ne.s32.totalorder %s541, %s542
      %p554 = scmp.eq.s32.totalorder %s112, 1
      %p555 = por %p553, %p554
      %p557 = scmp.ne.s32.totalorder %s542, %s556
      %p558 = scmp.eq.s32.totalorder %s112, 0
      %p559 = por %p557, %p558
      %s561 = sadd.s32 %s560, 1
      %p564 = scmp.eq.s32.totalorder %s106, 1
      %p565 = scmp.ne.s32.totalorder %s560, %s562
      %p566 = scmp.eq.s32.totalorder %s106, 0
      %p567 = por %p565, %p566
      %p568 = scmp.ne.s32.totalorder %s560, %s562
      %p569 = scmp.eq.s32.totalorder %s111, 1
      %p570 = por %p568, %p569
      %p571 = scmp.ne.s32.totalorder %s562, %s563
      %p572 = scmp.eq.s32.totalorder %s111, 0
      %p573 = por %p571, %p572
      %p574 = scmp.ne.s32.totalorder %s562, %s563
      %p575 = scmp.eq.s32.totalorder %s112, 1
      %p576 = por %p574, %p575
      %p578 = scmp.ne.s32.totalorder %s563, %s577
      %p579 = scmp.eq.s32.totalorder %s112, 0
      %p580 = por %p578, %p579
      %s582 = sadd.s32 %s581, 1
      %p585 = scmp.eq.s32.totalorder %s106, 1
      %p586 = scmp.ne.s32.totalorder %s581, %s583
      %p587 = scmp.eq.s32.totalorder %s106, 0
      %p588 = por %p586, %p587
      %p589 = scmp.ne.s32.totalorder %s581, %s583
      %p590 = scmp.eq.s32.totalorder %s111, 1
      %p591 = por %p589, %p590
      %p592 = scmp.ne.s32.totalorder %s583, %s584
      %p593 = scmp.eq.s32.totalorder %s111, 0
      %p594 = por %p592, %p593
      %p595 = scmp.ne.s32.totalorder %s583, %s584
      %p596 = scmp.eq.s32.totalorder %s112, 1
      %p597 = por %p595, %p596
      %p599 = scmp.ne.s32.totalorder %s584, %s598
      %p600 = scmp.eq.s32.totalorder %s112, 0
      %p601 = por %p599, %p600
      %s603 = sadd.s32 %s602, 1
      %p606 = scmp.eq.s32.totalorder %s106, 1
      %p607 = scmp.ne.s32.totalorder %s602, %s604
      %p608 = scmp.eq.s32.totalorder %s106, 0
      %p609 = por %p607, %p608
      %p610 = scmp.ne.s32.totalorder %s602, %s604
      %p611 = scmp.eq.s32.totalorder %s111, 1
      %p612 = por %p610, %p611
      %p613 = scmp.ne.s32.totalorder %s604, %s605
      %p614 = scmp.eq.s32.totalorder %s111, 0
      %p615 = por %p613, %p614
      %p616 = scmp.ne.s32.totalorder %s604, %s605
      %p617 = scmp.eq.s32.totalorder %s112, 1
      %p618 = por %p616, %p617
      %p620 = scmp.ne.s32.totalorder %s605, %s619
      %p621 = scmp.eq.s32.totalorder %s112, 0
      %p622 = por %p620, %p621
      %s624 = sadd.s32 %s623, 1
      %p627 = scmp.eq.s32.totalorder %s106, 1
      %p628 = scmp.ne.s32.totalorder %s623, %s625
      %p629 = scmp.eq.s32.totalorder %s106, 0
      %p630 = por %p628, %p629
      %p631 = scmp.ne.s32.totalorder %s623, %s625
      %p632 = scmp.eq.s32.totalorder %s111, 1
      %p633 = por %p631, %p632
      %p634 = scmp.ne.s32.totalorder %s625, %s626
      %p635 = scmp.eq.s32.totalorder %s111, 0
      %p636 = por %p634, %p635
      %p637 = scmp.ne.s32.totalorder %s625, %s626
      %p638 = scmp.eq.s32.totalorder %s112, 1
      %p639 = por %p637, %p638
      %p641 = scmp.ne.s32.totalorder %s626, %s640
      %p642 = scmp.eq.s32.totalorder %s112, 0
      %p643 = por %p641, %p642
      %s645 = sadd.s32 %s644, 1
      %p648 = scmp.eq.s32.totalorder %s106, 1
      %p649 = scmp.ne.s32.totalorder %s644, %s646
      %p650 = scmp.eq.s32.totalorder %s106, 0
      %p651 = por %p649, %p650
      %p652 = scmp.ne.s32.totalorder %s644, %s646
      %p653 = scmp.eq.s32.totalorder %s111, 1
      %p654 = por %p652, %p653
      %p655 = scmp.ne.s32.totalorder %s646, %s647
      %p656 = scmp.eq.s32.totalorder %s111, 0
      %p657 = por %p655, %p656
      %p658 = scmp.ne.s32.totalorder %s646, %s647
      %p659 = scmp.eq.s32.totalorder %s112, 1
      %p660 = por %p658, %p659
      %p662 = scmp.ne.s32.totalorder %s647, %s661
      %p663 = scmp.eq.s32.totalorder %s112, 0
      %p664 = por %p662, %p663
      %s666 = sadd.s32 %s665, 1
      %p669 = scmp.eq.s32.totalorder %s106, 1
      %p670 = scmp.ne.s32.totalorder %s665, %s667
      %p671 = scmp.eq.s32.totalorder %s106, 0
      %p672 = por %p670, %p671
      %p673 = scmp.ne.s32.totalorder %s665, %s667
      %p674 = scmp.eq.s32.totalorder %s111, 1
      %p675 = por %p673, %p674
      %p676 = scmp.ne.s32.totalorder %s667, %s668
      %p677 = scmp.eq.s32.totalorder %s111, 0
      %p678 = por %p676, %p677
      %p679 = scmp.ne.s32.totalorder %s667, %s668
      %p680 = scmp.eq.s32.totalorder %s112, 1
      %p681 = por %p679, %p680
      %p683 = scmp.ne.s32.totalorder %s668, %s682
      %p684 = scmp.eq.s32.totalorder %s112, 0
      %p685 = por %p683, %p684
      %s687 = sadd.s32 %s686, 1
      %p690 = scmp.eq.s32.totalorder %s106, 1
      %p691 = scmp.ne.s32.totalorder %s686, %s688
      %p692 = scmp.eq.s32.totalorder %s106, 0
      %p693 = por %p691, %p692
      %p694 = scmp.ne.s32.totalorder %s686, %s688
      %p695 = scmp.eq.s32.totalorder %s111, 1
      %p696 = por %p694, %p695
      %p697 = scmp.ne.s32.totalorder %s688, %s689
      %p698 = scmp.eq.s32.totalorder %s111, 0
      %p699 = por %p697, %p698
      %p700 = scmp.ne.s32.totalorder %s688, %s689
      %p701 = scmp.eq.s32.totalorder %s112, 1
      %p702 = por %p700, %p701
      %p704 = scmp.ne.s32.totalorder %s689, %s703
      %p705 = scmp.eq.s32.totalorder %s112, 0
      %p706 = por %p704, %p705
      %s708 = sadd.s32 %s707, 1
      %p711 = scmp.eq.s32.totalorder %s106, 1
      %p712 = scmp.ne.s32.totalorder %s707, %s709
      %p713 = scmp.eq.s32.totalorder %s106, 0
      %p714 = por %p712, %p713
      %p715 = scmp.ne.s32.totalorder %s707, %s709
      %p716 = scmp.eq.s32.totalorder %s111, 1
      %p717 = por %p715, %p716
      %p718 = scmp.ne.s32.totalorder %s709, %s710
      %p719 = scmp.eq.s32.totalorder %s111, 0
      %p720 = por %p718, %p719
      %p721 = scmp.ne.s32.totalorder %s709, %s710
      %p722 = scmp.eq.s32.totalorder %s112, 1
      %p723 = por %p721, %p722
      %p725 = scmp.ne.s32.totalorder %s710, %s724
      %p726 = scmp.eq.s32.totalorder %s112, 0
      %p727 = por %p725, %p726
      %s729 = sadd.s32 %s728, 1
      %p732 = scmp.eq.s32.totalorder %s106, 1
      %p733 = scmp.ne.s32.totalorder %s728, %s730
      %p734 = scmp.eq.s32.totalorder %s106, 0
      %p735 = por %p733, %p734
      %p736 = scmp.ne.s32.totalorder %s728, %s730
      %p737 = scmp.eq.s32.totalorder %s111, 1
      %p738 = por %p736, %p737
      %p739 = scmp.ne.s32.totalorder %s730, %s731
      %p740 = scmp.eq.s32.totalorder %s111, 0
      %p741 = por %p739, %p740
      %p742 = scmp.ne.s32.totalorder %s730, %s731
      %p743 = scmp.eq.s32.totalorder %s112, 1
      %p744 = por %p742, %p743
      %p746 = scmp.ne.s32.totalorder %s731, %s745
      %p747 = scmp.eq.s32.totalorder %s112, 0
      %p748 = por %p746, %p747
      %s750 = sadd.s32 %s749, 1
      %p753 = scmp.eq.s32.totalorder %s106, 1
      %p754 = scmp.ne.s32.totalorder %s749, %s751
      %p755 = scmp.eq.s32.totalorder %s106, 0
      %p756 = por %p754, %p755
      %p757 = scmp.ne.s32.totalorder %s749, %s751
      %p758 = scmp.eq.s32.totalorder %s111, 1
      %p759 = por %p757, %p758
      %p760 = scmp.ne.s32.totalorder %s751, %s752
      %p761 = scmp.eq.s32.totalorder %s111, 0
      %p762 = por %p760, %p761
      %p763 = scmp.ne.s32.totalorder %s751, %s752
      %p764 = scmp.eq.s32.totalorder %s112, 1
      %p765 = por %p763, %p764
      %p767 = scmp.ne.s32.totalorder %s752, %s766
      %p768 = scmp.eq.s32.totalorder %s112, 0
      %p769 = por %p767, %p768
      %s771 = sadd.s32 %s770, 1
      %p774 = scmp.eq.s32.totalorder %s106, 1
      %p775 = scmp.ne.s32.totalorder %s770, %s772
      %p776 = scmp.eq.s32.totalorder %s106, 0
      %p777 = por %p775, %p776
      %p778 = scmp.ne.s32.totalorder %s770, %s772
      %p779 = scmp.eq.s32.totalorder %s111, 1
      %p780 = por %p778, %p779
      %p781 = scmp.ne.s32.totalorder %s772, %s773
      %p782 = scmp.eq.s32.totalorder %s111, 0
      %p783 = por %p781, %p782
      %p784 = scmp.ne.s32.totalorder %s772, %s773
      %p785 = scmp.eq.s32.totalorder %s112, 1
      %p786 = por %p784, %p785
      %p788 = scmp.ne.s32.totalorder %s773, %s787
      %p789 = scmp.eq.s32.totalorder %s112, 0
      %p790 = por %p788, %p789
      %s792 = sadd.s32 %s791, 1
      %p795 = scmp.eq.s32.totalorder %s106, 1
      %p796 = scmp.ne.s32.totalorder %s791, %s793
      %p797 = scmp.eq.s32.totalorder %s106, 0
      %p798 = por %p796, %p797
      %p799 = scmp.ne.s32.totalorder %s791, %s793
      %p800 = scmp.eq.s32.totalorder %s111, 1
      %p801 = por %p799, %p800
      %p802 = scmp.ne.s32.totalorder %s793, %s794
      %p803 = scmp.eq.s32.totalorder %s111, 0
      %p804 = por %p802, %p803
      %p805 = scmp.ne.s32.totalorder %s793, %s794
      %p806 = scmp.eq.s32.totalorder %s112, 1
      %p807 = por %p805, %p806
      %p809 = scmp.ne.s32.totalorder %s794, %s808
      %p810 = scmp.eq.s32.totalorder %s112, 0
      %p811 = por %p809, %p810
      %s813 = sadd.s32 %s812, 1
      %p816 = scmp.eq.s32.totalorder %s106, 1
      %p817 = scmp.ne.s32.totalorder %s812, %s814
      %p818 = scmp.eq.s32.totalorder %s106, 0
      %p819 = por %p817, %p818
      %p820 = scmp.ne.s32.totalorder %s812, %s814
      %p821 = scmp.eq.s32.totalorder %s111, 1
      %p822 = por %p820, %p821
      %p823 = scmp.ne.s32.totalorder %s814, %s815
      %p824 = scmp.eq.s32.totalorder %s111, 0
      %p825 = por %p823, %p824
      %p826 = scmp.ne.s32.totalorder %s814, %s815
      %p827 = scmp.eq.s32.totalorder %s112, 1
      %p828 = por %p826, %p827
      %p830 = scmp.ne.s32.totalorder %s815, %s829
      %p831 = scmp.eq.s32.totalorder %s112, 0
      %p832 = por %p830, %p831
      %s834 = sadd.s32 %s833, 1
      %p837 = scmp.eq.s32.totalorder %s106, 1
      %p838 = scmp.ne.s32.totalorder %s833, %s835
      %p839 = scmp.eq.s32.totalorder %s106, 0
      %p840 = por %p838, %p839
      %p841 = scmp.ne.s32.totalorder %s833, %s835
      %p842 = scmp.eq.s32.totalorder %s111, 1
      %p843 = por %p841, %p842
      %p844 = scmp.ne.s32.totalorder %s835, %s836
      %p845 = scmp.eq.s32.totalorder %s111, 0
      %p846 = por %p844, %p845
      %p847 = scmp.ne.s32.totalorder %s835, %s836
      %p848 = scmp.eq.s32.totalorder %s112, 1
      %p849 = por %p847, %p848
      %p851 = scmp.ne.s32.totalorder %s836, %s850
      %p852 = scmp.eq.s32.totalorder %s112, 0
      %p853 = por %p851, %p852
      %s855 = sadd.s32 %s854, 1
      %p858 = scmp.eq.s32.totalorder %s106, 1
      %p859 = scmp.ne.s32.totalorder %s854, %s856
      %p860 = scmp.eq.s32.totalorder %s106, 0
      %p861 = por %p859, %p860
      %p862 = scmp.ne.s32.totalorder %s854, %s856
      %p863 = scmp.eq.s32.totalorder %s111, 1
      %p864 = por %p862, %p863
      %p865 = scmp.ne.s32.totalorder %s856, %s857
      %p866 = scmp.eq.s32.totalorder %s111, 0
      %p867 = por %p865, %p866
      %p868 = scmp.ne.s32.totalorder %s856, %s857
      %p869 = scmp.eq.s32.totalorder %s112, 1
      %p870 = por %p868, %p869
      %p872 = scmp.ne.s32.totalorder %s857, %s871
      %p873 = scmp.eq.s32.totalorder %s112, 0
      %p874 = por %p872, %p873
      %s876 = sadd.s32 %s875, 1
      %p879 = scmp.eq.s32.totalorder %s106, 1
      %p880 = scmp.ne.s32.totalorder %s875, %s877
      %p881 = scmp.eq.s32.totalorder %s106, 0
      %p882 = por %p880, %p881
      %p883 = scmp.ne.s32.totalorder %s875, %s877
      %p884 = scmp.eq.s32.totalorder %s111, 1
      %p885 = por %p883, %p884
      %p886 = scmp.ne.s32.totalorder %s877, %s878
      %p887 = scmp.eq.s32.totalorder %s111, 0
      %p888 = por %p886, %p887
      %p889 = scmp.ne.s32.totalorder %s877, %s878
      %p890 = scmp.eq.s32.totalorder %s112, 1
      %p891 = por %p889, %p890
      %p893 = scmp.ne.s32.totalorder %s878, %s892
      %p894 = scmp.eq.s32.totalorder %s112, 0
      %p895 = por %p893, %p894
      %s897 = sadd.s32 %s896, 1
      %p900 = scmp.eq.s32.totalorder %s106, 1
      %p901 = scmp.ne.s32.totalorder %s896, %s898
      %p902 = scmp.eq.s32.totalorder %s106, 0
      %p903 = por %p901, %p902
      %p904 = scmp.ne.s32.totalorder %s896, %s898
      %p905 = scmp.eq.s32.totalorder %s111, 1
      %p906 = por %p904, %p905
      %p907 = scmp.ne.s32.totalorder %s898, %s899
      %p908 = scmp.eq.s32.totalorder %s111, 0
      %p909 = por %p907, %p908
      %p910 = scmp.ne.s32.totalorder %s898, %s899
      %p911 = scmp.eq.s32.totalorder %s112, 1
      %p912 = por %p910, %p911
      %p914 = scmp.ne.s32.totalorder %s899, %s913
      %p915 = scmp.eq.s32.totalorder %s112, 0
      %p916 = por %p914, %p915
      %s918 = sadd.s32 %s917, 1
      %p921 = scmp.eq.s32.totalorder %s106, 1
      %p922 = scmp.ne.s32.totalorder %s917, %s919
      %p923 = scmp.eq.s32.totalorder %s106, 0
      %p924 = por %p922, %p923
      %p925 = scmp.ne.s32.totalorder %s917, %s919
      %p926 = scmp.eq.s32.totalorder %s111, 1
      %p927 = por %p925, %p926
      %p928 = scmp.ne.s32.totalorder %s919, %s920
      %p929 = scmp.eq.s32.totalorder %s111, 0
      %p930 = por %p928, %p929
      %p931 = scmp.ne.s32.totalorder %s919, %s920
      %p932 = scmp.eq.s32.totalorder %s112, 1
      %p933 = por %p931, %p932
      %p935 = scmp.ne.s32.totalorder %s920, %s934
      %p936 = scmp.eq.s32.totalorder %s112, 0
      %p937 = por %p935, %p936
      %s939 = sadd.s32 %s938, 1
      %p942 = scmp.eq.s32.totalorder %s106, 1
      %p943 = scmp.ne.s32.totalorder %s938, %s940
      %p944 = scmp.eq.s32.totalorder %s106, 0
      %p945 = por %p943, %p944
      %p946 = scmp.ne.s32.totalorder %s938, %s940
      %p947 = scmp.eq.s32.totalorder %s111, 1
      %p948 = por %p946, %p947
      %p949 = scmp.ne.s32.totalorder %s940, %s941
      %p950 = scmp.eq.s32.totalorder %s111, 0
      %p951 = por %p949, %p950
      %p952 = scmp.ne.s32.totalorder %s940, %s941
      %p953 = scmp.eq.s32.totalorder %s112, 1
      %p954 = por %p952, %p953
      %p956 = scmp.ne.s32.totalorder %s941, %s955
      %p957 = scmp.eq.s32.totalorder %s112, 0
      %p958 = por %p956, %p957
      %s960 = sadd.s32 %s959, 1
      %p963 = scmp.eq.s32.totalorder %s106, 1
      %p964 = scmp.ne.s32.totalorder %s959, %s961
      %p965 = scmp.eq.s32.totalorder %s106, 0
      %p966 = por %p964, %p965
      %p967 = scmp.ne.s32.totalorder %s959, %s961
      %p968 = scmp.eq.s32.totalorder %s111, 1
      %p969 = por %p967, %p968
      %p970 = scmp.ne.s32.totalorder %s961, %s962
      %p971 = scmp.eq.s32.totalorder %s111, 0
      %p972 = por %p970, %p971
      %p973 = scmp.ne.s32.totalorder %s961, %s962
      %p974 = scmp.eq.s32.totalorder %s112, 1
      %p975 = por %p973, %p974
      %p977 = scmp.ne.s32.totalorder %s962, %s976
      %p978 = scmp.eq.s32.totalorder %s112, 0
      %p979 = por %p977, %p978
      %s980 = ssub.s32 %s106, %s113
      %p981 = scmp.eq.s32.totalorder %s980, 0
      %s983 = sadd.s32 %s982, 1
      %s984 = scalar_select %p981, %s982, %s983
      %p987 = pneg %p981
      %p988 = scmp.eq.s32.totalorder %s106, 1
      %p989 = por %p987, %p988
      %p990 = scmp.ne.s32.totalorder %s982, %s985
      %p991 = scmp.eq.s32.totalorder %s106, 0
      %p992 = por %p990, %p991
      %p993 = scmp.ne.s32.totalorder %s982, %s985
      %p994 = scmp.eq.s32.totalorder %s111, 1
      %p995 = por %p993, %p994
      %p996 = scmp.ne.s32.totalorder %s985, %s986
      %p997 = scmp.eq.s32.totalorder %s111, 0
      %p998 = por %p996, %p997
      %p999 = scmp.ne.s32.totalorder %s985, %s986
      %p1000 = scmp.eq.s32.totalorder %s112, 1
      %p1001 = por %p999, %p1000
      %p1003 = scmp.ne.s32.totalorder %s986, %s1002
      %p1004 = scmp.eq.s32.totalorder %s112, 0
      %p1005 = por %p1003, %p1004
      %p1006 = scmp.le.s32.totalorder 1, %s106
      %p1007 = scmp.lt.s32.totalorder %s106, 3
      %p1008 = pnand %p1006, %p1007
      %p1009 = pneg %p1008
      // Predicated region
      $region9: #{forward.1} parent=5 // pred_check
        _
      $region10: #{forward.1} parent=5 // pred_check_branch
        %1011 = sbr.rel (%p1008) target = $region12
      $region11: #{forward.1} parent=5 // pred_region
        %s1012 = ssub.s32 %s106, 1
        // Predicated region
        $region13: #{forward.1} parent=11 // pred_check
          %p1013 = pneg %p153
        $region14: #{forward.1} parent=11 // pred_check_branch
          %1015 = sbr.rel (%p1013) target = $region16
        $region15: #{forward.1} parent=11 // pred_region
          %s1017 = ssub.s32 32, 32
          %1018 = vsyncadd [#allocation3], %s1017
          %s1019 = sshll.u32 [#allocation2], 4
          %s1020 = int_to_ptr.vmem [resolvable:$true] %s1019
          %1025 = dma.hbm_to_vmem [thread:$0]  %s3, 32, %s1020, [#allocation3], 16, 16, 1
        $region16: #{forward.1} parent=11 // pred_fallthru
          _
        // Predicated region
        $region17: #{forward.1} parent=11 // pred_check
          %p1026 = pneg %p174
        $region18: #{forward.1} parent=11 // pred_check_branch
          %1028 = sbr.rel (%p1026) target = $region20
        $region19: #{forward.1} parent=11 // pred_region
          %s1030 = ssub.s32 32, 32
          %1031 = vsyncadd [#allocation6], %s1030
          %s1032 = sshll.u32 [#allocation5], 4
          %s1033 = int_to_ptr.vmem [resolvable:$true] %s1032
          %1038 = dma.hbm_to_vmem [thread:$0]  %s5, 32, %s1033, [#allocation6], 16, 16, 1
        $region20: #{forward.1} parent=11 // pred_fallthru
          _
        // Predicated region
        $region21: #{forward.1} parent=11 // pred_check
          %p1039 = pneg %p195
        $region22: #{forward.1} parent=11 // pred_check_branch
          %1041 = sbr.rel (%p1039) target = $region24
        $region23: #{forward.1} parent=11 // pred_region
          %s1043 = ssub.s32 2560, 2560
          %1044 = vsyncadd [#allocation6], %s1043
          %s1045 = sshll.u32 [#allocation7], 4
          %s1046 = int_to_ptr.vmem [resolvable:$true] %s1045
          %1051 = dma.hbm_to_vmem [thread:$0]  %s7, 2560, %s1046, [#allocation6], 128, 128, 8
        $region24: #{forward.1} parent=11 // pred_fallthru
          _
        // Predicated region
        $region25: #{forward.1} parent=11 // pred_check
          %p1052 = pneg %p216
        $region26: #{forward.1} parent=11 // pred_check_branch
          %1054 = sbr.rel (%p1052) target = $region28
        $region27: #{forward.1} parent=11 // pred_region
          %s1056 = ssub.s32 2560, 2560
          %1057 = vsyncadd [#allocation9], %s1056
          %s1058 = sshll.u32 [#allocation8], 4
          %s1059 = int_to_ptr.vmem [resolvable:$true] %s1058
          %1064 = dma.hbm_to_vmem [thread:$0]  %s9, 2560, %s1059, [#allocation9], 128, 128, 8
        $region28: #{forward.1} parent=11 // pred_fallthru
          _
        // Predicated region
        $region29: #{forward.1} parent=11 // pred_check
          %p1065 = pneg %p237
        $region30: #{forward.1} parent=11 // pred_check_branch
          %1067 = sbr.rel (%p1065) target = $region32
        $region31: #{forward.1} parent=11 // pred_region
          %s1069 = ssub.s32 32, 32
          %1070 = vsyncadd [#allocation9], %s1069
          %s1071 = sshll.u32 [#allocation10], 4
          %s1072 = int_to_ptr.vmem [resolvable:$true] %s1071
          %1077 = dma.hbm_to_vmem [thread:$0]  %s11, 32, %s1072, [#allocation9], 16, 16, 1
        $region32: #{forward.1} parent=11 // pred_fallthru
          _
        // Predicated region
        $region33: #{forward.1} parent=11 // pred_check
          %p1078 = pneg %p258
        $region34: #{forward.1} parent=11 // pred_check_branch
          %1080 = sbr.rel (%p1078) target = $region36
        $region35: #{forward.1} parent=11 // pred_region
          %s1082 = ssub.s32 32, 32
          %1083 = vsyncadd [#allocation12], %s1082
          %s1084 = sshll.u32 [#allocation11], 4
          %s1085 = int_to_ptr.vmem [resolvable:$true] %s1084
          %1090 = dma.hbm_to_vmem [thread:$0]  %s13, 32, %s1085, [#allocation12], 16, 16, 1
        $region36: #{forward.1} parent=11 // pred_fallthru
          _
        // Predicated region
        $region37: #{forward.1} parent=11 // pred_check
          %p1091 = pneg %p279
        $region38: #{forward.1} parent=11 // pred_check_branch
          %1093 = sbr.rel (%p1091) target = $region40
        $region39: #{forward.1} parent=11 // pred_region
          %s1095 = ssub.s32 2560, 2560
          %1096 = vsyncadd [#allocation12], %s1095
          %s1097 = sshll.u32 [#allocation13], 4
          %s1098 = int_to_ptr.vmem [resolvable:$true] %s1097
          %1103 = dma.hbm_to_vmem [thread:$0]  %s15, 2560, %s1098, [#allocation12], 128, 128, 8
        $region40: #{forward.1} parent=11 // pred_fallthru
          _
        // Predicated region
        $region41: #{forward.1} parent=11 // pred_check
          %p1104 = pneg %p300
        $region42: #{forward.1} parent=11 // pred_check_branch
          %1106 = sbr.rel (%p1104) target = $region44
        $region43: #{forward.1} parent=11 // pred_region
          %s1108 = ssub.s32 2560, 2560
          %1109 = vsyncadd [#allocation15], %s1108
          %s1110 = sshll.u32 [#allocation14], 4
          %s1111 = int_to_ptr.vmem [resolvable:$true] %s1110
          %1116 = dma.hbm_to_vmem [thread:$0]  %s17, 2560, %s1111, [#allocation15], 128, 128, 8
        $region44: #{forward.1} parent=11 // pred_fallthru
          _
        // Predicated region
        $region45: #{forward.1} parent=11 // pred_check
          %p1117 = pneg %p321
        $region46: #{forward.1} parent=11 // pred_check_branch
          %1119 = sbr.rel (%p1117) target = $region48
        $region47: #{forward.1} parent=11 // pred_region
          %s1121 = ssub.s32 16, 16
          %1122 = vsyncadd [#allocation15], %s1121
          %s1124 = sshll.u32 [#allocation16], 4
          %s1125 = int_to_ptr.vmem [resolvable:$true] %s1124
          %1127 = dma.hbm_to_vmem [thread:$0]  %s19, 16, %s1125, [#allocation15]
        $region48: #{forward.1} parent=11 // pred_fallthru
          _
        // Predicated region
        $region49: #{forward.1} parent=11 // pred_check
          %p1128 = pneg %p342
        $region50: #{forward.1} parent=11 // pred_check_branch
          %1130 = sbr.rel (%p1128) target = $region52
        $region51: #{forward.1} parent=11 // pred_region
          %s1132 = ssub.s32 896, 896
          %1133 = vsyncadd [#allocation18], %s1132
          %s1134 = sshll.u32 [#allocation17], 4
          %s1135 = int_to_ptr.vmem [resolvable:$true] %s1134
          %1140 = dma.hbm_to_vmem [thread:$0]  %s21, 896, %s1135, [#allocation18], 128, 128, 8
        $region52: #{forward.1} parent=11 // pred_fallthru
          _
        // Predicated region
        $region53: #{forward.1} parent=11 // pred_check
          %p1141 = pneg %p363
        $region54: #{forward.1} parent=11 // pred_check_branch
          %1143 = sbr.rel (%p1141) target = $region56
        $region55: #{forward.1} parent=11 // pred_region
          %s1145 = ssub.s32 16, 16
          %1146 = vsyncadd [#allocation18], %s1145
          %s1148 = sshll.u32 [#allocation19], 4
          %s1149 = int_to_ptr.vmem [resolvable:$true] %s1148
          %1151 = dma.hbm_to_vmem [thread:$0]  %s23, 16, %s1149, [#allocation18]
        $region56: #{forward.1} parent=11 // pred_fallthru
          _
        // Predicated region
        $region57: #{forward.1} parent=11 // pred_check
          %p1152 = pneg %p384
        $region58: #{forward.1} parent=11 // pred_check_branch
          %1154 = sbr.rel (%p1152) target = $region60
        $region59: #{forward.1} parent=11 // pred_region
          _
        $region60: #{forward.1} parent=11 // pred_fallthru
          _
        // Predicated region
        $region61: #{forward.1} parent=11 // pred_check
          %p1155 = pneg %p405
        $region62: #{forward.1} parent=11 // pred_check_branch
          %1157 = sbr.rel (%p1155) target = $region64
        $region63: #{forward.1} parent=11 // pred_region
          %s1159 = ssub.s32 128, 128
          %1160 = vsyncadd [#allocation21], %s1159
          %s1162 = sshll.u32 [#allocation20], 4
          %s1163 = int_to_ptr.vmem [resolvable:$true] %s1162
          %1165 = dma.hbm_to_vmem [thread:$0]  %s27, 128, %s1163, [#allocation21]
        $region64: #{forward.1} parent=11 // pred_fallthru
          _
        // Predicated region
        $region65: #{forward.1} parent=11 // pred_check
          %p1166 = pneg %p426
        $region66: #{forward.1} parent=11 // pred_check_branch
          %1168 = sbr.rel (%p1166) target = $region68
        $region67: #{forward.1} parent=11 // pred_region
          %s1170 = ssub.s32 16, 16
          %1171 = vsyncadd [#allocation21], %s1170
          %s1173 = sshll.u32 [#allocation22], 4
          %s1174 = int_to_ptr.vmem [resolvable:$true] %s1173
          %1176 = dma.hbm_to_vmem [thread:$0]  %s29, 16, %s1174, [#allocation21]
        $region68: #{forward.1} parent=11 // pred_fallthru
          _
        // Predicated region
        $region69: #{forward.1} parent=11 // pred_check
          %p1177 = pneg %p447
        $region70: #{forward.1} parent=11 // pred_check_branch
          %1179 = sbr.rel (%p1177) target = $region72
        $region71: #{forward.1} parent=11 // pred_region
          _
        $region72: #{forward.1} parent=11 // pred_fallthru
          _
        // Predicated region
        $region73: #{forward.1} parent=11 // pred_check
          %p1180 = pneg %p468
        $region74: #{forward.1} parent=11 // pred_check_branch
          %1182 = sbr.rel (%p1180) target = $region76
        $region75: #{forward.1} parent=11 // pred_region
          _
        $region76: #{forward.1} parent=11 // pred_fallthru
          _
        // Predicated region
        $region77: #{forward.1} parent=11 // pred_check
          %p1183 = pneg %p489
        $region78: #{forward.1} parent=11 // pred_check_branch
          %1185 = sbr.rel (%p1183) target = $region80
        $region79: #{forward.1} parent=11 // pred_region
          %s1187 = ssub.s32 32, 32
          %1188 = vsyncadd [#allocation24], %s1187
          %s1189 = sshll.u32 [#allocation23], 4
          %s1190 = int_to_ptr.vmem [resolvable:$true] %s1189
          %1195 = dma.hbm_to_vmem [thread:$0]  %s35, 32, %s1190, [#allocation24], 16, 16, 1
        $region80: #{forward.1} parent=11 // pred_fallthru
          _
        // Predicated region
        $region81: #{forward.1} parent=11 // pred_check
          %p1196 = pneg %p510
        $region82: #{forward.1} parent=11 // pred_check_branch
          %1198 = sbr.rel (%p1196) target = $region84
        $region83: #{forward.1} parent=11 // pred_region
          _
        $region84: #{forward.1} parent=11 // pred_fallthru
          _
        // Predicated region
        $region85: #{forward.1} parent=11 // pred_check
          %p1199 = pneg %p531
        $region86: #{forward.1} parent=11 // pred_check_branch
          %1201 = sbr.rel (%p1199) target = $region88
        $region87: #{forward.1} parent=11 // pred_region
          %s1203 = ssub.s32 32, 32
          %1204 = vsyncadd [#allocation24], %s1203
          %s1205 = sshll.u32 [#allocation25], 4
          %s1206 = int_to_ptr.vmem [resolvable:$true] %s1205
          %1211 = dma.hbm_to_vmem [thread:$0]  %s39, 32, %s1206, [#allocation24], 16, 16, 1
        $region88: #{forward.1} parent=11 // pred_fallthru
          _
        // Predicated region
        $region89: #{forward.1} parent=11 // pred_check
          %p1212 = pneg %p552
        $region90: #{forward.1} parent=11 // pred_check_branch
          %1214 = sbr.rel (%p1212) target = $region92
        $region91: #{forward.1} parent=11 // pred_region
          %s1216 = ssub.s32 4096, 4096
          %1217 = vsyncadd [#allocation27], %s1216
          %s1218 = sshll.u32 [#allocation26], 4
          %s1219 = int_to_ptr.vmem [resolvable:$true] %s1218
          %1224 = dma.hbm_to_vmem [thread:$0]  %s41, 4096, %s1219, [#allocation27], 128, 128, 8
        $region92: #{forward.1} parent=11 // pred_fallthru
          _
        // Predicated region
        $region93: #{forward.1} parent=11 // pred_check
          %p1225 = pneg %p573
        $region94: #{forward.1} parent=11 // pred_check_branch
          %1227 = sbr.rel (%p1225) target = $region96
        $region95: #{forward.1} parent=11 // pred_region
          %s1229 = ssub.s32 1280, 1280
          %1230 = vsyncadd [#allocation27], %s1229
          %s1231 = sshll.u32 [#allocation28], 4
          %s1232 = int_to_ptr.vmem [resolvable:$true] %s1231
          %1237 = dma.hbm_to_vmem [thread:$0]  %s43, 1280, %s1232, [#allocation27], 128, 128, 8
        $region96: #{forward.1} parent=11 // pred_fallthru
          _
        // Predicated region
        $region97: #{forward.1} parent=11 // pred_check
          %p1238 = pneg %p594
        $region98: #{forward.1} parent=11 // pred_check_branch
          %1240 = sbr.rel (%p1238) target = $region100
        $region99: #{forward.1} parent=11 // pred_region
          %s1242 = ssub.s32 1280, 1280
          %1243 = vsyncadd [#allocation30], %s1242
          %s1244 = sshll.u32 [#allocation29], 4
          %s1245 = int_to_ptr.vmem [resolvable:$true] %s1244
          %1250 = dma.hbm_to_vmem [thread:$0]  %s45, 1280, %s1245, [#allocation30], 128, 128, 8
        $region100: #{forward.1} parent=11 // pred_fallthru
          _
        // Predicated region
        $region101: #{forward.1} parent=11 // pred_check
          %p1251 = pneg %p615
        $region102: #{forward.1} parent=11 // pred_check_branch
          %1253 = sbr.rel (%p1251) target = $region104
        $region103: #{forward.1} parent=11 // pred_region
          %s1255 = ssub.s32 256, 256
          %1256 = vsyncadd [#allocation30], %s1255
          %s1257 = sshll.u32 [#allocation31], 4
          %s1258 = int_to_ptr.vmem [resolvable:$true] %s1257
          %1263 = dma.hbm_to_vmem [thread:$0]  %s47, 256, %s1258, [#allocation30], 128, 128, 8
        $region104: #{forward.1} parent=11 // pred_fallthru
          _
        // Predicated region
        $region105: #{forward.1} parent=11 // pred_check
          %p1264 = pneg %p636
        $region106: #{forward.1} parent=11 // pred_check_branch
          %1266 = sbr.rel (%p1264) target = $region108
        $region107: #{forward.1} parent=11 // pred_region
          %s1268 = ssub.s32 256, 256
          %1269 = vsyncadd [#allocation33], %s1268
          %s1270 = sshll.u32 [#allocation32], 4
          %s1271 = int_to_ptr.vmem [resolvable:$true] %s1270
          %1276 = dma.hbm_to_vmem [thread:$0]  %s49, 256, %s1271, [#allocation33], 128, 128, 8
        $region108: #{forward.1} parent=11 // pred_fallthru
          _
        // Predicated region
        $region109: #{forward.1} parent=11 // pred_check
          %p1277 = pneg %p657
        $region110: #{forward.1} parent=11 // pred_check_branch
          %1279 = sbr.rel (%p1277) target = $region112
        $region111: #{forward.1} parent=11 // pred_region
          _
        $region112: #{forward.1} parent=11 // pred_fallthru
          _
        // Predicated region
        $region113: #{forward.1} parent=11 // pred_check
          %p1280 = pneg %p678
        $region114: #{forward.1} parent=11 // pred_check_branch
          %1282 = sbr.rel (%p1280) target = $region116
        $region115: #{forward.1} parent=11 // pred_region
          %s1284 = ssub.s32 256, 256
          %1285 = vsyncadd [#allocation33], %s1284
          %s1286 = sshll.u32 [#allocation34], 4
          %s1287 = int_to_ptr.vmem [resolvable:$true] %s1286
          %1292 = dma.hbm_to_vmem [thread:$0]  %s53, 256, %s1287, [#allocation33], 128, 128, 8
        $region116: #{forward.1} parent=11 // pred_fallthru
          _
        // Predicated region
        $region117: #{forward.1} parent=11 // pred_check
          %p1293 = pneg %p699
        $region118: #{forward.1} parent=11 // pred_check_branch
          %1295 = sbr.rel (%p1293) target = $region120
        $region119: #{forward.1} parent=11 // pred_region
          _
        $region120: #{forward.1} parent=11 // pred_fallthru
          _
        // Predicated region
        $region121: #{forward.1} parent=11 // pred_check
          %p1296 = pneg %p720
        $region122: #{forward.1} parent=11 // pred_check_branch
          %1298 = sbr.rel (%p1296) target = $region124
        $region123: #{forward.1} parent=11 // pred_region
          _
        $region124: #{forward.1} parent=11 // pred_fallthru
          _
        // Predicated region
        $region125: #{forward.1} parent=11 // pred_check
          %p1299 = pneg %p741
        $region126: #{forward.1} parent=11 // pred_check_branch
          %1301 = sbr.rel (%p1299) target = $region128
        $region127: #{forward.1} parent=11 // pred_region
          _
        $region128: #{forward.1} parent=11 // pred_fallthru
          _
        // Predicated region
        $region129: #{forward.1} parent=11 // pred_check
          %p1302 = pneg %p762
        $region130: #{forward.1} parent=11 // pred_check_branch
          %1304 = sbr.rel (%p1302) target = $region132
        $region131: #{forward.1} parent=11 // pred_region
          _
        $region132: #{forward.1} parent=11 // pred_fallthru
          _
        // Predicated region
        $region133: #{forward.1} parent=11 // pred_check
          %p1305 = pneg %p783
        $region134: #{forward.1} parent=11 // pred_check_branch
          %1307 = sbr.rel (%p1305) target = $region136
        $region135: #{forward.1} parent=11 // pred_region
          _
        $region136: #{forward.1} parent=11 // pred_fallthru
          _
        // Predicated region
        $region137: #{forward.1} parent=11 // pred_check
          %p1308 = pneg %p804
        $region138: #{forward.1} parent=11 // pred_check_branch
          %1310 = sbr.rel (%p1308) target = $region140
        $region139: #{forward.1} parent=11 // pred_region
          %s1312 = ssub.s32 256, 256
          %1313 = vsyncadd [#allocation36], %s1312
          %s1314 = sshll.u32 [#allocation35], 4
          %s1315 = int_to_ptr.vmem [resolvable:$true] %s1314
          %1320 = dma.hbm_to_vmem [thread:$0]  %s65, 256, %s1315, [#allocation36], 128, 128, 8
        $region140: #{forward.1} parent=11 // pred_fallthru
          _
        // Predicated region
        $region141: #{forward.1} parent=11 // pred_check
          %p1321 = pneg %p825
        $region142: #{forward.1} parent=11 // pred_check_branch
          %1323 = sbr.rel (%p1321) target = $region144
        $region143: #{forward.1} parent=11 // pred_region
          %s1325 = ssub.s32 32, 32
          %1326 = vsyncadd [#allocation36], %s1325
          %s1327 = sshll.u32 [#allocation37], 4
          %s1328 = int_to_ptr.vmem [resolvable:$true] %s1327
          %1333 = dma.hbm_to_vmem [thread:$0]  %s67, 32, %s1328, [#allocation36], 16, 16, 1
        $region144: #{forward.1} parent=11 // pred_fallthru
          _
        // Predicated region
        $region145: #{forward.1} parent=11 // pred_check
          %p1334 = pneg %p846
        $region146: #{forward.1} parent=11 // pred_check_branch
          %1336 = sbr.rel (%p1334) target = $region148
        $region147: #{forward.1} parent=11 // pred_region
          %s1338 = ssub.s32 32, 32
          %1339 = vsyncadd [#allocation39], %s1338
          %s1340 = sshll.u32 [#allocation38], 4
          %s1341 = int_to_ptr.vmem [resolvable:$true] %s1340
          %1346 = dma.hbm_to_vmem [thread:$0]  %s69, 32, %s1341, [#allocation39], 16, 16, 1
        $region148: #{forward.1} parent=11 // pred_fallthru
          _
        // Predicated region
        $region149: #{forward.1} parent=11 // pred_check
          %p1347 = pneg %p867
        $region150: #{forward.1} parent=11 // pred_check_branch
          %1349 = sbr.rel (%p1347) target = $region152
        $region151: #{forward.1} parent=11 // pred_region
          _
        $region152: #{forward.1} parent=11 // pred_fallthru
          _
        // Predicated region
        $region153: #{forward.1} parent=11 // pred_check
          %p1350 = pneg %p888
        $region154: #{forward.1} parent=11 // pred_check_branch
          %1352 = sbr.rel (%p1350) target = $region156
        $region155: #{forward.1} parent=11 // pred_region
          _
        $region156: #{forward.1} parent=11 // pred_fallthru
          _
        // Predicated region
        $region157: #{forward.1} parent=11 // pred_check
          %p1353 = pneg %p909
        $region158: #{forward.1} parent=11 // pred_check_branch
          %1355 = sbr.rel (%p1353) target = $region160
        $region159: #{forward.1} parent=11 // pred_region
          %s1357 = ssub.s32 32, 32
          %1358 = vsyncadd [#allocation39], %s1357
          %s1359 = sshll.u32 [#allocation40], 4
          %s1360 = int_to_ptr.vmem [resolvable:$true] %s1359
          %1365 = dma.hbm_to_vmem [thread:$0]  %s75, 32, %s1360, [#allocation39], 16, 16, 1
        $region160: #{forward.1} parent=11 // pred_fallthru
          _
        // Predicated region
        $region161: #{forward.1} parent=11 // pred_check
          %p1366 = pneg %p930
        $region162: #{forward.1} parent=11 // pred_check_branch
          %1368 = sbr.rel (%p1366) target = $region164
        $region163: #{forward.1} parent=11 // pred_region
          %s1370 = ssub.s32 32, 32
          %1371 = vsyncadd [#allocation42], %s1370
          %s1372 = sshll.u32 [#allocation41], 4
          %s1373 = int_to_ptr.vmem [resolvable:$true] %s1372
          %1378 = dma.hbm_to_vmem [thread:$0]  %s77, 32, %s1373, [#allocation42], 16, 16, 1
        $region164: #{forward.1} parent=11 // pred_fallthru
          _
        // Predicated region
        $region165: #{forward.1} parent=11 // pred_check
          %p1379 = pneg %p951
        $region166: #{forward.1} parent=11 // pred_check_branch
          %1381 = sbr.rel (%p1379) target = $region168
        $region167: #{forward.1} parent=11 // pred_region
          _
        $region168: #{forward.1} parent=11 // pred_fallthru
          _
        // Predicated region
        $region169: #{forward.1} parent=11 // pred_check
          %p1382 = pneg %p972
        $region170: #{forward.1} parent=11 // pred_check_branch
          %1384 = sbr.rel (%p1382) target = $region172
        $region171: #{forward.1} parent=11 // pred_region
          _
        $region172: #{forward.1} parent=11 // pred_fallthru
          _
      $region12: #{forward.1} parent=5 // pred_fallthru
        _
      %p1385 = scmp.lt.s32.totalorder %s106, 2
      // Predicated region
      $region173: #{forward.1} parent=5 // pred_check
        %p1386 = pneg %p1385
      $region174: #{forward.1} parent=5 // pred_check_branch
        %1388 = sbr.rel (%p1386) target = $region176
      $region175: #{forward.1} parent=5 // pred_region
        // Predicated region
        $region177: #{forward.1} parent=175 // pred_check
          %p1389 = pneg %p126
        $region178: #{forward.1} parent=175 // pred_check_branch
          %1391 = sbr.rel (%p1389) target = $region180
        $region179: #{forward.1} parent=175 // pred_region
          %p1392 = scmp.lt.s32.totalorder %s106, 1
          %s1393 = scalar_select %p1392, %s106, 1
          %s1394 = smul.addr %s1393, 2
          %s1395 = smul.addr %s1394, 8
          %s1396 = scalar_lea.vmem %s1, %s1395
        $region180: #{forward.1} parent=175 // pred_fallthru
          _
      $region176: #{forward.1} parent=5 // pred_fallthru
        _
      %p1397 = scmp.le.s32.totalorder 1, %s106
      %p1398 = scmp.lt.s32.totalorder %s106, 3
      %p1399 = pnand %p1397, %p1398
      %p1400 = pneg %p1399
      // Predicated region
      $region181: #{forward.1} parent=5 // pred_check
        _
      $region182: #{forward.1} parent=5 // pred_check_branch
        %1402 = sbr.rel (%p1399) target = $region184
      $region183: #{forward.1} parent=5 // pred_region
        %s1403 = ssub.s32 %s106, 1
        // Predicated region
        $region185: #{forward.1} parent=183 // pred_check
          %p1404 = pneg %p153
        $region186: #{forward.1} parent=183 // pred_check_branch
          %1406 = sbr.rel (%p1404) target = $region188
        $region187: #{forward.1} parent=183 // pred_region
          %1407 = dma.done [#allocation3], 32
        $region188: #{forward.1} parent=183 // pred_fallthru
          _
        // Predicated region
        $region189: #{forward.1} parent=183 // pred_check
          %p1408 = pneg %p174
        $region190: #{forward.1} parent=183 // pred_check_branch
          %1410 = sbr.rel (%p1408) target = $region192
        $region191: #{forward.1} parent=183 // pred_region
          %1411 = dma.done [#allocation6], 32
        $region192: #{forward.1} parent=183 // pred_fallthru
          _
        // Predicated region
        $region193: #{forward.1} parent=183 // pred_check
          %p1412 = pneg %p195
        $region194: #{forward.1} parent=183 // pred_check_branch
          %1414 = sbr.rel (%p1412) target = $region196
        $region195: #{forward.1} parent=183 // pred_region
          %1415 = dma.done [#allocation6], 2560
        $region196: #{forward.1} parent=183 // pred_fallthru
          _
        // Predicated region
        $region197: #{forward.1} parent=183 // pred_check
          %p1416 = pneg %p216
        $region198: #{forward.1} parent=183 // pred_check_branch
          %1418 = sbr.rel (%p1416) target = $region200
        $region199: #{forward.1} parent=183 // pred_region
          %1419 = dma.done [#allocation9], 2560
        $region200: #{forward.1} parent=183 // pred_fallthru
          _
        // Predicated region
        $region201: #{forward.1} parent=183 // pred_check
          %p1420 = pneg %p237
        $region202: #{forward.1} parent=183 // pred_check_branch
          %1422 = sbr.rel (%p1420) target = $region204
        $region203: #{forward.1} parent=183 // pred_region
          %1423 = dma.done [#allocation9], 32
        $region204: #{forward.1} parent=183 // pred_fallthru
          _
        // Predicated region
        $region205: #{forward.1} parent=183 // pred_check
          %p1424 = pneg %p258
        $region206: #{forward.1} parent=183 // pred_check_branch
          %1426 = sbr.rel (%p1424) target = $region208
        $region207: #{forward.1} parent=183 // pred_region
          %1427 = dma.done [#allocation12], 32
        $region208: #{forward.1} parent=183 // pred_fallthru
          _
        // Predicated region
        $region209: #{forward.1} parent=183 // pred_check
          %p1428 = pneg %p279
        $region210: #{forward.1} parent=183 // pred_check_branch
          %1430 = sbr.rel (%p1428) target = $region212
        $region211: #{forward.1} parent=183 // pred_region
          %1431 = dma.done [#allocation12], 2560
        $region212: #{forward.1} parent=183 // pred_fallthru
          _
        // Predicated region
        $region213: #{forward.1} parent=183 // pred_check
          %p1432 = pneg %p300
        $region214: #{forward.1} parent=183 // pred_check_branch
          %1434 = sbr.rel (%p1432) target = $region216
        $region215: #{forward.1} parent=183 // pred_region
          %1435 = dma.done [#allocation15], 2560
        $region216: #{forward.1} parent=183 // pred_fallthru
          _
        // Predicated region
        $region217: #{forward.1} parent=183 // pred_check
          %p1436 = pneg %p321
        $region218: #{forward.1} parent=183 // pred_check_branch
          %1438 = sbr.rel (%p1436) target = $region220
        $region219: #{forward.1} parent=183 // pred_region
          %1439 = dma.done [#allocation15], 16
        $region220: #{forward.1} parent=183 // pred_fallthru
          _
        // Predicated region
        $region221: #{forward.1} parent=183 // pred_check
          %p1440 = pneg %p342
        $region222: #{forward.1} parent=183 // pred_check_branch
          %1442 = sbr.rel (%p1440) target = $region224
        $region223: #{forward.1} parent=183 // pred_region
          %1443 = dma.done [#allocation18], 896
        $region224: #{forward.1} parent=183 // pred_fallthru
          _
        // Predicated region
        $region225: #{forward.1} parent=183 // pred_check
          %p1444 = pneg %p363
        $region226: #{forward.1} parent=183 // pred_check_branch
          %1446 = sbr.rel (%p1444) target = $region228
        $region227: #{forward.1} parent=183 // pred_region
          %1447 = dma.done [#allocation18], 16
        $region228: #{forward.1} parent=183 // pred_fallthru
          _
        // Predicated region
        $region229: #{forward.1} parent=183 // pred_check
          %p1448 = pneg %p405
        $region230: #{forward.1} parent=183 // pred_check_branch
          %1450 = sbr.rel (%p1448) target = $region232
        $region231: #{forward.1} parent=183 // pred_region
          %1451 = dma.done [#allocation21], 128
        $region232: #{forward.1} parent=183 // pred_fallthru
          _
        // Predicated region
        $region233: #{forward.1} parent=183 // pred_check
          %p1452 = pneg %p426
        $region234: #{forward.1} parent=183 // pred_check_branch
          %1454 = sbr.rel (%p1452) target = $region236
        $region235: #{forward.1} parent=183 // pred_region
          %1455 = dma.done [#allocation21], 16
        $region236: #{forward.1} parent=183 // pred_fallthru
          _
        // Predicated region
        $region237: #{forward.1} parent=183 // pred_check
          %p1456 = pneg %p489
        $region238: #{forward.1} parent=183 // pred_check_branch
          %1458 = sbr.rel (%p1456) target = $region240
        $region239: #{forward.1} parent=183 // pred_region
          %1459 = dma.done [#allocation24], 32
        $region240: #{forward.1} parent=183 // pred_fallthru
          _
        // Predicated region
        $region241: #{forward.1} parent=183 // pred_check
          %p1460 = pneg %p531
        $region242: #{forward.1} parent=183 // pred_check_branch
          %1462 = sbr.rel (%p1460) target = $region244
        $region243: #{forward.1} parent=183 // pred_region
          %1463 = dma.done [#allocation24], 32
        $region244: #{forward.1} parent=183 // pred_fallthru
          _
        // Predicated region
        $region245: #{forward.1} parent=183 // pred_check
          %p1464 = pneg %p552
        $region246: #{forward.1} parent=183 // pred_check_branch
          %1466 = sbr.rel (%p1464) target = $region248
        $region247: #{forward.1} parent=183 // pred_region
          %1467 = dma.done [#allocation27], 4096
        $region248: #{forward.1} parent=183 // pred_fallthru
          _
        // Predicated region
        $region249: #{forward.1} parent=183 // pred_check
          %p1468 = pneg %p573
        $region250: #{forward.1} parent=183 // pred_check_branch
          %1470 = sbr.rel (%p1468) target = $region252
        $region251: #{forward.1} parent=183 // pred_region
          %1471 = dma.done [#allocation27], 1280
        $region252: #{forward.1} parent=183 // pred_fallthru
          _
        // Predicated region
        $region253: #{forward.1} parent=183 // pred_check
          %p1472 = pneg %p594
        $region254: #{forward.1} parent=183 // pred_check_branch
          %1474 = sbr.rel (%p1472) target = $region256
        $region255: #{forward.1} parent=183 // pred_region
          %1475 = dma.done [#allocation30], 1280
        $region256: #{forward.1} parent=183 // pred_fallthru
          _
        // Predicated region
        $region257: #{forward.1} parent=183 // pred_check
          %p1476 = pneg %p615
        $region258: #{forward.1} parent=183 // pred_check_branch
          %1478 = sbr.rel (%p1476) target = $region260
        $region259: #{forward.1} parent=183 // pred_region
          %1479 = dma.done [#allocation30], 256
        $region260: #{forward.1} parent=183 // pred_fallthru
          _
        // Predicated region
        $region261: #{forward.1} parent=183 // pred_check
          %p1480 = pneg %p636
        $region262: #{forward.1} parent=183 // pred_check_branch
          %1482 = sbr.rel (%p1480) target = $region264
        $region263: #{forward.1} parent=183 // pred_region
          %1483 = dma.done [#allocation33], 256
        $region264: #{forward.1} parent=183 // pred_fallthru
          _
        // Predicated region
        $region265: #{forward.1} parent=183 // pred_check
          %p1484 = pneg %p678
        $region266: #{forward.1} parent=183 // pred_check_branch
          %1486 = sbr.rel (%p1484) target = $region268
        $region267: #{forward.1} parent=183 // pred_region
          %1487 = dma.done [#allocation33], 256
        $region268: #{forward.1} parent=183 // pred_fallthru
          _
        // Predicated region
        $region269: #{forward.1} parent=183 // pred_check
          %p1488 = pneg %p804
        $region270: #{forward.1} parent=183 // pred_check_branch
          %1490 = sbr.rel (%p1488) target = $region272
        $region271: #{forward.1} parent=183 // pred_region
          %1491 = dma.done [#allocation36], 256
        $region272: #{forward.1} parent=183 // pred_fallthru
          _
        // Predicated region
        $region273: #{forward.1} parent=183 // pred_check
          %p1492 = pneg %p825
        $region274: #{forward.1} parent=183 // pred_check_branch
          %1494 = sbr.rel (%p1492) target = $region276
        $region275: #{forward.1} parent=183 // pred_region
          %1495 = dma.done [#allocation36], 32
        $region276: #{forward.1} parent=183 // pred_fallthru
          _
        // Predicated region
        $region277: #{forward.1} parent=183 // pred_check
          %p1496 = pneg %p846
        $region278: #{forward.1} parent=183 // pred_check_branch
          %1498 = sbr.rel (%p1496) target = $region280
        $region279: #{forward.1} parent=183 // pred_region
          %1499 = dma.done [#allocation39], 32
        $region280: #{forward.1} parent=183 // pred_fallthru
          _
        // Predicated region
        $region281: #{forward.1} parent=183 // pred_check
          %p1500 = pneg %p909
        $region282: #{forward.1} parent=183 // pred_check_branch
          %1502 = sbr.rel (%p1500) target = $region284
        $region283: #{forward.1} parent=183 // pred_region
          %1503 = dma.done [#allocation39], 32
        $region284: #{forward.1} parent=183 // pred_fallthru
          _
        // Predicated region
        $region285: #{forward.1} parent=183 // pred_check
          %p1504 = pneg %p930
        $region286: #{forward.1} parent=183 // pred_check_branch
          %1506 = sbr.rel (%p1504) target = $region288
        $region287: #{forward.1} parent=183 // pred_region
          %1507 = dma.done [#allocation42], 32
        $region288: #{forward.1} parent=183 // pred_fallthru
          _
        %p1508 = scmp.lt.s32.totalorder %s111, 1
        %s1509 = scalar_select %p1508, %s111, 1
        %s1510 = smul.addr %s1509, 2
        %s1511 = smul.addr %s1510, 8
        %s1512 = scalar_lea.vmem %s1, %s1511
        %p1513 = pneg %p132
        %p1514 = pneg %p129
        %p1515 = pneg %p153
        %p1516 = pneg %p150
        %p1517 = pneg %p174
        %p1518 = pneg %p171
        %p1519 = pneg %p195
        %p1520 = pneg %p192
        %p1521 = pneg %p216
        %p1522 = pneg %p213
        %p1523 = pneg %p237
        %p1524 = pneg %p234
        %p1525 = pneg %p258
        %p1526 = pneg %p255
        %p1527 = pneg %p279
        %p1528 = pneg %p276
        %p1529 = pneg %p300
        %p1530 = pneg %p297
        %p1531 = pneg %p321
        %p1532 = pneg %p318
        %p1533 = pneg %p342
        %p1534 = pneg %p339
        %p1535 = pneg %p363
        %p1536 = pneg %p360
        %p1537 = pneg %p384
        %p1538 = pneg %p381
        %p1539 = pneg %p405
        %p1540 = pneg %p402
        %p1541 = pneg %p426
        %p1542 = pneg %p423
        %p1543 = pneg %p447
        %p1544 = pneg %p444
        %p1545 = pneg %p468
        %p1546 = pneg %p465
        %p1547 = pneg %p489
        %p1548 = pneg %p486
        %p1549 = pneg %p510
        %p1550 = pneg %p507
        %p1551 = pneg %p531
        %p1552 = pneg %p528
        %p1553 = pneg %p552
        %p1554 = pneg %p549
        %p1555 = pneg %p573
        %p1556 = pneg %p570
        %p1557 = pneg %p594
        %p1558 = pneg %p591
        %p1559 = pneg %p615
        %p1560 = pneg %p612
        %p1561 = pneg %p636
        %p1562 = pneg %p633
        %p1563 = pneg %p657
        %p1564 = pneg %p654
        %p1565 = pneg %p678
        %p1566 = pneg %p675
        %p1567 = pneg %p699
        %p1568 = pneg %p696
        %p1569 = pneg %p720
        %p1570 = pneg %p717
        %p1571 = pneg %p741
        %p1572 = pneg %p738
        %p1573 = pneg %p762
        %p1574 = pneg %p759
        %p1575 = pneg %p783
        %p1576 = pneg %p780
        %p1577 = pneg %p804
        %p1578 = pneg %p801
        %p1579 = pneg %p825
        %p1580 = pneg %p822
        %p1581 = pneg %p846
        %p1582 = pneg %p843
        %p1583 = pneg %p867
        %p1584 = pneg %p864
        %p1585 = pneg %p888
        %p1586 = pneg %p885
        %p1587 = pneg %p909
        %p1588 = pneg %p906
        %p1589 = pneg %p930
        %p1590 = pneg %p927
        %p1591 = pneg %p951
        %p1592 = pneg %p948
        %p1593 = pneg %p972
        %p1594 = pneg %p969
        %p1595 = pneg %p998
        %p1596 = pneg %p995
        %s1597 = sand.u32 %s985, 1
        %s1598 = scalar_lea.sflag [#allocation4], %s1597
        %s1599 = sand.u32 %s985, 1
        %s1600 = scalar_lea.vmem [#allocation43], %s1599
        %p1601 = scmp.lt.s32.totalorder %s111, 1
        %s1602 = scalar_select %p1601, %s111, 1
        %s1603 = smul.addr %s1602, 2
        %s1604 = smul.addr %s1603, 8
        %s1605 = scalar_lea.vmem %s1, %s1604
        %v1606 = vld [vmem:[%s1605] sm:$0xff]
        %v1607 = vld [vmem:[%s1605 + $0x8] sm:$0xff]
        %vm1608 = vcmask 64512
        %v1609 = vsel %vm1608, %v1606, 0.0
        %v1610 = vsel %vm1608, %v1607, 0.0
        %v1611 = vadd.f32 %v1609, %v1610
        %v1612 = vrot.slane %v1611, 4
        %v1613 = vadd.f32 %v1611, %v1612
        %v1614 = vrot.slane %v1613, 2
        %v1615 = vadd.f32 %v1613, %v1614
        %v1616 = vrot.slane %v1615, 1
        %v1617 = vadd.f32 %v1615, %v1616
        %v1618 = vrcp.pop 16.0
        %v1619 = vmul.f32 %v1617, %v1618
        %v1620 = vsub.f32 %v1606, %v1619
        %v1621 = vsub.f32 %v1607, %v1619
        %v1622 = vmul.f32 %v1620, %v1620
        %v1623 = vmul.f32 %v1621, %v1621
        %v1624 = vsel %vm1608, %v1622, 0.0
        %v1625 = vsel %vm1608, %v1623, 0.0
        %v1626 = vadd.f32 %v1624, %v1625
        %v1627 = vrot.slane %v1626, 4
        %v1628 = vadd.f32 %v1626, %v1627
        %v1629 = vrot.slane %v1628, 2
        %v1630 = vadd.f32 %v1628, %v1629
        %v1631 = vrot.slane %v1630, 1
        %v1632 = vadd.f32 %v1630, %v1631
        %v1633 = vmul.f32 %v1632, %v1618
        %v1634 = vadd.f32 %v1633, 1e-05
        %v1635 = vrsqrt.pop %v1634
        %v1636 = vmul.f32 %v1634, %v1635
        %vm1637 = vcmp.eq.f32.partialorder %v1634, inf
        %v1638 = vsel %vm1637, %v1634, %v1636
        %vm1639 = vcmp.eq.f32.partialorder %v1634, 0.0
        %v1640 = vand.u32 %v1634, 2147483648
        %v1641 = vsel %vm1639, %v1640, %v1638
        %v1642 = vrcp.pop %v1641
        %v1643 = vmul.f32 %v1620, %v1642
        %v1644 = vmul.f32 %v1621, %v1642
        %v1645 = vld [vmem:[%s57] sm:$0xff]
        %v1646 = vld [vmem:[%s57 + $0x8] sm:$0xff]
        %v1647 = vld [vmem:[%s57 + $0x10] sm:$0x3f]
        %vm1648 = vcmask 130048
        %v1650 = vsel %vm1648, %v1645, 0
        %v1653 = vsel %vm1648, %v1646, 0
        %v1656 = vsel %vm1648, %v1647, 0
        %1658 = vmatprep.subr.mxu0 0.0
        %1659 = vmatpush1.msra.mxu0 %v1643
        %1660 = vmatprep.subr.mxu0 0.0
        %1661 = vmatpush1.msra.mxu0 %v1644
        %1662 = vmatprep.subr.mxu0 0.0
        %1663 = vmatpush1.msra.mxu0 0.0
        %1664 = vmatprep.subr.mxu0 0.0
        %1665 = vmatpush1.msra.mxu0 0.0
        %1666 = vmatprep.subr.mxu0 0.0
        %1667 = vmatpush1.msra.mxu0 0.0
        %1668 = vmatprep.subr.mxu0 0.0
        %1669 = vmatpush1.msra.mxu0 0.0
        %1670 = vmatprep.subr.mxu0 0.0
        %1671 = vmatpush1.msra.mxu0 0.0
        %1672 = vmatprep.subr.mxu0 0.0
        %1673 = vmatpush1.msra.mxu0 0.0
        %1674 = vmatprep.subr.mxu0 0.0
        %1675 = vmatpush1.msra.mxu0 0.0
        %1676 = vmatprep.subr.mxu0 0.0
        %1677 = vmatpush1.msra.mxu0 0.0
        %1678 = vmatprep.subr.mxu0 0.0
        %1679 = vmatpush1.msra.mxu0 0.0
        %1680 = vmatprep.subr.mxu0 0.0
        %1681 = vmatpush1.msra.mxu0 0.0
        %1682 = vmatprep.subr.mxu0 0.0
        %1683 = vmatpush1.msra.mxu0 0.0
        %1684 = vmatprep.subr.mxu0 0.0
        %1685 = vmatpush1.msra.mxu0 0.0
        %1686 = vmatprep.subr.mxu0 0.0
        %1687 = vmatpush1.msra.mxu0 0.0
        %1688 = vmatprep.subr.mxu0 0.0
        %1689 = vmatpush1.msra.mxu0 0.0
        %1690 = vmatprep.subr.mxu0 0.0
        %1691 = vmatpush1.msra.mxu0 0.0
        %1692 = vmatprep.subr.mxu0 0.0
        %1693 = vmatpush1.msra.mxu0 0.0
        %1694 = vmatprep.subr.mxu0 0.0
        %1695 = vmatpush1.msra.mxu0 0.0
        %1696 = vmatprep.subr.mxu0 0.0
        %1697 = vmatpush1.msra.mxu0 0.0
        %1698 = vmatprep.subr.mxu0 0.0
        %1699 = vmatpush1.msra.mxu0 0.0
        %1700 = vmatprep.subr.mxu0 0.0
        %1701 = vmatpush1.msra.mxu0 0.0
        %1702 = vmatprep.subr.mxu0 0.0
        %1703 = vmatpush1.msra.mxu0 0.0
        %1704 = vmatprep.subr.mxu0 0.0
        %1705 = vmatpush1.msra.mxu0 0.0
        %1706 = vmatprep.subr.mxu0 0.0
        %1707 = vmatpush1.msra.mxu0 0.0
        %1708 = vmatprep.subr.mxu0 0.0
        %1709 = vmatpush1.msra.mxu0 0.0
        %1710 = vmatprep.subr.mxu0 0.0
        %1711 = vmatpush1.msra.mxu0 0.0
        %1712 = vmatprep.subr.mxu0 0.0
        %1713 = vmatpush1.msra.mxu0 0.0
        %1714 = vmatprep.subr.mxu0 0.0
        %1715 = vmatpush1.msra.mxu0 0.0
        %1716 = vmatprep.subr.mxu0 0.0
        %1717 = vmatpush1.msra.mxu0 0.0
        %1718 = vmatprep.subr.mxu0 0.0
        %1719 = vmatpush1.msra.mxu0 0.0
        %1720 = vmatprep.subr.mxu0 0.0
        %1721 = vmatpush1.msra.mxu0 0.0
        %1722 = vmatprep.mubr.f32.mxu0 0.0
        %1723 = vmatmul.mubr.f32.gmra.mrb[0].mxu0 %v1650
        %v1724 = vpop.f32.mrb[0].mxu0
        %v1725 = vadd.f32 0.0, %v1724
        %v1726 = vpop.f32.mrb[0].mxu0
        %1727 = vmatprep.mubr.f32.mxu0 0.0
        %1728 = vmatmul.mubr.f32.gmra.mrb[0].mxu0 %v1653
        %v1729 = vpop.f32.mrb[0].mxu0
        %v1730 = vadd.f32 0.0, %v1729
        %v1731 = vpop.f32.mrb[0].mxu0
        %1732 = vmatprep.mubr.f32.mxu0 0.0
        %1733 = vmatmul.mubr.f32.gmra.mrb[0].mxu0 %v1656
        %v1734 = vpop.f32.mrb[0].mxu0
        %v1735 = vadd.f32 0.0, %v1734
        %v1736 = vpop.f32.mrb[0].mxu0
        %1737 = vdwg.mxu0
        %v1738 = vld [vmem:[#allocation17] sm:$0xff]
        %s1739 = scalar_lea.vmem [#allocation17], 8
        %v1740 = vld [vmem:[%s1739] sm:$0xff]
        %vm1744 = vcmask 1046528
        %v1745 = vrot.slane %v1725, 1
        %v1746 = vrot.slane %v1730, 1
        %v1747 = vsel %vm1744, %v1745, %v1746
        %v1748 = vrot.slane %v1735, 1
        %v1749 = vsel %vm1744, %v1746, %v1748
        %v1750 = vsel %vm1608, %v1747, 0
        %v1752 = vsel %vm1608, %v1749, 0
        %1754 = vmatprep.subr.mxu0 0.0
        %1755 = vmatpush1.msra.mxu0 %v1740
        %1756 = vmatprep.subr.mxu0 0.0
        %1757 = vmatpush1.msra.mxu0 0.0
        %1758 = vmatprep.subr.mxu0 0.0
        %1759 = vmatpush1.msra.mxu0 0.0
        %1760 = vmatprep.subr.mxu0 0.0
        %1761 = vmatpush1.msra.mxu0 0.0
        %1762 = vmatprep.subr.mxu0 0.0
        %1763 = vmatpush1.msra.mxu0 0.0
        %1764 = vmatprep.subr.mxu0 0.0
        %1765 = vmatpush1.msra.mxu0 0.0
        %1766 = vmatprep.subr.mxu0 0.0
        %1767 = vmatpush1.msra.mxu0 0.0
        %1768 = vmatprep.subr.mxu0 0.0
        %1769 = vmatpush1.msra.mxu0 0.0
        %1770 = vmatprep.subr.mxu0 0.0
        %1771 = vmatpush1.msra.mxu0 0.0
        %1772 = vmatprep.subr.mxu0 0.0
        %1773 = vmatpush1.msra.mxu0 0.0
        %1774 = vmatprep.subr.mxu0 0.0
        %1775 = vmatpush1.msra.mxu0 0.0
        %1776 = vmatprep.subr.mxu0 0.0
        %1777 = vmatpush1.msra.mxu0 0.0
        %1778 = vmatprep.subr.mxu0 0.0
        %1779 = vmatpush1.msra.mxu0 0.0
        %1780 = vmatprep.subr.mxu0 0.0
        %1781 = vmatpush1.msra.mxu0 0.0
        %1782 = vmatprep.subr.mxu0 0.0
        %1783 = vmatpush1.msra.mxu0 0.0
        %1784 = vmatprep.subr.mxu0 0.0
        %1785 = vmatpush1.msra.mxu0 0.0
        %1786 = vmatprep.subr.mxu0 0.0
        %1787 = vmatpush1.msra.mxu0 0.0
        %1788 = vmatprep.subr.mxu0 0.0
        %1789 = vmatpush1.msra.mxu0 0.0
        %1790 = vmatprep.subr.mxu0 0.0
        %1791 = vmatpush1.msra.mxu0 0.0
        %1792 = vmatprep.subr.mxu0 0.0
        %1793 = vmatpush1.msra.mxu0 0.0
        %1794 = vmatprep.subr.mxu0 0.0
        %1795 = vmatpush1.msra.mxu0 0.0
        %1796 = vmatprep.subr.mxu0 0.0
        %1797 = vmatpush1.msra.mxu0 0.0
        %1798 = vmatprep.subr.mxu0 0.0
        %1799 = vmatpush1.msra.mxu0 0.0
        %1800 = vmatprep.subr.mxu0 0.0
        %1801 = vmatpush1.msra.mxu0 0.0
        %1802 = vmatprep.subr.mxu0 0.0
        %1803 = vmatpush1.msra.mxu0 0.0
        %1804 = vmatprep.subr.mxu0 0.0
        %1805 = vmatpush1.msra.mxu0 0.0
        %1806 = vmatprep.subr.mxu0 0.0
        %1807 = vmatpush1.msra.mxu0 0.0
        %1808 = vmatprep.subr.mxu0 0.0
        %1809 = vmatpush1.msra.mxu0 0.0
        %1810 = vmatprep.subr.mxu0 0.0
        %1811 = vmatpush1.msra.mxu0 0.0
        %1812 = vmatprep.subr.mxu0 0.0
        %1813 = vmatpush1.msra.mxu0 0.0
        %1814 = vmatprep.subr.mxu0 0.0
        %1815 = vmatpush1.msra.mxu0 0.0
        %1816 = vmatprep.subr.mxu0 0.0
        %1817 = vmatpush1.msra.mxu0 0.0
        %1818 = vmatprep.mubr.f32.mxu0 0.0
        %1819 = vmatmul.mubr.f32.gmra.mrb[0].mxu0 %v1750
        %v1820 = vpop.f32.mrb[0].mxu0
        %v1821 = vadd.f32 0.0, %v1820
        %v1822 = vpop.f32.mrb[0].mxu0
        %1823 = vmatprep.mubr.f32.mxu0 0.0
        %1824 = vmatmul.mubr.f32.gmra.mrb[0].mxu0 %v1752
        %v1825 = vpop.f32.mrb[0].mxu0
        %v1826 = vadd.f32 0.0, %v1825
        %v1827 = vpop.f32.mrb[0].mxu0
        %1828 = vdwg.mxu0
        %v1829 = vsel %vm1608, %v1725, 0
        %v1831 = vsel %vm1608, %v1730, 0
        %1833 = vmatprep.subr.mxu0 0.0
        %1834 = vmatpush1.msra.mxu0 %v1738
        %1835 = vmatprep.subr.mxu0 0.0
        %1836 = vmatpush1.msra.mxu0 0.0
        %1837 = vmatprep.subr.mxu0 0.0
        %1838 = vmatpush1.msra.mxu0 0.0
        %1839 = vmatprep.subr.mxu0 0.0
        %1840 = vmatpush1.msra.mxu0 0.0
        %1841 = vmatprep.subr.mxu0 0.0
        %1842 = vmatpush1.msra.mxu0 0.0
        %1843 = vmatprep.subr.mxu0 0.0
        %1844 = vmatpush1.msra.mxu0 0.0
        %1845 = vmatprep.subr.mxu0 0.0
        %1846 = vmatpush1.msra.mxu0 0.0
        %1847 = vmatprep.subr.mxu0 0.0
        %1848 = vmatpush1.msra.mxu0 0.0
        %1849 = vmatprep.subr.mxu0 0.0
        %1850 = vmatpush1.msra.mxu0 0.0
        %1851 = vmatprep.subr.mxu0 0.0
        %1852 = vmatpush1.msra.mxu0 0.0
        %1853 = vmatprep.subr.mxu0 0.0
        %1854 = vmatpush1.msra.mxu0 0.0
        %1855 = vmatprep.subr.mxu0 0.0
        %1856 = vmatpush1.msra.mxu0 0.0
        %1857 = vmatprep.subr.mxu0 0.0
        %1858 = vmatpush1.msra.mxu0 0.0
        %1859 = vmatprep.subr.mxu0 0.0
        %1860 = vmatpush1.msra.mxu0 0.0
        %1861 = vmatprep.subr.mxu0 0.0
        %1862 = vmatpush1.msra.mxu0 0.0
        %1863 = vmatprep.subr.mxu0 0.0
        %1864 = vmatpush1.msra.mxu0 0.0
        %1865 = vmatprep.subr.mxu0 0.0
        %1866 = vmatpush1.msra.mxu0 0.0
        %1867 = vmatprep.subr.mxu0 0.0
        %1868 = vmatpush1.msra.mxu0 0.0
        %1869 = vmatprep.subr.mxu0 0.0
        %1870 = vmatpush1.msra.mxu0 0.0
        %1871 = vmatprep.subr.mxu0 0.0
        %1872 = vmatpush1.msra.mxu0 0.0
        %1873 = vmatprep.subr.mxu0 0.0
        %1874 = vmatpush1.msra.mxu0 0.0
        %1875 = vmatprep.subr.mxu0 0.0
        %1876 = vmatpush1.msra.mxu0 0.0
        %1877 = vmatprep.subr.mxu0 0.0
        %1878 = vmatpush1.msra.mxu0 0.0
        %1879 = vmatprep.subr.mxu0 0.0
        %1880 = vmatpush1.msra.mxu0 0.0
        %1881 = vmatprep.subr.mxu0 0.0
        %1882 = vmatpush1.msra.mxu0 0.0
        %1883 = vmatprep.subr.mxu0 0.0
        %1884 = vmatpush1.msra.mxu0 0.0
        %1885 = vmatprep.subr.mxu0 0.0
        %1886 = vmatpush1.msra.mxu0 0.0
        %1887 = vmatprep.subr.mxu0 0.0
        %1888 = vmatpush1.msra.mxu0 0.0
        %1889 = vmatprep.subr.mxu0 0.0
        %1890 = vmatpush1.msra.mxu0 0.0
        %1891 = vmatprep.subr.mxu0 0.0
        %1892 = vmatpush1.msra.mxu0 0.0
        %1893 = vmatprep.subr.mxu0 0.0
        %1894 = vmatpush1.msra.mxu0 0.0
        %1895 = vmatprep.subr.mxu0 0.0
        %1896 = vmatpush1.msra.mxu0 0.0
        %1897 = vmatprep.mubr.f32.mxu0 0.0
        %1898 = vmatmul.mubr.f32.gmra.mrb[0].mxu0 %v1829
        %v1899 = vpop.f32.mrb[0].mxu0
        %v1900 = vadd.f32 %v1821, %v1899
        %v1901 = vpop.f32.mrb[0].mxu0
        %1902 = vmatprep.mubr.f32.mxu0 0.0
        %1903 = vmatmul.mubr.f32.gmra.mrb[0].mxu0 %v1831
        %v1904 = vpop.f32.mrb[0].mxu0
        %v1905 = vadd.f32 %v1826, %v1904
        %v1906 = vpop.f32.mrb[0].mxu0
        %1907 = vdwg.mxu0
        %s1908 = scalar_lea.vmem [#allocation17], 16
        %v1909 = vld [vmem:[%s1908] sm:$0xff]
        %vm1910 = vcmask 1045504
        %v1911 = vrot.slane %v1725, 2
        %v1912 = vrot.slane %v1730, 2
        %v1913 = vsel %vm1910, %v1911, %v1912
        %v1914 = vrot.slane %v1735, 2
        %v1915 = vsel %vm1910, %v1912, %v1914
        %v1916 = vsel %vm1608, %v1913, 0
        %v1918 = vsel %vm1608, %v1915, 0
        %1920 = vmatprep.subr.mxu0 0.0
        %1921 = vmatpush1.msra.mxu0 %v1909
        %1922 = vmatprep.subr.mxu0 0.0
        %1923 = vmatpush1.msra.mxu0 0.0
        %1924 = vmatprep.subr.mxu0 0.0
        %1925 = vmatpush1.msra.mxu0 0.0
        %1926 = vmatprep.subr.mxu0 0.0
        %1927 = vmatpush1.msra.mxu0 0.0
        %1928 = vmatprep.subr.mxu0 0.0
        %1929 = vmatpush1.msra.mxu0 0.0
        %1930 = vmatprep.subr.mxu0 0.0
        %1931 = vmatpush1.msra.mxu0 0.0
        %1932 = vmatprep.subr.mxu0 0.0
        %1933 = vmatpush1.msra.mxu0 0.0
        %1934 = vmatprep.subr.mxu0 0.0
        %1935 = vmatpush1.msra.mxu0 0.0
        %1936 = vmatprep.subr.mxu0 0.0
        %1937 = vmatpush1.msra.mxu0 0.0
        %1938 = vmatprep.subr.mxu0 0.0
        %1939 = vmatpush1.msra.mxu0 0.0
        %1940 = vmatprep.subr.mxu0 0.0
        %1941 = vmatpush1.msra.mxu0 0.0
        %1942 = vmatprep.subr.mxu0 0.0
        %1943 = vmatpush1.msra.mxu0 0.0
        %1944 = vmatprep.subr.mxu0 0.0
        %1945 = vmatpush1.msra.mxu0 0.0
        %1946 = vmatprep.subr.mxu0 0.0
        %1947 = vmatpush1.msra.mxu0 0.0
        %1948 = vmatprep.subr.mxu0 0.0
        %1949 = vmatpush1.msra.mxu0 0.0
        %1950 = vmatprep.subr.mxu0 0.0
        %1951 = vmatpush1.msra.mxu0 0.0
        %1952 = vmatprep.subr.mxu0 0.0
        %1953 = vmatpush1.msra.mxu0 0.0
        %1954 = vmatprep.subr.mxu0 0.0
        %1955 = vmatpush1.msra.mxu0 0.0
        %1956 = vmatprep.subr.mxu0 0.0
        %1957 = vmatpush1.msra.mxu0 0.0
        %1958 = vmatprep.subr.mxu0 0.0
        %1959 = vmatpush1.msra.mxu0 0.0
        %1960 = vmatprep.subr.mxu0 0.0
        %1961 = vmatpush1.msra.mxu0 0.0
        %1962 = vmatprep.subr.mxu0 0.0
        %1963 = vmatpush1.msra.mxu0 0.0
        %1964 = vmatprep.subr.mxu0 0.0
        %1965 = vmatpush1.msra.mxu0 0.0
        %1966 = vmatprep.subr.mxu0 0.0
        %1967 = vmatpush1.msra.mxu0 0.0
        %1968 = vmatprep.subr.mxu0 0.0
        %1969 = vmatpush1.msra.mxu0 0.0
        %1970 = vmatprep.subr.mxu0 0.0
        %1971 = vmatpush1.msra.mxu0 0.0
        %1972 = vmatprep.subr.mxu0 0.0
        %1973 = vmatpush1.msra.mxu0 0.0
        %1974 = vmatprep.subr.mxu0 0.0
        %1975 = vmatpush1.msra.mxu0 0.0
        %1976 = vmatprep.subr.mxu0 0.0
        %1977 = vmatpush1.msra.mxu0 0.0
        %1978 = vmatprep.subr.mxu0 0.0
        %1979 = vmatpush1.msra.mxu0 0.0
        %1980 = vmatprep.subr.mxu0 0.0
        %1981 = vmatpush1.msra.mxu0 0.0
        %1982 = vmatprep.subr.mxu0 0.0
        %1983 = vmatpush1.msra.mxu0 0.0
        %1984 = vmatprep.mubr.f32.mxu0 0.0
        %1985 = vmatmul.mubr.f32.gmra.mrb[0].mxu0 %v1916
        %v1986 = vpop.f32.mrb[0].mxu0
        %v1987 = vadd.f32 0.0, %v1986
        %v1988 = vpop.f32.mrb[0].mxu0
        %1989 = vmatprep.mubr.f32.mxu0 0.0
        %1990 = vmatmul.mubr.f32.gmra.mrb[0].mxu0 %v1918
        %v1991 = vpop.f32.mrb[0].mxu0
        %v1992 = vadd.f32 0.0, %v1991
        %v1993 = vpop.f32.mrb[0].mxu0
        %1994 = vdwg.mxu0
        %v1995 = vadd.f32 %v1900, %v1987
        %v1996 = vadd.f32 %v1905, %v1992
        %s1997 = scalar_lea.vmem [#allocation17], 24
        %v1998 = vld [vmem:[%s1997] sm:$0xff]
        %vm1999 = vcmask 1044480
        %v2000 = vrot.slane %v1725, 3
        %v2001 = vrot.slane %v1730, 3
        %v2002 = vsel %vm1999, %v2000, %v2001
        %v2003 = vrot.slane %v1735, 3
        %v2004 = vsel %vm1999, %v2001, %v2003
        %v2005 = vsel %vm1608, %v2002, 0
        %v2007 = vsel %vm1608, %v2004, 0
        %2009 = vmatprep.subr.mxu0 0.0
        %2010 = vmatpush1.msra.mxu0 %v1998
        %2011 = vmatprep.subr.mxu0 0.0
        %2012 = vmatpush1.msra.mxu0 0.0
        %2013 = vmatprep.subr.mxu0 0.0
        %2014 = vmatpush1.msra.mxu0 0.0
        %2015 = vmatprep.subr.mxu0 0.0
        %2016 = vmatpush1.msra.mxu0 0.0
        %2017 = vmatprep.subr.mxu0 0.0
        %2018 = vmatpush1.msra.mxu0 0.0
        %2019 = vmatprep.subr.mxu0 0.0
        %2020 = vmatpush1.msra.mxu0 0.0
        %2021 = vmatprep.subr.mxu0 0.0
        %2022 = vmatpush1.msra.mxu0 0.0
        %2023 = vmatprep.subr.mxu0 0.0
        %2024 = vmatpush1.msra.mxu0 0.0
        %2025 = vmatprep.subr.mxu0 0.0
        %2026 = vmatpush1.msra.mxu0 0.0
        %2027 = vmatprep.subr.mxu0 0.0
        %2028 = vmatpush1.msra.mxu0 0.0
        %2029 = vmatprep.subr.mxu0 0.0
        %2030 = vmatpush1.msra.mxu0 0.0
        %2031 = vmatprep.subr.mxu0 0.0
        %2032 = vmatpush1.msra.mxu0 0.0
        %2033 = vmatprep.subr.mxu0 0.0
        %2034 = vmatpush1.msra.mxu0 0.0
        %2035 = vmatprep.subr.mxu0 0.0
        %2036 = vmatpush1.msra.mxu0 0.0
        %2037 = vmatprep.subr.mxu0 0.0
        %2038 = vmatpush1.msra.mxu0 0.0
        %2039 = vmatprep.subr.mxu0 0.0
        %2040 = vmatpush1.msra.mxu0 0.0
        %2041 = vmatprep.subr.mxu0 0.0
        %2042 = vmatpush1.msra.mxu0 0.0
        %2043 = vmatprep.subr.mxu0 0.0
        %2044 = vmatpush1.msra.mxu0 0.0
        %2045 = vmatprep.subr.mxu0 0.0
        %2046 = vmatpush1.msra.mxu0 0.0
        %2047 = vmatprep.subr.mxu0 0.0
        %2048 = vmatpush1.msra.mxu0 0.0
        %2049 = vmatprep.subr.mxu0 0.0
        %2050 = vmatpush1.msra.mxu0 0.0
        %2051 = vmatprep.subr.mxu0 0.0
        %2052 = vmatpush1.msra.mxu0 0.0
        %2053 = vmatprep.subr.mxu0 0.0
        %2054 = vmatpush1.msra.mxu0 0.0
        %2055 = vmatprep.subr.mxu0 0.0
        %2056 = vmatpush1.msra.mxu0 0.0
        %2057 = vmatprep.subr.mxu0 0.0
        %2058 = vmatpush1.msra.mxu0 0.0
        %2059 = vmatprep.subr.mxu0 0.0
        %2060 = vmatpush1.msra.mxu0 0.0
        %2061 = vmatprep.subr.mxu0 0.0
        %2062 = vmatpush1.msra.mxu0 0.0
        %2063 = vmatprep.subr.mxu0 0.0
        %2064 = vmatpush1.msra.mxu0 0.0
        %2065 = vmatprep.subr.mxu0 0.0
        %2066 = vmatpush1.msra.mxu0 0.0
        %2067 = vmatprep.subr.mxu0 0.0
        %2068 = vmatpush1.msra.mxu0 0.0
        %2069 = vmatprep.subr.mxu0 0.0
        %2070 = vmatpush1.msra.mxu0 0.0
        %2071 = vmatprep.subr.mxu0 0.0
        %2072 = vmatpush1.msra.mxu0 0.0
        %2073 = vmatprep.mubr.f32.mxu0 0.0
        %2074 = vmatmul.mubr.f32.gmra.mrb[0].mxu0 %v2005
        %v2075 = vpop.f32.mrb[0].mxu0
        %v2076 = vadd.f32 0.0, %v2075
        %v2077 = vpop.f32.mrb[0].mxu0
        %2078 = vmatprep.mubr.f32.mxu0 0.0
        %2079 = vmatmul.mubr.f32.gmra.mrb[0].mxu0 %v2007
        %v2080 = vpop.f32.mrb[0].mxu0
        %v2081 = vadd.f32 0.0, %v2080
        %v2082 = vpop.f32.mrb[0].mxu0
        %2083 = vdwg.mxu0
        %v2084 = vadd.f32 %v1995, %v2076
        %v2085 = vadd.f32 %v1996, %v2081
        %s2086 = scalar_lea.vmem [#allocation17], 32
        %v2087 = vld [vmem:[%s2086] sm:$0xff]
        %vm2088 = vcmask 1043456
        %v2089 = vrot.slane %v1725, 4
        %v2090 = vrot.slane %v1730, 4
        %v2091 = vsel %vm2088, %v2089, %v2090
        %v2092 = vrot.slane %v1735, 4
        %v2093 = vsel %vm2088, %v2090, %v2092
        %v2094 = vsel %vm1608, %v2091, 0
        %v2096 = vsel %vm1608, %v2093, 0
        %2098 = vmatprep.subr.mxu0 0.0
        %2099 = vmatpush1.msra.mxu0 %v2087
        %2100 = vmatprep.subr.mxu0 0.0
        %2101 = vmatpush1.msra.mxu0 0.0
        %2102 = vmatprep.subr.mxu0 0.0
        %2103 = vmatpush1.msra.mxu0 0.0
        %2104 = vmatprep.subr.mxu0 0.0
        %2105 = vmatpush1.msra.mxu0 0.0
        %2106 = vmatprep.subr.mxu0 0.0
        %2107 = vmatpush1.msra.mxu0 0.0
        %2108 = vmatprep.subr.mxu0 0.0
        %2109 = vmatpush1.msra.mxu0 0.0
        %2110 = vmatprep.subr.mxu0 0.0
        %2111 = vmatpush1.msra.mxu0 0.0
        %2112 = vmatprep.subr.mxu0 0.0
        %2113 = vmatpush1.msra.mxu0 0.0
        %2114 = vmatprep.subr.mxu0 0.0
        %2115 = vmatpush1.msra.mxu0 0.0
        %2116 = vmatprep.subr.mxu0 0.0
        %2117 = vmatpush1.msra.mxu0 0.0
        %2118 = vmatprep.subr.mxu0 0.0
        %2119 = vmatpush1.msra.mxu0 0.0
        %2120 = vmatprep.subr.mxu0 0.0
        %2121 = vmatpush1.msra.mxu0 0.0
        %2122 = vmatprep.subr.mxu0 0.0
        %2123 = vmatpush1.msra.mxu0 0.0
        %2124 = vmatprep.subr.mxu0 0.0
        %2125 = vmatpush1.msra.mxu0 0.0
        %2126 = vmatprep.subr.mxu0 0.0
        %2127 = vmatpush1.msra.mxu0 0.0
        %2128 = vmatprep.subr.mxu0 0.0
        %2129 = vmatpush1.msra.mxu0 0.0
        %2130 = vmatprep.subr.mxu0 0.0
        %2131 = vmatpush1.msra.mxu0 0.0
        %2132 = vmatprep.subr.mxu0 0.0
        %2133 = vmatpush1.msra.mxu0 0.0
        %2134 = vmatprep.subr.mxu0 0.0
        %2135 = vmatpush1.msra.mxu0 0.0
        %2136 = vmatprep.subr.mxu0 0.0
        %2137 = vmatpush1.msra.mxu0 0.0
        %2138 = vmatprep.subr.mxu0 0.0
        %2139 = vmatpush1.msra.mxu0 0.0
        %2140 = vmatprep.subr.mxu0 0.0
        %2141 = vmatpush1.msra.mxu0 0.0
        %2142 = vmatprep.subr.mxu0 0.0
        %2143 = vmatpush1.msra.mxu0 0.0
        %2144 = vmatprep.subr.mxu0 0.0
        %2145 = vmatpush1.msra.mxu0 0.0
        %2146 = vmatprep.subr.mxu0 0.0
        %2147 = vmatpush1.msra.mxu0 0.0
        %2148 = vmatprep.subr.mxu0 0.0
        %2149 = vmatpush1.msra.mxu0 0.0
        %2150 = vmatprep.subr.mxu0 0.0
        %2151 = vmatpush1.msra.mxu0 0.0
        %2152 = vmatprep.subr.mxu0 0.0
        %2153 = vmatpush1.msra.mxu0 0.0
        %2154 = vmatprep.subr.mxu0 0.0
        %2155 = vmatpush1.msra.mxu0 0.0
        %2156 = vmatprep.subr.mxu0 0.0
        %2157 = vmatpush1.msra.mxu0 0.0
        %2158 = vmatprep.subr.mxu0 0.0
        %2159 = vmatpush1.msra.mxu0 0.0
        %2160 = vmatprep.subr.mxu0 0.0
        %2161 = vmatpush1.msra.mxu0 0.0
        %2162 = vmatprep.mubr.f32.mxu0 0.0
        %2163 = vmatmul.mubr.f32.gmra.mrb[0].mxu0 %v2094
        %v2164 = vpop.f32.mrb[0].mxu0
        %v2165 = vadd.f32 0.0, %v2164
        %v2166 = vpop.f32.mrb[0].mxu0
        %2167 = vmatprep.mubr.f32.mxu0 0.0
        %2168 = vmatmul.mubr.f32.gmra.mrb[0].mxu0 %v2096
        %v2169 = vpop.f32.mrb[0].mxu0
        %v2170 = vadd.f32 0.0, %v2169
        %v2171 = vpop.f32.mrb[0].mxu0
        %2172 = vdwg.mxu0
        %v2173 = vadd.f32 %v2084, %v2165
        %v2174 = vadd.f32 %v2085, %v2170
        %s2175 = scalar_lea.vmem [#allocation17], 40
        %v2176 = vld [vmem:[%s2175] sm:$0xff]
        %vm2177 = vcmask 1042432
        %v2178 = vrot.slane %v1725, 5
        %v2179 = vrot.slane %v1730, 5
        %v2180 = vsel %vm2177, %v2178, %v2179
        %v2181 = vrot.slane %v1735, 5
        %v2182 = vsel %vm2177, %v2179, %v2181
        %v2183 = vsel %vm1608, %v2180, 0
        %v2185 = vsel %vm1608, %v2182, 0
        %2187 = vmatprep.subr.mxu0 0.0
        %2188 = vmatpush1.msra.mxu0 %v2176
        %2189 = vmatprep.subr.mxu0 0.0
        %2190 = vmatpush1.msra.mxu0 0.0
        %2191 = vmatprep.subr.mxu0 0.0
        %2192 = vmatpush1.msra.mxu0 0.0
        %2193 = vmatprep.subr.mxu0 0.0
        %2194 = vmatpush1.msra.mxu0 0.0
        %2195 = vmatprep.subr.mxu0 0.0
        %2196 = vmatpush1.msra.mxu0 0.0
        %2197 = vmatprep.subr.mxu0 0.0
        %2198 = vmatpush1.msra.mxu0 0.0
        %2199 = vmatprep.subr.mxu0 0.0
        %2200 = vmatpush1.msra.mxu0 0.0
        %2201 = vmatprep.subr.mxu0 0.0
        %2202 = vmatpush1.msra.mxu0 0.0
        %2203 = vmatprep.subr.mxu0 0.0
        %2204 = vmatpush1.msra.mxu0 0.0
        %2205 = vmatprep.subr.mxu0 0.0
        %2206 = vmatpush1.msra.mxu0 0.0
        %2207 = vmatprep.subr.mxu0 0.0
        %2208 = vmatpush1.msra.mxu0 0.0
        %2209 = vmatprep.subr.mxu0 0.0
        %2210 = vmatpush1.msra.mxu0 0.0
        %2211 = vmatprep.subr.mxu0 0.0
        %2212 = vmatpush1.msra.mxu0 0.0
        %2213 = vmatprep.subr.mxu0 0.0
        %2214 = vmatpush1.msra.mxu0 0.0
        %2215 = vmatprep.subr.mxu0 0.0
        %2216 = vmatpush1.msra.mxu0 0.0
        %2217 = vmatprep.subr.mxu0 0.0
        %2218 = vmatpush1.msra.mxu0 0.0
        %2219 = vmatprep.subr.mxu0 0.0
        %2220 = vmatpush1.msra.mxu0 0.0
        %2221 = vmatprep.subr.mxu0 0.0
        %2222 = vmatpush1.msra.mxu0 0.0
        %2223 = vmatprep.subr.mxu0 0.0
        %2224 = vmatpush1.msra.mxu0 0.0
        %2225 = vmatprep.subr.mxu0 0.0
        %2226 = vmatpush1.msra.mxu0 0.0
        %2227 = vmatprep.subr.mxu0 0.0
        %2228 = vmatpush1.msra.mxu0 0.0
        %2229 = vmatprep.subr.mxu0 0.0
        %2230 = vmatpush1.msra.mxu0 0.0
        %2231 = vmatprep.subr.mxu0 0.0
        %2232 = vmatpush1.msra.mxu0 0.0
        %2233 = vmatprep.subr.mxu0 0.0
        %2234 = vmatpush1.msra.mxu0 0.0
        %2235 = vmatprep.subr.mxu0 0.0
        %2236 = vmatpush1.msra.mxu0 0.0
        %2237 = vmatprep.subr.mxu0 0.0
        %2238 = vmatpush1.msra.mxu0 0.0
        %2239 = vmatprep.subr.mxu0 0.0
        %2240 = vmatpush1.msra.mxu0 0.0
        %2241 = vmatprep.subr.mxu0 0.0
        %2242 = vmatpush1.msra.mxu0 0.0
        %2243 = vmatprep.subr.mxu0 0.0
        %2244 = vmatpush1.msra.mxu0 0.0
        %2245 = vmatprep.subr.mxu0 0.0
        %2246 = vmatpush1.msra.mxu0 0.0
        %2247 = vmatprep.subr.mxu0 0.0
        %2248 = vmatpush1.msra.mxu0 0.0
        %2249 = vmatprep.subr.mxu0 0.0
        %2250 = vmatpush1.msra.mxu0 0.0
        %2251 = vmatprep.mubr.f32.mxu0 0.0
        %2252 = vmatmul.mubr.f32.gmra.mrb[0].mxu0 %v2183
        %v2253 = vpop.f32.mrb[0].mxu0
        %v2254 = vadd.f32 0.0, %v2253
        %v2255 = vpop.f32.mrb[0].mxu0
        %2256 = vmatprep.mubr.f32.mxu0 0.0
        %2257 = vmatmul.mubr.f32.gmra.mrb[0].mxu0 %v2185
        %v2258 = vpop.f32.mrb[0].mxu0
        %v2259 = vadd.f32 0.0, %v2258
        %v2260 = vpop.f32.mrb[0].mxu0
        %2261 = vdwg.mxu0
        %v2262 = vadd.f32 %v2173, %v2254
        %v2263 = vadd.f32 %v2174, %v2259
        %s2264 = scalar_lea.vmem [#allocation17], 48
        %v2265 = vld [vmem:[%s2264] sm:$0xff]
        %vm2266 = vcmask 1041408
        %v2267 = vrot.slane %v1725, 6
        %v2268 = vrot.slane %v1730, 6
        %v2269 = vsel %vm2266, %v2267, %v2268
        %v2270 = vrot.slane %v1735, 6
        %v2271 = vsel %vm2266, %v2268, %v2270
        %v2272 = vsel %vm1608, %v2269, 0
        %v2274 = vsel %vm1608, %v2271, 0
        %2276 = vmatprep.subr.mxu0 0.0
        %2277 = vmatpush1.msra.mxu0 %v2265
        %2278 = vmatprep.subr.mxu0 0.0
        %2279 = vmatpush1.msra.mxu0 0.0
        %2280 = vmatprep.subr.mxu0 0.0
        %2281 = vmatpush1.msra.mxu0 0.0
        %2282 = vmatprep.subr.mxu0 0.0
        %2283 = vmatpush1.msra.mxu0 0.0
        %2284 = vmatprep.subr.mxu0 0.0
        %2285 = vmatpush1.msra.mxu0 0.0
        %2286 = vmatprep.subr.mxu0 0.0
        %2287 = vmatpush1.msra.mxu0 0.0
        %2288 = vmatprep.subr.mxu0 0.0
        %2289 = vmatpush1.msra.mxu0 0.0
        %2290 = vmatprep.subr.mxu0 0.0
        %2291 = vmatpush1.msra.mxu0 0.0
        %2292 = vmatprep.subr.mxu0 0.0
        %2293 = vmatpush1.msra.mxu0 0.0
        %2294 = vmatprep.subr.mxu0 0.0
        %2295 = vmatpush1.msra.mxu0 0.0
        %2296 = vmatprep.subr.mxu0 0.0
        %2297 = vmatpush1.msra.mxu0 0.0
        %2298 = vmatprep.subr.mxu0 0.0
        %2299 = vmatpush1.msra.mxu0 0.0
        %2300 = vmatprep.subr.mxu0 0.0
        %2301 = vmatpush1.msra.mxu0 0.0
        %2302 = vmatprep.subr.mxu0 0.0
        %2303 = vmatpush1.msra.mxu0 0.0
        %2304 = vmatprep.subr.mxu0 0.0
        %2305 = vmatpush1.msra.mxu0 0.0
        %2306 = vmatprep.subr.mxu0 0.0
        %2307 = vmatpush1.msra.mxu0 0.0
        %2308 = vmatprep.subr.mxu0 0.0
        %2309 = vmatpush1.msra.mxu0 0.0
        %2310 = vmatprep.subr.mxu0 0.0
        %2311 = vmatpush1.msra.mxu0 0.0
        %2312 = vmatprep.subr.mxu0 0.0
        %2313 = vmatpush1.msra.mxu0 0.0
        %2314 = vmatprep.subr.mxu0 0.0
        %2315 = vmatpush1.msra.mxu0 0.0
        %2316 = vmatprep.subr.mxu0 0.0
        %2317 = vmatpush1.msra.mxu0 0.0
        %2318 = vmatprep.subr.mxu0 0.0
        %2319 = vmatpush1.msra.mxu0 0.0
        %2320 = vmatprep.subr.mxu0 0.0
        %2321 = vmatpush1.msra.mxu0 0.0
        %2322 = vmatprep.subr.mxu0 0.0
        %2323 = vmatpush1.msra.mxu0 0.0
        %2324 = vmatprep.subr.mxu0 0.0
        %2325 = vmatpush1.msra.mxu0 0.0
        %2326 = vmatprep.subr.mxu0 0.0
        %2327 = vmatpush1.msra.mxu0 0.0
        %2328 = vmatprep.subr.mxu0 0.0
        %2329 = vmatpush1.msra.mxu0 0.0
        %2330 = vmatprep.subr.mxu0 0.0
        %2331 = vmatpush1.msra.mxu0 0.0
        %2332 = vmatprep.subr.mxu0 0.0
        %2333 = vmatpush1.msra.mxu0 0.0
        %2334 = vmatprep.subr.mxu0 0.0
        %2335 = vmatpush1.msra.mxu0 0.0
        %2336 = vmatprep.subr.mxu0 0.0
        %2337 = vmatpush1.msra.mxu0 0.0
        %2338 = vmatprep.subr.mxu0 0.0
        %2339 = vmatpush1.msra.mxu0 0.0
        %2340 = vmatprep.mubr.f32.mxu0 0.0
        %2341 = vmatmul.mubr.f32.gmra.mrb[0].mxu0 %v2272
        %v2342 = vpop.f32.mrb[0].mxu0
        %v2343 = vadd.f32 0.0, %v2342
        %v2344 = vpop.f32.mrb[0].mxu0
        %2345 = vmatprep.mubr.f32.mxu0 0.0
        %2346 = vmatmul.mubr.f32.gmra.mrb[0].mxu0 %v2274
        %v2347 = vpop.f32.mrb[0].mxu0
        %v2348 = vadd.f32 0.0, %v2347
        %v2349 = vpop.f32.mrb[0].mxu0
        %2350 = vdwg.mxu0
        %v2351 = vadd.f32 %v2262, %v2343
        %v2352 = vadd.f32 %v2263, %v2348
        %v2353 = vld [vmem:[#allocation16] sm:$0x1]
        %v2355 = vlaneseq
        %v2356 = vshrl.u32 %v2355, 7
        %v2357 = vsub.s32 0, %v2356
        %v2358 = vrot.slane %v2353, %v2357
        %v2360 = vadd.f32 %v2351, %v2358
        %v2361 = vadd.f32 %v2352, %v2358
        %v2362 = vld [vmem:[#allocation35] sm:$0xff]
        %v2363 = vld [vmem:[#allocation35 + $0x8] sm:$0x1]
        %v2365 = vsel %vm1648, %v2362, 0
        %v2368 = vsel %vm1648, %v2363, 0
        %2370 = vmatprep.subr.mxu0 0.0
        %2371 = vmatpush1.msra.mxu0 %v2360
        %2372 = vmatprep.subr.mxu0 0.0
        %2373 = vmatpush1.msra.mxu0 %v2361
        %2374 = vmatprep.subr.mxu0 0.0
        %2375 = vmatpush1.msra.mxu0 0.0
        %2376 = vmatprep.subr.mxu0 0.0
        %2377 = vmatpush1.msra.mxu0 0.0
        %2378 = vmatprep.subr.mxu0 0.0
        %2379 = vmatpush1.msra.mxu0 0.0
        %2380 = vmatprep.subr.mxu0 0.0
        %2381 = vmatpush1.msra.mxu0 0.0
        %2382 = vmatprep.subr.mxu0 0.0
        %2383 = vmatpush1.msra.mxu0 0.0
        %2384 = vmatprep.subr.mxu0 0.0
        %2385 = vmatpush1.msra.mxu0 0.0
        %2386 = vmatprep.subr.mxu0 0.0
        %2387 = vmatpush1.msra.mxu0 0.0
        %2388 = vmatprep.subr.mxu0 0.0
        %2389 = vmatpush1.msra.mxu0 0.0
        %2390 = vmatprep.subr.mxu0 0.0
        %2391 = vmatpush1.msra.mxu0 0.0
        %2392 = vmatprep.subr.mxu0 0.0
        %2393 = vmatpush1.msra.mxu0 0.0
        %2394 = vmatprep.subr.mxu0 0.0
        %2395 = vmatpush1.msra.mxu0 0.0
        %2396 = vmatprep.subr.mxu0 0.0
        %2397 = vmatpush1.msra.mxu0 0.0
        %2398 = vmatprep.subr.mxu0 0.0
        %2399 = vmatpush1.msra.mxu0 0.0
        %2400 = vmatprep.subr.mxu0 0.0
        %2401 = vmatpush1.msra.mxu0 0.0
        %2402 = vmatprep.subr.mxu0 0.0
        %2403 = vmatpush1.msra.mxu0 0.0
        %2404 = vmatprep.subr.mxu0 0.0
        %2405 = vmatpush1.msra.mxu0 0.0
        %2406 = vmatprep.subr.mxu0 0.0
        %2407 = vmatpush1.msra.mxu0 0.0
        %2408 = vmatprep.subr.mxu0 0.0
        %2409 = vmatpush1.msra.mxu0 0.0
        %2410 = vmatprep.subr.mxu0 0.0
        %2411 = vmatpush1.msra.mxu0 0.0
        %2412 = vmatprep.subr.mxu0 0.0
        %2413 = vmatpush1.msra.mxu0 0.0
        %2414 = vmatprep.subr.mxu0 0.0
        %2415 = vmatpush1.msra.mxu0 0.0
        %2416 = vmatprep.subr.mxu0 0.0
        %2417 = vmatpush1.msra.mxu0 0.0
        %2418 = vmatprep.subr.mxu0 0.0
        %2419 = vmatpush1.msra.mxu0 0.0
        %2420 = vmatprep.subr.mxu0 0.0
        %2421 = vmatpush1.msra.mxu0 0.0
        %2422 = vmatprep.subr.mxu0 0.0
        %2423 = vmatpush1.msra.mxu0 0.0
        %2424 = vmatprep.subr.mxu0 0.0
        %2425 = vmatpush1.msra.mxu0 0.0
        %2426 = vmatprep.subr.mxu0 0.0
        %2427 = vmatpush1.msra.mxu0 0.0
        %2428 = vmatprep.subr.mxu0 0.0
        %2429 = vmatpush1.msra.mxu0 0.0
        %2430 = vmatprep.subr.mxu0 0.0
        %2431 = vmatpush1.msra.mxu0 0.0
        %2432 = vmatprep.subr.mxu0 0.0
        %2433 = vmatpush1.msra.mxu0 0.0
        %2434 = vmatprep.mubr.f32.mxu0 0.0
        %2435 = vmatmul.mubr.f32.gmra.mrb[0].mxu0 %v2365
        %v2436 = vpop.f32.mrb[0].mxu0
        %v2437 = vadd.f32 0.0, %v2436
        %v2438 = vpop.f32.mrb[0].mxu0
        %2439 = vmatprep.mubr.f32.mxu0 0.0
        %2440 = vmatmul.mubr.f32.gmra.mrb[0].mxu0 %v2368
        %v2441 = vpop.f32.mrb[0].mxu0
        %v2442 = vadd.f32 0.0, %v2441
        %v2443 = vpop.f32.mrb[0].mxu0
        %2444 = vdwg.mxu0
        %v2445 = vld [vmem:[%s63] sm:$0xff]
        %v2446 = vld [vmem:[%s63 + $0x8] sm:$0x1]
        %v2448 = vsel %vm1648, %v2445, 0
        %v2451 = vsel %vm1648, %v2446, 0
        %2453 = vmatprep.subr.mxu0 0.0
        %2454 = vmatpush1.msra.mxu0 %v2360
        %2455 = vmatprep.subr.mxu0 0.0
        %2456 = vmatpush1.msra.mxu0 %v2361
        %2457 = vmatprep.subr.mxu0 0.0
        %2458 = vmatpush1.msra.mxu0 0.0
        %2459 = vmatprep.subr.mxu0 0.0
        %2460 = vmatpush1.msra.mxu0 0.0
        %2461 = vmatprep.subr.mxu0 0.0
        %2462 = vmatpush1.msra.mxu0 0.0
        %2463 = vmatprep.subr.mxu0 0.0
        %2464 = vmatpush1.msra.mxu0 0.0
        %2465 = vmatprep.subr.mxu0 0.0
        %2466 = vmatpush1.msra.mxu0 0.0
        %2467 = vmatprep.subr.mxu0 0.0
        %2468 = vmatpush1.msra.mxu0 0.0
        %2469 = vmatprep.subr.mxu0 0.0
        %2470 = vmatpush1.msra.mxu0 0.0
        %2471 = vmatprep.subr.mxu0 0.0
        %2472 = vmatpush1.msra.mxu0 0.0
        %2473 = vmatprep.subr.mxu0 0.0
        %2474 = vmatpush1.msra.mxu0 0.0
        %2475 = vmatprep.subr.mxu0 0.0
        %2476 = vmatpush1.msra.mxu0 0.0
        %2477 = vmatprep.subr.mxu0 0.0
        %2478 = vmatpush1.msra.mxu0 0.0
        %2479 = vmatprep.subr.mxu0 0.0
        %2480 = vmatpush1.msra.mxu0 0.0
        %2481 = vmatprep.subr.mxu0 0.0
        %2482 = vmatpush1.msra.mxu0 0.0
        %2483 = vmatprep.subr.mxu0 0.0
        %2484 = vmatpush1.msra.mxu0 0.0
        %2485 = vmatprep.subr.mxu0 0.0
        %2486 = vmatpush1.msra.mxu0 0.0
        %2487 = vmatprep.subr.mxu0 0.0
        %2488 = vmatpush1.msra.mxu0 0.0
        %2489 = vmatprep.subr.mxu0 0.0
        %2490 = vmatpush1.msra.mxu0 0.0
        %2491 = vmatprep.subr.mxu0 0.0
        %2492 = vmatpush1.msra.mxu0 0.0
        %2493 = vmatprep.subr.mxu0 0.0
        %2494 = vmatpush1.msra.mxu0 0.0
        %2495 = vmatprep.subr.mxu0 0.0
        %2496 = vmatpush1.msra.mxu0 0.0
        %2497 = vmatprep.subr.mxu0 0.0
        %2498 = vmatpush1.msra.mxu0 0.0
        %2499 = vmatprep.subr.mxu0 0.0
        %2500 = vmatpush1.msra.mxu0 0.0
        %2501 = vmatprep.subr.mxu0 0.0
        %2502 = vmatpush1.msra.mxu0 0.0
        %2503 = vmatprep.subr.mxu0 0.0
        %2504 = vmatpush1.msra.mxu0 0.0
        %2505 = vmatprep.subr.mxu0 0.0
        %2506 = vmatpush1.msra.mxu0 0.0
        %2507 = vmatprep.subr.mxu0 0.0
        %2508 = vmatpush1.msra.mxu0 0.0
        %2509 = vmatprep.subr.mxu0 0.0
        %2510 = vmatpush1.msra.mxu0 0.0
        %2511 = vmatprep.subr.mxu0 0.0
        %2512 = vmatpush1.msra.mxu0 0.0
        %2513 = vmatprep.subr.mxu0 0.0
        %2514 = vmatpush1.msra.mxu0 0.0
        %2515 = vmatprep.subr.mxu0 0.0
        %2516 = vmatpush1.msra.mxu0 0.0
        %2517 = vmatprep.mubr.f32.mxu0 0.0
        %2518 = vmatmul.mubr.f32.gmra.mrb[0].mxu0 %v2448
        %v2519 = vpop.f32.mrb[0].mxu0
        %v2520 = vadd.f32 0.0, %v2519
        %v2521 = vpop.f32.mrb[0].mxu0
        %2522 = vmatprep.mubr.f32.mxu0 0.0
        %2523 = vmatmul.mubr.f32.gmra.mrb[0].mxu0 %v2451
        %v2524 = vpop.f32.mrb[0].mxu0
        %v2525 = vadd.f32 0.0, %v2524
        %v2526 = vpop.f32.mrb[0].mxu0
        %2527 = vdwg.mxu0
        %v2528 = vld [vmem:[%s51] sm:$0xff]
        %v2529 = vld [vmem:[%s51 + $0x8] sm:$0x7]
        %v2530 = vld [vmem:[%s79] sm:$0x7]
        %v2531 = vld [vmem:[#allocation40] sm:$0x1]
        %vm2532 = vcmask 72704
        %v2534 = vsel %vm2532, %v2528, 0
        %v2537 = vsel %vm2532, %v2529, 0
        %vm2539 = vcmask 1040384
        %v2541 = vsel %vm2539, %v2442, 0
        %2543 = vmatprep.subr.mxu0 0.0
        %2544 = vmatpush1.msra.mxu0 %v2437
        %2545 = vmatprep.subr.mxu0 0.0
        %2546 = vmatpush1.msra.mxu0 %v2541
        %2547 = vmatprep.subr.mxu0 0.0
        %2548 = vmatpush1.msra.mxu0 0.0
        %2549 = vmatprep.subr.mxu0 0.0
        %2550 = vmatpush1.msra.mxu0 0.0
        %2551 = vmatprep.subr.mxu0 0.0
        %2552 = vmatpush1.msra.mxu0 0.0
        %2553 = vmatprep.subr.mxu0 0.0
        %2554 = vmatpush1.msra.mxu0 0.0
        %2555 = vmatprep.subr.mxu0 0.0
        %2556 = vmatpush1.msra.mxu0 0.0
        %2557 = vmatprep.subr.mxu0 0.0
        %2558 = vmatpush1.msra.mxu0 0.0
        %2559 = vmatprep.subr.mxu0 0.0
        %2560 = vmatpush1.msra.mxu0 0.0
        %2561 = vmatprep.subr.mxu0 0.0
        %2562 = vmatpush1.msra.mxu0 0.0
        %2563 = vmatprep.subr.mxu0 0.0
        %2564 = vmatpush1.msra.mxu0 0.0
        %2565 = vmatprep.subr.mxu0 0.0
        %2566 = vmatpush1.msra.mxu0 0.0
        %2567 = vmatprep.subr.mxu0 0.0
        %2568 = vmatpush1.msra.mxu0 0.0
        %2569 = vmatprep.subr.mxu0 0.0
        %2570 = vmatpush1.msra.mxu0 0.0
        %2571 = vmatprep.subr.mxu0 0.0
        %2572 = vmatpush1.msra.mxu0 0.0
        %2573 = vmatprep.subr.mxu0 0.0
        %2574 = vmatpush1.msra.mxu0 0.0
        %2575 = vmatprep.subr.mxu0 0.0
        %2576 = vmatpush1.msra.mxu0 0.0
        %2577 = vmatprep.subr.mxu0 0.0
        %2578 = vmatpush1.msra.mxu0 0.0
        %2579 = vmatprep.subr.mxu0 0.0
        %2580 = vmatpush1.msra.mxu0 0.0
        %2581 = vmatprep.subr.mxu0 0.0
        %2582 = vmatpush1.msra.mxu0 0.0
        %2583 = vmatprep.subr.mxu0 0.0
        %2584 = vmatpush1.msra.mxu0 0.0
        %2585 = vmatprep.subr.mxu0 0.0
        %2586 = vmatpush1.msra.mxu0 0.0
        %2587 = vmatprep.subr.mxu0 0.0
        %2588 = vmatpush1.msra.mxu0 0.0
        %2589 = vmatprep.subr.mxu0 0.0
        %2590 = vmatpush1.msra.mxu0 0.0
        %2591 = vmatprep.subr.mxu0 0.0
        %2592 = vmatpush1.msra.mxu0 0.0
        %2593 = vmatprep.subr.mxu0 0.0
        %2594 = vmatpush1.msra.mxu0 0.0
        %2595 = vmatprep.subr.mxu0 0.0
        %2596 = vmatpush1.msra.mxu0 0.0
        %2597 = vmatprep.subr.mxu0 0.0
        %2598 = vmatpush1.msra.mxu0 0.0
        %2599 = vmatprep.subr.mxu0 0.0
        %2600 = vmatpush1.msra.mxu0 0.0
        %2601 = vmatprep.subr.mxu0 0.0
        %2602 = vmatpush1.msra.mxu0 0.0
        %2603 = vmatprep.subr.mxu0 0.0
        %2604 = vmatpush1.msra.mxu0 0.0
        %2605 = vmatprep.subr.mxu0 0.0
        %2606 = vmatpush1.msra.mxu0 0.0
        %2607 = vmatprep.mubr.f32.mxu0 0.0
        %2608 = vmatmul.mubr.f32.gmra.mrb[0].mxu0 %v2534
        %v2609 = vpop.f32.mrb[0].mxu0
        %v2610 = vadd.f32 0.0, %v2609
        %v2611 = vpop.f32.mrb[0].mxu0
        %2612 = vmatprep.mubr.f32.mxu0 0.0
        %2613 = vmatmul.mubr.f32.gmra.mrb[0].mxu0 %v2537
        %v2614 = vpop.f32.mrb[0].mxu0
        %v2615 = vadd.f32 0.0, %v2614
        %v2616 = vpop.f32.mrb[0].mxu0
        %2617 = vdwg.mxu0
        %v2618 = vlaneseq
        %v2619 = vshrl.u32 %v2618, 7
        %v2620 = vsub.s32 0, %v2619
        %v2621 = vrot.slane %v2530, %v2620
        %v2622 = vmul.f32 %v2610, %v2621
        %v2623 = vmul.f32 %v2615, %v2621
        %v2624 = vadd.f32 %v2622, 0.0
        %v2625 = vadd.f32 %v2623, 0.0
        %v2626 = vlaneseq
        %v2627 = vshrl.u32 %v2626, 7
        %v2628 = vsub.s32 1, %v2627
        %v2629 = vrot.slane %v2530, %v2628
        %v2630 = vmul.f32 %v2610, %v2629
        %v2631 = vmul.f32 %v2615, %v2629
        %v2634 = vrot.slane %v2630, 1
        %v2635 = vrot.slane %v2631, 1
        %v2636 = vsel %vm1744, %v2634, %v2635
        %v2639 = vadd.f32 %v2624, %v2636
        %v2640 = vadd.f32 %v2625, %v2635
        %v2641 = vlaneseq
        %v2642 = vshrl.u32 %v2641, 7
        %v2643 = vsub.s32 2, %v2642
        %v2644 = vrot.slane %v2530, %v2643
        %v2645 = vmul.f32 %v2610, %v2644
        %v2646 = vmul.f32 %v2615, %v2644
        %v2649 = vrot.slane %v2645, 2
        %v2650 = vrot.slane %v2646, 2
        %v2651 = vsel %vm1910, %v2649, %v2650
        %v2654 = vadd.f32 %v2639, %v2651
        %v2655 = vadd.f32 %v2640, %v2650
        %v2657 = vlaneseq
        %v2658 = vshrl.u32 %v2657, 7
        %v2659 = vsub.s32 0, %v2658
        %v2660 = vrot.slane %v2531, %v2659
        %v2662 = vadd.f32 %v2654, %v2660
        %v2663 = vadd.f32 %v2655, %v2660
        %vm2664 = vcmp.gt.f32.partialorder %v2662, 0.0
        %vm2665 = vcmp.gt.f32.partialorder %v2663, 0.0
        %v2666 = vmul.f32 %v2662, 0.1
        %v2667 = vmul.f32 %v2663, 0.1
        %v2668 = vsel %vm2664, %v2662, %v2666
        %v2669 = vsel %vm2665, %v2663, %v2667
        %v2670 = vld [vmem:[#allocation34] sm:$0xff]
        %v2671 = vld [vmem:[#allocation34 + $0x8] sm:$0x7f]
        %v2672 = vld [vmem:[%s81] sm:$0x7f]
        %v2673 = vld [vmem:[#allocation41] sm:$0x1]
        %v2675 = vsel %vm2532, %v2670, 0
        %v2678 = vsel %vm2532, %v2671, 0
        %v2681 = vsel %vm2539, %v2669, 0
        %2683 = vmatprep.subr.mxu0 0.0
        %2684 = vmatpush1.msra.mxu0 %v2668
        %2685 = vmatprep.subr.mxu0 0.0
        %2686 = vmatpush1.msra.mxu0 %v2681
        %2687 = vmatprep.subr.mxu0 0.0
        %2688 = vmatpush1.msra.mxu0 0.0
        %2689 = vmatprep.subr.mxu0 0.0
        %2690 = vmatpush1.msra.mxu0 0.0
        %2691 = vmatprep.subr.mxu0 0.0
        %2692 = vmatpush1.msra.mxu0 0.0
        %2693 = vmatprep.subr.mxu0 0.0
        %2694 = vmatpush1.msra.mxu0 0.0
        %2695 = vmatprep.subr.mxu0 0.0
        %2696 = vmatpush1.msra.mxu0 0.0
        %2697 = vmatprep.subr.mxu0 0.0
        %2698 = vmatpush1.msra.mxu0 0.0
        %2699 = vmatprep.subr.mxu0 0.0
        %2700 = vmatpush1.msra.mxu0 0.0
        %2701 = vmatprep.subr.mxu0 0.0
        %2702 = vmatpush1.msra.mxu0 0.0
        %2703 = vmatprep.subr.mxu0 0.0
        %2704 = vmatpush1.msra.mxu0 0.0
        %2705 = vmatprep.subr.mxu0 0.0
        %2706 = vmatpush1.msra.mxu0 0.0
        %2707 = vmatprep.subr.mxu0 0.0
        %2708 = vmatpush1.msra.mxu0 0.0
        %2709 = vmatprep.subr.mxu0 0.0
        %2710 = vmatpush1.msra.mxu0 0.0
        %2711 = vmatprep.subr.mxu0 0.0
        %2712 = vmatpush1.msra.mxu0 0.0
        %2713 = vmatprep.subr.mxu0 0.0
        %2714 = vmatpush1.msra.mxu0 0.0
        %2715 = vmatprep.subr.mxu0 0.0
        %2716 = vmatpush1.msra.mxu0 0.0
        %2717 = vmatprep.subr.mxu0 0.0
        %2718 = vmatpush1.msra.mxu0 0.0
        %2719 = vmatprep.subr.mxu0 0.0
        %2720 = vmatpush1.msra.mxu0 0.0
        %2721 = vmatprep.subr.mxu0 0.0
        %2722 = vmatpush1.msra.mxu0 0.0
        %2723 = vmatprep.subr.mxu0 0.0
        %2724 = vmatpush1.msra.mxu0 0.0
        %2725 = vmatprep.subr.mxu0 0.0
        %2726 = vmatpush1.msra.mxu0 0.0
        %2727 = vmatprep.subr.mxu0 0.0
        %2728 = vmatpush1.msra.mxu0 0.0
        %2729 = vmatprep.subr.mxu0 0.0
        %2730 = vmatpush1.msra.mxu0 0.0
        %2731 = vmatprep.subr.mxu0 0.0
        %2732 = vmatpush1.msra.mxu0 0.0
        %2733 = vmatprep.subr.mxu0 0.0
        %2734 = vmatpush1.msra.mxu0 0.0
        %2735 = vmatprep.subr.mxu0 0.0
        %2736 = vmatpush1.msra.mxu0 0.0
        %2737 = vmatprep.subr.mxu0 0.0
        %2738 = vmatpush1.msra.mxu0 0.0
        %2739 = vmatprep.subr.mxu0 0.0
        %2740 = vmatpush1.msra.mxu0 0.0
        %2741 = vmatprep.subr.mxu0 0.0
        %2742 = vmatpush1.msra.mxu0 0.0
        %2743 = vmatprep.subr.mxu0 0.0
        %2744 = vmatpush1.msra.mxu0 0.0
        %2745 = vmatprep.subr.mxu0 0.0
        %2746 = vmatpush1.msra.mxu0 0.0
        %2747 = vmatprep.mubr.f32.mxu0 0.0
        %2748 = vmatmul.mubr.f32.gmra.mrb[0].mxu0 %v2675
        %v2749 = vpop.f32.mrb[0].mxu0
        %v2750 = vadd.f32 0.0, %v2749
        %v2751 = vpop.f32.mrb[0].mxu0
        %2752 = vmatprep.mubr.f32.mxu0 0.0
        %2753 = vmatmul.mubr.f32.gmra.mrb[0].mxu0 %v2678
        %v2754 = vpop.f32.mrb[0].mxu0
        %v2755 = vadd.f32 0.0, %v2754
        %v2756 = vpop.f32.mrb[0].mxu0
        %2757 = vdwg.mxu0
        %v2758 = vlaneseq
        %v2759 = vshrl.u32 %v2758, 7
        %v2760 = vsub.s32 0, %v2759
        %v2761 = vrot.slane %v2672, %v2760
        %v2762 = vmul.f32 %v2750, %v2761
        %v2763 = vmul.f32 %v2755, %v2761
        %v2764 = vadd.f32 %v2762, 0.0
        %v2765 = vadd.f32 %v2763, 0.0
        %v2766 = vlaneseq
        %v2767 = vshrl.u32 %v2766, 7
        %v2768 = vsub.s32 1, %v2767
        %v2769 = vrot.slane %v2672, %v2768
        %v2770 = vmul.f32 %v2750, %v2769
        %v2771 = vmul.f32 %v2755, %v2769
        %v2774 = vrot.slane %v2770, 1
        %v2775 = vrot.slane %v2771, 1
        %v2776 = vsel %vm1744, %v2774, %v2775
        %v2779 = vadd.f32 %v2764, %v2776
        %v2780 = vadd.f32 %v2765, %v2775
        %v2781 = vlaneseq
        %v2782 = vshrl.u32 %v2781, 7
        %v2783 = vsub.s32 2, %v2782
        %v2784 = vrot.slane %v2672, %v2783
        %v2785 = vmul.f32 %v2750, %v2784
        %v2786 = vmul.f32 %v2755, %v2784
        %v2789 = vrot.slane %v2785, 2
        %v2790 = vrot.slane %v2786, 2
        %v2791 = vsel %vm1910, %v2789, %v2790
        %v2794 = vadd.f32 %v2779, %v2791
        %v2795 = vadd.f32 %v2780, %v2790
        %v2796 = vlaneseq
        %v2797 = vshrl.u32 %v2796, 7
        %v2798 = vsub.s32 3, %v2797
        %v2799 = vrot.slane %v2672, %v2798
        %v2800 = vmul.f32 %v2750, %v2799
        %v2801 = vmul.f32 %v2755, %v2799
        %v2804 = vrot.slane %v2800, 3
        %v2805 = vrot.slane %v2801, 3
        %v2806 = vsel %vm1999, %v2804, %v2805
        %v2809 = vadd.f32 %v2794, %v2806
        %v2810 = vadd.f32 %v2795, %v2805
        %v2811 = vlaneseq
        %v2812 = vshrl.u32 %v2811, 7
        %v2813 = vsub.s32 4, %v2812
        %v2814 = vrot.slane %v2672, %v2813
        %v2815 = vmul.f32 %v2750, %v2814
        %v2816 = vmul.f32 %v2755, %v2814
        %v2819 = vrot.slane %v2815, 4
        %v2820 = vrot.slane %v2816, 4
        %v2821 = vsel %vm2088, %v2819, %v2820
        %v2824 = vadd.f32 %v2809, %v2821
        %v2825 = vadd.f32 %v2810, %v2820
        %v2826 = vlaneseq
        %v2827 = vshrl.u32 %v2826, 7
        %v2828 = vsub.s32 5, %v2827
        %v2829 = vrot.slane %v2672, %v2828
        %v2830 = vmul.f32 %v2750, %v2829
        %v2831 = vmul.f32 %v2755, %v2829
        %v2834 = vrot.slane %v2830, 5
        %v2835 = vrot.slane %v2831, 5
        %v2836 = vsel %vm2177, %v2834, %v2835
        %v2839 = vadd.f32 %v2824, %v2836
        %v2840 = vadd.f32 %v2825, %v2835
        %v2841 = vlaneseq
        %v2842 = vshrl.u32 %v2841, 7
        %v2843 = vsub.s32 6, %v2842
        %v2844 = vrot.slane %v2672, %v2843
        %v2845 = vmul.f32 %v2750, %v2844
        %v2846 = vmul.f32 %v2755, %v2844
        %v2849 = vrot.slane %v2845, 6
        %v2850 = vrot.slane %v2846, 6
        %v2851 = vsel %vm2266, %v2849, %v2850
        %v2854 = vadd.f32 %v2839, %v2851
        %v2855 = vadd.f32 %v2840, %v2850
        %v2857 = vlaneseq
        %v2858 = vshrl.u32 %v2857, 7
        %v2859 = vsub.s32 0, %v2858
        %v2860 = vrot.slane %v2673, %v2859
        %v2862 = vadd.f32 %v2854, %v2860
        %v2863 = vadd.f32 %v2855, %v2860
        %v2864 = vld [vmem:[%s71] sm:$0x7]
        %v2865 = vld [vmem:[#allocation37] sm:$0x1]
        %v2867 = vsel %vm2539, %v2525, 0
        %2869 = vmatprep.subr.mxu0 0.0
        %2870 = vmatpush1.msra.mxu0 %v2520
        %2871 = vmatprep.subr.mxu0 0.0
        %2872 = vmatpush1.msra.mxu0 %v2867
        %2873 = vmatprep.subr.mxu0 0.0
        %2874 = vmatpush1.msra.mxu0 0.0
        %2875 = vmatprep.subr.mxu0 0.0
        %2876 = vmatpush1.msra.mxu0 0.0
        %2877 = vmatprep.subr.mxu0 0.0
        %2878 = vmatpush1.msra.mxu0 0.0
        %2879 = vmatprep.subr.mxu0 0.0
        %2880 = vmatpush1.msra.mxu0 0.0
        %2881 = vmatprep.subr.mxu0 0.0
        %2882 = vmatpush1.msra.mxu0 0.0
        %2883 = vmatprep.subr.mxu0 0.0
        %2884 = vmatpush1.msra.mxu0 0.0
        %2885 = vmatprep.subr.mxu0 0.0
        %2886 = vmatpush1.msra.mxu0 0.0
        %2887 = vmatprep.subr.mxu0 0.0
        %2888 = vmatpush1.msra.mxu0 0.0
        %2889 = vmatprep.subr.mxu0 0.0
        %2890 = vmatpush1.msra.mxu0 0.0
        %2891 = vmatprep.subr.mxu0 0.0
        %2892 = vmatpush1.msra.mxu0 0.0
        %2893 = vmatprep.subr.mxu0 0.0
        %2894 = vmatpush1.msra.mxu0 0.0
        %2895 = vmatprep.subr.mxu0 0.0
        %2896 = vmatpush1.msra.mxu0 0.0
        %2897 = vmatprep.subr.mxu0 0.0
        %2898 = vmatpush1.msra.mxu0 0.0
        %2899 = vmatprep.subr.mxu0 0.0
        %2900 = vmatpush1.msra.mxu0 0.0
        %2901 = vmatprep.subr.mxu0 0.0
        %2902 = vmatpush1.msra.mxu0 0.0
        %2903 = vmatprep.subr.mxu0 0.0
        %2904 = vmatpush1.msra.mxu0 0.0
        %2905 = vmatprep.subr.mxu0 0.0
        %2906 = vmatpush1.msra.mxu0 0.0
        %2907 = vmatprep.subr.mxu0 0.0
        %2908 = vmatpush1.msra.mxu0 0.0
        %2909 = vmatprep.subr.mxu0 0.0
        %2910 = vmatpush1.msra.mxu0 0.0
        %2911 = vmatprep.subr.mxu0 0.0
        %2912 = vmatpush1.msra.mxu0 0.0
        %2913 = vmatprep.subr.mxu0 0.0
        %2914 = vmatpush1.msra.mxu0 0.0
        %2915 = vmatprep.subr.mxu0 0.0
        %2916 = vmatpush1.msra.mxu0 0.0
        %2917 = vmatprep.subr.mxu0 0.0
        %2918 = vmatpush1.msra.mxu0 0.0
        %2919 = vmatprep.subr.mxu0 0.0
        %2920 = vmatpush1.msra.mxu0 0.0
        %2921 = vmatprep.subr.mxu0 0.0
        %2922 = vmatpush1.msra.mxu0 0.0
        %2923 = vmatprep.subr.mxu0 0.0
        %2924 = vmatpush1.msra.mxu0 0.0
        %2925 = vmatprep.subr.mxu0 0.0
        %2926 = vmatpush1.msra.mxu0 0.0
        %2927 = vmatprep.subr.mxu0 0.0
        %2928 = vmatpush1.msra.mxu0 0.0
        %2929 = vmatprep.subr.mxu0 0.0
        %2930 = vmatpush1.msra.mxu0 0.0
        %2931 = vmatprep.subr.mxu0 0.0
        %2932 = vmatpush1.msra.mxu0 0.0
        %2933 = vmatprep.mubr.f32.mxu0 0.0
        %2934 = vmatmul.mubr.f32.gmra.mrb[0].mxu0 %v2534
        %v2935 = vpop.f32.mrb[0].mxu0
        %v2936 = vadd.f32 0.0, %v2935
        %v2937 = vpop.f32.mrb[0].mxu0
        %2938 = vmatprep.mubr.f32.mxu0 0.0
        %2939 = vmatmul.mubr.f32.gmra.mrb[0].mxu0 %v2537
        %v2940 = vpop.f32.mrb[0].mxu0
        %v2941 = vadd.f32 0.0, %v2940
        %v2942 = vpop.f32.mrb[0].mxu0
        %2943 = vdwg.mxu0
        %v2944 = vlaneseq
        %v2945 = vshrl.u32 %v2944, 7
        %v2946 = vsub.s32 0, %v2945
        %v2947 = vrot.slane %v2864, %v2946
        %v2948 = vmul.f32 %v2936, %v2947
        %v2949 = vmul.f32 %v2941, %v2947
        %v2950 = vadd.f32 %v2948, 0.0
        %v2951 = vadd.f32 %v2949, 0.0
        %v2952 = vlaneseq
        %v2953 = vshrl.u32 %v2952, 7
        %v2954 = vsub.s32 1, %v2953
        %v2955 = vrot.slane %v2864, %v2954
        %v2956 = vmul.f32 %v2936, %v2955
        %v2957 = vmul.f32 %v2941, %v2955
        %v2960 = vrot.slane %v2956, 1
        %v2961 = vrot.slane %v2957, 1
        %v2962 = vsel %vm1744, %v2960, %v2961
        %v2965 = vadd.f32 %v2950, %v2962
        %v2966 = vadd.f32 %v2951, %v2961
        %v2967 = vlaneseq
        %v2968 = vshrl.u32 %v2967, 7
        %v2969 = vsub.s32 2, %v2968
        %v2970 = vrot.slane %v2864, %v2969
        %v2971 = vmul.f32 %v2936, %v2970
        %v2972 = vmul.f32 %v2941, %v2970
        %v2975 = vrot.slane %v2971, 2
        %v2976 = vrot.slane %v2972, 2
        %v2977 = vsel %vm1910, %v2975, %v2976
        %v2980 = vadd.f32 %v2965, %v2977
        %v2981 = vadd.f32 %v2966, %v2976
        %v2983 = vlaneseq
        %v2984 = vshrl.u32 %v2983, 7
        %v2985 = vsub.s32 0, %v2984
        %v2986 = vrot.slane %v2865, %v2985
        %v2988 = vadd.f32 %v2980, %v2986
        %v2989 = vadd.f32 %v2981, %v2986
        %vm2990 = vcmp.gt.f32.partialorder %v2988, 0.0
        %vm2991 = vcmp.gt.f32.partialorder %v2989, 0.0
        %v2992 = vmul.f32 %v2988, 0.1
        %v2993 = vmul.f32 %v2989, 0.1
        %v2994 = vsel %vm2990, %v2988, %v2992
        %v2995 = vsel %vm2991, %v2989, %v2993
        %v2996 = vld [vmem:[%s73] sm:$0x7f]
        %v2997 = vld [vmem:[#allocation38] sm:$0x1]
        %v2999 = vsel %vm2539, %v2995, 0
        %3001 = vmatprep.subr.mxu0 0.0
        %3002 = vmatpush1.msra.mxu0 %v2994
        %3003 = vmatprep.subr.mxu0 0.0
        %3004 = vmatpush1.msra.mxu0 %v2999
        %3005 = vmatprep.subr.mxu0 0.0
        %3006 = vmatpush1.msra.mxu0 0.0
        %3007 = vmatprep.subr.mxu0 0.0
        %3008 = vmatpush1.msra.mxu0 0.0
        %3009 = vmatprep.subr.mxu0 0.0
        %3010 = vmatpush1.msra.mxu0 0.0
        %3011 = vmatprep.subr.mxu0 0.0
        %3012 = vmatpush1.msra.mxu0 0.0
        %3013 = vmatprep.subr.mxu0 0.0
        %3014 = vmatpush1.msra.mxu0 0.0
        %3015 = vmatprep.subr.mxu0 0.0
        %3016 = vmatpush1.msra.mxu0 0.0
        %3017 = vmatprep.subr.mxu0 0.0
        %3018 = vmatpush1.msra.mxu0 0.0
        %3019 = vmatprep.subr.mxu0 0.0
        %3020 = vmatpush1.msra.mxu0 0.0
        %3021 = vmatprep.subr.mxu0 0.0
        %3022 = vmatpush1.msra.mxu0 0.0
        %3023 = vmatprep.subr.mxu0 0.0
        %3024 = vmatpush1.msra.mxu0 0.0
        %3025 = vmatprep.subr.mxu0 0.0
        %3026 = vmatpush1.msra.mxu0 0.0
        %3027 = vmatprep.subr.mxu0 0.0
        %3028 = vmatpush1.msra.mxu0 0.0
        %3029 = vmatprep.subr.mxu0 0.0
        %3030 = vmatpush1.msra.mxu0 0.0
        %3031 = vmatprep.subr.mxu0 0.0
        %3032 = vmatpush1.msra.mxu0 0.0
        %3033 = vmatprep.subr.mxu0 0.0
        %3034 = vmatpush1.msra.mxu0 0.0
        %3035 = vmatprep.subr.mxu0 0.0
        %3036 = vmatpush1.msra.mxu0 0.0
        %3037 = vmatprep.subr.mxu0 0.0
        %3038 = vmatpush1.msra.mxu0 0.0
        %3039 = vmatprep.subr.mxu0 0.0
        %3040 = vmatpush1.msra.mxu0 0.0
        %3041 = vmatprep.subr.mxu0 0.0
        %3042 = vmatpush1.msra.mxu0 0.0
        %3043 = vmatprep.subr.mxu0 0.0
        %3044 = vmatpush1.msra.mxu0 0.0
        %3045 = vmatprep.subr.mxu0 0.0
        %3046 = vmatpush1.msra.mxu0 0.0
        %3047 = vmatprep.subr.mxu0 0.0
        %3048 = vmatpush1.msra.mxu0 0.0
        %3049 = vmatprep.subr.mxu0 0.0
        %3050 = vmatpush1.msra.mxu0 0.0
        %3051 = vmatprep.subr.mxu0 0.0
        %3052 = vmatpush1.msra.mxu0 0.0
        %3053 = vmatprep.subr.mxu0 0.0
        %3054 = vmatpush1.msra.mxu0 0.0
        %3055 = vmatprep.subr.mxu0 0.0
        %3056 = vmatpush1.msra.mxu0 0.0
        %3057 = vmatprep.subr.mxu0 0.0
        %3058 = vmatpush1.msra.mxu0 0.0
        %3059 = vmatprep.subr.mxu0 0.0
        %3060 = vmatpush1.msra.mxu0 0.0
        %3061 = vmatprep.subr.mxu0 0.0
        %3062 = vmatpush1.msra.mxu0 0.0
        %3063 = vmatprep.subr.mxu0 0.0
        %3064 = vmatpush1.msra.mxu0 0.0
        %3065 = vmatprep.mubr.f32.mxu0 0.0
        %3066 = vmatmul.mubr.f32.gmra.mrb[0].mxu0 %v2675
        %v3067 = vpop.f32.mrb[0].mxu0
        %v3068 = vadd.f32 0.0, %v3067
        %v3069 = vpop.f32.mrb[0].mxu0
        %3070 = vmatprep.mubr.f32.mxu0 0.0
        %3071 = vmatmul.mubr.f32.gmra.mrb[0].mxu0 %v2678
        %v3072 = vpop.f32.mrb[0].mxu0
        %v3073 = vadd.f32 0.0, %v3072
        %v3074 = vpop.f32.mrb[0].mxu0
        %3075 = vdwg.mxu0
        %v3076 = vlaneseq
        %v3077 = vshrl.u32 %v3076, 7
        %v3078 = vsub.s32 0, %v3077
        %v3079 = vrot.slane %v2996, %v3078
        %v3080 = vmul.f32 %v3068, %v3079
        %v3081 = vmul.f32 %v3073, %v3079
        %v3082 = vadd.f32 %v3080, 0.0
        %v3083 = vadd.f32 %v3081, 0.0
        %v3084 = vlaneseq
        %v3085 = vshrl.u32 %v3084, 7
        %v3086 = vsub.s32 1, %v3085
        %v3087 = vrot.slane %v2996, %v3086
        %v3088 = vmul.f32 %v3068, %v3087
        %v3089 = vmul.f32 %v3073, %v3087
        %v3092 = vrot.slane %v3088, 1
        %v3093 = vrot.slane %v3089, 1
        %v3094 = vsel %vm1744, %v3092, %v3093
        %v3097 = vadd.f32 %v3082, %v3094
        %v3098 = vadd.f32 %v3083, %v3093
        %v3099 = vlaneseq
        %v3100 = vshrl.u32 %v3099, 7
        %v3101 = vsub.s32 2, %v3100
        %v3102 = vrot.slane %v2996, %v3101
        %v3103 = vmul.f32 %v3068, %v3102
        %v3104 = vmul.f32 %v3073, %v3102
        %v3107 = vrot.slane %v3103, 2
        %v3108 = vrot.slane %v3104, 2
        %v3109 = vsel %vm1910, %v3107, %v3108
        %v3112 = vadd.f32 %v3097, %v3109
        %v3113 = vadd.f32 %v3098, %v3108
        %v3114 = vlaneseq
        %v3115 = vshrl.u32 %v3114, 7
        %v3116 = vsub.s32 3, %v3115
        %v3117 = vrot.slane %v2996, %v3116
        %v3118 = vmul.f32 %v3068, %v3117
        %v3119 = vmul.f32 %v3073, %v3117
        %v3122 = vrot.slane %v3118, 3
        %v3123 = vrot.slane %v3119, 3
        %v3124 = vsel %vm1999, %v3122, %v3123
        %v3127 = vadd.f32 %v3112, %v3124
        %v3128 = vadd.f32 %v3113, %v3123
        %v3129 = vlaneseq
        %v3130 = vshrl.u32 %v3129, 7
        %v3131 = vsub.s32 4, %v3130
        %v3132 = vrot.slane %v2996, %v3131
        %v3133 = vmul.f32 %v3068, %v3132
        %v3134 = vmul.f32 %v3073, %v3132
        %v3137 = vrot.slane %v3133, 4
        %v3138 = vrot.slane %v3134, 4
        %v3139 = vsel %vm2088, %v3137, %v3138
        %v3142 = vadd.f32 %v3127, %v3139
        %v3143 = vadd.f32 %v3128, %v3138
        %v3144 = vlaneseq
        %v3145 = vshrl.u32 %v3144, 7
        %v3146 = vsub.s32 5, %v3145
        %v3147 = vrot.slane %v2996, %v3146
        %v3148 = vmul.f32 %v3068, %v3147
        %v3149 = vmul.f32 %v3073, %v3147
        %v3152 = vrot.slane %v3148, 5
        %v3153 = vrot.slane %v3149, 5
        %v3154 = vsel %vm2177, %v3152, %v3153
        %v3157 = vadd.f32 %v3142, %v3154
        %v3158 = vadd.f32 %v3143, %v3153
        %v3159 = vlaneseq
        %v3160 = vshrl.u32 %v3159, 7
        %v3161 = vsub.s32 6, %v3160
        %v3162 = vrot.slane %v2996, %v3161
        %v3163 = vmul.f32 %v3068, %v3162
        %v3164 = vmul.f32 %v3073, %v3162
        %v3167 = vrot.slane %v3163, 6
        %v3168 = vrot.slane %v3164, 6
        %v3169 = vsel %vm2266, %v3167, %v3168
        %v3172 = vadd.f32 %v3157, %v3169
        %v3173 = vadd.f32 %v3158, %v3168
        %v3175 = vlaneseq
        %v3176 = vshrl.u32 %v3175, 7
        %v3177 = vsub.s32 0, %v3176
        %v3178 = vrot.slane %v2997, %v3177
        %v3180 = vadd.f32 %v3172, %v3178
        %v3181 = vadd.f32 %v3173, %v3178
        %v3182 = vld [vmem:[#allocation32] sm:$0xff]
        %v3183 = vld [vmem:[#allocation32 + $0x8] sm:$0xff]
        %v3184 = vld [vmem:[#allocation31] sm:$0xff]
        %v3185 = vld [vmem:[#allocation31 + $0x8] sm:$0xff]
        %v3187 = vsel %vm2532, %v3184, 0
        %v3190 = vsel %vm2532, %v3185, 0
        %v3193 = vsel %vm2539, %v3181, 0
        %3195 = vmatprep.subr.mxu0 0.0
        %3196 = vmatpush1.msra.mxu0 %v3180
        %3197 = vmatprep.subr.mxu0 0.0
        %3198 = vmatpush1.msra.mxu0 %v3193
        %3199 = vmatprep.subr.mxu0 0.0
        %3200 = vmatpush1.msra.mxu0 0.0
        %3201 = vmatprep.subr.mxu0 0.0
        %3202 = vmatpush1.msra.mxu0 0.0
        %3203 = vmatprep.subr.mxu0 0.0
        %3204 = vmatpush1.msra.mxu0 0.0
        %3205 = vmatprep.subr.mxu0 0.0
        %3206 = vmatpush1.msra.mxu0 0.0
        %3207 = vmatprep.subr.mxu0 0.0
        %3208 = vmatpush1.msra.mxu0 0.0
        %3209 = vmatprep.subr.mxu0 0.0
        %3210 = vmatpush1.msra.mxu0 0.0
        %3211 = vmatprep.subr.mxu0 0.0
        %3212 = vmatpush1.msra.mxu0 0.0
        %3213 = vmatprep.subr.mxu0 0.0
        %3214 = vmatpush1.msra.mxu0 0.0
        %3215 = vmatprep.subr.mxu0 0.0
        %3216 = vmatpush1.msra.mxu0 0.0
        %3217 = vmatprep.subr.mxu0 0.0
        %3218 = vmatpush1.msra.mxu0 0.0
        %3219 = vmatprep.subr.mxu0 0.0
        %3220 = vmatpush1.msra.mxu0 0.0
        %3221 = vmatprep.subr.mxu0 0.0
        %3222 = vmatpush1.msra.mxu0 0.0
        %3223 = vmatprep.subr.mxu0 0.0
        %3224 = vmatpush1.msra.mxu0 0.0
        %3225 = vmatprep.subr.mxu0 0.0
        %3226 = vmatpush1.msra.mxu0 0.0
        %3227 = vmatprep.subr.mxu0 0.0
        %3228 = vmatpush1.msra.mxu0 0.0
        %3229 = vmatprep.subr.mxu0 0.0
        %3230 = vmatpush1.msra.mxu0 0.0
        %3231 = vmatprep.subr.mxu0 0.0
        %3232 = vmatpush1.msra.mxu0 0.0
        %3233 = vmatprep.subr.mxu0 0.0
        %3234 = vmatpush1.msra.mxu0 0.0
        %3235 = vmatprep.subr.mxu0 0.0
        %3236 = vmatpush1.msra.mxu0 0.0
        %3237 = vmatprep.subr.mxu0 0.0
        %3238 = vmatpush1.msra.mxu0 0.0
        %3239 = vmatprep.subr.mxu0 0.0
        %3240 = vmatpush1.msra.mxu0 0.0
        %3241 = vmatprep.subr.mxu0 0.0
        %3242 = vmatpush1.msra.mxu0 0.0
        %3243 = vmatprep.subr.mxu0 0.0
        %3244 = vmatpush1.msra.mxu0 0.0
        %3245 = vmatprep.subr.mxu0 0.0
        %3246 = vmatpush1.msra.mxu0 0.0
        %3247 = vmatprep.subr.mxu0 0.0
        %3248 = vmatpush1.msra.mxu0 0.0
        %3249 = vmatprep.subr.mxu0 0.0
        %3250 = vmatpush1.msra.mxu0 0.0
        %3251 = vmatprep.subr.mxu0 0.0
        %3252 = vmatpush1.msra.mxu0 0.0
        %3253 = vmatprep.subr.mxu0 0.0
        %3254 = vmatpush1.msra.mxu0 0.0
        %3255 = vmatprep.subr.mxu0 0.0
        %3256 = vmatpush1.msra.mxu0 0.0
        %3257 = vmatprep.subr.mxu0 0.0
        %3258 = vmatpush1.msra.mxu0 0.0
        %3259 = vmatprep.mubr.f32.mxu0 0.0
        %3260 = vmatmul.mubr.f32.gmra.mrb[0].mxu0 %v3187
        %v3261 = vpop.f32.mrb[0].mxu0
        %v3262 = vadd.f32 0.0, %v3261
        %v3263 = vpop.f32.mrb[0].mxu0
        %3264 = vmatprep.mubr.f32.mxu0 0.0
        %3265 = vmatmul.mubr.f32.gmra.mrb[0].mxu0 %v3190
        %v3266 = vpop.f32.mrb[0].mxu0
        %v3267 = vadd.f32 0.0, %v3266
        %v3268 = vpop.f32.mrb[0].mxu0
        %3269 = vdwg.mxu0
        %v3271 = vsel %vm2532, %v3182, 0
        %v3274 = vsel %vm2532, %v3183, 0
        %v3277 = vsel %vm2539, %v2863, 0
        %3279 = vmatprep.subr.mxu0 0.0
        %3280 = vmatpush1.msra.mxu0 %v2862
        %3281 = vmatprep.subr.mxu0 0.0
        %3282 = vmatpush1.msra.mxu0 %v3277
        %3283 = vmatprep.subr.mxu0 0.0
        %3284 = vmatpush1.msra.mxu0 0.0
        %3285 = vmatprep.subr.mxu0 0.0
        %3286 = vmatpush1.msra.mxu0 0.0
        %3287 = vmatprep.subr.mxu0 0.0
        %3288 = vmatpush1.msra.mxu0 0.0
        %3289 = vmatprep.subr.mxu0 0.0
        %3290 = vmatpush1.msra.mxu0 0.0
        %3291 = vmatprep.subr.mxu0 0.0
        %3292 = vmatpush1.msra.mxu0 0.0
        %3293 = vmatprep.subr.mxu0 0.0
        %3294 = vmatpush1.msra.mxu0 0.0
        %3295 = vmatprep.subr.mxu0 0.0
        %3296 = vmatpush1.msra.mxu0 0.0
        %3297 = vmatprep.subr.mxu0 0.0
        %3298 = vmatpush1.msra.mxu0 0.0
        %3299 = vmatprep.subr.mxu0 0.0
        %3300 = vmatpush1.msra.mxu0 0.0
        %3301 = vmatprep.subr.mxu0 0.0
        %3302 = vmatpush1.msra.mxu0 0.0
        %3303 = vmatprep.subr.mxu0 0.0
        %3304 = vmatpush1.msra.mxu0 0.0
        %3305 = vmatprep.subr.mxu0 0.0
        %3306 = vmatpush1.msra.mxu0 0.0
        %3307 = vmatprep.subr.mxu0 0.0
        %3308 = vmatpush1.msra.mxu0 0.0
        %3309 = vmatprep.subr.mxu0 0.0
        %3310 = vmatpush1.msra.mxu0 0.0
        %3311 = vmatprep.subr.mxu0 0.0
        %3312 = vmatpush1.msra.mxu0 0.0
        %3313 = vmatprep.subr.mxu0 0.0
        %3314 = vmatpush1.msra.mxu0 0.0
        %3315 = vmatprep.subr.mxu0 0.0
        %3316 = vmatpush1.msra.mxu0 0.0
        %3317 = vmatprep.subr.mxu0 0.0
        %3318 = vmatpush1.msra.mxu0 0.0
        %3319 = vmatprep.subr.mxu0 0.0
        %3320 = vmatpush1.msra.mxu0 0.0
        %3321 = vmatprep.subr.mxu0 0.0
        %3322 = vmatpush1.msra.mxu0 0.0
        %3323 = vmatprep.subr.mxu0 0.0
        %3324 = vmatpush1.msra.mxu0 0.0
        %3325 = vmatprep.subr.mxu0 0.0
        %3326 = vmatpush1.msra.mxu0 0.0
        %3327 = vmatprep.subr.mxu0 0.0
        %3328 = vmatpush1.msra.mxu0 0.0
        %3329 = vmatprep.subr.mxu0 0.0
        %3330 = vmatpush1.msra.mxu0 0.0
        %3331 = vmatprep.subr.mxu0 0.0
        %3332 = vmatpush1.msra.mxu0 0.0
        %3333 = vmatprep.subr.mxu0 0.0
        %3334 = vmatpush1.msra.mxu0 0.0
        %3335 = vmatprep.subr.mxu0 0.0
        %3336 = vmatpush1.msra.mxu0 0.0
        %3337 = vmatprep.subr.mxu0 0.0
        %3338 = vmatpush1.msra.mxu0 0.0
        %3339 = vmatprep.subr.mxu0 0.0
        %3340 = vmatpush1.msra.mxu0 0.0
        %3341 = vmatprep.subr.mxu0 0.0
        %3342 = vmatpush1.msra.mxu0 0.0
        %3343 = vmatprep.mubr.f32.mxu0 0.0
        %3344 = vmatmul.mubr.f32.gmra.mrb[0].mxu0 %v3271
        %v3345 = vpop.f32.mrb[0].mxu0
        %v3346 = vadd.f32 %v3262, %v3345
        %v3347 = vpop.f32.mrb[0].mxu0
        %3348 = vmatprep.mubr.f32.mxu0 0.0
        %3349 = vmatmul.mubr.f32.gmra.mrb[0].mxu0 %v3274
        %v3350 = vpop.f32.mrb[0].mxu0
        %v3351 = vadd.f32 %v3267, %v3350
        %v3352 = vpop.f32.mrb[0].mxu0
        %3353 = vdwg.mxu0
        %v3354 = vld [vmem:[%s55] sm:$0xff]
        %v3355 = vld [vmem:[%s55 + $0x8] sm:$0xff]
        %v3356 = vld [vmem:[%s55 + $0x10] sm:$0x3]
        %v3358 = vsel %vm1648, %v3354, 0
        %v3361 = vsel %vm1648, %v3355, 0
        %v3364 = vsel %vm1648, %v3356, 0
        %3366 = vmatprep.subr.mxu0 0.0
        %3367 = vmatpush1.msra.mxu0 %v3346
        %3368 = vmatprep.subr.mxu0 0.0
        %3369 = vmatpush1.msra.mxu0 %v3351
        %3370 = vmatprep.subr.mxu0 0.0
        %3371 = vmatpush1.msra.mxu0 0.0
        %3372 = vmatprep.subr.mxu0 0.0
        %3373 = vmatpush1.msra.mxu0 0.0
        %3374 = vmatprep.subr.mxu0 0.0
        %3375 = vmatpush1.msra.mxu0 0.0
        %3376 = vmatprep.subr.mxu0 0.0
        %3377 = vmatpush1.msra.mxu0 0.0
        %3378 = vmatprep.subr.mxu0 0.0
        %3379 = vmatpush1.msra.mxu0 0.0
        %3380 = vmatprep.subr.mxu0 0.0
        %3381 = vmatpush1.msra.mxu0 0.0
        %3382 = vmatprep.subr.mxu0 0.0
        %3383 = vmatpush1.msra.mxu0 0.0
        %3384 = vmatprep.subr.mxu0 0.0
        %3385 = vmatpush1.msra.mxu0 0.0
        %3386 = vmatprep.subr.mxu0 0.0
        %3387 = vmatpush1.msra.mxu0 0.0
        %3388 = vmatprep.subr.mxu0 0.0
        %3389 = vmatpush1.msra.mxu0 0.0
        %3390 = vmatprep.subr.mxu0 0.0
        %3391 = vmatpush1.msra.mxu0 0.0
        %3392 = vmatprep.subr.mxu0 0.0
        %3393 = vmatpush1.msra.mxu0 0.0
        %3394 = vmatprep.subr.mxu0 0.0
        %3395 = vmatpush1.msra.mxu0 0.0
        %3396 = vmatprep.subr.mxu0 0.0
        %3397 = vmatpush1.msra.mxu0 0.0
        %3398 = vmatprep.subr.mxu0 0.0
        %3399 = vmatpush1.msra.mxu0 0.0
        %3400 = vmatprep.subr.mxu0 0.0
        %3401 = vmatpush1.msra.mxu0 0.0
        %3402 = vmatprep.subr.mxu0 0.0
        %3403 = vmatpush1.msra.mxu0 0.0
        %3404 = vmatprep.subr.mxu0 0.0
        %3405 = vmatpush1.msra.mxu0 0.0
        %3406 = vmatprep.subr.mxu0 0.0
        %3407 = vmatpush1.msra.mxu0 0.0
        %3408 = vmatprep.subr.mxu0 0.0
        %3409 = vmatpush1.msra.mxu0 0.0
        %3410 = vmatprep.subr.mxu0 0.0
        %3411 = vmatpush1.msra.mxu0 0.0
        %3412 = vmatprep.subr.mxu0 0.0
        %3413 = vmatpush1.msra.mxu0 0.0
        %3414 = vmatprep.subr.mxu0 0.0
        %3415 = vmatpush1.msra.mxu0 0.0
        %3416 = vmatprep.subr.mxu0 0.0
        %3417 = vmatpush1.msra.mxu0 0.0
        %3418 = vmatprep.subr.mxu0 0.0
        %3419 = vmatpush1.msra.mxu0 0.0
        %3420 = vmatprep.subr.mxu0 0.0
        %3421 = vmatpush1.msra.mxu0 0.0
        %3422 = vmatprep.subr.mxu0 0.0
        %3423 = vmatpush1.msra.mxu0 0.0
        %3424 = vmatprep.subr.mxu0 0.0
        %3425 = vmatpush1.msra.mxu0 0.0
        %3426 = vmatprep.subr.mxu0 0.0
        %3427 = vmatpush1.msra.mxu0 0.0
        %3428 = vmatprep.subr.mxu0 0.0
        %3429 = vmatpush1.msra.mxu0 0.0
        %3430 = vmatprep.mubr.f32.mxu0 0.0
        %3431 = vmatmul.mubr.f32.gmra.mrb[0].mxu0 %v3358
        %v3432 = vpop.f32.mrb[0].mxu0
        %v3433 = vadd.f32 0.0, %v3432
        %v3434 = vpop.f32.mrb[0].mxu0
        %3435 = vmatprep.mubr.f32.mxu0 0.0
        %3436 = vmatmul.mubr.f32.gmra.mrb[0].mxu0 %v3361
        %v3437 = vpop.f32.mrb[0].mxu0
        %v3438 = vadd.f32 0.0, %v3437
        %v3439 = vpop.f32.mrb[0].mxu0
        %3440 = vmatprep.mubr.f32.mxu0 0.0
        %3441 = vmatmul.mubr.f32.gmra.mrb[0].mxu0 %v3364
        %v3442 = vpop.f32.mrb[0].mxu0
        %v3443 = vadd.f32 0.0, %v3442
        %v3444 = vpop.f32.mrb[0].mxu0
        %3445 = vdwg.mxu0
        %v3446 = vld [vmem:[%s37] sm:$0xff]
        %v3447 = vld [vmem:[%s37 + $0x8] sm:$0xff]
        %v3448 = vld [vmem:[%s37 + $0x10] sm:$0xff]
        %v3449 = vld [vmem:[%s37 + $0x18] sm:$0xff]
        %v3450 = vld [vmem:[%s37 + $0x20] sm:$0xff]
        %v3451 = vld [vmem:[%s37 + $0x28] sm:$0xff]
        %v3452 = vld [vmem:[%s37 + $0x30] sm:$0xff]
        %v3453 = vld [vmem:[%s37 + $0x38] sm:$0xff]
        %v3454 = vld [vmem:[%s37 + $0x40] sm:$0xff]
        %v3455 = vld [vmem:[%s37 + $0x48] sm:$0xff]
        %v3456 = vld [vmem:[%s37 + $0x50] sm:$0xff]
        %v3457 = vld [vmem:[%s37 + $0x58] sm:$0xff]
        %v3458 = vld [vmem:[%s37 + $0x60] sm:$0xff]
        %v3459 = vld [vmem:[%s37 + $0x68] sm:$0xff]
        %v3460 = vld [vmem:[%s37 + $0x70] sm:$0xff]
        %v3461 = vld [vmem:[%s37 + $0x78] sm:$0xff]
        %s3462 = scalar_lea.vmem %s37, 128
        %v3463 = vld [vmem:[%s3462] sm:$0xff]
        %v3464 = vld [vmem:[%s3462 + $0x8] sm:$0xff]
        %v3465 = vld [vmem:[%s3462 + $0x10] sm:$0xff]
        %v3466 = vld [vmem:[%s3462 + $0x18] sm:$0xff]
        %v3467 = vld [vmem:[%s3462 + $0x20] sm:$0xff]
        %v3468 = vld [vmem:[%s3462 + $0x28] sm:$0xff]
        %v3469 = vld [vmem:[%s3462 + $0x30] sm:$0xff]
        %v3470 = vld [vmem:[%s3462 + $0x38] sm:$0xff]
        %v3471 = vld [vmem:[%s3462 + $0x40] sm:$0xff]
        %v3472 = vld [vmem:[%s3462 + $0x48] sm:$0xff]
        %v3473 = vld [vmem:[%s3462 + $0x50] sm:$0xff]
        %v3474 = vld [vmem:[%s3462 + $0x58] sm:$0xff]
        %v3475 = vld [vmem:[%s3462 + $0x60] sm:$0xff]
        %v3476 = vld [vmem:[%s3462 + $0x68] sm:$0xff]
        %v3477 = vld [vmem:[%s3462 + $0x70] sm:$0xff]
        %v3478 = vld [vmem:[%s3462 + $0x78] sm:$0xff]
        %v3482 = vrot.slane %v3433, 1
        %v3483 = vrot.slane %v3438, 1
        %v3484 = vsel %vm1744, %v3482, %v3483
        %v3485 = vrot.slane %v3443, 1
        %v3486 = vsel %vm1744, %v3483, %v3485
        %3489 = vmatprep.subr.mxu0 0.0
        %3490 = vmatpush1.msra.mxu0 %v3463
        %3491 = vmatprep.subr.mxu0 0.0
        %3492 = vmatpush1.msra.mxu0 %v3464
        %3493 = vmatprep.subr.mxu0 0.0
        %3494 = vmatpush1.msra.mxu0 %v3465
        %3495 = vmatprep.subr.mxu0 0.0
        %3496 = vmatpush1.msra.mxu0 %v3466
        %3497 = vmatprep.subr.mxu0 0.0
        %3498 = vmatpush1.msra.mxu0 %v3467
        %3499 = vmatprep.subr.mxu0 0.0
        %3500 = vmatpush1.msra.mxu0 %v3468
        %3501 = vmatprep.subr.mxu0 0.0
        %3502 = vmatpush1.msra.mxu0 %v3469
        %3503 = vmatprep.subr.mxu0 0.0
        %3504 = vmatpush1.msra.mxu0 %v3470
        %3505 = vmatprep.subr.mxu0 0.0
        %3506 = vmatpush1.msra.mxu0 %v3471
        %3507 = vmatprep.subr.mxu0 0.0
        %3508 = vmatpush1.msra.mxu0 %v3472
        %3509 = vmatprep.subr.mxu0 0.0
        %3510 = vmatpush1.msra.mxu0 %v3473
        %3511 = vmatprep.subr.mxu0 0.0
        %3512 = vmatpush1.msra.mxu0 %v3474
        %3513 = vmatprep.subr.mxu0 0.0
        %3514 = vmatpush1.msra.mxu0 %v3475
        %3515 = vmatprep.subr.mxu0 0.0
        %3516 = vmatpush1.msra.mxu0 %v3476
        %3517 = vmatprep.subr.mxu0 0.0
        %3518 = vmatpush1.msra.mxu0 %v3477
        %3519 = vmatprep.subr.mxu0 0.0
        %3520 = vmatpush1.msra.mxu0 %v3478
        %3521 = vmatprep.subr.mxu0 0.0
        %3522 = vmatpush1.msra.mxu0 0.0
        %3523 = vmatprep.subr.mxu0 0.0
        %3524 = vmatpush1.msra.mxu0 0.0
        %3525 = vmatprep.subr.mxu0 0.0
        %3526 = vmatpush1.msra.mxu0 0.0
        %3527 = vmatprep.subr.mxu0 0.0
        %3528 = vmatpush1.msra.mxu0 0.0
        %3529 = vmatprep.subr.mxu0 0.0
        %3530 = vmatpush1.msra.mxu0 0.0
        %3531 = vmatprep.subr.mxu0 0.0
        %3532 = vmatpush1.msra.mxu0 0.0
        %3533 = vmatprep.subr.mxu0 0.0
        %3534 = vmatpush1.msra.mxu0 0.0
        %3535 = vmatprep.subr.mxu0 0.0
        %3536 = vmatpush1.msra.mxu0 0.0
        %3537 = vmatprep.subr.mxu0 0.0
        %3538 = vmatpush1.msra.mxu0 0.0
        %3539 = vmatprep.subr.mxu0 0.0
        %3540 = vmatpush1.msra.mxu0 0.0
        %3541 = vmatprep.subr.mxu0 0.0
        %3542 = vmatpush1.msra.mxu0 0.0
        %3543 = vmatprep.subr.mxu0 0.0
        %3544 = vmatpush1.msra.mxu0 0.0
        %3545 = vmatprep.subr.mxu0 0.0
        %3546 = vmatpush1.msra.mxu0 0.0
        %3547 = vmatprep.subr.mxu0 0.0
        %3548 = vmatpush1.msra.mxu0 0.0
        %3549 = vmatprep.subr.mxu0 0.0
        %3550 = vmatpush1.msra.mxu0 0.0
        %3551 = vmatprep.subr.mxu0 0.0
        %3552 = vmatpush1.msra.mxu0 0.0
        %3553 = vmatprep.mubr.f32.mxu0 0.0
        %3554 = vmatmul.mubr.f32.gmra.mrb[0].mxu0 %v3484
        %v3555 = vpop.f32.mrb[0].mxu0
        %v3556 = vadd.f32 0.0, %v3555
        %v3557 = vpop.f32.mrb[0].mxu0
        %3558 = vmatprep.mubr.f32.mxu0 0.0
        %3559 = vmatmul.mubr.f32.gmra.mrb[0].mxu0 %v3486
        %v3560 = vpop.f32.mrb[0].mxu0
        %v3561 = vadd.f32 0.0, %v3560
        %v3562 = vpop.f32.mrb[0].mxu0
        %3563 = vdwg.mxu0
        %3564 = vmatprep.subr.mxu0 0.0
        %3565 = vmatpush1.msra.mxu0 %v3446
        %3566 = vmatprep.subr.mxu0 0.0
        %3567 = vmatpush1.msra.mxu0 %v3447
        %3568 = vmatprep.subr.mxu0 0.0
        %3569 = vmatpush1.msra.mxu0 %v3448
        %3570 = vmatprep.subr.mxu0 0.0
        %3571 = vmatpush1.msra.mxu0 %v3449
        %3572 = vmatprep.subr.mxu0 0.0
        %3573 = vmatpush1.msra.mxu0 %v3450
        %3574 = vmatprep.subr.mxu0 0.0
        %3575 = vmatpush1.msra.mxu0 %v3451
        %3576 = vmatprep.subr.mxu0 0.0
        %3577 = vmatpush1.msra.mxu0 %v3452
        %3578 = vmatprep.subr.mxu0 0.0
        %3579 = vmatpush1.msra.mxu0 %v3453
        %3580 = vmatprep.subr.mxu0 0.0
        %3581 = vmatpush1.msra.mxu0 %v3454
        %3582 = vmatprep.subr.mxu0 0.0
        %3583 = vmatpush1.msra.mxu0 %v3455
        %3584 = vmatprep.subr.mxu0 0.0
        %3585 = vmatpush1.msra.mxu0 %v3456
        %3586 = vmatprep.subr.mxu0 0.0
        %3587 = vmatpush1.msra.mxu0 %v3457
        %3588 = vmatprep.subr.mxu0 0.0
        %3589 = vmatpush1.msra.mxu0 %v3458
        %3590 = vmatprep.subr.mxu0 0.0
        %3591 = vmatpush1.msra.mxu0 %v3459
        %3592 = vmatprep.subr.mxu0 0.0
        %3593 = vmatpush1.msra.mxu0 %v3460
        %3594 = vmatprep.subr.mxu0 0.0
        %3595 = vmatpush1.msra.mxu0 %v3461
        %3596 = vmatprep.subr.mxu0 0.0
        %3597 = vmatpush1.msra.mxu0 0.0
        %3598 = vmatprep.subr.mxu0 0.0
        %3599 = vmatpush1.msra.mxu0 0.0
        %3600 = vmatprep.subr.mxu0 0.0
        %3601 = vmatpush1.msra.mxu0 0.0
        %3602 = vmatprep.subr.mxu0 0.0
        %3603 = vmatpush1.msra.mxu0 0.0
        %3604 = vmatprep.subr.mxu0 0.0
        %3605 = vmatpush1.msra.mxu0 0.0
        %3606 = vmatprep.subr.mxu0 0.0
        %3607 = vmatpush1.msra.mxu0 0.0
        %3608 = vmatprep.subr.mxu0 0.0
        %3609 = vmatpush1.msra.mxu0 0.0
        %3610 = vmatprep.subr.mxu0 0.0
        %3611 = vmatpush1.msra.mxu0 0.0
        %3612 = vmatprep.subr.mxu0 0.0
        %3613 = vmatpush1.msra.mxu0 0.0
        %3614 = vmatprep.subr.mxu0 0.0
        %3615 = vmatpush1.msra.mxu0 0.0
        %3616 = vmatprep.subr.mxu0 0.0
        %3617 = vmatpush1.msra.mxu0 0.0
        %3618 = vmatprep.subr.mxu0 0.0
        %3619 = vmatpush1.msra.mxu0 0.0
        %3620 = vmatprep.subr.mxu0 0.0
        %3621 = vmatpush1.msra.mxu0 0.0
        %3622 = vmatprep.subr.mxu0 0.0
        %3623 = vmatpush1.msra.mxu0 0.0
        %3624 = vmatprep.subr.mxu0 0.0
        %3625 = vmatpush1.msra.mxu0 0.0
        %3626 = vmatprep.subr.mxu0 0.0
        %3627 = vmatpush1.msra.mxu0 0.0
        %3628 = vmatprep.mubr.f32.mxu0 0.0
        %3629 = vmatmul.mubr.f32.gmra.mrb[0].mxu0 %v3433
        %v3630 = vpop.f32.mrb[0].mxu0
        %v3631 = vadd.f32 %v3556, %v3630
        %v3632 = vpop.f32.mrb[0].mxu0
        %3633 = vmatprep.mubr.f32.mxu0 0.0
        %3634 = vmatmul.mubr.f32.gmra.mrb[0].mxu0 %v3438
        %v3635 = vpop.f32.mrb[0].mxu0
        %v3636 = vadd.f32 %v3561, %v3635
        %v3637 = vpop.f32.mrb[0].mxu0
        %3638 = vdwg.mxu0
        %s3639 = scalar_lea.vmem %s37, 256
        %v3640 = vld [vmem:[%s3639] sm:$0xff]
        %v3641 = vld [vmem:[%s3639 + $0x8] sm:$0xff]
        %v3642 = vld [vmem:[%s3639 + $0x10] sm:$0xff]
        %v3643 = vld [vmem:[%s3639 + $0x18] sm:$0xff]
        %v3644 = vld [vmem:[%s3639 + $0x20] sm:$0xff]
        %v3645 = vld [vmem:[%s3639 + $0x28] sm:$0xff]
        %v3646 = vld [vmem:[%s3639 + $0x30] sm:$0xff]
        %v3647 = vld [vmem:[%s3639 + $0x38] sm:$0xff]
        %v3648 = vld [vmem:[%s3639 + $0x40] sm:$0xff]
        %v3649 = vld [vmem:[%s3639 + $0x48] sm:$0xff]
        %v3650 = vld [vmem:[%s3639 + $0x50] sm:$0xff]
        %v3651 = vld [vmem:[%s3639 + $0x58] sm:$0xff]
        %v3652 = vld [vmem:[%s3639 + $0x60] sm:$0xff]
        %v3653 = vld [vmem:[%s3639 + $0x68] sm:$0xff]
        %v3654 = vld [vmem:[%s3639 + $0x70] sm:$0xff]
        %v3655 = vld [vmem:[%s3639 + $0x78] sm:$0xff]
        %v3656 = vrot.slane %v3433, 2
        %v3657 = vrot.slane %v3438, 2
        %v3658 = vsel %vm1910, %v3656, %v3657
        %v3659 = vrot.slane %v3443, 2
        %v3660 = vsel %vm1910, %v3657, %v3659
        %3663 = vmatprep.subr.mxu0 0.0
        %3664 = vmatpush1.msra.mxu0 %v3640
        %3665 = vmatprep.subr.mxu0 0.0
        %3666 = vmatpush1.msra.mxu0 %v3641
        %3667 = vmatprep.subr.mxu0 0.0
        %3668 = vmatpush1.msra.mxu0 %v3642
        %3669 = vmatprep.subr.mxu0 0.0
        %3670 = vmatpush1.msra.mxu0 %v3643
        %3671 = vmatprep.subr.mxu0 0.0
        %3672 = vmatpush1.msra.mxu0 %v3644
        %3673 = vmatprep.subr.mxu0 0.0
        %3674 = vmatpush1.msra.mxu0 %v3645
        %3675 = vmatprep.subr.mxu0 0.0
        %3676 = vmatpush1.msra.mxu0 %v3646
        %3677 = vmatprep.subr.mxu0 0.0
        %3678 = vmatpush1.msra.mxu0 %v3647
        %3679 = vmatprep.subr.mxu0 0.0
        %3680 = vmatpush1.msra.mxu0 %v3648
        %3681 = vmatprep.subr.mxu0 0.0
        %3682 = vmatpush1.msra.mxu0 %v3649
        %3683 = vmatprep.subr.mxu0 0.0
        %3684 = vmatpush1.msra.mxu0 %v3650
        %3685 = vmatprep.subr.mxu0 0.0
        %3686 = vmatpush1.msra.mxu0 %v3651
        %3687 = vmatprep.subr.mxu0 0.0
        %3688 = vmatpush1.msra.mxu0 %v3652
        %3689 = vmatprep.subr.mxu0 0.0
        %3690 = vmatpush1.msra.mxu0 %v3653
        %3691 = vmatprep.subr.mxu0 0.0
        %3692 = vmatpush1.msra.mxu0 %v3654
        %3693 = vmatprep.subr.mxu0 0.0
        %3694 = vmatpush1.msra.mxu0 %v3655
        %3695 = vmatprep.subr.mxu0 0.0
        %3696 = vmatpush1.msra.mxu0 0.0
        %3697 = vmatprep.subr.mxu0 0.0
        %3698 = vmatpush1.msra.mxu0 0.0
        %3699 = vmatprep.subr.mxu0 0.0
        %3700 = vmatpush1.msra.mxu0 0.0
        %3701 = vmatprep.subr.mxu0 0.0
        %3702 = vmatpush1.msra.mxu0 0.0
        %3703 = vmatprep.subr.mxu0 0.0
        %3704 = vmatpush1.msra.mxu0 0.0
        %3705 = vmatprep.subr.mxu0 0.0
        %3706 = vmatpush1.msra.mxu0 0.0
        %3707 = vmatprep.subr.mxu0 0.0
        %3708 = vmatpush1.msra.mxu0 0.0
        %3709 = vmatprep.subr.mxu0 0.0
        %3710 = vmatpush1.msra.mxu0 0.0
        %3711 = vmatprep.subr.mxu0 0.0
        %3712 = vmatpush1.msra.mxu0 0.0
        %3713 = vmatprep.subr.mxu0 0.0
        %3714 = vmatpush1.msra.mxu0 0.0
        %3715 = vmatprep.subr.mxu0 0.0
        %3716 = vmatpush1.msra.mxu0 0.0
        %3717 = vmatprep.subr.mxu0 0.0
        %3718 = vmatpush1.msra.mxu0 0.0
        %3719 = vmatprep.subr.mxu0 0.0
        %3720 = vmatpush1.msra.mxu0 0.0
        %3721 = vmatprep.subr.mxu0 0.0
        %3722 = vmatpush1.msra.mxu0 0.0
        %3723 = vmatprep.subr.mxu0 0.0
        %3724 = vmatpush1.msra.mxu0 0.0
        %3725 = vmatprep.subr.mxu0 0.0
        %3726 = vmatpush1.msra.mxu0 0.0
        %3727 = vmatprep.mubr.f32.mxu0 0.0
        %3728 = vmatmul.mubr.f32.gmra.mrb[0].mxu0 %v3658
        %v3729 = vpop.f32.mrb[0].mxu0
        %v3730 = vadd.f32 0.0, %v3729
        %v3731 = vpop.f32.mrb[0].mxu0
        %3732 = vmatprep.mubr.f32.mxu0 0.0
        %3733 = vmatmul.mubr.f32.gmra.mrb[0].mxu0 %v3660
        %v3734 = vpop.f32.mrb[0].mxu0
        %v3735 = vadd.f32 0.0, %v3734
        %v3736 = vpop.f32.mrb[0].mxu0
        %3737 = vdwg.mxu0
        %v3738 = vadd.f32 %v3631, %v3730
        %v3739 = vadd.f32 %v3636, %v3735
        %v3740 = vld [vmem:[#allocation23] sm:$0x1]
        %v3742 = vlaneseq
        %v3743 = vshrl.u32 %v3742, 7
        %v3744 = vsub.s32 0, %v3743
        %v3745 = vrot.slane %v3740, %v3744
        %v3747 = vadd.f32 %v3738, %v3745
        %v3748 = vadd.f32 %v3739, %v3745
        %v3749 = vadd.f32 %v3747, %v2360
        %v3750 = vadd.f32 %v3748, %v2361
        %v3751 = vld [vmem:[%s61] sm:$0xff]
        %v3752 = vld [vmem:[%s61 + $0x8] sm:$0xff]
        %v3753 = vld [vmem:[%s61 + $0x10] sm:$0xff]
        %v3754 = vld [vmem:[%s61 + $0x18] sm:$0xff]
        %v3755 = vld [vmem:[%s61 + $0x20] sm:$0xff]
        %v3756 = vld [vmem:[%s61 + $0x28] sm:$0xff]
        %v3757 = vld [vmem:[%s61 + $0x30] sm:$0xff]
        %v3758 = vld [vmem:[%s61 + $0x38] sm:$0xff]
        %v3759 = vld [vmem:[%s61 + $0x40] sm:$0xff]
        %v3760 = vld [vmem:[%s61 + $0x48] sm:$0xff]
        %v3761 = vld [vmem:[%s61 + $0x50] sm:$0xff]
        %v3762 = vld [vmem:[%s61 + $0x58] sm:$0xff]
        %v3763 = vld [vmem:[%s61 + $0x60] sm:$0xff]
        %v3764 = vld [vmem:[%s61 + $0x68] sm:$0xff]
        %v3765 = vld [vmem:[%s61 + $0x70] sm:$0xff]
        %v3766 = vld [vmem:[%s61 + $0x78] sm:$0xff]
        %3767 = vmatprep.subr.mxu0 0.0
        %3768 = vmatpush1.msra.mxu0 %v3751
        %3769 = vmatprep.subr.mxu0 0.0
        %3770 = vmatpush1.msra.mxu0 %v3752
        %3771 = vmatprep.subr.mxu0 0.0
        %3772 = vmatpush1.msra.mxu0 %v3753
        %3773 = vmatprep.subr.mxu0 0.0
        %3774 = vmatpush1.msra.mxu0 %v3754
        %3775 = vmatprep.subr.mxu0 0.0
        %3776 = vmatpush1.msra.mxu0 %v3755
        %3777 = vmatprep.subr.mxu0 0.0
        %3778 = vmatpush1.msra.mxu0 %v3756
        %3779 = vmatprep.subr.mxu0 0.0
        %3780 = vmatpush1.msra.mxu0 %v3757
        %3781 = vmatprep.subr.mxu0 0.0
        %3782 = vmatpush1.msra.mxu0 %v3758
        %3783 = vmatprep.subr.mxu0 0.0
        %3784 = vmatpush1.msra.mxu0 %v3759
        %3785 = vmatprep.subr.mxu0 0.0
        %3786 = vmatpush1.msra.mxu0 %v3760
        %3787 = vmatprep.subr.mxu0 0.0
        %3788 = vmatpush1.msra.mxu0 %v3761
        %3789 = vmatprep.subr.mxu0 0.0
        %3790 = vmatpush1.msra.mxu0 %v3762
        %3791 = vmatprep.subr.mxu0 0.0
        %3792 = vmatpush1.msra.mxu0 %v3763
        %3793 = vmatprep.subr.mxu0 0.0
        %3794 = vmatpush1.msra.mxu0 %v3764
        %3795 = vmatprep.subr.mxu0 0.0
        %3796 = vmatpush1.msra.mxu0 %v3765
        %3797 = vmatprep.subr.mxu0 0.0
        %3798 = vmatpush1.msra.mxu0 %v3766
        %3799 = vmatprep.subr.mxu0 0.0
        %3800 = vmatpush1.msra.mxu0 0.0
        %3801 = vmatprep.subr.mxu0 0.0
        %3802 = vmatpush1.msra.mxu0 0.0
        %3803 = vmatprep.subr.mxu0 0.0
        %3804 = vmatpush1.msra.mxu0 0.0
        %3805 = vmatprep.subr.mxu0 0.0
        %3806 = vmatpush1.msra.mxu0 0.0
        %3807 = vmatprep.subr.mxu0 0.0
        %3808 = vmatpush1.msra.mxu0 0.0
        %3809 = vmatprep.subr.mxu0 0.0
        %3810 = vmatpush1.msra.mxu0 0.0
        %3811 = vmatprep.subr.mxu0 0.0
        %3812 = vmatpush1.msra.mxu0 0.0
        %3813 = vmatprep.subr.mxu0 0.0
        %3814 = vmatpush1.msra.mxu0 0.0
        %3815 = vmatprep.subr.mxu0 0.0
        %3816 = vmatpush1.msra.mxu0 0.0
        %3817 = vmatprep.subr.mxu0 0.0
        %3818 = vmatpush1.msra.mxu0 0.0
        %3819 = vmatprep.subr.mxu0 0.0
        %3820 = vmatpush1.msra.mxu0 0.0
        %3821 = vmatprep.subr.mxu0 0.0
        %3822 = vmatpush1.msra.mxu0 0.0
        %3823 = vmatprep.subr.mxu0 0.0
        %3824 = vmatpush1.msra.mxu0 0.0
        %3825 = vmatprep.subr.mxu0 0.0
        %3826 = vmatpush1.msra.mxu0 0.0
        %3827 = vmatprep.subr.mxu0 0.0
        %3828 = vmatpush1.msra.mxu0 0.0
        %3829 = vmatprep.subr.mxu0 0.0
        %3830 = vmatpush1.msra.mxu0 0.0
        %3831 = vmatprep.mubr.f32.mxu0 0.0
        %3832 = vmatmul.mubr.f32.gmra.mrb[0].mxu0 %v3749
        %v3833 = vpop.f32.mrb[0].mxu0
        %v3834 = vadd.f32 0.0, %v3833
        %v3835 = vpop.f32.mrb[0].mxu0
        %3836 = vmatprep.mubr.f32.mxu0 0.0
        %3837 = vmatmul.mubr.f32.gmra.mrb[0].mxu0 %v3750
        %v3838 = vpop.f32.mrb[0].mxu0
        %v3839 = vadd.f32 0.0, %v3838
        %v3840 = vpop.f32.mrb[0].mxu0
        %3841 = vdwg.mxu0
        %v3842 = vld [vmem:[%s59] sm:$0xff]
        %v3843 = vld [vmem:[%s59 + $0x8] sm:$0xff]
        %v3844 = vld [vmem:[%s59 + $0x10] sm:$0xff]
        %v3845 = vld [vmem:[%s59 + $0x18] sm:$0xff]
        %v3846 = vld [vmem:[%s59 + $0x20] sm:$0xff]
        %v3847 = vld [vmem:[%s59 + $0x28] sm:$0xff]
        %v3848 = vld [vmem:[%s59 + $0x30] sm:$0xff]
        %v3849 = vld [vmem:[%s59 + $0x38] sm:$0xff]
        %v3850 = vld [vmem:[%s59 + $0x40] sm:$0xff]
        %v3851 = vld [vmem:[%s59 + $0x48] sm:$0xff]
        %v3852 = vld [vmem:[%s59 + $0x50] sm:$0xff]
        %v3853 = vld [vmem:[%s59 + $0x58] sm:$0xff]
        %v3854 = vld [vmem:[%s59 + $0x60] sm:$0xff]
        %v3855 = vld [vmem:[%s59 + $0x68] sm:$0xff]
        %v3856 = vld [vmem:[%s59 + $0x70] sm:$0xff]
        %v3857 = vld [vmem:[%s59 + $0x78] sm:$0xff]
        %3858 = vmatprep.subr.mxu0 0.0
        %3859 = vmatpush1.msra.mxu0 %v3842
        %3860 = vmatprep.subr.mxu0 0.0
        %3861 = vmatpush1.msra.mxu0 %v3843
        %3862 = vmatprep.subr.mxu0 0.0
        %3863 = vmatpush1.msra.mxu0 %v3844
        %3864 = vmatprep.subr.mxu0 0.0
        %3865 = vmatpush1.msra.mxu0 %v3845
        %3866 = vmatprep.subr.mxu0 0.0
        %3867 = vmatpush1.msra.mxu0 %v3846
        %3868 = vmatprep.subr.mxu0 0.0
        %3869 = vmatpush1.msra.mxu0 %v3847
        %3870 = vmatprep.subr.mxu0 0.0
        %3871 = vmatpush1.msra.mxu0 %v3848
        %3872 = vmatprep.subr.mxu0 0.0
        %3873 = vmatpush1.msra.mxu0 %v3849
        %3874 = vmatprep.subr.mxu0 0.0
        %3875 = vmatpush1.msra.mxu0 %v3850
        %3876 = vmatprep.subr.mxu0 0.0
        %3877 = vmatpush1.msra.mxu0 %v3851
        %3878 = vmatprep.subr.mxu0 0.0
        %3879 = vmatpush1.msra.mxu0 %v3852
        %3880 = vmatprep.subr.mxu0 0.0
        %3881 = vmatpush1.msra.mxu0 %v3853
        %3882 = vmatprep.subr.mxu0 0.0
        %3883 = vmatpush1.msra.mxu0 %v3854
        %3884 = vmatprep.subr.mxu0 0.0
        %3885 = vmatpush1.msra.mxu0 %v3855
        %3886 = vmatprep.subr.mxu0 0.0
        %3887 = vmatpush1.msra.mxu0 %v3856
        %3888 = vmatprep.subr.mxu0 0.0
        %3889 = vmatpush1.msra.mxu0 %v3857
        %3890 = vmatprep.subr.mxu0 0.0
        %3891 = vmatpush1.msra.mxu0 0.0
        %3892 = vmatprep.subr.mxu0 0.0
        %3893 = vmatpush1.msra.mxu0 0.0
        %3894 = vmatprep.subr.mxu0 0.0
        %3895 = vmatpush1.msra.mxu0 0.0
        %3896 = vmatprep.subr.mxu0 0.0
        %3897 = vmatpush1.msra.mxu0 0.0
        %3898 = vmatprep.subr.mxu0 0.0
        %3899 = vmatpush1.msra.mxu0 0.0
        %3900 = vmatprep.subr.mxu0 0.0
        %3901 = vmatpush1.msra.mxu0 0.0
        %3902 = vmatprep.subr.mxu0 0.0
        %3903 = vmatpush1.msra.mxu0 0.0
        %3904 = vmatprep.subr.mxu0 0.0
        %3905 = vmatpush1.msra.mxu0 0.0
        %3906 = vmatprep.subr.mxu0 0.0
        %3907 = vmatpush1.msra.mxu0 0.0
        %3908 = vmatprep.subr.mxu0 0.0
        %3909 = vmatpush1.msra.mxu0 0.0
        %3910 = vmatprep.subr.mxu0 0.0
        %3911 = vmatpush1.msra.mxu0 0.0
        %3912 = vmatprep.subr.mxu0 0.0
        %3913 = vmatpush1.msra.mxu0 0.0
        %3914 = vmatprep.subr.mxu0 0.0
        %3915 = vmatpush1.msra.mxu0 0.0
        %3916 = vmatprep.subr.mxu0 0.0
        %3917 = vmatpush1.msra.mxu0 0.0
        %3918 = vmatprep.subr.mxu0 0.0
        %3919 = vmatpush1.msra.mxu0 0.0
        %3920 = vmatprep.subr.mxu0 0.0
        %3921 = vmatpush1.msra.mxu0 0.0
        %3922 = vmatprep.mubr.f32.mxu0 0.0
        %3923 = vmatmul.mubr.f32.gmra.mrb[0].mxu0 %v3749
        %v3924 = vpop.f32.mrb[0].mxu0
        %v3925 = vadd.f32 0.0, %v3924
        %v3926 = vpop.f32.mrb[0].mxu0
        %3927 = vmatprep.mubr.f32.mxu0 0.0
        %3928 = vmatmul.mubr.f32.gmra.mrb[0].mxu0 %v3750
        %v3929 = vpop.f32.mrb[0].mxu0
        %v3930 = vadd.f32 0.0, %v3929
        %v3931 = vpop.f32.mrb[0].mxu0
        %3932 = vdwg.mxu0
        %v3933 = vld [vmem:[#allocation13] sm:$0xff]
        %v3934 = vld [vmem:[#allocation13 + $0x8] sm:$0xff]
        %v3935 = vld [vmem:[#allocation13 + $0x10] sm:$0xff]
        %v3936 = vld [vmem:[#allocation13 + $0x18] sm:$0xff]
        %v3937 = vld [vmem:[#allocation13 + $0x20] sm:$0xff]
        %v3938 = vld [vmem:[#allocation13 + $0x28] sm:$0xff]
        %v3939 = vld [vmem:[#allocation13 + $0x30] sm:$0xff]
        %v3940 = vld [vmem:[#allocation13 + $0x38] sm:$0xff]
        %v3941 = vld [vmem:[#allocation13 + $0x40] sm:$0xff]
        %v3942 = vld [vmem:[#allocation13 + $0x48] sm:$0xff]
        %v3943 = vld [vmem:[#allocation10] sm:$0x1]
        %v3944 = vld [vmem:[#allocation14] sm:$0xff]
        %v3945 = vld [vmem:[#allocation14 + $0x8] sm:$0xff]
        %v3946 = vld [vmem:[#allocation14 + $0x10] sm:$0xff]
        %v3947 = vld [vmem:[#allocation14 + $0x18] sm:$0xff]
        %v3948 = vld [vmem:[#allocation14 + $0x20] sm:$0xff]
        %v3949 = vld [vmem:[#allocation14 + $0x28] sm:$0xff]
        %v3950 = vld [vmem:[#allocation14 + $0x30] sm:$0xff]
        %v3951 = vld [vmem:[#allocation14 + $0x38] sm:$0xff]
        %v3952 = vld [vmem:[#allocation14 + $0x40] sm:$0xff]
        %v3953 = vld [vmem:[#allocation14 + $0x48] sm:$0xff]
        %v3954 = vld [vmem:[#allocation11] sm:$0x1]
        %v3956 = vlaneseq
        %v3957 = vshrl.u32 %v3956, 7
        %v3958 = vsub.s32 0, %v3957
        %v3959 = vrot.slane %v3943, %v3958
        %vm3961 = vcmask 654336
        %v3963 = vsel %vm3961, %v3834, 0
        %v3966 = vsel %vm3961, %v3839, 0
        %3968 = vmatprep.subr.mxu0 0.0
        %3969 = vmatpush1.msra.mxu0 %v3933
        %3970 = vmatprep.subr.mxu0 0.0
        %3971 = vmatpush1.msra.mxu0 %v3934
        %3972 = vmatprep.subr.mxu0 0.0
        %3973 = vmatpush1.msra.mxu0 %v3935
        %3974 = vmatprep.subr.mxu0 0.0
        %3975 = vmatpush1.msra.mxu0 %v3936
        %3976 = vmatprep.subr.mxu0 0.0
        %3977 = vmatpush1.msra.mxu0 %v3937
        %3978 = vmatprep.subr.mxu0 0.0
        %3979 = vmatpush1.msra.mxu0 %v3938
        %3980 = vmatprep.subr.mxu0 0.0
        %3981 = vmatpush1.msra.mxu0 %v3939
        %3982 = vmatprep.subr.mxu0 0.0
        %3983 = vmatpush1.msra.mxu0 %v3940
        %3984 = vmatprep.subr.mxu0 0.0
        %3985 = vmatpush1.msra.mxu0 %v3941
        %3986 = vmatprep.subr.mxu0 0.0
        %3987 = vmatpush1.msra.mxu0 %v3942
        %3988 = vmatprep.subr.mxu0 0.0
        %3989 = vmatpush1.msra.mxu0 0.0
        %3990 = vmatprep.subr.mxu0 0.0
        %3991 = vmatpush1.msra.mxu0 0.0
        %3992 = vmatprep.subr.mxu0 0.0
        %3993 = vmatpush1.msra.mxu0 0.0
        %3994 = vmatprep.subr.mxu0 0.0
        %3995 = vmatpush1.msra.mxu0 0.0
        %3996 = vmatprep.subr.mxu0 0.0
        %3997 = vmatpush1.msra.mxu0 0.0
        %3998 = vmatprep.subr.mxu0 0.0
        %3999 = vmatpush1.msra.mxu0 0.0
        %4000 = vmatprep.subr.mxu0 0.0
        %4001 = vmatpush1.msra.mxu0 0.0
        %4002 = vmatprep.subr.mxu0 0.0
        %4003 = vmatpush1.msra.mxu0 0.0
        %4004 = vmatprep.subr.mxu0 0.0
        %4005 = vmatpush1.msra.mxu0 0.0
        %4006 = vmatprep.subr.mxu0 0.0
        %4007 = vmatpush1.msra.mxu0 0.0
        %4008 = vmatprep.subr.mxu0 0.0
        %4009 = vmatpush1.msra.mxu0 0.0
        %4010 = vmatprep.subr.mxu0 0.0
        %4011 = vmatpush1.msra.mxu0 0.0
        %4012 = vmatprep.subr.mxu0 0.0
        %4013 = vmatpush1.msra.mxu0 0.0
        %4014 = vmatprep.subr.mxu0 0.0
        %4015 = vmatpush1.msra.mxu0 0.0
        %4016 = vmatprep.subr.mxu0 0.0
        %4017 = vmatpush1.msra.mxu0 0.0
        %4018 = vmatprep.subr.mxu0 0.0
        %4019 = vmatpush1.msra.mxu0 0.0
        %4020 = vmatprep.subr.mxu0 0.0
        %4021 = vmatpush1.msra.mxu0 0.0
        %4022 = vmatprep.subr.mxu0 0.0
        %4023 = vmatpush1.msra.mxu0 0.0
        %4024 = vmatprep.subr.mxu0 0.0
        %4025 = vmatpush1.msra.mxu0 0.0
        %4026 = vmatprep.subr.mxu0 0.0
        %4027 = vmatpush1.msra.mxu0 0.0
        %4028 = vmatprep.subr.mxu0 0.0
        %4029 = vmatpush1.msra.mxu0 0.0
        %4030 = vmatprep.subr.mxu0 0.0
        %4031 = vmatpush1.msra.mxu0 0.0
        %4032 = vmatprep.mubr.f32.mxu0 0.0
        %4033 = vmatmul.mubr.f32.gmra.mrb[0].mxu0 %v3963
        %v4034 = vpop.f32.mrb[0].mxu0
        %v4035 = vadd.f32 %v3959, %v4034
        %v4036 = vpop.f32.mrb[0].mxu0
        %4037 = vmatprep.mubr.f32.mxu0 0.0
        %4038 = vmatmul.mubr.f32.gmra.mrb[0].mxu0 %v3966
        %v4039 = vpop.f32.mrb[0].mxu0
        %v4040 = vadd.f32 %v3959, %v4039
        %v4041 = vpop.f32.mrb[0].mxu0
        %4042 = vdwg.mxu0
        %vm4043 = vcmp.gt.f32.partialorder %v4035, 0.0
        %vm4044 = vcmp.gt.f32.partialorder %v4040, 0.0
        %v4045 = vmul.f32 %v4035, 0.1
        %v4046 = vmul.f32 %v4040, 0.1
        %v4047 = vsel %vm4043, %v4035, %v4045
        %v4048 = vsel %vm4044, %v4040, %v4046
        %v4050 = vlaneseq
        %v4051 = vshrl.u32 %v4050, 7
        %v4052 = vsub.s32 0, %v4051
        %v4053 = vrot.slane %v3954, %v4052
        %v4056 = vsel %vm3961, %v4047, 0
        %v4059 = vsel %vm3961, %v4048, 0
        %4061 = vmatprep.subr.mxu0 0.0
        %4062 = vmatpush1.msra.mxu0 %v3944
        %4063 = vmatprep.subr.mxu0 0.0
        %4064 = vmatpush1.msra.mxu0 %v3945
        %4065 = vmatprep.subr.mxu0 0.0
        %4066 = vmatpush1.msra.mxu0 %v3946
        %4067 = vmatprep.subr.mxu0 0.0
        %4068 = vmatpush1.msra.mxu0 %v3947
        %4069 = vmatprep.subr.mxu0 0.0
        %4070 = vmatpush1.msra.mxu0 %v3948
        %4071 = vmatprep.subr.mxu0 0.0
        %4072 = vmatpush1.msra.mxu0 %v3949
        %4073 = vmatprep.subr.mxu0 0.0
        %4074 = vmatpush1.msra.mxu0 %v3950
        %4075 = vmatprep.subr.mxu0 0.0
        %4076 = vmatpush1.msra.mxu0 %v3951
        %4077 = vmatprep.subr.mxu0 0.0
        %4078 = vmatpush1.msra.mxu0 %v3952
        %4079 = vmatprep.subr.mxu0 0.0
        %4080 = vmatpush1.msra.mxu0 %v3953
        %4081 = vmatprep.subr.mxu0 0.0
        %4082 = vmatpush1.msra.mxu0 0.0
        %4083 = vmatprep.subr.mxu0 0.0
        %4084 = vmatpush1.msra.mxu0 0.0
        %4085 = vmatprep.subr.mxu0 0.0
        %4086 = vmatpush1.msra.mxu0 0.0
        %4087 = vmatprep.subr.mxu0 0.0
        %4088 = vmatpush1.msra.mxu0 0.0
        %4089 = vmatprep.subr.mxu0 0.0
        %4090 = vmatpush1.msra.mxu0 0.0
        %4091 = vmatprep.subr.mxu0 0.0
        %4092 = vmatpush1.msra.mxu0 0.0
        %4093 = vmatprep.subr.mxu0 0.0
        %4094 = vmatpush1.msra.mxu0 0.0
        %4095 = vmatprep.subr.mxu0 0.0
        %4096 = vmatpush1.msra.mxu0 0.0
        %4097 = vmatprep.subr.mxu0 0.0
        %4098 = vmatpush1.msra.mxu0 0.0
        %4099 = vmatprep.subr.mxu0 0.0
        %4100 = vmatpush1.msra.mxu0 0.0
        %4101 = vmatprep.subr.mxu0 0.0
        %4102 = vmatpush1.msra.mxu0 0.0
        %4103 = vmatprep.subr.mxu0 0.0
        %4104 = vmatpush1.msra.mxu0 0.0
        %4105 = vmatprep.subr.mxu0 0.0
        %4106 = vmatpush1.msra.mxu0 0.0
        %4107 = vmatprep.subr.mxu0 0.0
        %4108 = vmatpush1.msra.mxu0 0.0
        %4109 = vmatprep.subr.mxu0 0.0
        %4110 = vmatpush1.msra.mxu0 0.0
        %4111 = vmatprep.subr.mxu0 0.0
        %4112 = vmatpush1.msra.mxu0 0.0
        %4113 = vmatprep.subr.mxu0 0.0
        %4114 = vmatpush1.msra.mxu0 0.0
        %4115 = vmatprep.subr.mxu0 0.0
        %4116 = vmatpush1.msra.mxu0 0.0
        %4117 = vmatprep.subr.mxu0 0.0
        %4118 = vmatpush1.msra.mxu0 0.0
        %4119 = vmatprep.subr.mxu0 0.0
        %4120 = vmatpush1.msra.mxu0 0.0
        %4121 = vmatprep.subr.mxu0 0.0
        %4122 = vmatpush1.msra.mxu0 0.0
        %4123 = vmatprep.subr.mxu0 0.0
        %4124 = vmatpush1.msra.mxu0 0.0
        %4125 = vmatprep.mubr.f32.mxu0 0.0
        %4126 = vmatmul.mubr.f32.gmra.mrb[0].mxu0 %v4056
        %v4127 = vpop.f32.mrb[0].mxu0
        %v4128 = vadd.f32 %v4053, %v4127
        %v4129 = vpop.f32.mrb[0].mxu0
        %4130 = vmatprep.mubr.f32.mxu0 0.0
        %4131 = vmatmul.mubr.f32.gmra.mrb[0].mxu0 %v4059
        %v4132 = vpop.f32.mrb[0].mxu0
        %v4133 = vadd.f32 %v4053, %v4132
        %v4134 = vpop.f32.mrb[0].mxu0
        %4135 = vdwg.mxu0
        %v4136 = vld [vmem:[#allocation7] sm:$0xff]
        %v4137 = vld [vmem:[#allocation7 + $0x8] sm:$0xff]
        %v4138 = vld [vmem:[#allocation7 + $0x10] sm:$0xff]
        %v4139 = vld [vmem:[#allocation7 + $0x18] sm:$0xff]
        %v4140 = vld [vmem:[#allocation7 + $0x20] sm:$0xff]
        %v4141 = vld [vmem:[#allocation7 + $0x28] sm:$0xff]
        %v4142 = vld [vmem:[#allocation7 + $0x30] sm:$0xff]
        %v4143 = vld [vmem:[#allocation7 + $0x38] sm:$0xff]
        %v4144 = vld [vmem:[#allocation7 + $0x40] sm:$0xff]
        %v4145 = vld [vmem:[#allocation7 + $0x48] sm:$0xff]
        %v4146 = vld [vmem:[#allocation2] sm:$0x1]
        %v4147 = vld [vmem:[#allocation8] sm:$0xff]
        %v4148 = vld [vmem:[#allocation8 + $0x8] sm:$0xff]
        %v4149 = vld [vmem:[#allocation8 + $0x10] sm:$0xff]
        %v4150 = vld [vmem:[#allocation8 + $0x18] sm:$0xff]
        %v4151 = vld [vmem:[#allocation8 + $0x20] sm:$0xff]
        %v4152 = vld [vmem:[#allocation8 + $0x28] sm:$0xff]
        %v4153 = vld [vmem:[#allocation8 + $0x30] sm:$0xff]
        %v4154 = vld [vmem:[#allocation8 + $0x38] sm:$0xff]
        %v4155 = vld [vmem:[#allocation8 + $0x40] sm:$0xff]
        %v4156 = vld [vmem:[#allocation8 + $0x48] sm:$0xff]
        %v4157 = vld [vmem:[#allocation5] sm:$0x1]
        %v4159 = vlaneseq
        %v4160 = vshrl.u32 %v4159, 7
        %v4161 = vsub.s32 0, %v4160
        %v4162 = vrot.slane %v4146, %v4161
        %v4165 = vsel %vm3961, %v3925, 0
        %v4168 = vsel %vm3961, %v3930, 0
        %4170 = vmatprep.subr.mxu0 0.0
        %4171 = vmatpush1.msra.mxu0 %v4136
        %4172 = vmatprep.subr.mxu0 0.0
        %4173 = vmatpush1.msra.mxu0 %v4137
        %4174 = vmatprep.subr.mxu0 0.0
        %4175 = vmatpush1.msra.mxu0 %v4138
        %4176 = vmatprep.subr.mxu0 0.0
        %4177 = vmatpush1.msra.mxu0 %v4139
        %4178 = vmatprep.subr.mxu0 0.0
        %4179 = vmatpush1.msra.mxu0 %v4140
        %4180 = vmatprep.subr.mxu0 0.0
        %4181 = vmatpush1.msra.mxu0 %v4141
        %4182 = vmatprep.subr.mxu0 0.0
        %4183 = vmatpush1.msra.mxu0 %v4142
        %4184 = vmatprep.subr.mxu0 0.0
        %4185 = vmatpush1.msra.mxu0 %v4143
        %4186 = vmatprep.subr.mxu0 0.0
        %4187 = vmatpush1.msra.mxu0 %v4144
        %4188 = vmatprep.subr.mxu0 0.0
        %4189 = vmatpush1.msra.mxu0 %v4145
        %4190 = vmatprep.subr.mxu0 0.0
        %4191 = vmatpush1.msra.mxu0 0.0
        %4192 = vmatprep.subr.mxu0 0.0
        %4193 = vmatpush1.msra.mxu0 0.0
        %4194 = vmatprep.subr.mxu0 0.0
        %4195 = vmatpush1.msra.mxu0 0.0
        %4196 = vmatprep.subr.mxu0 0.0
        %4197 = vmatpush1.msra.mxu0 0.0
        %4198 = vmatprep.subr.mxu0 0.0
        %4199 = vmatpush1.msra.mxu0 0.0
        %4200 = vmatprep.subr.mxu0 0.0
        %4201 = vmatpush1.msra.mxu0 0.0
        %4202 = vmatprep.subr.mxu0 0.0
        %4203 = vmatpush1.msra.mxu0 0.0
        %4204 = vmatprep.subr.mxu0 0.0
        %4205 = vmatpush1.msra.mxu0 0.0
        %4206 = vmatprep.subr.mxu0 0.0
        %4207 = vmatpush1.msra.mxu0 0.0
        %4208 = vmatprep.subr.mxu0 0.0
        %4209 = vmatpush1.msra.mxu0 0.0
        %4210 = vmatprep.subr.mxu0 0.0
        %4211 = vmatpush1.msra.mxu0 0.0
        %4212 = vmatprep.subr.mxu0 0.0
        %4213 = vmatpush1.msra.mxu0 0.0
        %4214 = vmatprep.subr.mxu0 0.0
        %4215 = vmatpush1.msra.mxu0 0.0
        %4216 = vmatprep.subr.mxu0 0.0
        %4217 = vmatpush1.msra.mxu0 0.0
        %4218 = vmatprep.subr.mxu0 0.0
        %4219 = vmatpush1.msra.mxu0 0.0
        %4220 = vmatprep.subr.mxu0 0.0
        %4221 = vmatpush1.msra.mxu0 0.0
        %4222 = vmatprep.subr.mxu0 0.0
        %4223 = vmatpush1.msra.mxu0 0.0
        %4224 = vmatprep.subr.mxu0 0.0
        %4225 = vmatpush1.msra.mxu0 0.0
        %4226 = vmatprep.subr.mxu0 0.0
        %4227 = vmatpush1.msra.mxu0 0.0
        %4228 = vmatprep.subr.mxu0 0.0
        %4229 = vmatpush1.msra.mxu0 0.0
        %4230 = vmatprep.subr.mxu0 0.0
        %4231 = vmatpush1.msra.mxu0 0.0
        %4232 = vmatprep.subr.mxu0 0.0
        %4233 = vmatpush1.msra.mxu0 0.0
        %4234 = vmatprep.mubr.f32.mxu0 0.0
        %4235 = vmatmul.mubr.f32.gmra.mrb[0].mxu0 %v4165
        %v4236 = vpop.f32.mrb[0].mxu0
        %v4237 = vadd.f32 %v4162, %v4236
        %v4238 = vpop.f32.mrb[0].mxu0
        %4239 = vmatprep.mubr.f32.mxu0 0.0
        %4240 = vmatmul.mubr.f32.gmra.mrb[0].mxu0 %v4168
        %v4241 = vpop.f32.mrb[0].mxu0
        %v4242 = vadd.f32 %v4162, %v4241
        %v4243 = vpop.f32.mrb[0].mxu0
        %4244 = vdwg.mxu0
        %vm4245 = vcmp.gt.f32.partialorder %v4237, 0.0
        %vm4246 = vcmp.gt.f32.partialorder %v4242, 0.0
        %v4247 = vmul.f32 %v4237, 0.1
        %v4248 = vmul.f32 %v4242, 0.1
        %v4249 = vsel %vm4245, %v4237, %v4247
        %v4250 = vsel %vm4246, %v4242, %v4248
        %v4252 = vlaneseq
        %v4253 = vshrl.u32 %v4252, 7
        %v4254 = vsub.s32 0, %v4253
        %v4255 = vrot.slane %v4157, %v4254
        %v4258 = vsel %vm3961, %v4249, 0
        %v4261 = vsel %vm3961, %v4250, 0
        %4263 = vmatprep.subr.mxu0 0.0
        %4264 = vmatpush1.msra.mxu0 %v4147
        %4265 = vmatprep.subr.mxu0 0.0
        %4266 = vmatpush1.msra.mxu0 %v4148
        %4267 = vmatprep.subr.mxu0 0.0
        %4268 = vmatpush1.msra.mxu0 %v4149
        %4269 = vmatprep.subr.mxu0 0.0
        %4270 = vmatpush1.msra.mxu0 %v4150
        %4271 = vmatprep.subr.mxu0 0.0
        %4272 = vmatpush1.msra.mxu0 %v4151
        %4273 = vmatprep.subr.mxu0 0.0
        %4274 = vmatpush1.msra.mxu0 %v4152
        %4275 = vmatprep.subr.mxu0 0.0
        %4276 = vmatpush1.msra.mxu0 %v4153
        %4277 = vmatprep.subr.mxu0 0.0
        %4278 = vmatpush1.msra.mxu0 %v4154
        %4279 = vmatprep.subr.mxu0 0.0
        %4280 = vmatpush1.msra.mxu0 %v4155
        %4281 = vmatprep.subr.mxu0 0.0
        %4282 = vmatpush1.msra.mxu0 %v4156
        %4283 = vmatprep.subr.mxu0 0.0
        %4284 = vmatpush1.msra.mxu0 0.0
        %4285 = vmatprep.subr.mxu0 0.0
        %4286 = vmatpush1.msra.mxu0 0.0
        %4287 = vmatprep.subr.mxu0 0.0
        %4288 = vmatpush1.msra.mxu0 0.0
        %4289 = vmatprep.subr.mxu0 0.0
        %4290 = vmatpush1.msra.mxu0 0.0
        %4291 = vmatprep.subr.mxu0 0.0
        %4292 = vmatpush1.msra.mxu0 0.0
        %4293 = vmatprep.subr.mxu0 0.0
        %4294 = vmatpush1.msra.mxu0 0.0
        %4295 = vmatprep.subr.mxu0 0.0
        %4296 = vmatpush1.msra.mxu0 0.0
        %4297 = vmatprep.subr.mxu0 0.0
        %4298 = vmatpush1.msra.mxu0 0.0
        %4299 = vmatprep.subr.mxu0 0.0
        %4300 = vmatpush1.msra.mxu0 0.0
        %4301 = vmatprep.subr.mxu0 0.0
        %4302 = vmatpush1.msra.mxu0 0.0
        %4303 = vmatprep.subr.mxu0 0.0
        %4304 = vmatpush1.msra.mxu0 0.0
        %4305 = vmatprep.subr.mxu0 0.0
        %4306 = vmatpush1.msra.mxu0 0.0
        %4307 = vmatprep.subr.mxu0 0.0
        %4308 = vmatpush1.msra.mxu0 0.0
        %4309 = vmatprep.subr.mxu0 0.0
        %4310 = vmatpush1.msra.mxu0 0.0
        %4311 = vmatprep.subr.mxu0 0.0
        %4312 = vmatpush1.msra.mxu0 0.0
        %4313 = vmatprep.subr.mxu0 0.0
        %4314 = vmatpush1.msra.mxu0 0.0
        %4315 = vmatprep.subr.mxu0 0.0
        %4316 = vmatpush1.msra.mxu0 0.0
        %4317 = vmatprep.subr.mxu0 0.0
        %4318 = vmatpush1.msra.mxu0 0.0
        %4319 = vmatprep.subr.mxu0 0.0
        %4320 = vmatpush1.msra.mxu0 0.0
        %4321 = vmatprep.subr.mxu0 0.0
        %4322 = vmatpush1.msra.mxu0 0.0
        %4323 = vmatprep.subr.mxu0 0.0
        %4324 = vmatpush1.msra.mxu0 0.0
        %4325 = vmatprep.subr.mxu0 0.0
        %4326 = vmatpush1.msra.mxu0 0.0
        %4327 = vmatprep.mubr.f32.mxu0 0.0
        %4328 = vmatmul.mubr.f32.gmra.mrb[0].mxu0 %v4258
        %v4329 = vpop.f32.mrb[0].mxu0
        %v4330 = vadd.f32 %v4255, %v4329
        %v4331 = vpop.f32.mrb[0].mxu0
        %4332 = vmatprep.mubr.f32.mxu0 0.0
        %4333 = vmatmul.mubr.f32.gmra.mrb[0].mxu0 %v4261
        %v4334 = vpop.f32.mrb[0].mxu0
        %v4335 = vadd.f32 %v4255, %v4334
        %v4336 = vpop.f32.mrb[0].mxu0
        %4337 = vdwg.mxu0
        %v4338 = vld [vmem:[#allocation29] sm:$0xff]
        %v4339 = vld [vmem:[#allocation29 + $0x8] sm:$0xff]
        %v4340 = vld [vmem:[#allocation29 + $0x10] sm:$0xff]
        %v4341 = vld [vmem:[#allocation29 + $0x18] sm:$0xff]
        %v4342 = vld [vmem:[#allocation29 + $0x20] sm:$0xff]
        %v4343 = vld [vmem:[#allocation29 + $0x28] sm:$0xff]
        %v4344 = vld [vmem:[#allocation29 + $0x30] sm:$0xff]
        %v4345 = vld [vmem:[#allocation29 + $0x38] sm:$0xff]
        %v4346 = vld [vmem:[#allocation29 + $0x40] sm:$0xff]
        %v4347 = vld [vmem:[#allocation29 + $0x48] sm:$0xff]
        %v4348 = vld [vmem:[#allocation28] sm:$0xff]
        %v4349 = vld [vmem:[#allocation28 + $0x8] sm:$0xff]
        %v4350 = vld [vmem:[#allocation28 + $0x10] sm:$0xff]
        %v4351 = vld [vmem:[#allocation28 + $0x18] sm:$0xff]
        %v4352 = vld [vmem:[#allocation28 + $0x20] sm:$0xff]
        %v4353 = vld [vmem:[#allocation28 + $0x28] sm:$0xff]
        %v4354 = vld [vmem:[#allocation28 + $0x30] sm:$0xff]
        %v4355 = vld [vmem:[#allocation28 + $0x38] sm:$0xff]
        %v4356 = vld [vmem:[#allocation28 + $0x40] sm:$0xff]
        %v4357 = vld [vmem:[#allocation28 + $0x48] sm:$0xff]
        %v4359 = vsel %vm3961, %v4330, 0
        %v4362 = vsel %vm3961, %v4335, 0
        %4364 = vmatprep.subr.mxu0 0.0
        %4365 = vmatpush1.msra.mxu0 %v4348
        %4366 = vmatprep.subr.mxu0 0.0
        %4367 = vmatpush1.msra.mxu0 %v4349
        %4368 = vmatprep.subr.mxu0 0.0
        %4369 = vmatpush1.msra.mxu0 %v4350
        %4370 = vmatprep.subr.mxu0 0.0
        %4371 = vmatpush1.msra.mxu0 %v4351
        %4372 = vmatprep.subr.mxu0 0.0
        %4373 = vmatpush1.msra.mxu0 %v4352
        %4374 = vmatprep.subr.mxu0 0.0
        %4375 = vmatpush1.msra.mxu0 %v4353
        %4376 = vmatprep.subr.mxu0 0.0
        %4377 = vmatpush1.msra.mxu0 %v4354
        %4378 = vmatprep.subr.mxu0 0.0
        %4379 = vmatpush1.msra.mxu0 %v4355
        %4380 = vmatprep.subr.mxu0 0.0
        %4381 = vmatpush1.msra.mxu0 %v4356
        %4382 = vmatprep.subr.mxu0 0.0
        %4383 = vmatpush1.msra.mxu0 %v4357
        %4384 = vmatprep.subr.mxu0 0.0
        %4385 = vmatpush1.msra.mxu0 0.0
        %4386 = vmatprep.subr.mxu0 0.0
        %4387 = vmatpush1.msra.mxu0 0.0
        %4388 = vmatprep.subr.mxu0 0.0
        %4389 = vmatpush1.msra.mxu0 0.0
        %4390 = vmatprep.subr.mxu0 0.0
        %4391 = vmatpush1.msra.mxu0 0.0
        %4392 = vmatprep.subr.mxu0 0.0
        %4393 = vmatpush1.msra.mxu0 0.0
        %4394 = vmatprep.subr.mxu0 0.0
        %4395 = vmatpush1.msra.mxu0 0.0
        %4396 = vmatprep.subr.mxu0 0.0
        %4397 = vmatpush1.msra.mxu0 0.0
        %4398 = vmatprep.subr.mxu0 0.0
        %4399 = vmatpush1.msra.mxu0 0.0
        %4400 = vmatprep.subr.mxu0 0.0
        %4401 = vmatpush1.msra.mxu0 0.0
        %4402 = vmatprep.subr.mxu0 0.0
        %4403 = vmatpush1.msra.mxu0 0.0
        %4404 = vmatprep.subr.mxu0 0.0
        %4405 = vmatpush1.msra.mxu0 0.0
        %4406 = vmatprep.subr.mxu0 0.0
        %4407 = vmatpush1.msra.mxu0 0.0
        %4408 = vmatprep.subr.mxu0 0.0
        %4409 = vmatpush1.msra.mxu0 0.0
        %4410 = vmatprep.subr.mxu0 0.0
        %4411 = vmatpush1.msra.mxu0 0.0
        %4412 = vmatprep.subr.mxu0 0.0
        %4413 = vmatpush1.msra.mxu0 0.0
        %4414 = vmatprep.subr.mxu0 0.0
        %4415 = vmatpush1.msra.mxu0 0.0
        %4416 = vmatprep.subr.mxu0 0.0
        %4417 = vmatpush1.msra.mxu0 0.0
        %4418 = vmatprep.subr.mxu0 0.0
        %4419 = vmatpush1.msra.mxu0 0.0
        %4420 = vmatprep.subr.mxu0 0.0
        %4421 = vmatpush1.msra.mxu0 0.0
        %4422 = vmatprep.subr.mxu0 0.0
        %4423 = vmatpush1.msra.mxu0 0.0
        %4424 = vmatprep.subr.mxu0 0.0
        %4425 = vmatpush1.msra.mxu0 0.0
        %4426 = vmatprep.subr.mxu0 0.0
        %4427 = vmatpush1.msra.mxu0 0.0
        %4428 = vmatprep.mubr.f32.mxu0 0.0
        %4429 = vmatmul.mubr.f32.gmra.mrb[0].mxu0 %v4359
        %v4430 = vpop.f32.mrb[0].mxu0
        %v4431 = vadd.f32 0.0, %v4430
        %v4432 = vpop.f32.mrb[0].mxu0
        %4433 = vmatprep.mubr.f32.mxu0 0.0
        %4434 = vmatmul.mubr.f32.gmra.mrb[0].mxu0 %v4362
        %v4435 = vpop.f32.mrb[0].mxu0
        %v4436 = vadd.f32 0.0, %v4435
        %v4437 = vpop.f32.mrb[0].mxu0
        %4438 = vdwg.mxu0
        %v4440 = vsel %vm3961, %v4128, 0
        %v4443 = vsel %vm3961, %v4133, 0
        %4445 = vmatprep.subr.mxu0 0.0
        %4446 = vmatpush1.msra.mxu0 %v4338
        %4447 = vmatprep.subr.mxu0 0.0
        %4448 = vmatpush1.msra.mxu0 %v4339
        %4449 = vmatprep.subr.mxu0 0.0
        %4450 = vmatpush1.msra.mxu0 %v4340
        %4451 = vmatprep.subr.mxu0 0.0
        %4452 = vmatpush1.msra.mxu0 %v4341
        %4453 = vmatprep.subr.mxu0 0.0
        %4454 = vmatpush1.msra.mxu0 %v4342
        %4455 = vmatprep.subr.mxu0 0.0
        %4456 = vmatpush1.msra.mxu0 %v4343
        %4457 = vmatprep.subr.mxu0 0.0
        %4458 = vmatpush1.msra.mxu0 %v4344
        %4459 = vmatprep.subr.mxu0 0.0
        %4460 = vmatpush1.msra.mxu0 %v4345
        %4461 = vmatprep.subr.mxu0 0.0
        %4462 = vmatpush1.msra.mxu0 %v4346
        %4463 = vmatprep.subr.mxu0 0.0
        %4464 = vmatpush1.msra.mxu0 %v4347
        %4465 = vmatprep.subr.mxu0 0.0
        %4466 = vmatpush1.msra.mxu0 0.0
        %4467 = vmatprep.subr.mxu0 0.0
        %4468 = vmatpush1.msra.mxu0 0.0
        %4469 = vmatprep.subr.mxu0 0.0
        %4470 = vmatpush1.msra.mxu0 0.0
        %4471 = vmatprep.subr.mxu0 0.0
        %4472 = vmatpush1.msra.mxu0 0.0
        %4473 = vmatprep.subr.mxu0 0.0
        %4474 = vmatpush1.msra.mxu0 0.0
        %4475 = vmatprep.subr.mxu0 0.0
        %4476 = vmatpush1.msra.mxu0 0.0
        %4477 = vmatprep.subr.mxu0 0.0
        %4478 = vmatpush1.msra.mxu0 0.0
        %4479 = vmatprep.subr.mxu0 0.0
        %4480 = vmatpush1.msra.mxu0 0.0
        %4481 = vmatprep.subr.mxu0 0.0
        %4482 = vmatpush1.msra.mxu0 0.0
        %4483 = vmatprep.subr.mxu0 0.0
        %4484 = vmatpush1.msra.mxu0 0.0
        %4485 = vmatprep.subr.mxu0 0.0
        %4486 = vmatpush1.msra.mxu0 0.0
        %4487 = vmatprep.subr.mxu0 0.0
        %4488 = vmatpush1.msra.mxu0 0.0
        %4489 = vmatprep.subr.mxu0 0.0
        %4490 = vmatpush1.msra.mxu0 0.0
        %4491 = vmatprep.subr.mxu0 0.0
        %4492 = vmatpush1.msra.mxu0 0.0
        %4493 = vmatprep.subr.mxu0 0.0
        %4494 = vmatpush1.msra.mxu0 0.0
        %4495 = vmatprep.subr.mxu0 0.0
        %4496 = vmatpush1.msra.mxu0 0.0
        %4497 = vmatprep.subr.mxu0 0.0
        %4498 = vmatpush1.msra.mxu0 0.0
        %4499 = vmatprep.subr.mxu0 0.0
        %4500 = vmatpush1.msra.mxu0 0.0
        %4501 = vmatprep.subr.mxu0 0.0
        %4502 = vmatpush1.msra.mxu0 0.0
        %4503 = vmatprep.subr.mxu0 0.0
        %4504 = vmatpush1.msra.mxu0 0.0
        %4505 = vmatprep.subr.mxu0 0.0
        %4506 = vmatpush1.msra.mxu0 0.0
        %4507 = vmatprep.subr.mxu0 0.0
        %4508 = vmatpush1.msra.mxu0 0.0
        %4509 = vmatprep.mubr.f32.mxu0 0.0
        %4510 = vmatmul.mubr.f32.gmra.mrb[0].mxu0 %v4440
        %v4511 = vpop.f32.mrb[0].mxu0
        %v4512 = vadd.f32 %v4431, %v4511
        %v4513 = vpop.f32.mrb[0].mxu0
        %4514 = vmatprep.mubr.f32.mxu0 0.0
        %4515 = vmatmul.mubr.f32.gmra.mrb[0].mxu0 %v4443
        %v4516 = vpop.f32.mrb[0].mxu0
        %v4517 = vadd.f32 %v4436, %v4516
        %v4518 = vpop.f32.mrb[0].mxu0
        %4519 = vdwg.mxu0
        %v4520 = vld [vmem:[#allocation26] sm:$0xff]
        %v4521 = vld [vmem:[#allocation26 + $0x8] sm:$0xff]
        %v4522 = vld [vmem:[#allocation26 + $0x10] sm:$0xff]
        %v4523 = vld [vmem:[#allocation26 + $0x18] sm:$0xff]
        %v4524 = vld [vmem:[#allocation26 + $0x20] sm:$0xff]
        %v4525 = vld [vmem:[#allocation26 + $0x28] sm:$0xff]
        %v4526 = vld [vmem:[#allocation26 + $0x30] sm:$0xff]
        %v4527 = vld [vmem:[#allocation26 + $0x38] sm:$0xff]
        %v4528 = vld [vmem:[#allocation26 + $0x40] sm:$0xff]
        %v4529 = vld [vmem:[#allocation26 + $0x48] sm:$0xff]
        %v4530 = vld [vmem:[#allocation26 + $0x50] sm:$0xff]
        %v4531 = vld [vmem:[#allocation26 + $0x58] sm:$0xff]
        %v4532 = vld [vmem:[#allocation26 + $0x60] sm:$0xff]
        %v4533 = vld [vmem:[#allocation26 + $0x68] sm:$0xff]
        %v4534 = vld [vmem:[#allocation26 + $0x70] sm:$0xff]
        %v4535 = vld [vmem:[#allocation26 + $0x78] sm:$0xff]
        %v4536 = vld [vmem:[#allocation25] sm:$0x1]
        %v4538 = vlaneseq
        %v4539 = vshrl.u32 %v4538, 7
        %v4540 = vsub.s32 0, %v4539
        %v4541 = vrot.slane %v4536, %v4540
        %4543 = vmatprep.subr.mxu0 0.0
        %4544 = vmatpush1.msra.mxu0 %v4520
        %4545 = vmatprep.subr.mxu0 0.0
        %4546 = vmatpush1.msra.mxu0 %v4521
        %4547 = vmatprep.subr.mxu0 0.0
        %4548 = vmatpush1.msra.mxu0 %v4522
        %4549 = vmatprep.subr.mxu0 0.0
        %4550 = vmatpush1.msra.mxu0 %v4523
        %4551 = vmatprep.subr.mxu0 0.0
        %4552 = vmatpush1.msra.mxu0 %v4524
        %4553 = vmatprep.subr.mxu0 0.0
        %4554 = vmatpush1.msra.mxu0 %v4525
        %4555 = vmatprep.subr.mxu0 0.0
        %4556 = vmatpush1.msra.mxu0 %v4526
        %4557 = vmatprep.subr.mxu0 0.0
        %4558 = vmatpush1.msra.mxu0 %v4527
        %4559 = vmatprep.subr.mxu0 0.0
        %4560 = vmatpush1.msra.mxu0 %v4528
        %4561 = vmatprep.subr.mxu0 0.0
        %4562 = vmatpush1.msra.mxu0 %v4529
        %4563 = vmatprep.subr.mxu0 0.0
        %4564 = vmatpush1.msra.mxu0 %v4530
        %4565 = vmatprep.subr.mxu0 0.0
        %4566 = vmatpush1.msra.mxu0 %v4531
        %4567 = vmatprep.subr.mxu0 0.0
        %4568 = vmatpush1.msra.mxu0 %v4532
        %4569 = vmatprep.subr.mxu0 0.0
        %4570 = vmatpush1.msra.mxu0 %v4533
        %4571 = vmatprep.subr.mxu0 0.0
        %4572 = vmatpush1.msra.mxu0 %v4534
        %4573 = vmatprep.subr.mxu0 0.0
        %4574 = vmatpush1.msra.mxu0 %v4535
        %4575 = vmatprep.subr.mxu0 0.0
        %4576 = vmatpush1.msra.mxu0 0.0
        %4577 = vmatprep.subr.mxu0 0.0
        %4578 = vmatpush1.msra.mxu0 0.0
        %4579 = vmatprep.subr.mxu0 0.0
        %4580 = vmatpush1.msra.mxu0 0.0
        %4581 = vmatprep.subr.mxu0 0.0
        %4582 = vmatpush1.msra.mxu0 0.0
        %4583 = vmatprep.subr.mxu0 0.0
        %4584 = vmatpush1.msra.mxu0 0.0
        %4585 = vmatprep.subr.mxu0 0.0
        %4586 = vmatpush1.msra.mxu0 0.0
        %4587 = vmatprep.subr.mxu0 0.0
        %4588 = vmatpush1.msra.mxu0 0.0
        %4589 = vmatprep.subr.mxu0 0.0
        %4590 = vmatpush1.msra.mxu0 0.0
        %4591 = vmatprep.subr.mxu0 0.0
        %4592 = vmatpush1.msra.mxu0 0.0
        %4593 = vmatprep.subr.mxu0 0.0
        %4594 = vmatpush1.msra.mxu0 0.0
        %4595 = vmatprep.subr.mxu0 0.0
        %4596 = vmatpush1.msra.mxu0 0.0
        %4597 = vmatprep.subr.mxu0 0.0
        %4598 = vmatpush1.msra.mxu0 0.0
        %4599 = vmatprep.subr.mxu0 0.0
        %4600 = vmatpush1.msra.mxu0 0.0
        %4601 = vmatprep.subr.mxu0 0.0
        %4602 = vmatpush1.msra.mxu0 0.0
        %4603 = vmatprep.subr.mxu0 0.0
        %4604 = vmatpush1.msra.mxu0 0.0
        %4605 = vmatprep.subr.mxu0 0.0
        %4606 = vmatpush1.msra.mxu0 0.0
        %4607 = vmatprep.mubr.f32.mxu0 0.0
        %4608 = vmatmul.mubr.f32.gmra.mrb[0].mxu0 %v4512
        %v4609 = vpop.f32.mrb[0].mxu0
        %v4610 = vadd.f32 %v4541, %v4609
        %v4611 = vpop.f32.mrb[0].mxu0
        %4612 = vmatprep.mubr.f32.mxu0 0.0
        %4613 = vmatmul.mubr.f32.gmra.mrb[0].mxu0 %v4517
        %v4614 = vpop.f32.mrb[0].mxu0
        %v4615 = vadd.f32 %v4541, %v4614
        %v4616 = vpop.f32.mrb[0].mxu0
        %4617 = vdwg.mxu0
        %v4618 = vadd.f32 %v4610, %v3749
        %v4619 = vadd.f32 %v4615, %v3750
        %4620 = vmatprep.subr.mxu0 0.0
        %4621 = vmatpush1.msra.mxu0 %v4618
        %4622 = vmatprep.subr.mxu0 0.0
        %4623 = vmatpush1.msra.mxu0 %v4619
        %4624 = vmatprep.subr.mxu0 0.0
        %4625 = vmatpush1.msra.mxu0 0.0
        %4626 = vmatprep.subr.mxu0 0.0
        %4627 = vmatpush1.msra.mxu0 0.0
        %4628 = vmatprep.subr.mxu0 0.0
        %4629 = vmatpush1.msra.mxu0 0.0
        %4630 = vmatprep.subr.mxu0 0.0
        %4631 = vmatpush1.msra.mxu0 0.0
        %4632 = vmatprep.subr.mxu0 0.0
        %4633 = vmatpush1.msra.mxu0 0.0
        %4634 = vmatprep.subr.mxu0 0.0
        %4635 = vmatpush1.msra.mxu0 0.0
        %4636 = vmatprep.subr.mxu0 0.0
        %4637 = vmatpush1.msra.mxu0 0.0
        %4638 = vmatprep.subr.mxu0 0.0
        %4639 = vmatpush1.msra.mxu0 0.0
        %4640 = vmatprep.subr.mxu0 0.0
        %4641 = vmatpush1.msra.mxu0 0.0
        %4642 = vmatprep.subr.mxu0 0.0
        %4643 = vmatpush1.msra.mxu0 0.0
        %4644 = vmatprep.subr.mxu0 0.0
        %4645 = vmatpush1.msra.mxu0 0.0
        %4646 = vmatprep.subr.mxu0 0.0
        %4647 = vmatpush1.msra.mxu0 0.0
        %4648 = vmatprep.subr.mxu0 0.0
        %4649 = vmatpush1.msra.mxu0 0.0
        %4650 = vmatprep.subr.mxu0 0.0
        %4651 = vmatpush1.msra.mxu0 0.0
        %4652 = vmatprep.subr.mxu0 0.0
        %4653 = vmatpush1.msra.mxu0 0.0
        %4654 = vmatprep.subr.mxu0 0.0
        %4655 = vmatpush1.msra.mxu0 0.0
        %4656 = vmatprep.subr.mxu0 0.0
        %4657 = vmatpush1.msra.mxu0 0.0
        %4658 = vmatprep.subr.mxu0 0.0
        %4659 = vmatpush1.msra.mxu0 0.0
        %4660 = vmatprep.subr.mxu0 0.0
        %4661 = vmatpush1.msra.mxu0 0.0
        %4662 = vmatprep.subr.mxu0 0.0
        %4663 = vmatpush1.msra.mxu0 0.0
        %4664 = vmatprep.subr.mxu0 0.0
        %4665 = vmatpush1.msra.mxu0 0.0
        %4666 = vmatprep.subr.mxu0 0.0
        %4667 = vmatpush1.msra.mxu0 0.0
        %4668 = vmatprep.subr.mxu0 0.0
        %4669 = vmatpush1.msra.mxu0 0.0
        %4670 = vmatprep.subr.mxu0 0.0
        %4671 = vmatpush1.msra.mxu0 0.0
        %4672 = vmatprep.subr.mxu0 0.0
        %4673 = vmatpush1.msra.mxu0 0.0
        %4674 = vmatprep.subr.mxu0 0.0
        %4675 = vmatpush1.msra.mxu0 0.0
        %4676 = vmatprep.subr.mxu0 0.0
        %4677 = vmatpush1.msra.mxu0 0.0
        %4678 = vmatprep.subr.mxu0 0.0
        %4679 = vmatpush1.msra.mxu0 0.0
        %4680 = vmatprep.subr.mxu0 0.0
        %4681 = vmatpush1.msra.mxu0 0.0
        %4682 = vmatprep.subr.mxu0 0.0
        %4683 = vmatpush1.msra.mxu0 0.0
        %4684 = vmatprep.mubr.f32.mxu0 0.0
        %4685 = vmatmul.mubr.f32.gmra.mrb[0].mxu0 %v2365
        %v4686 = vpop.f32.mrb[0].mxu0
        %v4687 = vadd.f32 0.0, %v4686
        %v4688 = vpop.f32.mrb[0].mxu0
        %4689 = vmatprep.mubr.f32.mxu0 0.0
        %4690 = vmatmul.mubr.f32.gmra.mrb[0].mxu0 %v2368
        %v4691 = vpop.f32.mrb[0].mxu0
        %v4692 = vadd.f32 0.0, %v4691
        %v4693 = vpop.f32.mrb[0].mxu0
        %4694 = vdwg.mxu0
        %4695 = vmatprep.subr.mxu0 0.0
        %4696 = vmatpush1.msra.mxu0 %v4618
        %4697 = vmatprep.subr.mxu0 0.0
        %4698 = vmatpush1.msra.mxu0 %v4619
        %4699 = vmatprep.subr.mxu0 0.0
        %4700 = vmatpush1.msra.mxu0 0.0
        %4701 = vmatprep.subr.mxu0 0.0
        %4702 = vmatpush1.msra.mxu0 0.0
        %4703 = vmatprep.subr.mxu0 0.0
        %4704 = vmatpush1.msra.mxu0 0.0
        %4705 = vmatprep.subr.mxu0 0.0
        %4706 = vmatpush1.msra.mxu0 0.0
        %4707 = vmatprep.subr.mxu0 0.0
        %4708 = vmatpush1.msra.mxu0 0.0
        %4709 = vmatprep.subr.mxu0 0.0
        %4710 = vmatpush1.msra.mxu0 0.0
        %4711 = vmatprep.subr.mxu0 0.0
        %4712 = vmatpush1.msra.mxu0 0.0
        %4713 = vmatprep.subr.mxu0 0.0
        %4714 = vmatpush1.msra.mxu0 0.0
        %4715 = vmatprep.subr.mxu0 0.0
        %4716 = vmatpush1.msra.mxu0 0.0
        %4717 = vmatprep.subr.mxu0 0.0
        %4718 = vmatpush1.msra.mxu0 0.0
        %4719 = vmatprep.subr.mxu0 0.0
        %4720 = vmatpush1.msra.mxu0 0.0
        %4721 = vmatprep.subr.mxu0 0.0
        %4722 = vmatpush1.msra.mxu0 0.0
        %4723 = vmatprep.subr.mxu0 0.0
        %4724 = vmatpush1.msra.mxu0 0.0
        %4725 = vmatprep.subr.mxu0 0.0
        %4726 = vmatpush1.msra.mxu0 0.0
        %4727 = vmatprep.subr.mxu0 0.0
        %4728 = vmatpush1.msra.mxu0 0.0
        %4729 = vmatprep.subr.mxu0 0.0
        %4730 = vmatpush1.msra.mxu0 0.0
        %4731 = vmatprep.subr.mxu0 0.0
        %4732 = vmatpush1.msra.mxu0 0.0
        %4733 = vmatprep.subr.mxu0 0.0
        %4734 = vmatpush1.msra.mxu0 0.0
        %4735 = vmatprep.subr.mxu0 0.0
        %4736 = vmatpush1.msra.mxu0 0.0
        %4737 = vmatprep.subr.mxu0 0.0
        %4738 = vmatpush1.msra.mxu0 0.0
        %4739 = vmatprep.subr.mxu0 0.0
        %4740 = vmatpush1.msra.mxu0 0.0
        %4741 = vmatprep.subr.mxu0 0.0
        %4742 = vmatpush1.msra.mxu0 0.0
        %4743 = vmatprep.subr.mxu0 0.0
        %4744 = vmatpush1.msra.mxu0 0.0
        %4745 = vmatprep.subr.mxu0 0.0
        %4746 = vmatpush1.msra.mxu0 0.0
        %4747 = vmatprep.subr.mxu0 0.0
        %4748 = vmatpush1.msra.mxu0 0.0
        %4749 = vmatprep.subr.mxu0 0.0
        %4750 = vmatpush1.msra.mxu0 0.0
        %4751 = vmatprep.subr.mxu0 0.0
        %4752 = vmatpush1.msra.mxu0 0.0
        %4753 = vmatprep.subr.mxu0 0.0
        %4754 = vmatpush1.msra.mxu0 0.0
        %4755 = vmatprep.subr.mxu0 0.0
        %4756 = vmatpush1.msra.mxu0 0.0
        %4757 = vmatprep.subr.mxu0 0.0
        %4758 = vmatpush1.msra.mxu0 0.0
        %4759 = vmatprep.mubr.f32.mxu0 0.0
        %4760 = vmatmul.mubr.f32.gmra.mrb[0].mxu0 %v2448
        %v4761 = vpop.f32.mrb[0].mxu0
        %v4762 = vadd.f32 0.0, %v4761
        %v4763 = vpop.f32.mrb[0].mxu0
        %4764 = vmatprep.mubr.f32.mxu0 0.0
        %4765 = vmatmul.mubr.f32.gmra.mrb[0].mxu0 %v2451
        %v4766 = vpop.f32.mrb[0].mxu0
        %v4767 = vadd.f32 0.0, %v4766
        %v4768 = vpop.f32.mrb[0].mxu0
        %4769 = vdwg.mxu0
        %s4770 = scalar_lea.vmem %s79, 4
        %v4771 = vld [vmem:[%s4770] sm:$0x7]
        %s4772 = scalar_lea.vmem [#allocation40], 1
        %v4773 = vld [vmem:[%s4772] sm:$0x1]
        %v4775 = vsel %vm2539, %v4692, 0
        %4777 = vmatprep.subr.mxu0 0.0
        %4778 = vmatpush1.msra.mxu0 %v4687
        %4779 = vmatprep.subr.mxu0 0.0
        %4780 = vmatpush1.msra.mxu0 %v4775
        %4781 = vmatprep.subr.mxu0 0.0
        %4782 = vmatpush1.msra.mxu0 0.0
        %4783 = vmatprep.subr.mxu0 0.0
        %4784 = vmatpush1.msra.mxu0 0.0
        %4785 = vmatprep.subr.mxu0 0.0
        %4786 = vmatpush1.msra.mxu0 0.0
        %4787 = vmatprep.subr.mxu0 0.0
        %4788 = vmatpush1.msra.mxu0 0.0
        %4789 = vmatprep.subr.mxu0 0.0
        %4790 = vmatpush1.msra.mxu0 0.0
        %4791 = vmatprep.subr.mxu0 0.0
        %4792 = vmatpush1.msra.mxu0 0.0
        %4793 = vmatprep.subr.mxu0 0.0
        %4794 = vmatpush1.msra.mxu0 0.0
        %4795 = vmatprep.subr.mxu0 0.0
        %4796 = vmatpush1.msra.mxu0 0.0
        %4797 = vmatprep.subr.mxu0 0.0
        %4798 = vmatpush1.msra.mxu0 0.0
        %4799 = vmatprep.subr.mxu0 0.0
        %4800 = vmatpush1.msra.mxu0 0.0
        %4801 = vmatprep.subr.mxu0 0.0
        %4802 = vmatpush1.msra.mxu0 0.0
        %4803 = vmatprep.subr.mxu0 0.0
        %4804 = vmatpush1.msra.mxu0 0.0
        %4805 = vmatprep.subr.mxu0 0.0
        %4806 = vmatpush1.msra.mxu0 0.0
        %4807 = vmatprep.subr.mxu0 0.0
        %4808 = vmatpush1.msra.mxu0 0.0
        %4809 = vmatprep.subr.mxu0 0.0
        %4810 = vmatpush1.msra.mxu0 0.0
        %4811 = vmatprep.subr.mxu0 0.0
        %4812 = vmatpush1.msra.mxu0 0.0
        %4813 = vmatprep.subr.mxu0 0.0
        %4814 = vmatpush1.msra.mxu0 0.0
        %4815 = vmatprep.subr.mxu0 0.0
        %4816 = vmatpush1.msra.mxu0 0.0
        %4817 = vmatprep.subr.mxu0 0.0
        %4818 = vmatpush1.msra.mxu0 0.0
        %4819 = vmatprep.subr.mxu0 0.0
        %4820 = vmatpush1.msra.mxu0 0.0
        %4821 = vmatprep.subr.mxu0 0.0
        %4822 = vmatpush1.msra.mxu0 0.0
        %4823 = vmatprep.subr.mxu0 0.0
        %4824 = vmatpush1.msra.mxu0 0.0
        %4825 = vmatprep.subr.mxu0 0.0
        %4826 = vmatpush1.msra.mxu0 0.0
        %4827 = vmatprep.subr.mxu0 0.0
        %4828 = vmatpush1.msra.mxu0 0.0
        %4829 = vmatprep.subr.mxu0 0.0
        %4830 = vmatpush1.msra.mxu0 0.0
        %4831 = vmatprep.subr.mxu0 0.0
        %4832 = vmatpush1.msra.mxu0 0.0
        %4833 = vmatprep.subr.mxu0 0.0
        %4834 = vmatpush1.msra.mxu0 0.0
        %4835 = vmatprep.subr.mxu0 0.0
        %4836 = vmatpush1.msra.mxu0 0.0
        %4837 = vmatprep.subr.mxu0 0.0
        %4838 = vmatpush1.msra.mxu0 0.0
        %4839 = vmatprep.subr.mxu0 0.0
        %4840 = vmatpush1.msra.mxu0 0.0
        %4841 = vmatprep.mubr.f32.mxu0 0.0
        %4842 = vmatmul.mubr.f32.gmra.mrb[0].mxu0 %v2534
        %v4843 = vpop.f32.mrb[0].mxu0
        %v4844 = vadd.f32 0.0, %v4843
        %v4845 = vpop.f32.mrb[0].mxu0
        %4846 = vmatprep.mubr.f32.mxu0 0.0
        %4847 = vmatmul.mubr.f32.gmra.mrb[0].mxu0 %v2537
        %v4848 = vpop.f32.mrb[0].mxu0
        %v4849 = vadd.f32 0.0, %v4848
        %v4850 = vpop.f32.mrb[0].mxu0
        %4851 = vdwg.mxu0
        %v4852 = vlaneseq
        %v4853 = vshrl.u32 %v4852, 7
        %v4854 = vsub.s32 0, %v4853
        %v4855 = vrot.slane %v4771, %v4854
        %v4856 = vmul.f32 %v4844, %v4855
        %v4857 = vmul.f32 %v4849, %v4855
        %v4858 = vadd.f32 %v4856, 0.0
        %v4859 = vadd.f32 %v4857, 0.0
        %v4860 = vlaneseq
        %v4861 = vshrl.u32 %v4860, 7
        %v4862 = vsub.s32 1, %v4861
        %v4863 = vrot.slane %v4771, %v4862
        %v4864 = vmul.f32 %v4844, %v4863
        %v4865 = vmul.f32 %v4849, %v4863
        %v4868 = vrot.slane %v4864, 1
        %v4869 = vrot.slane %v4865, 1
        %v4870 = vsel %vm1744, %v4868, %v4869
        %v4873 = vadd.f32 %v4858, %v4870
        %v4874 = vadd.f32 %v4859, %v4869
        %v4875 = vlaneseq
        %v4876 = vshrl.u32 %v4875, 7
        %v4877 = vsub.s32 2, %v4876
        %v4878 = vrot.slane %v4771, %v4877
        %v4879 = vmul.f32 %v4844, %v4878
        %v4880 = vmul.f32 %v4849, %v4878
        %v4883 = vrot.slane %v4879, 2
        %v4884 = vrot.slane %v4880, 2
        %v4885 = vsel %vm1910, %v4883, %v4884
        %v4888 = vadd.f32 %v4873, %v4885
        %v4889 = vadd.f32 %v4874, %v4884
        %v4891 = vlaneseq
        %v4892 = vshrl.u32 %v4891, 7
        %v4893 = vsub.s32 0, %v4892
        %v4894 = vrot.slane %v4773, %v4893
        %v4896 = vadd.f32 %v4888, %v4894
        %v4897 = vadd.f32 %v4889, %v4894
        %vm4898 = vcmp.gt.f32.partialorder %v4896, 0.0
        %vm4899 = vcmp.gt.f32.partialorder %v4897, 0.0
        %v4900 = vmul.f32 %v4896, 0.1
        %v4901 = vmul.f32 %v4897, 0.1
        %v4902 = vsel %vm4898, %v4896, %v4900
        %v4903 = vsel %vm4899, %v4897, %v4901
        %s4904 = scalar_lea.vmem %s81, 8
        %v4905 = vld [vmem:[%s4904] sm:$0x7f]
        %s4906 = scalar_lea.vmem [#allocation41], 1
        %v4907 = vld [vmem:[%s4906] sm:$0x1]
        %v4909 = vsel %vm2539, %v4903, 0
        %4911 = vmatprep.subr.mxu0 0.0
        %4912 = vmatpush1.msra.mxu0 %v4902
        %4913 = vmatprep.subr.mxu0 0.0
        %4914 = vmatpush1.msra.mxu0 %v4909
        %4915 = vmatprep.subr.mxu0 0.0
        %4916 = vmatpush1.msra.mxu0 0.0
        %4917 = vmatprep.subr.mxu0 0.0
        %4918 = vmatpush1.msra.mxu0 0.0
        %4919 = vmatprep.subr.mxu0 0.0
        %4920 = vmatpush1.msra.mxu0 0.0
        %4921 = vmatprep.subr.mxu0 0.0
        %4922 = vmatpush1.msra.mxu0 0.0
        %4923 = vmatprep.subr.mxu0 0.0
        %4924 = vmatpush1.msra.mxu0 0.0
        %4925 = vmatprep.subr.mxu0 0.0
        %4926 = vmatpush1.msra.mxu0 0.0
        %4927 = vmatprep.subr.mxu0 0.0
        %4928 = vmatpush1.msra.mxu0 0.0
        %4929 = vmatprep.subr.mxu0 0.0
        %4930 = vmatpush1.msra.mxu0 0.0
        %4931 = vmatprep.subr.mxu0 0.0
        %4932 = vmatpush1.msra.mxu0 0.0
        %4933 = vmatprep.subr.mxu0 0.0
        %4934 = vmatpush1.msra.mxu0 0.0
        %4935 = vmatprep.subr.mxu0 0.0
        %4936 = vmatpush1.msra.mxu0 0.0
        %4937 = vmatprep.subr.mxu0 0.0
        %4938 = vmatpush1.msra.mxu0 0.0
        %4939 = vmatprep.subr.mxu0 0.0
        %4940 = vmatpush1.msra.mxu0 0.0
        %4941 = vmatprep.subr.mxu0 0.0
        %4942 = vmatpush1.msra.mxu0 0.0
        %4943 = vmatprep.subr.mxu0 0.0
        %4944 = vmatpush1.msra.mxu0 0.0
        %4945 = vmatprep.subr.mxu0 0.0
        %4946 = vmatpush1.msra.mxu0 0.0
        %4947 = vmatprep.subr.mxu0 0.0
        %4948 = vmatpush1.msra.mxu0 0.0
        %4949 = vmatprep.subr.mxu0 0.0
        %4950 = vmatpush1.msra.mxu0 0.0
        %4951 = vmatprep.subr.mxu0 0.0
        %4952 = vmatpush1.msra.mxu0 0.0
        %4953 = vmatprep.subr.mxu0 0.0
        %4954 = vmatpush1.msra.mxu0 0.0
        %4955 = vmatprep.subr.mxu0 0.0
        %4956 = vmatpush1.msra.mxu0 0.0
        %4957 = vmatprep.subr.mxu0 0.0
        %4958 = vmatpush1.msra.mxu0 0.0
        %4959 = vmatprep.subr.mxu0 0.0
        %4960 = vmatpush1.msra.mxu0 0.0
        %4961 = vmatprep.subr.mxu0 0.0
        %4962 = vmatpush1.msra.mxu0 0.0
        %4963 = vmatprep.subr.mxu0 0.0
        %4964 = vmatpush1.msra.mxu0 0.0
        %4965 = vmatprep.subr.mxu0 0.0
        %4966 = vmatpush1.msra.mxu0 0.0
        %4967 = vmatprep.subr.mxu0 0.0
        %4968 = vmatpush1.msra.mxu0 0.0
        %4969 = vmatprep.subr.mxu0 0.0
        %4970 = vmatpush1.msra.mxu0 0.0
        %4971 = vmatprep.subr.mxu0 0.0
        %4972 = vmatpush1.msra.mxu0 0.0
        %4973 = vmatprep.subr.mxu0 0.0
        %4974 = vmatpush1.msra.mxu0 0.0
        %4975 = vmatprep.mubr.f32.mxu0 0.0
        %4976 = vmatmul.mubr.f32.gmra.mrb[0].mxu0 %v2675
        %v4977 = vpop.f32.mrb[0].mxu0
        %v4978 = vadd.f32 0.0, %v4977
        %v4979 = vpop.f32.mrb[0].mxu0
        %4980 = vmatprep.mubr.f32.mxu0 0.0
        %4981 = vmatmul.mubr.f32.gmra.mrb[0].mxu0 %v2678
        %v4982 = vpop.f32.mrb[0].mxu0
        %v4983 = vadd.f32 0.0, %v4982
        %v4984 = vpop.f32.mrb[0].mxu0
        %4985 = vdwg.mxu0
        %v4986 = vlaneseq
        %v4987 = vshrl.u32 %v4986, 7
        %v4988 = vsub.s32 0, %v4987
        %v4989 = vrot.slane %v4905, %v4988
        %v4990 = vmul.f32 %v4978, %v4989
        %v4991 = vmul.f32 %v4983, %v4989
        %v4992 = vadd.f32 %v4990, 0.0
        %v4993 = vadd.f32 %v4991, 0.0
        %v4994 = vlaneseq
        %v4995 = vshrl.u32 %v4994, 7
        %v4996 = vsub.s32 1, %v4995
        %v4997 = vrot.slane %v4905, %v4996
        %v4998 = vmul.f32 %v4978, %v4997
        %v4999 = vmul.f32 %v4983, %v4997
        %v5002 = vrot.slane %v4998, 1
        %v5003 = vrot.slane %v4999, 1
        %v5004 = vsel %vm1744, %v5002, %v5003
        %v5007 = vadd.f32 %v4992, %v5004
        %v5008 = vadd.f32 %v4993, %v5003
        %v5009 = vlaneseq
        %v5010 = vshrl.u32 %v5009, 7
        %v5011 = vsub.s32 2, %v5010
        %v5012 = vrot.slane %v4905, %v5011
        %v5013 = vmul.f32 %v4978, %v5012
        %v5014 = vmul.f32 %v4983, %v5012
        %v5017 = vrot.slane %v5013, 2
        %v5018 = vrot.slane %v5014, 2
        %v5019 = vsel %vm1910, %v5017, %v5018
        %v5022 = vadd.f32 %v5007, %v5019
        %v5023 = vadd.f32 %v5008, %v5018
        %v5024 = vlaneseq
        %v5025 = vshrl.u32 %v5024, 7
        %v5026 = vsub.s32 3, %v5025
        %v5027 = vrot.slane %v4905, %v5026
        %v5028 = vmul.f32 %v4978, %v5027
        %v5029 = vmul.f32 %v4983, %v5027
        %v5032 = vrot.slane %v5028, 3
        %v5033 = vrot.slane %v5029, 3
        %v5034 = vsel %vm1999, %v5032, %v5033
        %v5037 = vadd.f32 %v5022, %v5034
        %v5038 = vadd.f32 %v5023, %v5033
        %v5039 = vlaneseq
        %v5040 = vshrl.u32 %v5039, 7
        %v5041 = vsub.s32 4, %v5040
        %v5042 = vrot.slane %v4905, %v5041
        %v5043 = vmul.f32 %v4978, %v5042
        %v5044 = vmul.f32 %v4983, %v5042
        %v5047 = vrot.slane %v5043, 4
        %v5048 = vrot.slane %v5044, 4
        %v5049 = vsel %vm2088, %v5047, %v5048
        %v5052 = vadd.f32 %v5037, %v5049
        %v5053 = vadd.f32 %v5038, %v5048
        %v5054 = vlaneseq
        %v5055 = vshrl.u32 %v5054, 7
        %v5056 = vsub.s32 5, %v5055
        %v5057 = vrot.slane %v4905, %v5056
        %v5058 = vmul.f32 %v4978, %v5057
        %v5059 = vmul.f32 %v4983, %v5057
        %v5062 = vrot.slane %v5058, 5
        %v5063 = vrot.slane %v5059, 5
        %v5064 = vsel %vm2177, %v5062, %v5063
        %v5067 = vadd.f32 %v5052, %v5064
        %v5068 = vadd.f32 %v5053, %v5063
        %v5069 = vlaneseq
        %v5070 = vshrl.u32 %v5069, 7
        %v5071 = vsub.s32 6, %v5070
        %v5072 = vrot.slane %v4905, %v5071
        %v5073 = vmul.f32 %v4978, %v5072
        %v5074 = vmul.f32 %v4983, %v5072
        %v5077 = vrot.slane %v5073, 6
        %v5078 = vrot.slane %v5074, 6
        %v5079 = vsel %vm2266, %v5077, %v5078
        %v5082 = vadd.f32 %v5067, %v5079
        %v5083 = vadd.f32 %v5068, %v5078
        %v5085 = vlaneseq
        %v5086 = vshrl.u32 %v5085, 7
        %v5087 = vsub.s32 0, %v5086
        %v5088 = vrot.slane %v4907, %v5087
        %v5090 = vadd.f32 %v5082, %v5088
        %v5091 = vadd.f32 %v5083, %v5088
        %s5092 = scalar_lea.vmem %s71, 4
        %v5093 = vld [vmem:[%s5092] sm:$0x7]
        %s5094 = scalar_lea.vmem [#allocation37], 1
        %v5095 = vld [vmem:[%s5094] sm:$0x1]
        %v5097 = vsel %vm2539, %v4767, 0
        %5099 = vmatprep.subr.mxu0 0.0
        %5100 = vmatpush1.msra.mxu0 %v4762
        %5101 = vmatprep.subr.mxu0 0.0
        %5102 = vmatpush1.msra.mxu0 %v5097
        %5103 = vmatprep.subr.mxu0 0.0
        %5104 = vmatpush1.msra.mxu0 0.0
        %5105 = vmatprep.subr.mxu0 0.0
        %5106 = vmatpush1.msra.mxu0 0.0
        %5107 = vmatprep.subr.mxu0 0.0
        %5108 = vmatpush1.msra.mxu0 0.0
        %5109 = vmatprep.subr.mxu0 0.0
        %5110 = vmatpush1.msra.mxu0 0.0
        %5111 = vmatprep.subr.mxu0 0.0
        %5112 = vmatpush1.msra.mxu0 0.0
        %5113 = vmatprep.subr.mxu0 0.0
        %5114 = vmatpush1.msra.mxu0 0.0
        %5115 = vmatprep.subr.mxu0 0.0
        %5116 = vmatpush1.msra.mxu0 0.0
        %5117 = vmatprep.subr.mxu0 0.0
        %5118 = vmatpush1.msra.mxu0 0.0
        %5119 = vmatprep.subr.mxu0 0.0
        %5120 = vmatpush1.msra.mxu0 0.0
        %5121 = vmatprep.subr.mxu0 0.0
        %5122 = vmatpush1.msra.mxu0 0.0
        %5123 = vmatprep.subr.mxu0 0.0
        %5124 = vmatpush1.msra.mxu0 0.0
        %5125 = vmatprep.subr.mxu0 0.0
        %5126 = vmatpush1.msra.mxu0 0.0
        %5127 = vmatprep.subr.mxu0 0.0
        %5128 = vmatpush1.msra.mxu0 0.0
        %5129 = vmatprep.subr.mxu0 0.0
        %5130 = vmatpush1.msra.mxu0 0.0
        %5131 = vmatprep.subr.mxu0 0.0
        %5132 = vmatpush1.msra.mxu0 0.0
        %5133 = vmatprep.subr.mxu0 0.0
        %5134 = vmatpush1.msra.mxu0 0.0
        %5135 = vmatprep.subr.mxu0 0.0
        %5136 = vmatpush1.msra.mxu0 0.0
        %5137 = vmatprep.subr.mxu0 0.0
        %5138 = vmatpush1.msra.mxu0 0.0
        %5139 = vmatprep.subr.mxu0 0.0
        %5140 = vmatpush1.msra.mxu0 0.0
        %5141 = vmatprep.subr.mxu0 0.0
        %5142 = vmatpush1.msra.mxu0 0.0
        %5143 = vmatprep.subr.mxu0 0.0
        %5144 = vmatpush1.msra.mxu0 0.0
        %5145 = vmatprep.subr.mxu0 0.0
        %5146 = vmatpush1.msra.mxu0 0.0
        %5147 = vmatprep.subr.mxu0 0.0
        %5148 = vmatpush1.msra.mxu0 0.0
        %5149 = vmatprep.subr.mxu0 0.0
        %5150 = vmatpush1.msra.mxu0 0.0
        %5151 = vmatprep.subr.mxu0 0.0
        %5152 = vmatpush1.msra.mxu0 0.0
        %5153 = vmatprep.subr.mxu0 0.0
        %5154 = vmatpush1.msra.mxu0 0.0
        %5155 = vmatprep.subr.mxu0 0.0
        %5156 = vmatpush1.msra.mxu0 0.0
        %5157 = vmatprep.subr.mxu0 0.0
        %5158 = vmatpush1.msra.mxu0 0.0
        %5159 = vmatprep.subr.mxu0 0.0
        %5160 = vmatpush1.msra.mxu0 0.0
        %5161 = vmatprep.subr.mxu0 0.0
        %5162 = vmatpush1.msra.mxu0 0.0
        %5163 = vmatprep.mubr.f32.mxu0 0.0
        %5164 = vmatmul.mubr.f32.gmra.mrb[0].mxu0 %v2534
        %v5165 = vpop.f32.mrb[0].mxu0
        %v5166 = vadd.f32 0.0, %v5165
        %v5167 = vpop.f32.mrb[0].mxu0
        %5168 = vmatprep.mubr.f32.mxu0 0.0
        %5169 = vmatmul.mubr.f32.gmra.mrb[0].mxu0 %v2537
        %v5170 = vpop.f32.mrb[0].mxu0
        %v5171 = vadd.f32 0.0, %v5170
        %v5172 = vpop.f32.mrb[0].mxu0
        %5173 = vdwg.mxu0
        %v5174 = vlaneseq
        %v5175 = vshrl.u32 %v5174, 7
        %v5176 = vsub.s32 0, %v5175
        %v5177 = vrot.slane %v5093, %v5176
        %v5178 = vmul.f32 %v5166, %v5177
        %v5179 = vmul.f32 %v5171, %v5177
        %v5180 = vadd.f32 %v5178, 0.0
        %v5181 = vadd.f32 %v5179, 0.0
        %v5182 = vlaneseq
        %v5183 = vshrl.u32 %v5182, 7
        %v5184 = vsub.s32 1, %v5183
        %v5185 = vrot.slane %v5093, %v5184
        %v5186 = vmul.f32 %v5166, %v5185
        %v5187 = vmul.f32 %v5171, %v5185
        %v5190 = vrot.slane %v5186, 1
        %v5191 = vrot.slane %v5187, 1
        %v5192 = vsel %vm1744, %v5190, %v5191
        %v5195 = vadd.f32 %v5180, %v5192
        %v5196 = vadd.f32 %v5181, %v5191
        %v5197 = vlaneseq
        %v5198 = vshrl.u32 %v5197, 7
        %v5199 = vsub.s32 2, %v5198
        %v5200 = vrot.slane %v5093, %v5199
        %v5201 = vmul.f32 %v5166, %v5200
        %v5202 = vmul.f32 %v5171, %v5200
        %v5205 = vrot.slane %v5201, 2
        %v5206 = vrot.slane %v5202, 2
        %v5207 = vsel %vm1910, %v5205, %v5206
        %v5210 = vadd.f32 %v5195, %v5207
        %v5211 = vadd.f32 %v5196, %v5206
        %v5213 = vlaneseq
        %v5214 = vshrl.u32 %v5213, 7
        %v5215 = vsub.s32 0, %v5214
        %v5216 = vrot.slane %v5095, %v5215
        %v5218 = vadd.f32 %v5210, %v5216
        %v5219 = vadd.f32 %v5211, %v5216
        %vm5220 = vcmp.gt.f32.partialorder %v5218, 0.0
        %vm5221 = vcmp.gt.f32.partialorder %v5219, 0.0
        %v5222 = vmul.f32 %v5218, 0.1
        %v5223 = vmul.f32 %v5219, 0.1
        %v5224 = vsel %vm5220, %v5218, %v5222
        %v5225 = vsel %vm5221, %v5219, %v5223
        %s5226 = scalar_lea.vmem %s73, 8
        %v5227 = vld [vmem:[%s5226] sm:$0x7f]
        %s5228 = scalar_lea.vmem [#allocation38], 1
        %v5229 = vld [vmem:[%s5228] sm:$0x1]
        %v5231 = vsel %vm2539, %v5225, 0
        %5233 = vmatprep.subr.mxu0 0.0
        %5234 = vmatpush1.msra.mxu0 %v5224
        %5235 = vmatprep.subr.mxu0 0.0
        %5236 = vmatpush1.msra.mxu0 %v5231
        %5237 = vmatprep.subr.mxu0 0.0
        %5238 = vmatpush1.msra.mxu0 0.0
        %5239 = vmatprep.subr.mxu0 0.0
        %5240 = vmatpush1.msra.mxu0 0.0
        %5241 = vmatprep.subr.mxu0 0.0
        %5242 = vmatpush1.msra.mxu0 0.0
        %5243 = vmatprep.subr.mxu0 0.0
        %5244 = vmatpush1.msra.mxu0 0.0
        %5245 = vmatprep.subr.mxu0 0.0
        %5246 = vmatpush1.msra.mxu0 0.0
        %5247 = vmatprep.subr.mxu0 0.0
        %5248 = vmatpush1.msra.mxu0 0.0
        %5249 = vmatprep.subr.mxu0 0.0
        %5250 = vmatpush1.msra.mxu0 0.0
        %5251 = vmatprep.subr.mxu0 0.0
        %5252 = vmatpush1.msra.mxu0 0.0
        %5253 = vmatprep.subr.mxu0 0.0
        %5254 = vmatpush1.msra.mxu0 0.0
        %5255 = vmatprep.subr.mxu0 0.0
        %5256 = vmatpush1.msra.mxu0 0.0
        %5257 = vmatprep.subr.mxu0 0.0
        %5258 = vmatpush1.msra.mxu0 0.0
        %5259 = vmatprep.subr.mxu0 0.0
        %5260 = vmatpush1.msra.mxu0 0.0
        %5261 = vmatprep.subr.mxu0 0.0
        %5262 = vmatpush1.msra.mxu0 0.0
        %5263 = vmatprep.subr.mxu0 0.0
        %5264 = vmatpush1.msra.mxu0 0.0
        %5265 = vmatprep.subr.mxu0 0.0
        %5266 = vmatpush1.msra.mxu0 0.0
        %5267 = vmatprep.subr.mxu0 0.0
        %5268 = vmatpush1.msra.mxu0 0.0
        %5269 = vmatprep.subr.mxu0 0.0
        %5270 = vmatpush1.msra.mxu0 0.0
        %5271 = vmatprep.subr.mxu0 0.0
        %5272 = vmatpush1.msra.mxu0 0.0
        %5273 = vmatprep.subr.mxu0 0.0
        %5274 = vmatpush1.msra.mxu0 0.0
        %5275 = vmatprep.subr.mxu0 0.0
        %5276 = vmatpush1.msra.mxu0 0.0
        %5277 = vmatprep.subr.mxu0 0.0
        %5278 = vmatpush1.msra.mxu0 0.0
        %5279 = vmatprep.subr.mxu0 0.0
        %5280 = vmatpush1.msra.mxu0 0.0
        %5281 = vmatprep.subr.mxu0 0.0
        %5282 = vmatpush1.msra.mxu0 0.0
        %5283 = vmatprep.subr.mxu0 0.0
        %5284 = vmatpush1.msra.mxu0 0.0
        %5285 = vmatprep.subr.mxu0 0.0
        %5286 = vmatpush1.msra.mxu0 0.0
        %5287 = vmatprep.subr.mxu0 0.0
        %5288 = vmatpush1.msra.mxu0 0.0
        %5289 = vmatprep.subr.mxu0 0.0
        %5290 = vmatpush1.msra.mxu0 0.0
        %5291 = vmatprep.subr.mxu0 0.0
        %5292 = vmatpush1.msra.mxu0 0.0
        %5293 = vmatprep.subr.mxu0 0.0
        %5294 = vmatpush1.msra.mxu0 0.0
        %5295 = vmatprep.subr.mxu0 0.0
        %5296 = vmatpush1.msra.mxu0 0.0
        %5297 = vmatprep.mubr.f32.mxu0 0.0
        %5298 = vmatmul.mubr.f32.gmra.mrb[0].mxu0 %v2675
        %v5299 = vpop.f32.mrb[0].mxu0
        %v5300 = vadd.f32 0.0, %v5299
        %v5301 = vpop.f32.mrb[0].mxu0
        %5302 = vmatprep.mubr.f32.mxu0 0.0
        %5303 = vmatmul.mubr.f32.gmra.mrb[0].mxu0 %v2678
        %v5304 = vpop.f32.mrb[0].mxu0
        %v5305 = vadd.f32 0.0, %v5304
        %v5306 = vpop.f32.mrb[0].mxu0
        %5307 = vdwg.mxu0
        %v5308 = vlaneseq
        %v5309 = vshrl.u32 %v5308, 7
        %v5310 = vsub.s32 0, %v5309
        %v5311 = vrot.slane %v5227, %v5310
        %v5312 = vmul.f32 %v5300, %v5311
        %v5313 = vmul.f32 %v5305, %v5311
        %v5314 = vadd.f32 %v5312, 0.0
        %v5315 = vadd.f32 %v5313, 0.0
        %v5316 = vlaneseq
        %v5317 = vshrl.u32 %v5316, 7
        %v5318 = vsub.s32 1, %v5317
        %v5319 = vrot.slane %v5227, %v5318
        %v5320 = vmul.f32 %v5300, %v5319
        %v5321 = vmul.f32 %v5305, %v5319
        %v5324 = vrot.slane %v5320, 1
        %v5325 = vrot.slane %v5321, 1
        %v5326 = vsel %vm1744, %v5324, %v5325
        %v5329 = vadd.f32 %v5314, %v5326
        %v5330 = vadd.f32 %v5315, %v5325
        %v5331 = vlaneseq
        %v5332 = vshrl.u32 %v5331, 7
        %v5333 = vsub.s32 2, %v5332
        %v5334 = vrot.slane %v5227, %v5333
        %v5335 = vmul.f32 %v5300, %v5334
        %v5336 = vmul.f32 %v5305, %v5334
        %v5339 = vrot.slane %v5335, 2
        %v5340 = vrot.slane %v5336, 2
        %v5341 = vsel %vm1910, %v5339, %v5340
        %v5344 = vadd.f32 %v5329, %v5341
        %v5345 = vadd.f32 %v5330, %v5340
        %v5346 = vlaneseq
        %v5347 = vshrl.u32 %v5346, 7
        %v5348 = vsub.s32 3, %v5347
        %v5349 = vrot.slane %v5227, %v5348
        %v5350 = vmul.f32 %v5300, %v5349
        %v5351 = vmul.f32 %v5305, %v5349
        %v5354 = vrot.slane %v5350, 3
        %v5355 = vrot.slane %v5351, 3
        %v5356 = vsel %vm1999, %v5354, %v5355
        %v5359 = vadd.f32 %v5344, %v5356
        %v5360 = vadd.f32 %v5345, %v5355
        %v5361 = vlaneseq
        %v5362 = vshrl.u32 %v5361, 7
        %v5363 = vsub.s32 4, %v5362
        %v5364 = vrot.slane %v5227, %v5363
        %v5365 = vmul.f32 %v5300, %v5364
        %v5366 = vmul.f32 %v5305, %v5364
        %v5369 = vrot.slane %v5365, 4
        %v5370 = vrot.slane %v5366, 4
        %v5371 = vsel %vm2088, %v5369, %v5370
        %v5374 = vadd.f32 %v5359, %v5371
        %v5375 = vadd.f32 %v5360, %v5370
        %v5376 = vlaneseq
        %v5377 = vshrl.u32 %v5376, 7
        %v5378 = vsub.s32 5, %v5377
        %v5379 = vrot.slane %v5227, %v5378
        %v5380 = vmul.f32 %v5300, %v5379
        %v5381 = vmul.f32 %v5305, %v5379
        %v5384 = vrot.slane %v5380, 5
        %v5385 = vrot.slane %v5381, 5
        %v5386 = vsel %vm2177, %v5384, %v5385
        %v5389 = vadd.f32 %v5374, %v5386
        %v5390 = vadd.f32 %v5375, %v5385
        %v5391 = vlaneseq
        %v5392 = vshrl.u32 %v5391, 7
        %v5393 = vsub.s32 6, %v5392
        %v5394 = vrot.slane %v5227, %v5393
        %v5395 = vmul.f32 %v5300, %v5394
        %v5396 = vmul.f32 %v5305, %v5394
        %v5399 = vrot.slane %v5395, 6
        %v5400 = vrot.slane %v5396, 6
        %v5401 = vsel %vm2266, %v5399, %v5400
        %v5404 = vadd.f32 %v5389, %v5401
        %v5405 = vadd.f32 %v5390, %v5400
        %v5407 = vlaneseq
        %v5408 = vshrl.u32 %v5407, 7
        %v5409 = vsub.s32 0, %v5408
        %v5410 = vrot.slane %v5229, %v5409
        %v5412 = vadd.f32 %v5404, %v5410
        %v5413 = vadd.f32 %v5405, %v5410
        %v5415 = vsel %vm2539, %v5413, 0
        %5417 = vmatprep.subr.mxu0 0.0
        %5418 = vmatpush1.msra.mxu0 %v5412
        %5419 = vmatprep.subr.mxu0 0.0
        %5420 = vmatpush1.msra.mxu0 %v5415
        %5421 = vmatprep.subr.mxu0 0.0
        %5422 = vmatpush1.msra.mxu0 0.0
        %5423 = vmatprep.subr.mxu0 0.0
        %5424 = vmatpush1.msra.mxu0 0.0
        %5425 = vmatprep.subr.mxu0 0.0
        %5426 = vmatpush1.msra.mxu0 0.0
        %5427 = vmatprep.subr.mxu0 0.0
        %5428 = vmatpush1.msra.mxu0 0.0
        %5429 = vmatprep.subr.mxu0 0.0
        %5430 = vmatpush1.msra.mxu0 0.0
        %5431 = vmatprep.subr.mxu0 0.0
        %5432 = vmatpush1.msra.mxu0 0.0
        %5433 = vmatprep.subr.mxu0 0.0
        %5434 = vmatpush1.msra.mxu0 0.0
        %5435 = vmatprep.subr.mxu0 0.0
        %5436 = vmatpush1.msra.mxu0 0.0
        %5437 = vmatprep.subr.mxu0 0.0
        %5438 = vmatpush1.msra.mxu0 0.0
        %5439 = vmatprep.subr.mxu0 0.0
        %5440 = vmatpush1.msra.mxu0 0.0
        %5441 = vmatprep.subr.mxu0 0.0
        %5442 = vmatpush1.msra.mxu0 0.0
        %5443 = vmatprep.subr.mxu0 0.0
        %5444 = vmatpush1.msra.mxu0 0.0
        %5445 = vmatprep.subr.mxu0 0.0
        %5446 = vmatpush1.msra.mxu0 0.0
        %5447 = vmatprep.subr.mxu0 0.0
        %5448 = vmatpush1.msra.mxu0 0.0
        %5449 = vmatprep.subr.mxu0 0.0
        %5450 = vmatpush1.msra.mxu0 0.0
        %5451 = vmatprep.subr.mxu0 0.0
        %5452 = vmatpush1.msra.mxu0 0.0
        %5453 = vmatprep.subr.mxu0 0.0
        %5454 = vmatpush1.msra.mxu0 0.0
        %5455 = vmatprep.subr.mxu0 0.0
        %5456 = vmatpush1.msra.mxu0 0.0
        %5457 = vmatprep.subr.mxu0 0.0
        %5458 = vmatpush1.msra.mxu0 0.0
        %5459 = vmatprep.subr.mxu0 0.0
        %5460 = vmatpush1.msra.mxu0 0.0
        %5461 = vmatprep.subr.mxu0 0.0
        %5462 = vmatpush1.msra.mxu0 0.0
        %5463 = vmatprep.subr.mxu0 0.0
        %5464 = vmatpush1.msra.mxu0 0.0
        %5465 = vmatprep.subr.mxu0 0.0
        %5466 = vmatpush1.msra.mxu0 0.0
        %5467 = vmatprep.subr.mxu0 0.0
        %5468 = vmatpush1.msra.mxu0 0.0
        %5469 = vmatprep.subr.mxu0 0.0
        %5470 = vmatpush1.msra.mxu0 0.0
        %5471 = vmatprep.subr.mxu0 0.0
        %5472 = vmatpush1.msra.mxu0 0.0
        %5473 = vmatprep.subr.mxu0 0.0
        %5474 = vmatpush1.msra.mxu0 0.0
        %5475 = vmatprep.subr.mxu0 0.0
        %5476 = vmatpush1.msra.mxu0 0.0
        %5477 = vmatprep.subr.mxu0 0.0
        %5478 = vmatpush1.msra.mxu0 0.0
        %5479 = vmatprep.subr.mxu0 0.0
        %5480 = vmatpush1.msra.mxu0 0.0
        %5481 = vmatprep.mubr.f32.mxu0 0.0
        %5482 = vmatmul.mubr.f32.gmra.mrb[0].mxu0 %v3187
        %v5483 = vpop.f32.mrb[0].mxu0
        %v5484 = vadd.f32 0.0, %v5483
        %v5485 = vpop.f32.mrb[0].mxu0
        %5486 = vmatprep.mubr.f32.mxu0 0.0
        %5487 = vmatmul.mubr.f32.gmra.mrb[0].mxu0 %v3190
        %v5488 = vpop.f32.mrb[0].mxu0
        %v5489 = vadd.f32 0.0, %v5488
        %v5490 = vpop.f32.mrb[0].mxu0
        %5491 = vdwg.mxu0
        %v5493 = vsel %vm2539, %v5091, 0
        %5495 = vmatprep.subr.mxu0 0.0
        %5496 = vmatpush1.msra.mxu0 %v5090
        %5497 = vmatprep.subr.mxu0 0.0
        %5498 = vmatpush1.msra.mxu0 %v5493
        %5499 = vmatprep.subr.mxu0 0.0
        %5500 = vmatpush1.msra.mxu0 0.0
        %5501 = vmatprep.subr.mxu0 0.0
        %5502 = vmatpush1.msra.mxu0 0.0
        %5503 = vmatprep.subr.mxu0 0.0
        %5504 = vmatpush1.msra.mxu0 0.0
        %5505 = vmatprep.subr.mxu0 0.0
        %5506 = vmatpush1.msra.mxu0 0.0
        %5507 = vmatprep.subr.mxu0 0.0
        %5508 = vmatpush1.msra.mxu0 0.0
        %5509 = vmatprep.subr.mxu0 0.0
        %5510 = vmatpush1.msra.mxu0 0.0
        %5511 = vmatprep.subr.mxu0 0.0
        %5512 = vmatpush1.msra.mxu0 0.0
        %5513 = vmatprep.subr.mxu0 0.0
        %5514 = vmatpush1.msra.mxu0 0.0
        %5515 = vmatprep.subr.mxu0 0.0
        %5516 = vmatpush1.msra.mxu0 0.0
        %5517 = vmatprep.subr.mxu0 0.0
        %5518 = vmatpush1.msra.mxu0 0.0
        %5519 = vmatprep.subr.mxu0 0.0
        %5520 = vmatpush1.msra.mxu0 0.0
        %5521 = vmatprep.subr.mxu0 0.0
        %5522 = vmatpush1.msra.mxu0 0.0
        %5523 = vmatprep.subr.mxu0 0.0
        %5524 = vmatpush1.msra.mxu0 0.0
        %5525 = vmatprep.subr.mxu0 0.0
        %5526 = vmatpush1.msra.mxu0 0.0
        %5527 = vmatprep.subr.mxu0 0.0
        %5528 = vmatpush1.msra.mxu0 0.0
        %5529 = vmatprep.subr.mxu0 0.0
        %5530 = vmatpush1.msra.mxu0 0.0
        %5531 = vmatprep.subr.mxu0 0.0
        %5532 = vmatpush1.msra.mxu0 0.0
        %5533 = vmatprep.subr.mxu0 0.0
        %5534 = vmatpush1.msra.mxu0 0.0
        %5535 = vmatprep.subr.mxu0 0.0
        %5536 = vmatpush1.msra.mxu0 0.0
        %5537 = vmatprep.subr.mxu0 0.0
        %5538 = vmatpush1.msra.mxu0 0.0
        %5539 = vmatprep.subr.mxu0 0.0
        %5540 = vmatpush1.msra.mxu0 0.0
        %5541 = vmatprep.subr.mxu0 0.0
        %5542 = vmatpush1.msra.mxu0 0.0
        %5543 = vmatprep.subr.mxu0 0.0
        %5544 = vmatpush1.msra.mxu0 0.0
        %5545 = vmatprep.subr.mxu0 0.0
        %5546 = vmatpush1.msra.mxu0 0.0
        %5547 = vmatprep.subr.mxu0 0.0
        %5548 = vmatpush1.msra.mxu0 0.0
        %5549 = vmatprep.subr.mxu0 0.0
        %5550 = vmatpush1.msra.mxu0 0.0
        %5551 = vmatprep.subr.mxu0 0.0
        %5552 = vmatpush1.msra.mxu0 0.0
        %5553 = vmatprep.subr.mxu0 0.0
        %5554 = vmatpush1.msra.mxu0 0.0
        %5555 = vmatprep.subr.mxu0 0.0
        %5556 = vmatpush1.msra.mxu0 0.0
        %5557 = vmatprep.subr.mxu0 0.0
        %5558 = vmatpush1.msra.mxu0 0.0
        %5559 = vmatprep.mubr.f32.mxu0 0.0
        %5560 = vmatmul.mubr.f32.gmra.mrb[0].mxu0 %v3271
        %v5561 = vpop.f32.mrb[0].mxu0
        %v5562 = vadd.f32 %v5484, %v5561
        %v5563 = vpop.f32.mrb[0].mxu0
        %5564 = vmatprep.mubr.f32.mxu0 0.0
        %5565 = vmatmul.mubr.f32.gmra.mrb[0].mxu0 %v3274
        %v5566 = vpop.f32.mrb[0].mxu0
        %v5567 = vadd.f32 %v5489, %v5566
        %v5568 = vpop.f32.mrb[0].mxu0
        %5569 = vdwg.mxu0
        %5570 = vmatprep.subr.mxu0 0.0
        %5571 = vmatpush1.msra.mxu0 %v5562
        %5572 = vmatprep.subr.mxu0 0.0
        %5573 = vmatpush1.msra.mxu0 %v5567
        %5574 = vmatprep.subr.mxu0 0.0
        %5575 = vmatpush1.msra.mxu0 0.0
        %5576 = vmatprep.subr.mxu0 0.0
        %5577 = vmatpush1.msra.mxu0 0.0
        %5578 = vmatprep.subr.mxu0 0.0
        %5579 = vmatpush1.msra.mxu0 0.0
        %5580 = vmatprep.subr.mxu0 0.0
        %5581 = vmatpush1.msra.mxu0 0.0
        %5582 = vmatprep.subr.mxu0 0.0
        %5583 = vmatpush1.msra.mxu0 0.0
        %5584 = vmatprep.subr.mxu0 0.0
        %5585 = vmatpush1.msra.mxu0 0.0
        %5586 = vmatprep.subr.mxu0 0.0
        %5587 = vmatpush1.msra.mxu0 0.0
        %5588 = vmatprep.subr.mxu0 0.0
        %5589 = vmatpush1.msra.mxu0 0.0
        %5590 = vmatprep.subr.mxu0 0.0
        %5591 = vmatpush1.msra.mxu0 0.0
        %5592 = vmatprep.subr.mxu0 0.0
        %5593 = vmatpush1.msra.mxu0 0.0
        %5594 = vmatprep.subr.mxu0 0.0
        %5595 = vmatpush1.msra.mxu0 0.0
        %5596 = vmatprep.subr.mxu0 0.0
        %5597 = vmatpush1.msra.mxu0 0.0
        %5598 = vmatprep.subr.mxu0 0.0
        %5599 = vmatpush1.msra.mxu0 0.0
        %5600 = vmatprep.subr.mxu0 0.0
        %5601 = vmatpush1.msra.mxu0 0.0
        %5602 = vmatprep.subr.mxu0 0.0
        %5603 = vmatpush1.msra.mxu0 0.0
        %5604 = vmatprep.subr.mxu0 0.0
        %5605 = vmatpush1.msra.mxu0 0.0
        %5606 = vmatprep.subr.mxu0 0.0
        %5607 = vmatpush1.msra.mxu0 0.0
        %5608 = vmatprep.subr.mxu0 0.0
        %5609 = vmatpush1.msra.mxu0 0.0
        %5610 = vmatprep.subr.mxu0 0.0
        %5611 = vmatpush1.msra.mxu0 0.0
        %5612 = vmatprep.subr.mxu0 0.0
        %5613 = vmatpush1.msra.mxu0 0.0
        %5614 = vmatprep.subr.mxu0 0.0
        %5615 = vmatpush1.msra.mxu0 0.0
        %5616 = vmatprep.subr.mxu0 0.0
        %5617 = vmatpush1.msra.mxu0 0.0
        %5618 = vmatprep.subr.mxu0 0.0
        %5619 = vmatpush1.msra.mxu0 0.0
        %5620 = vmatprep.subr.mxu0 0.0
        %5621 = vmatpush1.msra.mxu0 0.0
        %5622 = vmatprep.subr.mxu0 0.0
        %5623 = vmatpush1.msra.mxu0 0.0
        %5624 = vmatprep.subr.mxu0 0.0
        %5625 = vmatpush1.msra.mxu0 0.0
        %5626 = vmatprep.subr.mxu0 0.0
        %5627 = vmatpush1.msra.mxu0 0.0
        %5628 = vmatprep.subr.mxu0 0.0
        %5629 = vmatpush1.msra.mxu0 0.0
        %5630 = vmatprep.subr.mxu0 0.0
        %5631 = vmatpush1.msra.mxu0 0.0
        %5632 = vmatprep.subr.mxu0 0.0
        %5633 = vmatpush1.msra.mxu0 0.0
        %5634 = vmatprep.mubr.f32.mxu0 0.0
        %5635 = vmatmul.mubr.f32.gmra.mrb[0].mxu0 %v3358
        %v5636 = vpop.f32.mrb[0].mxu0
        %v5637 = vadd.f32 0.0, %v5636
        %v5638 = vpop.f32.mrb[0].mxu0
        %5639 = vmatprep.mubr.f32.mxu0 0.0
        %5640 = vmatmul.mubr.f32.gmra.mrb[0].mxu0 %v3361
        %v5641 = vpop.f32.mrb[0].mxu0
        %v5642 = vadd.f32 0.0, %v5641
        %v5643 = vpop.f32.mrb[0].mxu0
        %5644 = vmatprep.mubr.f32.mxu0 0.0
        %5645 = vmatmul.mubr.f32.gmra.mrb[0].mxu0 %v3364
        %v5646 = vpop.f32.mrb[0].mxu0
        %v5647 = vadd.f32 0.0, %v5646
        %v5648 = vpop.f32.mrb[0].mxu0
        %5649 = vdwg.mxu0
        %s5650 = scalar_lea.vmem %s37, 384
        %v5651 = vld [vmem:[%s5650] sm:$0xff]
        %v5652 = vld [vmem:[%s5650 + $0x8] sm:$0xff]
        %v5653 = vld [vmem:[%s5650 + $0x10] sm:$0xff]
        %v5654 = vld [vmem:[%s5650 + $0x18] sm:$0xff]
        %v5655 = vld [vmem:[%s5650 + $0x20] sm:$0xff]
        %v5656 = vld [vmem:[%s5650 + $0x28] sm:$0xff]
        %v5657 = vld [vmem:[%s5650 + $0x30] sm:$0xff]
        %v5658 = vld [vmem:[%s5650 + $0x38] sm:$0xff]
        %v5659 = vld [vmem:[%s5650 + $0x40] sm:$0xff]
        %v5660 = vld [vmem:[%s5650 + $0x48] sm:$0xff]
        %v5661 = vld [vmem:[%s5650 + $0x50] sm:$0xff]
        %v5662 = vld [vmem:[%s5650 + $0x58] sm:$0xff]
        %v5663 = vld [vmem:[%s5650 + $0x60] sm:$0xff]
        %v5664 = vld [vmem:[%s5650 + $0x68] sm:$0xff]
        %v5665 = vld [vmem:[%s5650 + $0x70] sm:$0xff]
        %v5666 = vld [vmem:[%s5650 + $0x78] sm:$0xff]
        %s5667 = scalar_lea.vmem %s37, 512
        %v5668 = vld [vmem:[%s5667] sm:$0xff]
        %v5669 = vld [vmem:[%s5667 + $0x8] sm:$0xff]
        %v5670 = vld [vmem:[%s5667 + $0x10] sm:$0xff]
        %v5671 = vld [vmem:[%s5667 + $0x18] sm:$0xff]
        %v5672 = vld [vmem:[%s5667 + $0x20] sm:$0xff]
        %v5673 = vld [vmem:[%s5667 + $0x28] sm:$0xff]
        %v5674 = vld [vmem:[%s5667 + $0x30] sm:$0xff]
        %v5675 = vld [vmem:[%s5667 + $0x38] sm:$0xff]
        %v5676 = vld [vmem:[%s5667 + $0x40] sm:$0xff]
        %v5677 = vld [vmem:[%s5667 + $0x48] sm:$0xff]
        %v5678 = vld [vmem:[%s5667 + $0x50] sm:$0xff]
        %v5679 = vld [vmem:[%s5667 + $0x58] sm:$0xff]
        %v5680 = vld [vmem:[%s5667 + $0x60] sm:$0xff]
        %v5681 = vld [vmem:[%s5667 + $0x68] sm:$0xff]
        %v5682 = vld [vmem:[%s5667 + $0x70] sm:$0xff]
        %v5683 = vld [vmem:[%s5667 + $0x78] sm:$0xff]
        %v5687 = vrot.slane %v5637, 1
        %v5688 = vrot.slane %v5642, 1
        %v5689 = vsel %vm1744, %v5687, %v5688
        %v5690 = vrot.slane %v5647, 1
        %v5691 = vsel %vm1744, %v5688, %v5690
        %5694 = vmatprep.subr.mxu0 0.0
        %5695 = vmatpush1.msra.mxu0 %v5668
        %5696 = vmatprep.subr.mxu0 0.0
        %5697 = vmatpush1.msra.mxu0 %v5669
        %5698 = vmatprep.subr.mxu0 0.0
        %5699 = vmatpush1.msra.mxu0 %v5670
        %5700 = vmatprep.subr.mxu0 0.0
        %5701 = vmatpush1.msra.mxu0 %v5671
        %5702 = vmatprep.subr.mxu0 0.0
        %5703 = vmatpush1.msra.mxu0 %v5672
        %5704 = vmatprep.subr.mxu0 0.0
        %5705 = vmatpush1.msra.mxu0 %v5673
        %5706 = vmatprep.subr.mxu0 0.0
        %5707 = vmatpush1.msra.mxu0 %v5674
        %5708 = vmatprep.subr.mxu0 0.0
        %5709 = vmatpush1.msra.mxu0 %v5675
        %5710 = vmatprep.subr.mxu0 0.0
        %5711 = vmatpush1.msra.mxu0 %v5676
        %5712 = vmatprep.subr.mxu0 0.0
        %5713 = vmatpush1.msra.mxu0 %v5677
        %5714 = vmatprep.subr.mxu0 0.0
        %5715 = vmatpush1.msra.mxu0 %v5678
        %5716 = vmatprep.subr.mxu0 0.0
        %5717 = vmatpush1.msra.mxu0 %v5679
        %5718 = vmatprep.subr.mxu0 0.0
        %5719 = vmatpush1.msra.mxu0 %v5680
        %5720 = vmatprep.subr.mxu0 0.0
        %5721 = vmatpush1.msra.mxu0 %v5681
        %5722 = vmatprep.subr.mxu0 0.0
        %5723 = vmatpush1.msra.mxu0 %v5682
        %5724 = vmatprep.subr.mxu0 0.0
        %5725 = vmatpush1.msra.mxu0 %v5683
        %5726 = vmatprep.subr.mxu0 0.0
        %5727 = vmatpush1.msra.mxu0 0.0
        %5728 = vmatprep.subr.mxu0 0.0
        %5729 = vmatpush1.msra.mxu0 0.0
        %5730 = vmatprep.subr.mxu0 0.0
        %5731 = vmatpush1.msra.mxu0 0.0
        %5732 = vmatprep.subr.mxu0 0.0
        %5733 = vmatpush1.msra.mxu0 0.0
        %5734 = vmatprep.subr.mxu0 0.0
        %5735 = vmatpush1.msra.mxu0 0.0
        %5736 = vmatprep.subr.mxu0 0.0
        %5737 = vmatpush1.msra.mxu0 0.0
        %5738 = vmatprep.subr.mxu0 0.0
        %5739 = vmatpush1.msra.mxu0 0.0
        %5740 = vmatprep.subr.mxu0 0.0
        %5741 = vmatpush1.msra.mxu0 0.0
        %5742 = vmatprep.subr.mxu0 0.0
        %5743 = vmatpush1.msra.mxu0 0.0
        %5744 = vmatprep.subr.mxu0 0.0
        %5745 = vmatpush1.msra.mxu0 0.0
        %5746 = vmatprep.subr.mxu0 0.0
        %5747 = vmatpush1.msra.mxu0 0.0
        %5748 = vmatprep.subr.mxu0 0.0
        %5749 = vmatpush1.msra.mxu0 0.0
        %5750 = vmatprep.subr.mxu0 0.0
        %5751 = vmatpush1.msra.mxu0 0.0
        %5752 = vmatprep.subr.mxu0 0.0
        %5753 = vmatpush1.msra.mxu0 0.0
        %5754 = vmatprep.subr.mxu0 0.0
        %5755 = vmatpush1.msra.mxu0 0.0
        %5756 = vmatprep.subr.mxu0 0.0
        %5757 = vmatpush1.msra.mxu0 0.0
        %5758 = vmatprep.mubr.f32.mxu0 0.0
        %5759 = vmatmul.mubr.f32.gmra.mrb[0].mxu0 %v5689
        %v5760 = vpop.f32.mrb[0].mxu0
        %v5761 = vadd.f32 0.0, %v5760
        %v5762 = vpop.f32.mrb[0].mxu0
        %5763 = vmatprep.mubr.f32.mxu0 0.0
        %5764 = vmatmul.mubr.f32.gmra.mrb[0].mxu0 %v5691
        %v5765 = vpop.f32.mrb[0].mxu0
        %v5766 = vadd.f32 0.0, %v5765
        %v5767 = vpop.f32.mrb[0].mxu0
        %5768 = vdwg.mxu0
        %5769 = vmatprep.subr.mxu0 0.0
        %5770 = vmatpush1.msra.mxu0 %v5651
        %5771 = vmatprep.subr.mxu0 0.0
        %5772 = vmatpush1.msra.mxu0 %v5652
        %5773 = vmatprep.subr.mxu0 0.0
        %5774 = vmatpush1.msra.mxu0 %v5653
        %5775 = vmatprep.subr.mxu0 0.0
        %5776 = vmatpush1.msra.mxu0 %v5654
        %5777 = vmatprep.subr.mxu0 0.0
        %5778 = vmatpush1.msra.mxu0 %v5655
        %5779 = vmatprep.subr.mxu0 0.0
        %5780 = vmatpush1.msra.mxu0 %v5656
        %5781 = vmatprep.subr.mxu0 0.0
        %5782 = vmatpush1.msra.mxu0 %v5657
        %5783 = vmatprep.subr.mxu0 0.0
        %5784 = vmatpush1.msra.mxu0 %v5658
        %5785 = vmatprep.subr.mxu0 0.0
        %5786 = vmatpush1.msra.mxu0 %v5659
        %5787 = vmatprep.subr.mxu0 0.0
        %5788 = vmatpush1.msra.mxu0 %v5660
        %5789 = vmatprep.subr.mxu0 0.0
        %5790 = vmatpush1.msra.mxu0 %v5661
        %5791 = vmatprep.subr.mxu0 0.0
        %5792 = vmatpush1.msra.mxu0 %v5662
        %5793 = vmatprep.subr.mxu0 0.0
        %5794 = vmatpush1.msra.mxu0 %v5663
        %5795 = vmatprep.subr.mxu0 0.0
        %5796 = vmatpush1.msra.mxu0 %v5664
        %5797 = vmatprep.subr.mxu0 0.0
        %5798 = vmatpush1.msra.mxu0 %v5665
        %5799 = vmatprep.subr.mxu0 0.0
        %5800 = vmatpush1.msra.mxu0 %v5666
        %5801 = vmatprep.subr.mxu0 0.0
        %5802 = vmatpush1.msra.mxu0 0.0
        %5803 = vmatprep.subr.mxu0 0.0
        %5804 = vmatpush1.msra.mxu0 0.0
        %5805 = vmatprep.subr.mxu0 0.0
        %5806 = vmatpush1.msra.mxu0 0.0
        %5807 = vmatprep.subr.mxu0 0.0
        %5808 = vmatpush1.msra.mxu0 0.0
        %5809 = vmatprep.subr.mxu0 0.0
        %5810 = vmatpush1.msra.mxu0 0.0
        %5811 = vmatprep.subr.mxu0 0.0
        %5812 = vmatpush1.msra.mxu0 0.0
        %5813 = vmatprep.subr.mxu0 0.0
        %5814 = vmatpush1.msra.mxu0 0.0
        %5815 = vmatprep.subr.mxu0 0.0
        %5816 = vmatpush1.msra.mxu0 0.0
        %5817 = vmatprep.subr.mxu0 0.0
        %5818 = vmatpush1.msra.mxu0 0.0
        %5819 = vmatprep.subr.mxu0 0.0
        %5820 = vmatpush1.msra.mxu0 0.0
        %5821 = vmatprep.subr.mxu0 0.0
        %5822 = vmatpush1.msra.mxu0 0.0
        %5823 = vmatprep.subr.mxu0 0.0
        %5824 = vmatpush1.msra.mxu0 0.0
        %5825 = vmatprep.subr.mxu0 0.0
        %5826 = vmatpush1.msra.mxu0 0.0
        %5827 = vmatprep.subr.mxu0 0.0
        %5828 = vmatpush1.msra.mxu0 0.0
        %5829 = vmatprep.subr.mxu0 0.0
        %5830 = vmatpush1.msra.mxu0 0.0
        %5831 = vmatprep.subr.mxu0 0.0
        %5832 = vmatpush1.msra.mxu0 0.0
        %5833 = vmatprep.mubr.f32.mxu0 0.0
        %5834 = vmatmul.mubr.f32.gmra.mrb[0].mxu0 %v5637
        %v5835 = vpop.f32.mrb[0].mxu0
        %v5836 = vadd.f32 %v5761, %v5835
        %v5837 = vpop.f32.mrb[0].mxu0
        %5838 = vmatprep.mubr.f32.mxu0 0.0
        %5839 = vmatmul.mubr.f32.gmra.mrb[0].mxu0 %v5642
        %v5840 = vpop.f32.mrb[0].mxu0
        %v5841 = vadd.f32 %v5766, %v5840
        %v5842 = vpop.f32.mrb[0].mxu0
        %5843 = vdwg.mxu0
        %s5844 = scalar_lea.vmem %s37, 640
        %v5845 = vld [vmem:[%s5844] sm:$0xff]
        %v5846 = vld [vmem:[%s5844 + $0x8] sm:$0xff]
        %v5847 = vld [vmem:[%s5844 + $0x10] sm:$0xff]
        %v5848 = vld [vmem:[%s5844 + $0x18] sm:$0xff]
        %v5849 = vld [vmem:[%s5844 + $0x20] sm:$0xff]
        %v5850 = vld [vmem:[%s5844 + $0x28] sm:$0xff]
        %v5851 = vld [vmem:[%s5844 + $0x30] sm:$0xff]
        %v5852 = vld [vmem:[%s5844 + $0x38] sm:$0xff]
        %v5853 = vld [vmem:[%s5844 + $0x40] sm:$0xff]
        %v5854 = vld [vmem:[%s5844 + $0x48] sm:$0xff]
        %v5855 = vld [vmem:[%s5844 + $0x50] sm:$0xff]
        %v5856 = vld [vmem:[%s5844 + $0x58] sm:$0xff]
        %v5857 = vld [vmem:[%s5844 + $0x60] sm:$0xff]
        %v5858 = vld [vmem:[%s5844 + $0x68] sm:$0xff]
        %v5859 = vld [vmem:[%s5844 + $0x70] sm:$0xff]
        %v5860 = vld [vmem:[%s5844 + $0x78] sm:$0xff]
        %v5861 = vrot.slane %v5637, 2
        %v5862 = vrot.slane %v5642, 2
        %v5863 = vsel %vm1910, %v5861, %v5862
        %v5864 = vrot.slane %v5647, 2
        %v5865 = vsel %vm1910, %v5862, %v5864
        %5868 = vmatprep.subr.mxu0 0.0
        %5869 = vmatpush1.msra.mxu0 %v5845
        %5870 = vmatprep.subr.mxu0 0.0
        %5871 = vmatpush1.msra.mxu0 %v5846
        %5872 = vmatprep.subr.mxu0 0.0
        %5873 = vmatpush1.msra.mxu0 %v5847
        %5874 = vmatprep.subr.mxu0 0.0
        %5875 = vmatpush1.msra.mxu0 %v5848
        %5876 = vmatprep.subr.mxu0 0.0
        %5877 = vmatpush1.msra.mxu0 %v5849
        %5878 = vmatprep.subr.mxu0 0.0
        %5879 = vmatpush1.msra.mxu0 %v5850
        %5880 = vmatprep.subr.mxu0 0.0
        %5881 = vmatpush1.msra.mxu0 %v5851
        %5882 = vmatprep.subr.mxu0 0.0
        %5883 = vmatpush1.msra.mxu0 %v5852
        %5884 = vmatprep.subr.mxu0 0.0
        %5885 = vmatpush1.msra.mxu0 %v5853
        %5886 = vmatprep.subr.mxu0 0.0
        %5887 = vmatpush1.msra.mxu0 %v5854
        %5888 = vmatprep.subr.mxu0 0.0
        %5889 = vmatpush1.msra.mxu0 %v5855
        %5890 = vmatprep.subr.mxu0 0.0
        %5891 = vmatpush1.msra.mxu0 %v5856
        %5892 = vmatprep.subr.mxu0 0.0
        %5893 = vmatpush1.msra.mxu0 %v5857
        %5894 = vmatprep.subr.mxu0 0.0
        %5895 = vmatpush1.msra.mxu0 %v5858
        %5896 = vmatprep.subr.mxu0 0.0
        %5897 = vmatpush1.msra.mxu0 %v5859
        %5898 = vmatprep.subr.mxu0 0.0
        %5899 = vmatpush1.msra.mxu0 %v5860
        %5900 = vmatprep.subr.mxu0 0.0
        %5901 = vmatpush1.msra.mxu0 0.0
        %5902 = vmatprep.subr.mxu0 0.0
        %5903 = vmatpush1.msra.mxu0 0.0
        %5904 = vmatprep.subr.mxu0 0.0
        %5905 = vmatpush1.msra.mxu0 0.0
        %5906 = vmatprep.subr.mxu0 0.0
        %5907 = vmatpush1.msra.mxu0 0.0
        %5908 = vmatprep.subr.mxu0 0.0
        %5909 = vmatpush1.msra.mxu0 0.0
        %5910 = vmatprep.subr.mxu0 0.0
        %5911 = vmatpush1.msra.mxu0 0.0
        %5912 = vmatprep.subr.mxu0 0.0
        %5913 = vmatpush1.msra.mxu0 0.0
        %5914 = vmatprep.subr.mxu0 0.0
        %5915 = vmatpush1.msra.mxu0 0.0
        %5916 = vmatprep.subr.mxu0 0.0
        %5917 = vmatpush1.msra.mxu0 0.0
        %5918 = vmatprep.subr.mxu0 0.0
        %5919 = vmatpush1.msra.mxu0 0.0
        %5920 = vmatprep.subr.mxu0 0.0
        %5921 = vmatpush1.msra.mxu0 0.0
        %5922 = vmatprep.subr.mxu0 0.0
        %5923 = vmatpush1.msra.mxu0 0.0
        %5924 = vmatprep.subr.mxu0 0.0
        %5925 = vmatpush1.msra.mxu0 0.0
        %5926 = vmatprep.subr.mxu0 0.0
        %5927 = vmatpush1.msra.mxu0 0.0
        %5928 = vmatprep.subr.mxu0 0.0
        %5929 = vmatpush1.msra.mxu0 0.0
        %5930 = vmatprep.subr.mxu0 0.0
        %5931 = vmatpush1.msra.mxu0 0.0
        %5932 = vmatprep.mubr.f32.mxu0 0.0
        %5933 = vmatmul.mubr.f32.gmra.mrb[0].mxu0 %v5863
        %v5934 = vpop.f32.mrb[0].mxu0
        %v5935 = vadd.f32 0.0, %v5934
        %v5936 = vpop.f32.mrb[0].mxu0
        %5937 = vmatprep.mubr.f32.mxu0 0.0
        %5938 = vmatmul.mubr.f32.gmra.mrb[0].mxu0 %v5865
        %v5939 = vpop.f32.mrb[0].mxu0
        %v5940 = vadd.f32 0.0, %v5939
        %v5941 = vpop.f32.mrb[0].mxu0
        %5942 = vdwg.mxu0
        %v5943 = vadd.f32 %v5836, %v5935
        %v5944 = vadd.f32 %v5841, %v5940
        %s5945 = scalar_lea.vmem [#allocation23], 1
        %v5946 = vld [vmem:[%s5945] sm:$0x1]
        %v5948 = vlaneseq
        %v5949 = vshrl.u32 %v5948, 7
        %v5950 = vsub.s32 0, %v5949
        %v5951 = vrot.slane %v5946, %v5950
        %v5953 = vadd.f32 %v5943, %v5951
        %v5954 = vadd.f32 %v5944, %v5951
        %v5955 = vadd.f32 %v5953, %v4618
        %v5956 = vadd.f32 %v5954, %v4619
        %5957 = vmatprep.subr.mxu0 0.0
        %5958 = vmatpush1.msra.mxu0 %v3751
        %5959 = vmatprep.subr.mxu0 0.0
        %5960 = vmatpush1.msra.mxu0 %v3752
        %5961 = vmatprep.subr.mxu0 0.0
        %5962 = vmatpush1.msra.mxu0 %v3753
        %5963 = vmatprep.subr.mxu0 0.0
        %5964 = vmatpush1.msra.mxu0 %v3754
        %5965 = vmatprep.subr.mxu0 0.0
        %5966 = vmatpush1.msra.mxu0 %v3755
        %5967 = vmatprep.subr.mxu0 0.0
        %5968 = vmatpush1.msra.mxu0 %v3756
        %5969 = vmatprep.subr.mxu0 0.0
        %5970 = vmatpush1.msra.mxu0 %v3757
        %5971 = vmatprep.subr.mxu0 0.0
        %5972 = vmatpush1.msra.mxu0 %v3758
        %5973 = vmatprep.subr.mxu0 0.0
        %5974 = vmatpush1.msra.mxu0 %v3759
        %5975 = vmatprep.subr.mxu0 0.0
        %5976 = vmatpush1.msra.mxu0 %v3760
        %5977 = vmatprep.subr.mxu0 0.0
        %5978 = vmatpush1.msra.mxu0 %v3761
        %5979 = vmatprep.subr.mxu0 0.0
        %5980 = vmatpush1.msra.mxu0 %v3762
        %5981 = vmatprep.subr.mxu0 0.0
        %5982 = vmatpush1.msra.mxu0 %v3763
        %5983 = vmatprep.subr.mxu0 0.0
        %5984 = vmatpush1.msra.mxu0 %v3764
        %5985 = vmatprep.subr.mxu0 0.0
        %5986 = vmatpush1.msra.mxu0 %v3765
        %5987 = vmatprep.subr.mxu0 0.0
        %5988 = vmatpush1.msra.mxu0 %v3766
        %5989 = vmatprep.subr.mxu0 0.0
        %5990 = vmatpush1.msra.mxu0 0.0
        %5991 = vmatprep.subr.mxu0 0.0
        %5992 = vmatpush1.msra.mxu0 0.0
        %5993 = vmatprep.subr.mxu0 0.0
        %5994 = vmatpush1.msra.mxu0 0.0
        %5995 = vmatprep.subr.mxu0 0.0
        %5996 = vmatpush1.msra.mxu0 0.0
        %5997 = vmatprep.subr.mxu0 0.0
        %5998 = vmatpush1.msra.mxu0 0.0
        %5999 = vmatprep.subr.mxu0 0.0
        %6000 = vmatpush1.msra.mxu0 0.0
        %6001 = vmatprep.subr.mxu0 0.0
        %6002 = vmatpush1.msra.mxu0 0.0
        %6003 = vmatprep.subr.mxu0 0.0
        %6004 = vmatpush1.msra.mxu0 0.0
        %6005 = vmatprep.subr.mxu0 0.0
        %6006 = vmatpush1.msra.mxu0 0.0
        %6007 = vmatprep.subr.mxu0 0.0
        %6008 = vmatpush1.msra.mxu0 0.0
        %6009 = vmatprep.subr.mxu0 0.0
        %6010 = vmatpush1.msra.mxu0 0.0
        %6011 = vmatprep.subr.mxu0 0.0
        %6012 = vmatpush1.msra.mxu0 0.0
        %6013 = vmatprep.subr.mxu0 0.0
        %6014 = vmatpush1.msra.mxu0 0.0
        %6015 = vmatprep.subr.mxu0 0.0
        %6016 = vmatpush1.msra.mxu0 0.0
        %6017 = vmatprep.subr.mxu0 0.0
        %6018 = vmatpush1.msra.mxu0 0.0
        %6019 = vmatprep.subr.mxu0 0.0
        %6020 = vmatpush1.msra.mxu0 0.0
        %6021 = vmatprep.mubr.f32.mxu0 0.0
        %6022 = vmatmul.mubr.f32.gmra.mrb[0].mxu0 %v5955
        %v6023 = vpop.f32.mrb[0].mxu0
        %v6024 = vadd.f32 0.0, %v6023
        %v6025 = vpop.f32.mrb[0].mxu0
        %6026 = vmatprep.mubr.f32.mxu0 0.0
        %6027 = vmatmul.mubr.f32.gmra.mrb[0].mxu0 %v5956
        %v6028 = vpop.f32.mrb[0].mxu0
        %v6029 = vadd.f32 0.0, %v6028
        %v6030 = vpop.f32.mrb[0].mxu0
        %6031 = vdwg.mxu0
        %6032 = vmatprep.subr.mxu0 0.0
        %6033 = vmatpush1.msra.mxu0 %v3842
        %6034 = vmatprep.subr.mxu0 0.0
        %6035 = vmatpush1.msra.mxu0 %v3843
        %6036 = vmatprep.subr.mxu0 0.0
        %6037 = vmatpush1.msra.mxu0 %v3844
        %6038 = vmatprep.subr.mxu0 0.0
        %6039 = vmatpush1.msra.mxu0 %v3845
        %6040 = vmatprep.subr.mxu0 0.0
        %6041 = vmatpush1.msra.mxu0 %v3846
        %6042 = vmatprep.subr.mxu0 0.0
        %6043 = vmatpush1.msra.mxu0 %v3847
        %6044 = vmatprep.subr.mxu0 0.0
        %6045 = vmatpush1.msra.mxu0 %v3848
        %6046 = vmatprep.subr.mxu0 0.0
        %6047 = vmatpush1.msra.mxu0 %v3849
        %6048 = vmatprep.subr.mxu0 0.0
        %6049 = vmatpush1.msra.mxu0 %v3850
        %6050 = vmatprep.subr.mxu0 0.0
        %6051 = vmatpush1.msra.mxu0 %v3851
        %6052 = vmatprep.subr.mxu0 0.0
        %6053 = vmatpush1.msra.mxu0 %v3852
        %6054 = vmatprep.subr.mxu0 0.0
        %6055 = vmatpush1.msra.mxu0 %v3853
        %6056 = vmatprep.subr.mxu0 0.0
        %6057 = vmatpush1.msra.mxu0 %v3854
        %6058 = vmatprep.subr.mxu0 0.0
        %6059 = vmatpush1.msra.mxu0 %v3855
        %6060 = vmatprep.subr.mxu0 0.0
        %6061 = vmatpush1.msra.mxu0 %v3856
        %6062 = vmatprep.subr.mxu0 0.0
        %6063 = vmatpush1.msra.mxu0 %v3857
        %6064 = vmatprep.subr.mxu0 0.0
        %6065 = vmatpush1.msra.mxu0 0.0
        %6066 = vmatprep.subr.mxu0 0.0
        %6067 = vmatpush1.msra.mxu0 0.0
        %6068 = vmatprep.subr.mxu0 0.0
        %6069 = vmatpush1.msra.mxu0 0.0
        %6070 = vmatprep.subr.mxu0 0.0
        %6071 = vmatpush1.msra.mxu0 0.0
        %6072 = vmatprep.subr.mxu0 0.0
        %6073 = vmatpush1.msra.mxu0 0.0
        %6074 = vmatprep.subr.mxu0 0.0
        %6075 = vmatpush1.msra.mxu0 0.0
        %6076 = vmatprep.subr.mxu0 0.0
        %6077 = vmatpush1.msra.mxu0 0.0
        %6078 = vmatprep.subr.mxu0 0.0
        %6079 = vmatpush1.msra.mxu0 0.0
        %6080 = vmatprep.subr.mxu0 0.0
        %6081 = vmatpush1.msra.mxu0 0.0
        %6082 = vmatprep.subr.mxu0 0.0
        %6083 = vmatpush1.msra.mxu0 0.0
        %6084 = vmatprep.subr.mxu0 0.0
        %6085 = vmatpush1.msra.mxu0 0.0
        %6086 = vmatprep.subr.mxu0 0.0
        %6087 = vmatpush1.msra.mxu0 0.0
        %6088 = vmatprep.subr.mxu0 0.0
        %6089 = vmatpush1.msra.mxu0 0.0
        %6090 = vmatprep.subr.mxu0 0.0
        %6091 = vmatpush1.msra.mxu0 0.0
        %6092 = vmatprep.subr.mxu0 0.0
        %6093 = vmatpush1.msra.mxu0 0.0
        %6094 = vmatprep.subr.mxu0 0.0
        %6095 = vmatpush1.msra.mxu0 0.0
        %6096 = vmatprep.mubr.f32.mxu0 0.0
        %6097 = vmatmul.mubr.f32.gmra.mrb[0].mxu0 %v5955
        %v6098 = vpop.f32.mrb[0].mxu0
        %v6099 = vadd.f32 0.0, %v6098
        %v6100 = vpop.f32.mrb[0].mxu0
        %6101 = vmatprep.mubr.f32.mxu0 0.0
        %6102 = vmatmul.mubr.f32.gmra.mrb[0].mxu0 %v5956
        %v6103 = vpop.f32.mrb[0].mxu0
        %v6104 = vadd.f32 0.0, %v6103
        %v6105 = vpop.f32.mrb[0].mxu0
        %6106 = vdwg.mxu0
        %s6107 = scalar_lea.vmem [#allocation13], 80
        %v6108 = vld [vmem:[%s6107] sm:$0xff]
        %v6109 = vld [vmem:[%s6107 + $0x8] sm:$0xff]
        %v6110 = vld [vmem:[%s6107 + $0x10] sm:$0xff]
        %v6111 = vld [vmem:[%s6107 + $0x18] sm:$0xff]
        %v6112 = vld [vmem:[%s6107 + $0x20] sm:$0xff]
        %v6113 = vld [vmem:[%s6107 + $0x28] sm:$0xff]
        %v6114 = vld [vmem:[%s6107 + $0x30] sm:$0xff]
        %v6115 = vld [vmem:[%s6107 + $0x38] sm:$0xff]
        %v6116 = vld [vmem:[%s6107 + $0x40] sm:$0xff]
        %v6117 = vld [vmem:[%s6107 + $0x48] sm:$0xff]
        %s6118 = scalar_lea.vmem [#allocation10], 1
        %v6119 = vld [vmem:[%s6118] sm:$0x1]
        %s6120 = scalar_lea.vmem [#allocation14], 80
        %v6121 = vld [vmem:[%s6120] sm:$0xff]
        %v6122 = vld [vmem:[%s6120 + $0x8] sm:$0xff]
        %v6123 = vld [vmem:[%s6120 + $0x10] sm:$0xff]
        %v6124 = vld [vmem:[%s6120 + $0x18] sm:$0xff]
        %v6125 = vld [vmem:[%s6120 + $0x20] sm:$0xff]
        %v6126 = vld [vmem:[%s6120 + $0x28] sm:$0xff]
        %v6127 = vld [vmem:[%s6120 + $0x30] sm:$0xff]
        %v6128 = vld [vmem:[%s6120 + $0x38] sm:$0xff]
        %v6129 = vld [vmem:[%s6120 + $0x40] sm:$0xff]
        %v6130 = vld [vmem:[%s6120 + $0x48] sm:$0xff]
        %s6131 = scalar_lea.vmem [#allocation11], 1
        %v6132 = vld [vmem:[%s6131] sm:$0x1]
        %v6134 = vlaneseq
        %v6135 = vshrl.u32 %v6134, 7
        %v6136 = vsub.s32 0, %v6135
        %v6137 = vrot.slane %v6119, %v6136
        %v6140 = vsel %vm3961, %v6024, 0
        %v6143 = vsel %vm3961, %v6029, 0
        %6145 = vmatprep.subr.mxu0 0.0
        %6146 = vmatpush1.msra.mxu0 %v6108
        %6147 = vmatprep.subr.mxu0 0.0
        %6148 = vmatpush1.msra.mxu0 %v6109
        %6149 = vmatprep.subr.mxu0 0.0
        %6150 = vmatpush1.msra.mxu0 %v6110
        %6151 = vmatprep.subr.mxu0 0.0
        %6152 = vmatpush1.msra.mxu0 %v6111
        %6153 = vmatprep.subr.mxu0 0.0
        %6154 = vmatpush1.msra.mxu0 %v6112
        %6155 = vmatprep.subr.mxu0 0.0
        %6156 = vmatpush1.msra.mxu0 %v6113
        %6157 = vmatprep.subr.mxu0 0.0
        %6158 = vmatpush1.msra.mxu0 %v6114
        %6159 = vmatprep.subr.mxu0 0.0
        %6160 = vmatpush1.msra.mxu0 %v6115
        %6161 = vmatprep.subr.mxu0 0.0
        %6162 = vmatpush1.msra.mxu0 %v6116
        %6163 = vmatprep.subr.mxu0 0.0
        %6164 = vmatpush1.msra.mxu0 %v6117
        %6165 = vmatprep.subr.mxu0 0.0
        %6166 = vmatpush1.msra.mxu0 0.0
        %6167 = vmatprep.subr.mxu0 0.0
        %6168 = vmatpush1.msra.mxu0 0.0
        %6169 = vmatprep.subr.mxu0 0.0
        %6170 = vmatpush1.msra.mxu0 0.0
        %6171 = vmatprep.subr.mxu0 0.0
        %6172 = vmatpush1.msra.mxu0 0.0
        %6173 = vmatprep.subr.mxu0 0.0
        %6174 = vmatpush1.msra.mxu0 0.0
        %6175 = vmatprep.subr.mxu0 0.0
        %6176 = vmatpush1.msra.mxu0 0.0
        %6177 = vmatprep.subr.mxu0 0.0
        %6178 = vmatpush1.msra.mxu0 0.0
        %6179 = vmatprep.subr.mxu0 0.0
        %6180 = vmatpush1.msra.mxu0 0.0
        %6181 = vmatprep.subr.mxu0 0.0
        %6182 = vmatpush1.msra.mxu0 0.0
        %6183 = vmatprep.subr.mxu0 0.0
        %6184 = vmatpush1.msra.mxu0 0.0
        %6185 = vmatprep.subr.mxu0 0.0
        %6186 = vmatpush1.msra.mxu0 0.0
        %6187 = vmatprep.subr.mxu0 0.0
        %6188 = vmatpush1.msra.mxu0 0.0
        %6189 = vmatprep.subr.mxu0 0.0
        %6190 = vmatpush1.msra.mxu0 0.0
        %6191 = vmatprep.subr.mxu0 0.0
        %6192 = vmatpush1.msra.mxu0 0.0
        %6193 = vmatprep.subr.mxu0 0.0
        %6194 = vmatpush1.msra.mxu0 0.0
        %6195 = vmatprep.subr.mxu0 0.0
        %6196 = vmatpush1.msra.mxu0 0.0
        %6197 = vmatprep.subr.mxu0 0.0
        %6198 = vmatpush1.msra.mxu0 0.0
        %6199 = vmatprep.subr.mxu0 0.0
        %6200 = vmatpush1.msra.mxu0 0.0
        %6201 = vmatprep.subr.mxu0 0.0
        %6202 = vmatpush1.msra.mxu0 0.0
        %6203 = vmatprep.subr.mxu0 0.0
        %6204 = vmatpush1.msra.mxu0 0.0
        %6205 = vmatprep.subr.mxu0 0.0
        %6206 = vmatpush1.msra.mxu0 0.0
        %6207 = vmatprep.subr.mxu0 0.0
        %6208 = vmatpush1.msra.mxu0 0.0
        %6209 = vmatprep.mubr.f32.mxu0 0.0
        %6210 = vmatmul.mubr.f32.gmra.mrb[0].mxu0 %v6140
        %v6211 = vpop.f32.mrb[0].mxu0
        %v6212 = vadd.f32 %v6137, %v6211
        %v6213 = vpop.f32.mrb[0].mxu0
        %6214 = vmatprep.mubr.f32.mxu0 0.0
        %6215 = vmatmul.mubr.f32.gmra.mrb[0].mxu0 %v6143
        %v6216 = vpop.f32.mrb[0].mxu0
        %v6217 = vadd.f32 %v6137, %v6216
        %v6218 = vpop.f32.mrb[0].mxu0
        %6219 = vdwg.mxu0
        %vm6220 = vcmp.gt.f32.partialorder %v6212, 0.0
        %vm6221 = vcmp.gt.f32.partialorder %v6217, 0.0
        %v6222 = vmul.f32 %v6212, 0.1
        %v6223 = vmul.f32 %v6217, 0.1
        %v6224 = vsel %vm6220, %v6212, %v6222
        %v6225 = vsel %vm6221, %v6217, %v6223
        %v6227 = vlaneseq
        %v6228 = vshrl.u32 %v6227, 7
        %v6229 = vsub.s32 0, %v6228
        %v6230 = vrot.slane %v6132, %v6229
        %v6233 = vsel %vm3961, %v6224, 0
        %v6236 = vsel %vm3961, %v6225, 0
        %6238 = vmatprep.subr.mxu0 0.0
        %6239 = vmatpush1.msra.mxu0 %v6121
        %6240 = vmatprep.subr.mxu0 0.0
        %6241 = vmatpush1.msra.mxu0 %v6122
        %6242 = vmatprep.subr.mxu0 0.0
        %6243 = vmatpush1.msra.mxu0 %v6123
        %6244 = vmatprep.subr.mxu0 0.0
        %6245 = vmatpush1.msra.mxu0 %v6124
        %6246 = vmatprep.subr.mxu0 0.0
        %6247 = vmatpush1.msra.mxu0 %v6125
        %6248 = vmatprep.subr.mxu0 0.0
        %6249 = vmatpush1.msra.mxu0 %v6126
        %6250 = vmatprep.subr.mxu0 0.0
        %6251 = vmatpush1.msra.mxu0 %v6127
        %6252 = vmatprep.subr.mxu0 0.0
        %6253 = vmatpush1.msra.mxu0 %v6128
        %6254 = vmatprep.subr.mxu0 0.0
        %6255 = vmatpush1.msra.mxu0 %v6129
        %6256 = vmatprep.subr.mxu0 0.0
        %6257 = vmatpush1.msra.mxu0 %v6130
        %6258 = vmatprep.subr.mxu0 0.0
        %6259 = vmatpush1.msra.mxu0 0.0
        %6260 = vmatprep.subr.mxu0 0.0
        %6261 = vmatpush1.msra.mxu0 0.0
        %6262 = vmatprep.subr.mxu0 0.0
        %6263 = vmatpush1.msra.mxu0 0.0
        %6264 = vmatprep.subr.mxu0 0.0
        %6265 = vmatpush1.msra.mxu0 0.0
        %6266 = vmatprep.subr.mxu0 0.0
        %6267 = vmatpush1.msra.mxu0 0.0
        %6268 = vmatprep.subr.mxu0 0.0
        %6269 = vmatpush1.msra.mxu0 0.0
        %6270 = vmatprep.subr.mxu0 0.0
        %6271 = vmatpush1.msra.mxu0 0.0
        %6272 = vmatprep.subr.mxu0 0.0
        %6273 = vmatpush1.msra.mxu0 0.0
        %6274 = vmatprep.subr.mxu0 0.0
        %6275 = vmatpush1.msra.mxu0 0.0
        %6276 = vmatprep.subr.mxu0 0.0
        %6277 = vmatpush1.msra.mxu0 0.0
        %6278 = vmatprep.subr.mxu0 0.0
        %6279 = vmatpush1.msra.mxu0 0.0
        %6280 = vmatprep.subr.mxu0 0.0
        %6281 = vmatpush1.msra.mxu0 0.0
        %6282 = vmatprep.subr.mxu0 0.0
        %6283 = vmatpush1.msra.mxu0 0.0
        %6284 = vmatprep.subr.mxu0 0.0
        %6285 = vmatpush1.msra.mxu0 0.0
        %6286 = vmatprep.subr.mxu0 0.0
        %6287 = vmatpush1.msra.mxu0 0.0
        %6288 = vmatprep.subr.mxu0 0.0
        %6289 = vmatpush1.msra.mxu0 0.0
        %6290 = vmatprep.subr.mxu0 0.0
        %6291 = vmatpush1.msra.mxu0 0.0
        %6292 = vmatprep.subr.mxu0 0.0
        %6293 = vmatpush1.msra.mxu0 0.0
        %6294 = vmatprep.subr.mxu0 0.0
        %6295 = vmatpush1.msra.mxu0 0.0
        %6296 = vmatprep.subr.mxu0 0.0
        %6297 = vmatpush1.msra.mxu0 0.0
        %6298 = vmatprep.subr.mxu0 0.0
        %6299 = vmatpush1.msra.mxu0 0.0
        %6300 = vmatprep.subr.mxu0 0.0
        %6301 = vmatpush1.msra.mxu0 0.0
        %6302 = vmatprep.mubr.f32.mxu0 0.0
        %6303 = vmatmul.mubr.f32.gmra.mrb[0].mxu0 %v6233
        %v6304 = vpop.f32.mrb[0].mxu0
        %v6305 = vadd.f32 %v6230, %v6304
        %v6306 = vpop.f32.mrb[0].mxu0
        %6307 = vmatprep.mubr.f32.mxu0 0.0
        %6308 = vmatmul.mubr.f32.gmra.mrb[0].mxu0 %v6236
        %v6309 = vpop.f32.mrb[0].mxu0
        %v6310 = vadd.f32 %v6230, %v6309
        %v6311 = vpop.f32.mrb[0].mxu0
        %6312 = vdwg.mxu0
        %s6313 = scalar_lea.vmem [#allocation7], 80
        %v6314 = vld [vmem:[%s6313] sm:$0xff]
        %v6315 = vld [vmem:[%s6313 + $0x8] sm:$0xff]
        %v6316 = vld [vmem:[%s6313 + $0x10] sm:$0xff]
        %v6317 = vld [vmem:[%s6313 + $0x18] sm:$0xff]
        %v6318 = vld [vmem:[%s6313 + $0x20] sm:$0xff]
        %v6319 = vld [vmem:[%s6313 + $0x28] sm:$0xff]
        %v6320 = vld [vmem:[%s6313 + $0x30] sm:$0xff]
        %v6321 = vld [vmem:[%s6313 + $0x38] sm:$0xff]
        %v6322 = vld [vmem:[%s6313 + $0x40] sm:$0xff]
        %v6323 = vld [vmem:[%s6313 + $0x48] sm:$0xff]
        %s6324 = scalar_lea.vmem [#allocation2], 1
        %v6325 = vld [vmem:[%s6324] sm:$0x1]
        %s6326 = scalar_lea.vmem [#allocation8], 80
        %v6327 = vld [vmem:[%s6326] sm:$0xff]
        %v6328 = vld [vmem:[%s6326 + $0x8] sm:$0xff]
        %v6329 = vld [vmem:[%s6326 + $0x10] sm:$0xff]
        %v6330 = vld [vmem:[%s6326 + $0x18] sm:$0xff]
        %v6331 = vld [vmem:[%s6326 + $0x20] sm:$0xff]
        %v6332 = vld [vmem:[%s6326 + $0x28] sm:$0xff]
        %v6333 = vld [vmem:[%s6326 + $0x30] sm:$0xff]
        %v6334 = vld [vmem:[%s6326 + $0x38] sm:$0xff]
        %v6335 = vld [vmem:[%s6326 + $0x40] sm:$0xff]
        %v6336 = vld [vmem:[%s6326 + $0x48] sm:$0xff]
        %s6337 = scalar_lea.vmem [#allocation5], 1
        %v6338 = vld [vmem:[%s6337] sm:$0x1]
        %v6340 = vlaneseq
        %v6341 = vshrl.u32 %v6340, 7
        %v6342 = vsub.s32 0, %v6341
        %v6343 = vrot.slane %v6325, %v6342
        %v6346 = vsel %vm3961, %v6099, 0
        %v6349 = vsel %vm3961, %v6104, 0
        %6351 = vmatprep.subr.mxu0 0.0
        %6352 = vmatpush1.msra.mxu0 %v6314
        %6353 = vmatprep.subr.mxu0 0.0
        %6354 = vmatpush1.msra.mxu0 %v6315
        %6355 = vmatprep.subr.mxu0 0.0
        %6356 = vmatpush1.msra.mxu0 %v6316
        %6357 = vmatprep.subr.mxu0 0.0
        %6358 = vmatpush1.msra.mxu0 %v6317
        %6359 = vmatprep.subr.mxu0 0.0
        %6360 = vmatpush1.msra.mxu0 %v6318
        %6361 = vmatprep.subr.mxu0 0.0
        %6362 = vmatpush1.msra.mxu0 %v6319
        %6363 = vmatprep.subr.mxu0 0.0
        %6364 = vmatpush1.msra.mxu0 %v6320
        %6365 = vmatprep.subr.mxu0 0.0
        %6366 = vmatpush1.msra.mxu0 %v6321
        %6367 = vmatprep.subr.mxu0 0.0
        %6368 = vmatpush1.msra.mxu0 %v6322
        %6369 = vmatprep.subr.mxu0 0.0
        %6370 = vmatpush1.msra.mxu0 %v6323
        %6371 = vmatprep.subr.mxu0 0.0
        %6372 = vmatpush1.msra.mxu0 0.0
        %6373 = vmatprep.subr.mxu0 0.0
        %6374 = vmatpush1.msra.mxu0 0.0
        %6375 = vmatprep.subr.mxu0 0.0
        %6376 = vmatpush1.msra.mxu0 0.0
        %6377 = vmatprep.subr.mxu0 0.0
        %6378 = vmatpush1.msra.mxu0 0.0
        %6379 = vmatprep.subr.mxu0 0.0
        %6380 = vmatpush1.msra.mxu0 0.0
        %6381 = vmatprep.subr.mxu0 0.0
        %6382 = vmatpush1.msra.mxu0 0.0
        %6383 = vmatprep.subr.mxu0 0.0
        %6384 = vmatpush1.msra.mxu0 0.0
        %6385 = vmatprep.subr.mxu0 0.0
        %6386 = vmatpush1.msra.mxu0 0.0
        %6387 = vmatprep.subr.mxu0 0.0
        %6388 = vmatpush1.msra.mxu0 0.0
        %6389 = vmatprep.subr.mxu0 0.0
        %6390 = vmatpush1.msra.mxu0 0.0
        %6391 = vmatprep.subr.mxu0 0.0
        %6392 = vmatpush1.msra.mxu0 0.0
        %6393 = vmatprep.subr.mxu0 0.0
        %6394 = vmatpush1.msra.mxu0 0.0
        %6395 = vmatprep.subr.mxu0 0.0
        %6396 = vmatpush1.msra.mxu0 0.0
        %6397 = vmatprep.subr.mxu0 0.0
        %6398 = vmatpush1.msra.mxu0 0.0
        %6399 = vmatprep.subr.mxu0 0.0
        %6400 = vmatpush1.msra.mxu0 0.0
        %6401 = vmatprep.subr.mxu0 0.0
        %6402 = vmatpush1.msra.mxu0 0.0
        %6403 = vmatprep.subr.mxu0 0.0
        %6404 = vmatpush1.msra.mxu0 0.0
        %6405 = vmatprep.subr.mxu0 0.0
        %6406 = vmatpush1.msra.mxu0 0.0
        %6407 = vmatprep.subr.mxu0 0.0
        %6408 = vmatpush1.msra.mxu0 0.0
        %6409 = vmatprep.subr.mxu0 0.0
        %6410 = vmatpush1.msra.mxu0 0.0
        %6411 = vmatprep.subr.mxu0 0.0
        %6412 = vmatpush1.msra.mxu0 0.0
        %6413 = vmatprep.subr.mxu0 0.0
        %6414 = vmatpush1.msra.mxu0 0.0
        %6415 = vmatprep.mubr.f32.mxu0 0.0
        %6416 = vmatmul.mubr.f32.gmra.mrb[0].mxu0 %v6346
        %v6417 = vpop.f32.mrb[0].mxu0
        %v6418 = vadd.f32 %v6343, %v6417
        %v6419 = vpop.f32.mrb[0].mxu0
        %6420 = vmatprep.mubr.f32.mxu0 0.0
        %6421 = vmatmul.mubr.f32.gmra.mrb[0].mxu0 %v6349
        %v6422 = vpop.f32.mrb[0].mxu0
        %v6423 = vadd.f32 %v6343, %v6422
        %v6424 = vpop.f32.mrb[0].mxu0
        %6425 = vdwg.mxu0
        %vm6426 = vcmp.gt.f32.partialorder %v6418, 0.0
        %vm6427 = vcmp.gt.f32.partialorder %v6423, 0.0
        %v6428 = vmul.f32 %v6418, 0.1
        %v6429 = vmul.f32 %v6423, 0.1
        %v6430 = vsel %vm6426, %v6418, %v6428
        %v6431 = vsel %vm6427, %v6423, %v6429
        %v6433 = vlaneseq
        %v6434 = vshrl.u32 %v6433, 7
        %v6435 = vsub.s32 0, %v6434
        %v6436 = vrot.slane %v6338, %v6435
        %v6439 = vsel %vm3961, %v6430, 0
        %v6442 = vsel %vm3961, %v6431, 0
        %6444 = vmatprep.subr.mxu0 0.0
        %6445 = vmatpush1.msra.mxu0 %v6327
        %6446 = vmatprep.subr.mxu0 0.0
        %6447 = vmatpush1.msra.mxu0 %v6328
        %6448 = vmatprep.subr.mxu0 0.0
        %6449 = vmatpush1.msra.mxu0 %v6329
        %6450 = vmatprep.subr.mxu0 0.0
        %6451 = vmatpush1.msra.mxu0 %v6330
        %6452 = vmatprep.subr.mxu0 0.0
        %6453 = vmatpush1.msra.mxu0 %v6331
        %6454 = vmatprep.subr.mxu0 0.0
        %6455 = vmatpush1.msra.mxu0 %v6332
        %6456 = vmatprep.subr.mxu0 0.0
        %6457 = vmatpush1.msra.mxu0 %v6333
        %6458 = vmatprep.subr.mxu0 0.0
        %6459 = vmatpush1.msra.mxu0 %v6334
        %6460 = vmatprep.subr.mxu0 0.0
        %6461 = vmatpush1.msra.mxu0 %v6335
        %6462 = vmatprep.subr.mxu0 0.0
        %6463 = vmatpush1.msra.mxu0 %v6336
        %6464 = vmatprep.subr.mxu0 0.0
        %6465 = vmatpush1.msra.mxu0 0.0
        %6466 = vmatprep.subr.mxu0 0.0
        %6467 = vmatpush1.msra.mxu0 0.0
        %6468 = vmatprep.subr.mxu0 0.0
        %6469 = vmatpush1.msra.mxu0 0.0
        %6470 = vmatprep.subr.mxu0 0.0
        %6471 = vmatpush1.msra.mxu0 0.0
        %6472 = vmatprep.subr.mxu0 0.0
        %6473 = vmatpush1.msra.mxu0 0.0
        %6474 = vmatprep.subr.mxu0 0.0
        %6475 = vmatpush1.msra.mxu0 0.0
        %6476 = vmatprep.subr.mxu0 0.0
        %6477 = vmatpush1.msra.mxu0 0.0
        %6478 = vmatprep.subr.mxu0 0.0
        %6479 = vmatpush1.msra.mxu0 0.0
        %6480 = vmatprep.subr.mxu0 0.0
        %6481 = vmatpush1.msra.mxu0 0.0
        %6482 = vmatprep.subr.mxu0 0.0
        %6483 = vmatpush1.msra.mxu0 0.0
        %6484 = vmatprep.subr.mxu0 0.0
        %6485 = vmatpush1.msra.mxu0 0.0
        %6486 = vmatprep.subr.mxu0 0.0
        %6487 = vmatpush1.msra.mxu0 0.0
        %6488 = vmatprep.subr.mxu0 0.0
        %6489 = vmatpush1.msra.mxu0 0.0
        %6490 = vmatprep.subr.mxu0 0.0
        %6491 = vmatpush1.msra.mxu0 0.0
        %6492 = vmatprep.subr.mxu0 0.0
        %6493 = vmatpush1.msra.mxu0 0.0
        %6494 = vmatprep.subr.mxu0 0.0
        %6495 = vmatpush1.msra.mxu0 0.0
        %6496 = vmatprep.subr.mxu0 0.0
        %6497 = vmatpush1.msra.mxu0 0.0
        %6498 = vmatprep.subr.mxu0 0.0
        %6499 = vmatpush1.msra.mxu0 0.0
        %6500 = vmatprep.subr.mxu0 0.0
        %6501 = vmatpush1.msra.mxu0 0.0
        %6502 = vmatprep.subr.mxu0 0.0
        %6503 = vmatpush1.msra.mxu0 0.0
        %6504 = vmatprep.subr.mxu0 0.0
        %6505 = vmatpush1.msra.mxu0 0.0
        %6506 = vmatprep.subr.mxu0 0.0
        %6507 = vmatpush1.msra.mxu0 0.0
        %6508 = vmatprep.mubr.f32.mxu0 0.0
        %6509 = vmatmul.mubr.f32.gmra.mrb[0].mxu0 %v6439
        %v6510 = vpop.f32.mrb[0].mxu0
        %v6511 = vadd.f32 %v6436, %v6510
        %v6512 = vpop.f32.mrb[0].mxu0
        %6513 = vmatprep.mubr.f32.mxu0 0.0
        %6514 = vmatmul.mubr.f32.gmra.mrb[0].mxu0 %v6442
        %v6515 = vpop.f32.mrb[0].mxu0
        %v6516 = vadd.f32 %v6436, %v6515
        %v6517 = vpop.f32.mrb[0].mxu0
        %6518 = vdwg.mxu0
        %v6520 = vsel %vm3961, %v6511, 0
        %v6523 = vsel %vm3961, %v6516, 0
        %6525 = vmatprep.subr.mxu0 0.0
        %6526 = vmatpush1.msra.mxu0 %v4348
        %6527 = vmatprep.subr.mxu0 0.0
        %6528 = vmatpush1.msra.mxu0 %v4349
        %6529 = vmatprep.subr.mxu0 0.0
        %6530 = vmatpush1.msra.mxu0 %v4350
        %6531 = vmatprep.subr.mxu0 0.0
        %6532 = vmatpush1.msra.mxu0 %v4351
        %6533 = vmatprep.subr.mxu0 0.0
        %6534 = vmatpush1.msra.mxu0 %v4352
        %6535 = vmatprep.subr.mxu0 0.0
        %6536 = vmatpush1.msra.mxu0 %v4353
        %6537 = vmatprep.subr.mxu0 0.0
        %6538 = vmatpush1.msra.mxu0 %v4354
        %6539 = vmatprep.subr.mxu0 0.0
        %6540 = vmatpush1.msra.mxu0 %v4355
        %6541 = vmatprep.subr.mxu0 0.0
        %6542 = vmatpush1.msra.mxu0 %v4356
        %6543 = vmatprep.subr.mxu0 0.0
        %6544 = vmatpush1.msra.mxu0 %v4357
        %6545 = vmatprep.subr.mxu0 0.0
        %6546 = vmatpush1.msra.mxu0 0.0
        %6547 = vmatprep.subr.mxu0 0.0
        %6548 = vmatpush1.msra.mxu0 0.0
        %6549 = vmatprep.subr.mxu0 0.0
        %6550 = vmatpush1.msra.mxu0 0.0
        %6551 = vmatprep.subr.mxu0 0.0
        %6552 = vmatpush1.msra.mxu0 0.0
        %6553 = vmatprep.subr.mxu0 0.0
        %6554 = vmatpush1.msra.mxu0 0.0
        %6555 = vmatprep.subr.mxu0 0.0
        %6556 = vmatpush1.msra.mxu0 0.0
        %6557 = vmatprep.subr.mxu0 0.0
        %6558 = vmatpush1.msra.mxu0 0.0
        %6559 = vmatprep.subr.mxu0 0.0
        %6560 = vmatpush1.msra.mxu0 0.0
        %6561 = vmatprep.subr.mxu0 0.0
        %6562 = vmatpush1.msra.mxu0 0.0
        %6563 = vmatprep.subr.mxu0 0.0
        %6564 = vmatpush1.msra.mxu0 0.0
        %6565 = vmatprep.subr.mxu0 0.0
        %6566 = vmatpush1.msra.mxu0 0.0
        %6567 = vmatprep.subr.mxu0 0.0
        %6568 = vmatpush1.msra.mxu0 0.0
        %6569 = vmatprep.subr.mxu0 0.0
        %6570 = vmatpush1.msra.mxu0 0.0
        %6571 = vmatprep.subr.mxu0 0.0
        %6572 = vmatpush1.msra.mxu0 0.0
        %6573 = vmatprep.subr.mxu0 0.0
        %6574 = vmatpush1.msra.mxu0 0.0
        %6575 = vmatprep.subr.mxu0 0.0
        %6576 = vmatpush1.msra.mxu0 0.0
        %6577 = vmatprep.subr.mxu0 0.0
        %6578 = vmatpush1.msra.mxu0 0.0
        %6579 = vmatprep.subr.mxu0 0.0
        %6580 = vmatpush1.msra.mxu0 0.0
        %6581 = vmatprep.subr.mxu0 0.0
        %6582 = vmatpush1.msra.mxu0 0.0
        %6583 = vmatprep.subr.mxu0 0.0
        %6584 = vmatpush1.msra.mxu0 0.0
        %6585 = vmatprep.subr.mxu0 0.0
        %6586 = vmatpush1.msra.mxu0 0.0
        %6587 = vmatprep.subr.mxu0 0.0
        %6588 = vmatpush1.msra.mxu0 0.0
        %6589 = vmatprep.mubr.f32.mxu0 0.0
        %6590 = vmatmul.mubr.f32.gmra.mrb[0].mxu0 %v6520
        %v6591 = vpop.f32.mrb[0].mxu0
        %v6592 = vadd.f32 0.0, %v6591
        %v6593 = vpop.f32.mrb[0].mxu0
        %6594 = vmatprep.mubr.f32.mxu0 0.0
        %6595 = vmatmul.mubr.f32.gmra.mrb[0].mxu0 %v6523
        %v6596 = vpop.f32.mrb[0].mxu0
        %v6597 = vadd.f32 0.0, %v6596
        %v6598 = vpop.f32.mrb[0].mxu0
        %6599 = vdwg.mxu0
        %v6601 = vsel %vm3961, %v6305, 0
        %v6604 = vsel %vm3961, %v6310, 0
        %6606 = vmatprep.subr.mxu0 0.0
        %6607 = vmatpush1.msra.mxu0 %v4338
        %6608 = vmatprep.subr.mxu0 0.0
        %6609 = vmatpush1.msra.mxu0 %v4339
        %6610 = vmatprep.subr.mxu0 0.0
        %6611 = vmatpush1.msra.mxu0 %v4340
        %6612 = vmatprep.subr.mxu0 0.0
        %6613 = vmatpush1.msra.mxu0 %v4341
        %6614 = vmatprep.subr.mxu0 0.0
        %6615 = vmatpush1.msra.mxu0 %v4342
        %6616 = vmatprep.subr.mxu0 0.0
        %6617 = vmatpush1.msra.mxu0 %v4343
        %6618 = vmatprep.subr.mxu0 0.0
        %6619 = vmatpush1.msra.mxu0 %v4344
        %6620 = vmatprep.subr.mxu0 0.0
        %6621 = vmatpush1.msra.mxu0 %v4345
        %6622 = vmatprep.subr.mxu0 0.0
        %6623 = vmatpush1.msra.mxu0 %v4346
        %6624 = vmatprep.subr.mxu0 0.0
        %6625 = vmatpush1.msra.mxu0 %v4347
        %6626 = vmatprep.subr.mxu0 0.0
        %6627 = vmatpush1.msra.mxu0 0.0
        %6628 = vmatprep.subr.mxu0 0.0
        %6629 = vmatpush1.msra.mxu0 0.0
        %6630 = vmatprep.subr.mxu0 0.0
        %6631 = vmatpush1.msra.mxu0 0.0
        %6632 = vmatprep.subr.mxu0 0.0
        %6633 = vmatpush1.msra.mxu0 0.0
        %6634 = vmatprep.subr.mxu0 0.0
        %6635 = vmatpush1.msra.mxu0 0.0
        %6636 = vmatprep.subr.mxu0 0.0
        %6637 = vmatpush1.msra.mxu0 0.0
        %6638 = vmatprep.subr.mxu0 0.0
        %6639 = vmatpush1.msra.mxu0 0.0
        %6640 = vmatprep.subr.mxu0 0.0
        %6641 = vmatpush1.msra.mxu0 0.0
        %6642 = vmatprep.subr.mxu0 0.0
        %6643 = vmatpush1.msra.mxu0 0.0
        %6644 = vmatprep.subr.mxu0 0.0
        %6645 = vmatpush1.msra.mxu0 0.0
        %6646 = vmatprep.subr.mxu0 0.0
        %6647 = vmatpush1.msra.mxu0 0.0
        %6648 = vmatprep.subr.mxu0 0.0
        %6649 = vmatpush1.msra.mxu0 0.0
        %6650 = vmatprep.subr.mxu0 0.0
        %6651 = vmatpush1.msra.mxu0 0.0
        %6652 = vmatprep.subr.mxu0 0.0
        %6653 = vmatpush1.msra.mxu0 0.0
        %6654 = vmatprep.subr.mxu0 0.0
        %6655 = vmatpush1.msra.mxu0 0.0
        %6656 = vmatprep.subr.mxu0 0.0
        %6657 = vmatpush1.msra.mxu0 0.0
        %6658 = vmatprep.subr.mxu0 0.0
        %6659 = vmatpush1.msra.mxu0 0.0
        %6660 = vmatprep.subr.mxu0 0.0
        %6661 = vmatpush1.msra.mxu0 0.0
        %6662 = vmatprep.subr.mxu0 0.0
        %6663 = vmatpush1.msra.mxu0 0.0
        %6664 = vmatprep.subr.mxu0 0.0
        %6665 = vmatpush1.msra.mxu0 0.0
        %6666 = vmatprep.subr.mxu0 0.0
        %6667 = vmatpush1.msra.mxu0 0.0
        %6668 = vmatprep.subr.mxu0 0.0
        %6669 = vmatpush1.msra.mxu0 0.0
        %6670 = vmatprep.mubr.f32.mxu0 0.0
        %6671 = vmatmul.mubr.f32.gmra.mrb[0].mxu0 %v6601
        %v6672 = vpop.f32.mrb[0].mxu0
        %v6673 = vadd.f32 %v6592, %v6672
        %v6674 = vpop.f32.mrb[0].mxu0
        %6675 = vmatprep.mubr.f32.mxu0 0.0
        %6676 = vmatmul.mubr.f32.gmra.mrb[0].mxu0 %v6604
        %v6677 = vpop.f32.mrb[0].mxu0
        %v6678 = vadd.f32 %v6597, %v6677
        %v6679 = vpop.f32.mrb[0].mxu0
        %6680 = vdwg.mxu0
        %s6681 = scalar_lea.vmem [#allocation26], 128
        %v6682 = vld [vmem:[%s6681] sm:$0xff]
        %v6683 = vld [vmem:[%s6681 + $0x8] sm:$0xff]
        %v6684 = vld [vmem:[%s6681 + $0x10] sm:$0xff]
        %v6685 = vld [vmem:[%s6681 + $0x18] sm:$0xff]
        %v6686 = vld [vmem:[%s6681 + $0x20] sm:$0xff]
        %v6687 = vld [vmem:[%s6681 + $0x28] sm:$0xff]
        %v6688 = vld [vmem:[%s6681 + $0x30] sm:$0xff]
        %v6689 = vld [vmem:[%s6681 + $0x38] sm:$0xff]
        %v6690 = vld [vmem:[%s6681 + $0x40] sm:$0xff]
        %v6691 = vld [vmem:[%s6681 + $0x48] sm:$0xff]
        %v6692 = vld [vmem:[%s6681 + $0x50] sm:$0xff]
        %v6693 = vld [vmem:[%s6681 + $0x58] sm:$0xff]
        %v6694 = vld [vmem:[%s6681 + $0x60] sm:$0xff]
        %v6695 = vld [vmem:[%s6681 + $0x68] sm:$0xff]
        %v6696 = vld [vmem:[%s6681 + $0x70] sm:$0xff]
        %v6697 = vld [vmem:[%s6681 + $0x78] sm:$0xff]
        %s6698 = scalar_lea.vmem [#allocation25], 1
        %v6699 = vld [vmem:[%s6698] sm:$0x1]
        %v6701 = vlaneseq
        %v6702 = vshrl.u32 %v6701, 7
        %v6703 = vsub.s32 0, %v6702
        %v6704 = vrot.slane %v6699, %v6703
        %6706 = vmatprep.subr.mxu0 0.0
        %6707 = vmatpush1.msra.mxu0 %v6682
        %6708 = vmatprep.subr.mxu0 0.0
        %6709 = vmatpush1.msra.mxu0 %v6683
        %6710 = vmatprep.subr.mxu0 0.0
        %6711 = vmatpush1.msra.mxu0 %v6684
        %6712 = vmatprep.subr.mxu0 0.0
        %6713 = vmatpush1.msra.mxu0 %v6685
        %6714 = vmatprep.subr.mxu0 0.0
        %6715 = vmatpush1.msra.mxu0 %v6686
        %6716 = vmatprep.subr.mxu0 0.0
        %6717 = vmatpush1.msra.mxu0 %v6687
        %6718 = vmatprep.subr.mxu0 0.0
        %6719 = vmatpush1.msra.mxu0 %v6688
        %6720 = vmatprep.subr.mxu0 0.0
        %6721 = vmatpush1.msra.mxu0 %v6689
        %6722 = vmatprep.subr.mxu0 0.0
        %6723 = vmatpush1.msra.mxu0 %v6690
        %6724 = vmatprep.subr.mxu0 0.0
        %6725 = vmatpush1.msra.mxu0 %v6691
        %6726 = vmatprep.subr.mxu0 0.0
        %6727 = vmatpush1.msra.mxu0 %v6692
        %6728 = vmatprep.subr.mxu0 0.0
        %6729 = vmatpush1.msra.mxu0 %v6693
        %6730 = vmatprep.subr.mxu0 0.0
        %6731 = vmatpush1.msra.mxu0 %v6694
        %6732 = vmatprep.subr.mxu0 0.0
        %6733 = vmatpush1.msra.mxu0 %v6695
        %6734 = vmatprep.subr.mxu0 0.0
        %6735 = vmatpush1.msra.mxu0 %v6696
        %6736 = vmatprep.subr.mxu0 0.0
        %6737 = vmatpush1.msra.mxu0 %v6697
        %6738 = vmatprep.subr.mxu0 0.0
        %6739 = vmatpush1.msra.mxu0 0.0
        %6740 = vmatprep.subr.mxu0 0.0
        %6741 = vmatpush1.msra.mxu0 0.0
        %6742 = vmatprep.subr.mxu0 0.0
        %6743 = vmatpush1.msra.mxu0 0.0
        %6744 = vmatprep.subr.mxu0 0.0
        %6745 = vmatpush1.msra.mxu0 0.0
        %6746 = vmatprep.subr.mxu0 0.0
        %6747 = vmatpush1.msra.mxu0 0.0
        %6748 = vmatprep.subr.mxu0 0.0
        %6749 = vmatpush1.msra.mxu0 0.0
        %6750 = vmatprep.subr.mxu0 0.0
        %6751 = vmatpush1.msra.mxu0 0.0
        %6752 = vmatprep.subr.mxu0 0.0
        %6753 = vmatpush1.msra.mxu0 0.0
        %6754 = vmatprep.subr.mxu0 0.0
        %6755 = vmatpush1.msra.mxu0 0.0
        %6756 = vmatprep.subr.mxu0 0.0
        %6757 = vmatpush1.msra.mxu0 0.0
        %6758 = vmatprep.subr.mxu0 0.0
        %6759 = vmatpush1.msra.mxu0 0.0
        %6760 = vmatprep.subr.mxu0 0.0
        %6761 = vmatpush1.msra.mxu0 0.0
        %6762 = vmatprep.subr.mxu0 0.0
        %6763 = vmatpush1.msra.mxu0 0.0
        %6764 = vmatprep.subr.mxu0 0.0
        %6765 = vmatpush1.msra.mxu0 0.0
        %6766 = vmatprep.subr.mxu0 0.0
        %6767 = vmatpush1.msra.mxu0 0.0
        %6768 = vmatprep.subr.mxu0 0.0
        %6769 = vmatpush1.msra.mxu0 0.0
        %6770 = vmatprep.mubr.f32.mxu0 0.0
        %6771 = vmatmul.mubr.f32.gmra.mrb[0].mxu0 %v6673
        %v6772 = vpop.f32.mrb[0].mxu0
        %v6773 = vadd.f32 %v6704, %v6772
        %v6774 = vpop.f32.mrb[0].mxu0
        %6775 = vmatprep.mubr.f32.mxu0 0.0
        %6776 = vmatmul.mubr.f32.gmra.mrb[0].mxu0 %v6678
        %v6777 = vpop.f32.mrb[0].mxu0
        %v6778 = vadd.f32 %v6704, %v6777
        %v6779 = vpop.f32.mrb[0].mxu0
        %6780 = vdwg.mxu0
        %v6781 = vadd.f32 %v6773, %v5955
        %v6782 = vadd.f32 %v6778, %v5956
        %v6783 = vld [vmem:[%s31] sm:$0xff]
        %v6784 = vld [vmem:[%s31 + $0x8] sm:$0xff]
        %v6785 = vld [vmem:[%s31 + $0x10] sm:$0xff]
        %v6786 = vld [vmem:[%s31 + $0x18] sm:$0xff]
        %v6787 = vld [vmem:[%s31 + $0x20] sm:$0xff]
        %v6788 = vld [vmem:[%s31 + $0x28] sm:$0xff]
        %v6789 = vld [vmem:[%s31 + $0x30] sm:$0xff]
        %v6790 = vld [vmem:[%s31 + $0x38] sm:$0xff]
        %v6791 = vld [vmem:[%s31 + $0x40] sm:$0xff]
        %v6792 = vld [vmem:[%s31 + $0x48] sm:$0xff]
        %v6793 = vld [vmem:[%s31 + $0x50] sm:$0xff]
        %v6794 = vld [vmem:[%s31 + $0x58] sm:$0xff]
        %v6795 = vld [vmem:[%s31 + $0x60] sm:$0xff]
        %v6796 = vld [vmem:[%s31 + $0x68] sm:$0xff]
        %v6797 = vld [vmem:[%s31 + $0x70] sm:$0xff]
        %v6798 = vld [vmem:[%s31 + $0x78] sm:$0xff]
        %v6799 = vld [vmem:[%s31 + $0x80] sm:$0xff]
        %v6800 = vld [vmem:[%s31 + $0x88] sm:$0xff]
        %v6801 = vld [vmem:[%s31 + $0x90] sm:$0xff]
        %v6802 = vld [vmem:[%s31 + $0x98] sm:$0xff]
        %v6803 = vld [vmem:[%s31 + $0xa0] sm:$0xff]
        %v6804 = vld [vmem:[%s31 + $0xa8] sm:$0xff]
        %v6805 = vld [vmem:[%s31 + $0xb0] sm:$0xff]
        %v6806 = vld [vmem:[%s31 + $0xb8] sm:$0xff]
        %v6807 = vld [vmem:[%s31 + $0xc0] sm:$0xff]
        %v6808 = vld [vmem:[%s31 + $0xc8] sm:$0xff]
        %v6809 = vld [vmem:[%s31 + $0xd0] sm:$0xff]
        %v6810 = vld [vmem:[%s31 + $0xd8] sm:$0xff]
        %v6811 = vld [vmem:[%s31 + $0xe0] sm:$0xff]
        %v6812 = vld [vmem:[%s31 + $0xe8] sm:$0xff]
        %v6813 = vld [vmem:[%s31 + $0xf0] sm:$0xff]
        %v6814 = vld [vmem:[%s31 + $0xf8] sm:$0xff]
        %v6815 = vld [vmem:[%s31 + $0x100] sm:$0xff]
        %v6816 = vld [vmem:[%s31 + $0x108] sm:$0xff]
        %v6817 = vld [vmem:[%s31 + $0x110] sm:$0xff]
        %v6818 = vld [vmem:[%s31 + $0x118] sm:$0xff]
        %v6819 = vld [vmem:[%s31 + $0x120] sm:$0xff]
        %v6820 = vld [vmem:[%s31 + $0x128] sm:$0xff]
        %v6821 = vld [vmem:[%s31 + $0x130] sm:$0xff]
        %v6822 = vld [vmem:[%s31 + $0x138] sm:$0xff]
        %v6823 = vld [vmem:[%s31 + $0x140] sm:$0xff]
        %v6824 = vld [vmem:[%s31 + $0x148] sm:$0xff]
        %v6825 = vld [vmem:[%s31 + $0x150] sm:$0xff]
        %v6826 = vld [vmem:[%s31 + $0x158] sm:$0xff]
        %v6827 = vld [vmem:[%s31 + $0x160] sm:$0xff]
        %v6828 = vld [vmem:[%s31 + $0x168] sm:$0xff]
        %v6829 = vld [vmem:[%s31 + $0x170] sm:$0xff]
        %v6830 = vld [vmem:[%s31 + $0x178] sm:$0xff]
        %v6831 = vld [vmem:[%s31 + $0x180] sm:$0xff]
        %v6832 = vld [vmem:[%s31 + $0x188] sm:$0xff]
        %v6833 = vld [vmem:[%s31 + $0x190] sm:$0xff]
        %v6834 = vld [vmem:[%s31 + $0x198] sm:$0xff]
        %v6835 = vld [vmem:[%s31 + $0x1a0] sm:$0xff]
        %v6836 = vld [vmem:[%s31 + $0x1a8] sm:$0xff]
        %v6837 = vld [vmem:[%s31 + $0x1b0] sm:$0xff]
        %v6838 = vld [vmem:[%s31 + $0x1b8] sm:$0xff]
        %v6839 = vld [vmem:[%s31 + $0x1c0] sm:$0xff]
        %v6840 = vld [vmem:[%s31 + $0x1c8] sm:$0xff]
        %v6841 = vld [vmem:[%s31 + $0x1d0] sm:$0xff]
        %v6842 = vld [vmem:[%s31 + $0x1d8] sm:$0xff]
        %v6843 = vld [vmem:[%s31 + $0x1e0] sm:$0xff]
        %v6844 = vld [vmem:[%s31 + $0x1e8] sm:$0xff]
        %v6845 = vld [vmem:[%s31 + $0x1f0] sm:$0xff]
        %v6846 = vld [vmem:[%s31 + $0x1f8] sm:$0xff]
        %v6847 = vld [vmem:[%s31 + $0x200] sm:$0xff]
        %v6848 = vld [vmem:[%s31 + $0x208] sm:$0xff]
        %v6849 = vld [vmem:[%s31 + $0x210] sm:$0xff]
        %v6850 = vld [vmem:[%s31 + $0x218] sm:$0xff]
        %v6851 = vld [vmem:[%s31 + $0x220] sm:$0xff]
        %v6852 = vld [vmem:[%s31 + $0x228] sm:$0xff]
        %v6853 = vld [vmem:[%s31 + $0x230] sm:$0xff]
        %v6854 = vld [vmem:[%s31 + $0x238] sm:$0xff]
        %v6855 = vld [vmem:[%s31 + $0x240] sm:$0xff]
        %v6856 = vld [vmem:[%s31 + $0x248] sm:$0xff]
        %v6857 = vld [vmem:[%s31 + $0x250] sm:$0xff]
        %v6858 = vld [vmem:[%s31 + $0x258] sm:$0xff]
        %v6859 = vld [vmem:[%s31 + $0x260] sm:$0xff]
        %v6860 = vld [vmem:[%s31 + $0x268] sm:$0xff]
        %v6861 = vld [vmem:[%s31 + $0x270] sm:$0xff]
        %v6862 = vld [vmem:[%s31 + $0x278] sm:$0xff]
        %v6863 = vld [vmem:[%s31 + $0x280] sm:$0xff]
        %v6864 = vld [vmem:[%s31 + $0x288] sm:$0xff]
        %v6865 = vld [vmem:[%s31 + $0x290] sm:$0xff]
        %v6866 = vld [vmem:[%s31 + $0x298] sm:$0xff]
        %v6867 = vld [vmem:[%s31 + $0x2a0] sm:$0xff]
        %v6868 = vld [vmem:[%s31 + $0x2a8] sm:$0xff]
        %v6869 = vld [vmem:[%s31 + $0x2b0] sm:$0xff]
        %v6870 = vld [vmem:[%s31 + $0x2b8] sm:$0xff]
        %v6871 = vld [vmem:[%s31 + $0x2c0] sm:$0xff]
        %v6872 = vld [vmem:[%s31 + $0x2c8] sm:$0xff]
        %v6873 = vld [vmem:[%s31 + $0x2d0] sm:$0xff]
        %v6874 = vld [vmem:[%s31 + $0x2d8] sm:$0xff]
        %v6875 = vld [vmem:[%s31 + $0x2e0] sm:$0xff]
        %v6876 = vld [vmem:[%s31 + $0x2e8] sm:$0xff]
        %v6877 = vld [vmem:[%s31 + $0x2f0] sm:$0xff]
        %v6878 = vld [vmem:[%s31 + $0x2f8] sm:$0xff]
        %v6879 = vld [vmem:[%s31 + $0x300] sm:$0xff]
        %v6880 = vld [vmem:[%s31 + $0x308] sm:$0xff]
        %v6881 = vld [vmem:[%s31 + $0x310] sm:$0xff]
        %v6882 = vld [vmem:[%s31 + $0x318] sm:$0xff]
        %v6883 = vld [vmem:[%s31 + $0x320] sm:$0xff]
        %v6884 = vld [vmem:[%s31 + $0x328] sm:$0xff]
        %v6885 = vld [vmem:[%s31 + $0x330] sm:$0xff]
        %v6886 = vld [vmem:[%s31 + $0x338] sm:$0xff]
        %v6887 = vld [vmem:[%s31 + $0x340] sm:$0xff]
        %v6888 = vld [vmem:[%s31 + $0x348] sm:$0xff]
        %v6889 = vld [vmem:[%s31 + $0x350] sm:$0xff]
        %v6890 = vld [vmem:[%s31 + $0x358] sm:$0xff]
        %v6891 = vld [vmem:[%s31 + $0x360] sm:$0xff]
        %v6892 = vld [vmem:[%s31 + $0x368] sm:$0xff]
        %v6893 = vld [vmem:[%s31 + $0x370] sm:$0xff]
        %v6894 = vld [vmem:[%s31 + $0x378] sm:$0xff]
        %v6895 = vld [vmem:[%s31 + $0x380] sm:$0xff]
        %v6896 = vld [vmem:[%s31 + $0x388] sm:$0xff]
        %v6897 = vld [vmem:[%s31 + $0x390] sm:$0xff]
        %v6898 = vld [vmem:[%s31 + $0x398] sm:$0xff]
        %v6899 = vld [vmem:[%s31 + $0x3a0] sm:$0xff]
        %v6900 = vld [vmem:[%s31 + $0x3a8] sm:$0xff]
        %v6901 = vld [vmem:[%s31 + $0x3b0] sm:$0xff]
        %v6902 = vld [vmem:[%s31 + $0x3b8] sm:$0xff]
        %v6903 = vld [vmem:[%s31 + $0x3c0] sm:$0xff]
        %v6904 = vld [vmem:[%s31 + $0x3c8] sm:$0xff]
        %v6905 = vld [vmem:[%s31 + $0x3d0] sm:$0xff]
        %v6906 = vld [vmem:[%s31 + $0x3d8] sm:$0xff]
        %v6907 = vld [vmem:[%s31 + $0x3e0] sm:$0xff]
        %v6908 = vld [vmem:[%s31 + $0x3e8] sm:$0xff]
        %v6909 = vld [vmem:[%s31 + $0x3f0] sm:$0xff]
        %v6910 = vld [vmem:[%s31 + $0x3f8] sm:$0xff]
        %v6911 = vld [vmem:[#allocation20] sm:$0xff]
        %v6913 = vlaneseq
        %v6914 = vshrl.u32 %v6913, 7
        %v6915 = vsub.s32 0, %v6914
        %v6916 = vrot.slane %v6911, %v6915
        %v6917 = vlaneseq
        %v6918 = vshrl.u32 %v6917, 7
        %v6919 = vsub.s32 1, %v6918
        %v6920 = vrot.slane %v6911, %v6919
        %v6921 = vlaneseq
        %v6922 = vshrl.u32 %v6921, 7
        %v6923 = vsub.s32 2, %v6922
        %v6924 = vrot.slane %v6911, %v6923
        %v6925 = vlaneseq
        %v6926 = vshrl.u32 %v6925, 7
        %v6927 = vsub.s32 3, %v6926
        %v6928 = vrot.slane %v6911, %v6927
        %v6929 = vlaneseq
        %v6930 = vshrl.u32 %v6929, 7
        %v6931 = vsub.s32 4, %v6930
        %v6932 = vrot.slane %v6911, %v6931
        %v6933 = vlaneseq
        %v6934 = vshrl.u32 %v6933, 7
        %v6935 = vsub.s32 5, %v6934
        %v6936 = vrot.slane %v6911, %v6935
        %v6937 = vlaneseq
        %v6938 = vshrl.u32 %v6937, 7
        %v6939 = vsub.s32 6, %v6938
        %v6940 = vrot.slane %v6911, %v6939
        %v6941 = vlaneseq
        %v6942 = vshrl.u32 %v6941, 7
        %v6943 = vsub.s32 7, %v6942
        %v6944 = vrot.slane %v6911, %v6943
        %6953 = vmatprep.subr.mxu0 %v6784
        %6954 = vmatpush1.msra.mxu0 %v6783
        %6955 = vmatprep.subr.mxu0 %v6792
        %6956 = vmatpush1.msra.mxu0 %v6791
        %6957 = vmatprep.subr.mxu0 %v6800
        %6958 = vmatpush1.msra.mxu0 %v6799
        %6959 = vmatprep.subr.mxu0 %v6808
        %6960 = vmatpush1.msra.mxu0 %v6807
        %6961 = vmatprep.subr.mxu0 %v6816
        %6962 = vmatpush1.msra.mxu0 %v6815
        %6963 = vmatprep.subr.mxu0 %v6824
        %6964 = vmatpush1.msra.mxu0 %v6823
        %6965 = vmatprep.subr.mxu0 %v6832
        %6966 = vmatpush1.msra.mxu0 %v6831
        %6967 = vmatprep.subr.mxu0 %v6840
        %6968 = vmatpush1.msra.mxu0 %v6839
        %6969 = vmatprep.subr.mxu0 %v6848
        %6970 = vmatpush1.msra.mxu0 %v6847
        %6971 = vmatprep.subr.mxu0 %v6856
        %6972 = vmatpush1.msra.mxu0 %v6855
        %6973 = vmatprep.subr.mxu0 %v6864
        %6974 = vmatpush1.msra.mxu0 %v6863
        %6975 = vmatprep.subr.mxu0 %v6872
        %6976 = vmatpush1.msra.mxu0 %v6871
        %6977 = vmatprep.subr.mxu0 %v6880
        %6978 = vmatpush1.msra.mxu0 %v6879
        %6979 = vmatprep.subr.mxu0 %v6888
        %6980 = vmatpush1.msra.mxu0 %v6887
        %6981 = vmatprep.subr.mxu0 %v6896
        %6982 = vmatpush1.msra.mxu0 %v6895
        %6983 = vmatprep.subr.mxu0 %v6904
        %6984 = vmatpush1.msra.mxu0 %v6903
        %6985 = vmatprep.subr.mxu0 0.0
        %6986 = vmatpush1.msra.mxu0 0.0
        %6987 = vmatprep.subr.mxu0 0.0
        %6988 = vmatpush1.msra.mxu0 0.0
        %6989 = vmatprep.subr.mxu0 0.0
        %6990 = vmatpush1.msra.mxu0 0.0
        %6991 = vmatprep.subr.mxu0 0.0
        %6992 = vmatpush1.msra.mxu0 0.0
        %6993 = vmatprep.subr.mxu0 0.0
        %6994 = vmatpush1.msra.mxu0 0.0
        %6995 = vmatprep.subr.mxu0 0.0
        %6996 = vmatpush1.msra.mxu0 0.0
        %6997 = vmatprep.subr.mxu0 0.0
        %6998 = vmatpush1.msra.mxu0 0.0
        %6999 = vmatprep.subr.mxu0 0.0
        %7000 = vmatpush1.msra.mxu0 0.0
        %7001 = vmatprep.subr.mxu0 0.0
        %7002 = vmatpush1.msra.mxu0 0.0
        %7003 = vmatprep.subr.mxu0 0.0
        %7004 = vmatpush1.msra.mxu0 0.0
        %7005 = vmatprep.subr.mxu0 0.0
        %7006 = vmatpush1.msra.mxu0 0.0
        %7007 = vmatprep.subr.mxu0 0.0
        %7008 = vmatpush1.msra.mxu0 0.0
        %7009 = vmatprep.subr.mxu0 0.0
        %7010 = vmatpush1.msra.mxu0 0.0
        %7011 = vmatprep.subr.mxu0 0.0
        %7012 = vmatpush1.msra.mxu0 0.0
        %7013 = vmatprep.subr.mxu0 0.0
        %7014 = vmatpush1.msra.mxu0 0.0
        %7015 = vmatprep.subr.mxu0 0.0
        %7016 = vmatpush1.msra.mxu0 0.0
        %7017 = vmatprep.mubr.f32.mxu0 0.0
        %7018 = vmatmul.mubr.f32.gmra.mrb[0].mxu0 %v6781
        %v7019 = vpop.f32.mrb[0].mxu0
        %v7020 = vadd.f32 %v6916, %v7019
        %v7021 = vpop.f32.mrb[0].mxu0
        %v7022 = vadd.f32 %v6920, %v7021
        %7023 = vmatprep.mubr.f32.mxu0 0.0
        %7024 = vmatmul.mubr.f32.gmra.mrb[0].mxu0 %v6782
        %v7025 = vpop.f32.mrb[0].mxu0
        %v7026 = vadd.f32 %v6916, %v7025
        %v7027 = vpop.f32.mrb[0].mxu0
        %v7028 = vadd.f32 %v6920, %v7027
        %7029 = vdwg.mxu0
        %7030 = vmatprep.subr.mxu0 %v6786
        %7031 = vmatpush1.msra.mxu0 %v6785
        %7032 = vmatprep.subr.mxu0 %v6794
        %7033 = vmatpush1.msra.mxu0 %v6793
        %7034 = vmatprep.subr.mxu0 %v6802
        %7035 = vmatpush1.msra.mxu0 %v6801
        %7036 = vmatprep.subr.mxu0 %v6810
        %7037 = vmatpush1.msra.mxu0 %v6809
        %7038 = vmatprep.subr.mxu0 %v6818
        %7039 = vmatpush1.msra.mxu0 %v6817
        %7040 = vmatprep.subr.mxu0 %v6826
        %7041 = vmatpush1.msra.mxu0 %v6825
        %7042 = vmatprep.subr.mxu0 %v6834
        %7043 = vmatpush1.msra.mxu0 %v6833
        %7044 = vmatprep.subr.mxu0 %v6842
        %7045 = vmatpush1.msra.mxu0 %v6841
        %7046 = vmatprep.subr.mxu0 %v6850
        %7047 = vmatpush1.msra.mxu0 %v6849
        %7048 = vmatprep.subr.mxu0 %v6858
        %7049 = vmatpush1.msra.mxu0 %v6857
        %7050 = vmatprep.subr.mxu0 %v6866
        %7051 = vmatpush1.msra.mxu0 %v6865
        %7052 = vmatprep.subr.mxu0 %v6874
        %7053 = vmatpush1.msra.mxu0 %v6873
        %7054 = vmatprep.subr.mxu0 %v6882
        %7055 = vmatpush1.msra.mxu0 %v6881
        %7056 = vmatprep.subr.mxu0 %v6890
        %7057 = vmatpush1.msra.mxu0 %v6889
        %7058 = vmatprep.subr.mxu0 %v6898
        %7059 = vmatpush1.msra.mxu0 %v6897
        %7060 = vmatprep.subr.mxu0 %v6906
        %7061 = vmatpush1.msra.mxu0 %v6905
        %7062 = vmatprep.subr.mxu0 0.0
        %7063 = vmatpush1.msra.mxu0 0.0
        %7064 = vmatprep.subr.mxu0 0.0
        %7065 = vmatpush1.msra.mxu0 0.0
        %7066 = vmatprep.subr.mxu0 0.0
        %7067 = vmatpush1.msra.mxu0 0.0
        %7068 = vmatprep.subr.mxu0 0.0
        %7069 = vmatpush1.msra.mxu0 0.0
        %7070 = vmatprep.subr.mxu0 0.0
        %7071 = vmatpush1.msra.mxu0 0.0
        %7072 = vmatprep.subr.mxu0 0.0
        %7073 = vmatpush1.msra.mxu0 0.0
        %7074 = vmatprep.subr.mxu0 0.0
        %7075 = vmatpush1.msra.mxu0 0.0
        %7076 = vmatprep.subr.mxu0 0.0
        %7077 = vmatpush1.msra.mxu0 0.0
        %7078 = vmatprep.subr.mxu0 0.0
        %7079 = vmatpush1.msra.mxu0 0.0
        %7080 = vmatprep.subr.mxu0 0.0
        %7081 = vmatpush1.msra.mxu0 0.0
        %7082 = vmatprep.subr.mxu0 0.0
        %7083 = vmatpush1.msra.mxu0 0.0
        %7084 = vmatprep.subr.mxu0 0.0
        %7085 = vmatpush1.msra.mxu0 0.0
        %7086 = vmatprep.subr.mxu0 0.0
        %7087 = vmatpush1.msra.mxu0 0.0
        %7088 = vmatprep.subr.mxu0 0.0
        %7089 = vmatpush1.msra.mxu0 0.0
        %7090 = vmatprep.subr.mxu0 0.0
        %7091 = vmatpush1.msra.mxu0 0.0
        %7092 = vmatprep.subr.mxu0 0.0
        %7093 = vmatpush1.msra.mxu0 0.0
        %7094 = vmatprep.mubr.f32.mxu0 0.0
        %7095 = vmatmul.mubr.f32.gmra.mrb[0].mxu0 %v6781
        %v7096 = vpop.f32.mrb[0].mxu0
        %v7097 = vadd.f32 %v6924, %v7096
        %v7098 = vpop.f32.mrb[0].mxu0
        %v7099 = vadd.f32 %v6928, %v7098
        %7100 = vmatprep.mubr.f32.mxu0 0.0
        %7101 = vmatmul.mubr.f32.gmra.mrb[0].mxu0 %v6782
        %v7102 = vpop.f32.mrb[0].mxu0
        %v7103 = vadd.f32 %v6924, %v7102
        %v7104 = vpop.f32.mrb[0].mxu0
        %v7105 = vadd.f32 %v6928, %v7104
        %7106 = vdwg.mxu0
        %7107 = vmatprep.subr.mxu0 %v6788
        %7108 = vmatpush1.msra.mxu0 %v6787
        %7109 = vmatprep.subr.mxu0 %v6796
        %7110 = vmatpush1.msra.mxu0 %v6795
        %7111 = vmatprep.subr.mxu0 %v6804
        %7112 = vmatpush1.msra.mxu0 %v6803
        %7113 = vmatprep.subr.mxu0 %v6812
        %7114 = vmatpush1.msra.mxu0 %v6811
        %7115 = vmatprep.subr.mxu0 %v6820
        %7116 = vmatpush1.msra.mxu0 %v6819
        %7117 = vmatprep.subr.mxu0 %v6828
        %7118 = vmatpush1.msra.mxu0 %v6827
        %7119 = vmatprep.subr.mxu0 %v6836
        %7120 = vmatpush1.msra.mxu0 %v6835
        %7121 = vmatprep.subr.mxu0 %v6844
        %7122 = vmatpush1.msra.mxu0 %v6843
        %7123 = vmatprep.subr.mxu0 %v6852
        %7124 = vmatpush1.msra.mxu0 %v6851
        %7125 = vmatprep.subr.mxu0 %v6860
        %7126 = vmatpush1.msra.mxu0 %v6859
        %7127 = vmatprep.subr.mxu0 %v6868
        %7128 = vmatpush1.msra.mxu0 %v6867
        %7129 = vmatprep.subr.mxu0 %v6876
        %7130 = vmatpush1.msra.mxu0 %v6875
        %7131 = vmatprep.subr.mxu0 %v6884
        %7132 = vmatpush1.msra.mxu0 %v6883
        %7133 = vmatprep.subr.mxu0 %v6892
        %7134 = vmatpush1.msra.mxu0 %v6891
        %7135 = vmatprep.subr.mxu0 %v6900
        %7136 = vmatpush1.msra.mxu0 %v6899
        %7137 = vmatprep.subr.mxu0 %v6908
        %7138 = vmatpush1.msra.mxu0 %v6907
        %7139 = vmatprep.subr.mxu0 0.0
        %7140 = vmatpush1.msra.mxu0 0.0
        %7141 = vmatprep.subr.mxu0 0.0
        %7142 = vmatpush1.msra.mxu0 0.0
        %7143 = vmatprep.subr.mxu0 0.0
        %7144 = vmatpush1.msra.mxu0 0.0
        %7145 = vmatprep.subr.mxu0 0.0
        %7146 = vmatpush1.msra.mxu0 0.0
        %7147 = vmatprep.subr.mxu0 0.0
        %7148 = vmatpush1.msra.mxu0 0.0
        %7149 = vmatprep.subr.mxu0 0.0
        %7150 = vmatpush1.msra.mxu0 0.0
        %7151 = vmatprep.subr.mxu0 0.0
        %7152 = vmatpush1.msra.mxu0 0.0
        %7153 = vmatprep.subr.mxu0 0.0
        %7154 = vmatpush1.msra.mxu0 0.0
        %7155 = vmatprep.subr.mxu0 0.0
        %7156 = vmatpush1.msra.mxu0 0.0
        %7157 = vmatprep.subr.mxu0 0.0
        %7158 = vmatpush1.msra.mxu0 0.0
        %7159 = vmatprep.subr.mxu0 0.0
        %7160 = vmatpush1.msra.mxu0 0.0
        %7161 = vmatprep.subr.mxu0 0.0
        %7162 = vmatpush1.msra.mxu0 0.0
        %7163 = vmatprep.subr.mxu0 0.0
        %7164 = vmatpush1.msra.mxu0 0.0
        %7165 = vmatprep.subr.mxu0 0.0
        %7166 = vmatpush1.msra.mxu0 0.0
        %7167 = vmatprep.subr.mxu0 0.0
        %7168 = vmatpush1.msra.mxu0 0.0
        %7169 = vmatprep.subr.mxu0 0.0
        %7170 = vmatpush1.msra.mxu0 0.0
        %7171 = vmatprep.mubr.f32.mxu0 0.0
        %7172 = vmatmul.mubr.f32.gmra.mrb[0].mxu0 %v6781
        %v7173 = vpop.f32.mrb[0].mxu0
        %v7174 = vadd.f32 %v6932, %v7173
        %v7175 = vpop.f32.mrb[0].mxu0
        %v7176 = vadd.f32 %v6936, %v7175
        %7177 = vmatprep.mubr.f32.mxu0 0.0
        %7178 = vmatmul.mubr.f32.gmra.mrb[0].mxu0 %v6782
        %v7179 = vpop.f32.mrb[0].mxu0
        %v7180 = vadd.f32 %v6932, %v7179
        %v7181 = vpop.f32.mrb[0].mxu0
        %v7182 = vadd.f32 %v6936, %v7181
        %7183 = vdwg.mxu0
        %7184 = vmatprep.subr.mxu0 %v6790
        %7185 = vmatpush1.msra.mxu0 %v6789
        %7186 = vmatprep.subr.mxu0 %v6798
        %7187 = vmatpush1.msra.mxu0 %v6797
        %7188 = vmatprep.subr.mxu0 %v6806
        %7189 = vmatpush1.msra.mxu0 %v6805
        %7190 = vmatprep.subr.mxu0 %v6814
        %7191 = vmatpush1.msra.mxu0 %v6813
        %7192 = vmatprep.subr.mxu0 %v6822
        %7193 = vmatpush1.msra.mxu0 %v6821
        %7194 = vmatprep.subr.mxu0 %v6830
        %7195 = vmatpush1.msra.mxu0 %v6829
        %7196 = vmatprep.subr.mxu0 %v6838
        %7197 = vmatpush1.msra.mxu0 %v6837
        %7198 = vmatprep.subr.mxu0 %v6846
        %7199 = vmatpush1.msra.mxu0 %v6845
        %7200 = vmatprep.subr.mxu0 %v6854
        %7201 = vmatpush1.msra.mxu0 %v6853
        %7202 = vmatprep.subr.mxu0 %v6862
        %7203 = vmatpush1.msra.mxu0 %v6861
        %7204 = vmatprep.subr.mxu0 %v6870
        %7205 = vmatpush1.msra.mxu0 %v6869
        %7206 = vmatprep.subr.mxu0 %v6878
        %7207 = vmatpush1.msra.mxu0 %v6877
        %7208 = vmatprep.subr.mxu0 %v6886
        %7209 = vmatpush1.msra.mxu0 %v6885
        %7210 = vmatprep.subr.mxu0 %v6894
        %7211 = vmatpush1.msra.mxu0 %v6893
        %7212 = vmatprep.subr.mxu0 %v6902
        %7213 = vmatpush1.msra.mxu0 %v6901
        %7214 = vmatprep.subr.mxu0 %v6910
        %7215 = vmatpush1.msra.mxu0 %v6909
        %7216 = vmatprep.subr.mxu0 0.0
        %7217 = vmatpush1.msra.mxu0 0.0
        %7218 = vmatprep.subr.mxu0 0.0
        %7219 = vmatpush1.msra.mxu0 0.0
        %7220 = vmatprep.subr.mxu0 0.0
        %7221 = vmatpush1.msra.mxu0 0.0
        %7222 = vmatprep.subr.mxu0 0.0
        %7223 = vmatpush1.msra.mxu0 0.0
        %7224 = vmatprep.subr.mxu0 0.0
        %7225 = vmatpush1.msra.mxu0 0.0
        %7226 = vmatprep.subr.mxu0 0.0
        %7227 = vmatpush1.msra.mxu0 0.0
        %7228 = vmatprep.subr.mxu0 0.0
        %7229 = vmatpush1.msra.mxu0 0.0
        %7230 = vmatprep.subr.mxu0 0.0
        %7231 = vmatpush1.msra.mxu0 0.0
        %7232 = vmatprep.subr.mxu0 0.0
        %7233 = vmatpush1.msra.mxu0 0.0
        %7234 = vmatprep.subr.mxu0 0.0
        %7235 = vmatpush1.msra.mxu0 0.0
        %7236 = vmatprep.subr.mxu0 0.0
        %7237 = vmatpush1.msra.mxu0 0.0
        %7238 = vmatprep.subr.mxu0 0.0
        %7239 = vmatpush1.msra.mxu0 0.0
        %7240 = vmatprep.subr.mxu0 0.0
        %7241 = vmatpush1.msra.mxu0 0.0
        %7242 = vmatprep.subr.mxu0 0.0
        %7243 = vmatpush1.msra.mxu0 0.0
        %7244 = vmatprep.subr.mxu0 0.0
        %7245 = vmatpush1.msra.mxu0 0.0
        %7246 = vmatprep.subr.mxu0 0.0
        %7247 = vmatpush1.msra.mxu0 0.0
        %7248 = vmatprep.mubr.f32.mxu0 0.0
        %7249 = vmatmul.mubr.f32.gmra.mrb[0].mxu0 %v6781
        %v7250 = vpop.f32.mrb[0].mxu0
        %v7251 = vadd.f32 %v6940, %v7250
        %v7252 = vpop.f32.mrb[0].mxu0
        %v7253 = vadd.f32 %v6944, %v7252
        %7254 = vmatprep.mubr.f32.mxu0 0.0
        %7255 = vmatmul.mubr.f32.gmra.mrb[0].mxu0 %v6782
        %v7256 = vpop.f32.mrb[0].mxu0
        %v7257 = vadd.f32 %v6940, %v7256
        %v7258 = vpop.f32.mrb[0].mxu0
        %v7259 = vadd.f32 %v6944, %v7258
        %7260 = vdwg.mxu0
        %v7261 = vmax.f32 %v7020, 0.0
        %v7262 = vmax.f32 %v7022, 0.0
        %v7263 = vmax.f32 %v7097, 0.0
        %v7264 = vmax.f32 %v7099, 0.0
        %v7265 = vmax.f32 %v7174, 0.0
        %v7266 = vmax.f32 %v7176, 0.0
        %v7267 = vmax.f32 %v7251, 0.0
        %v7268 = vmax.f32 %v7253, 0.0
        %v7269 = vmax.f32 %v7026, 0.0
        %v7270 = vmax.f32 %v7028, 0.0
        %v7271 = vmax.f32 %v7103, 0.0
        %v7272 = vmax.f32 %v7105, 0.0
        %v7273 = vmax.f32 %v7180, 0.0
        %v7274 = vmax.f32 %v7182, 0.0
        %v7275 = vmax.f32 %v7257, 0.0
        %v7276 = vmax.f32 %v7259, 0.0
        %v7277 = vld [vmem:[%s33] sm:$0xff]
        %v7278 = vld [vmem:[%s33 + $0x8] sm:$0xff]
        %v7279 = vld [vmem:[%s33 + $0x10] sm:$0xff]
        %v7280 = vld [vmem:[%s33 + $0x18] sm:$0xff]
        %v7281 = vld [vmem:[%s33 + $0x20] sm:$0xff]
        %v7282 = vld [vmem:[%s33 + $0x28] sm:$0xff]
        %v7283 = vld [vmem:[%s33 + $0x30] sm:$0xff]
        %v7284 = vld [vmem:[%s33 + $0x38] sm:$0xff]
        %v7285 = vld [vmem:[%s33 + $0x40] sm:$0xff]
        %v7286 = vld [vmem:[%s33 + $0x48] sm:$0xff]
        %v7287 = vld [vmem:[%s33 + $0x50] sm:$0xff]
        %v7288 = vld [vmem:[%s33 + $0x58] sm:$0xff]
        %v7289 = vld [vmem:[%s33 + $0x60] sm:$0xff]
        %v7290 = vld [vmem:[%s33 + $0x68] sm:$0xff]
        %v7291 = vld [vmem:[%s33 + $0x70] sm:$0xff]
        %v7292 = vld [vmem:[%s33 + $0x78] sm:$0xff]
        %v7293 = vld [vmem:[%s33 + $0x80] sm:$0xff]
        %v7294 = vld [vmem:[%s33 + $0x88] sm:$0xff]
        %v7295 = vld [vmem:[%s33 + $0x90] sm:$0xff]
        %v7296 = vld [vmem:[%s33 + $0x98] sm:$0xff]
        %v7297 = vld [vmem:[%s33 + $0xa0] sm:$0xff]
        %v7298 = vld [vmem:[%s33 + $0xa8] sm:$0xff]
        %v7299 = vld [vmem:[%s33 + $0xb0] sm:$0xff]
        %v7300 = vld [vmem:[%s33 + $0xb8] sm:$0xff]
        %v7301 = vld [vmem:[%s33 + $0xc0] sm:$0xff]
        %v7302 = vld [vmem:[%s33 + $0xc8] sm:$0xff]
        %v7303 = vld [vmem:[%s33 + $0xd0] sm:$0xff]
        %v7304 = vld [vmem:[%s33 + $0xd8] sm:$0xff]
        %v7305 = vld [vmem:[%s33 + $0xe0] sm:$0xff]
        %v7306 = vld [vmem:[%s33 + $0xe8] sm:$0xff]
        %v7307 = vld [vmem:[%s33 + $0xf0] sm:$0xff]
        %v7308 = vld [vmem:[%s33 + $0xf8] sm:$0xff]
        %v7309 = vld [vmem:[%s33 + $0x100] sm:$0xff]
        %v7310 = vld [vmem:[%s33 + $0x108] sm:$0xff]
        %v7311 = vld [vmem:[%s33 + $0x110] sm:$0xff]
        %v7312 = vld [vmem:[%s33 + $0x118] sm:$0xff]
        %v7313 = vld [vmem:[%s33 + $0x120] sm:$0xff]
        %v7314 = vld [vmem:[%s33 + $0x128] sm:$0xff]
        %v7315 = vld [vmem:[%s33 + $0x130] sm:$0xff]
        %v7316 = vld [vmem:[%s33 + $0x138] sm:$0xff]
        %v7317 = vld [vmem:[%s33 + $0x140] sm:$0xff]
        %v7318 = vld [vmem:[%s33 + $0x148] sm:$0xff]
        %v7319 = vld [vmem:[%s33 + $0x150] sm:$0xff]
        %v7320 = vld [vmem:[%s33 + $0x158] sm:$0xff]
        %v7321 = vld [vmem:[%s33 + $0x160] sm:$0xff]
        %v7322 = vld [vmem:[%s33 + $0x168] sm:$0xff]
        %v7323 = vld [vmem:[%s33 + $0x170] sm:$0xff]
        %v7324 = vld [vmem:[%s33 + $0x178] sm:$0xff]
        %v7325 = vld [vmem:[%s33 + $0x180] sm:$0xff]
        %v7326 = vld [vmem:[%s33 + $0x188] sm:$0xff]
        %v7327 = vld [vmem:[%s33 + $0x190] sm:$0xff]
        %v7328 = vld [vmem:[%s33 + $0x198] sm:$0xff]
        %v7329 = vld [vmem:[%s33 + $0x1a0] sm:$0xff]
        %v7330 = vld [vmem:[%s33 + $0x1a8] sm:$0xff]
        %v7331 = vld [vmem:[%s33 + $0x1b0] sm:$0xff]
        %v7332 = vld [vmem:[%s33 + $0x1b8] sm:$0xff]
        %v7333 = vld [vmem:[%s33 + $0x1c0] sm:$0xff]
        %v7334 = vld [vmem:[%s33 + $0x1c8] sm:$0xff]
        %v7335 = vld [vmem:[%s33 + $0x1d0] sm:$0xff]
        %v7336 = vld [vmem:[%s33 + $0x1d8] sm:$0xff]
        %v7337 = vld [vmem:[%s33 + $0x1e0] sm:$0xff]
        %v7338 = vld [vmem:[%s33 + $0x1e8] sm:$0xff]
        %v7339 = vld [vmem:[%s33 + $0x1f0] sm:$0xff]
        %v7340 = vld [vmem:[%s33 + $0x1f8] sm:$0xff]
        %v7341 = vld [vmem:[%s33 + $0x200] sm:$0xff]
        %v7342 = vld [vmem:[%s33 + $0x208] sm:$0xff]
        %v7343 = vld [vmem:[%s33 + $0x210] sm:$0xff]
        %v7344 = vld [vmem:[%s33 + $0x218] sm:$0xff]
        %v7345 = vld [vmem:[%s33 + $0x220] sm:$0xff]
        %v7346 = vld [vmem:[%s33 + $0x228] sm:$0xff]
        %v7347 = vld [vmem:[%s33 + $0x230] sm:$0xff]
        %v7348 = vld [vmem:[%s33 + $0x238] sm:$0xff]
        %v7349 = vld [vmem:[%s33 + $0x240] sm:$0xff]
        %v7350 = vld [vmem:[%s33 + $0x248] sm:$0xff]
        %v7351 = vld [vmem:[%s33 + $0x250] sm:$0xff]
        %v7352 = vld [vmem:[%s33 + $0x258] sm:$0xff]
        %v7353 = vld [vmem:[%s33 + $0x260] sm:$0xff]
        %v7354 = vld [vmem:[%s33 + $0x268] sm:$0xff]
        %v7355 = vld [vmem:[%s33 + $0x270] sm:$0xff]
        %v7356 = vld [vmem:[%s33 + $0x278] sm:$0xff]
        %v7357 = vld [vmem:[%s33 + $0x280] sm:$0xff]
        %v7358 = vld [vmem:[%s33 + $0x288] sm:$0xff]
        %v7359 = vld [vmem:[%s33 + $0x290] sm:$0xff]
        %v7360 = vld [vmem:[%s33 + $0x298] sm:$0xff]
        %v7361 = vld [vmem:[%s33 + $0x2a0] sm:$0xff]
        %v7362 = vld [vmem:[%s33 + $0x2a8] sm:$0xff]
        %v7363 = vld [vmem:[%s33 + $0x2b0] sm:$0xff]
        %v7364 = vld [vmem:[%s33 + $0x2b8] sm:$0xff]
        %v7365 = vld [vmem:[%s33 + $0x2c0] sm:$0xff]
        %v7366 = vld [vmem:[%s33 + $0x2c8] sm:$0xff]
        %v7367 = vld [vmem:[%s33 + $0x2d0] sm:$0xff]
        %v7368 = vld [vmem:[%s33 + $0x2d8] sm:$0xff]
        %v7369 = vld [vmem:[%s33 + $0x2e0] sm:$0xff]
        %v7370 = vld [vmem:[%s33 + $0x2e8] sm:$0xff]
        %v7371 = vld [vmem:[%s33 + $0x2f0] sm:$0xff]
        %v7372 = vld [vmem:[%s33 + $0x2f8] sm:$0xff]
        %v7373 = vld [vmem:[%s33 + $0x300] sm:$0xff]
        %v7374 = vld [vmem:[%s33 + $0x308] sm:$0xff]
        %v7375 = vld [vmem:[%s33 + $0x310] sm:$0xff]
        %v7376 = vld [vmem:[%s33 + $0x318] sm:$0xff]
        %v7377 = vld [vmem:[%s33 + $0x320] sm:$0xff]
        %v7378 = vld [vmem:[%s33 + $0x328] sm:$0xff]
        %v7379 = vld [vmem:[%s33 + $0x330] sm:$0xff]
        %v7380 = vld [vmem:[%s33 + $0x338] sm:$0xff]
        %v7381 = vld [vmem:[%s33 + $0x340] sm:$0xff]
        %v7382 = vld [vmem:[%s33 + $0x348] sm:$0xff]
        %v7383 = vld [vmem:[%s33 + $0x350] sm:$0xff]
        %v7384 = vld [vmem:[%s33 + $0x358] sm:$0xff]
        %v7385 = vld [vmem:[%s33 + $0x360] sm:$0xff]
        %v7386 = vld [vmem:[%s33 + $0x368] sm:$0xff]
        %v7387 = vld [vmem:[%s33 + $0x370] sm:$0xff]
        %v7388 = vld [vmem:[%s33 + $0x378] sm:$0xff]
        %v7389 = vld [vmem:[%s33 + $0x380] sm:$0xff]
        %v7390 = vld [vmem:[%s33 + $0x388] sm:$0xff]
        %v7391 = vld [vmem:[%s33 + $0x390] sm:$0xff]
        %v7392 = vld [vmem:[%s33 + $0x398] sm:$0xff]
        %v7393 = vld [vmem:[%s33 + $0x3a0] sm:$0xff]
        %v7394 = vld [vmem:[%s33 + $0x3a8] sm:$0xff]
        %v7395 = vld [vmem:[%s33 + $0x3b0] sm:$0xff]
        %v7396 = vld [vmem:[%s33 + $0x3b8] sm:$0xff]
        %v7397 = vld [vmem:[%s33 + $0x3c0] sm:$0xff]
        %v7398 = vld [vmem:[%s33 + $0x3c8] sm:$0xff]
        %v7399 = vld [vmem:[%s33 + $0x3d0] sm:$0xff]
        %v7400 = vld [vmem:[%s33 + $0x3d8] sm:$0xff]
        %v7401 = vld [vmem:[%s33 + $0x3e0] sm:$0xff]
        %v7402 = vld [vmem:[%s33 + $0x3e8] sm:$0xff]
        %v7403 = vld [vmem:[%s33 + $0x3f0] sm:$0xff]
        %v7404 = vld [vmem:[%s33 + $0x3f8] sm:$0xff]
        %v7405 = vld [vmem:[#allocation22] sm:$0x1]
        %v7407 = vlaneseq
        %v7408 = vshrl.u32 %v7407, 7
        %v7409 = vsub.s32 0, %v7408
        %v7410 = vrot.slane %v7405, %v7409
        %7412 = vmatprep.subr.mxu0 0.0
        %7413 = vmatpush1.msra.mxu0 %v7277
        %7414 = vmatprep.subr.mxu0 0.0
        %7415 = vmatpush1.msra.mxu0 %v7278
        %7416 = vmatprep.subr.mxu0 0.0
        %7417 = vmatpush1.msra.mxu0 %v7279
        %7418 = vmatprep.subr.mxu0 0.0
        %7419 = vmatpush1.msra.mxu0 %v7280
        %7420 = vmatprep.subr.mxu0 0.0
        %7421 = vmatpush1.msra.mxu0 %v7281
        %7422 = vmatprep.subr.mxu0 0.0
        %7423 = vmatpush1.msra.mxu0 %v7282
        %7424 = vmatprep.subr.mxu0 0.0
        %7425 = vmatpush1.msra.mxu0 %v7283
        %7426 = vmatprep.subr.mxu0 0.0
        %7427 = vmatpush1.msra.mxu0 %v7284
        %7428 = vmatprep.subr.mxu0 0.0
        %7429 = vmatpush1.msra.mxu0 %v7285
        %7430 = vmatprep.subr.mxu0 0.0
        %7431 = vmatpush1.msra.mxu0 %v7286
        %7432 = vmatprep.subr.mxu0 0.0
        %7433 = vmatpush1.msra.mxu0 %v7287
        %7434 = vmatprep.subr.mxu0 0.0
        %7435 = vmatpush1.msra.mxu0 %v7288
        %7436 = vmatprep.subr.mxu0 0.0
        %7437 = vmatpush1.msra.mxu0 %v7289
        %7438 = vmatprep.subr.mxu0 0.0
        %7439 = vmatpush1.msra.mxu0 %v7290
        %7440 = vmatprep.subr.mxu0 0.0
        %7441 = vmatpush1.msra.mxu0 %v7291
        %7442 = vmatprep.subr.mxu0 0.0
        %7443 = vmatpush1.msra.mxu0 %v7292
        %7444 = vmatprep.subr.mxu0 0.0
        %7445 = vmatpush1.msra.mxu0 %v7293
        %7446 = vmatprep.subr.mxu0 0.0
        %7447 = vmatpush1.msra.mxu0 %v7294
        %7448 = vmatprep.subr.mxu0 0.0
        %7449 = vmatpush1.msra.mxu0 %v7295
        %7450 = vmatprep.subr.mxu0 0.0
        %7451 = vmatpush1.msra.mxu0 %v7296
        %7452 = vmatprep.subr.mxu0 0.0
        %7453 = vmatpush1.msra.mxu0 %v7297
        %7454 = vmatprep.subr.mxu0 0.0
        %7455 = vmatpush1.msra.mxu0 %v7298
        %7456 = vmatprep.subr.mxu0 0.0
        %7457 = vmatpush1.msra.mxu0 %v7299
        %7458 = vmatprep.subr.mxu0 0.0
        %7459 = vmatpush1.msra.mxu0 %v7300
        %7460 = vmatprep.subr.mxu0 0.0
        %7461 = vmatpush1.msra.mxu0 %v7301
        %7462 = vmatprep.subr.mxu0 0.0
        %7463 = vmatpush1.msra.mxu0 %v7302
        %7464 = vmatprep.subr.mxu0 0.0
        %7465 = vmatpush1.msra.mxu0 %v7303
        %7466 = vmatprep.subr.mxu0 0.0
        %7467 = vmatpush1.msra.mxu0 %v7304
        %7468 = vmatprep.subr.mxu0 0.0
        %7469 = vmatpush1.msra.mxu0 %v7305
        %7470 = vmatprep.subr.mxu0 0.0
        %7471 = vmatpush1.msra.mxu0 %v7306
        %7472 = vmatprep.subr.mxu0 0.0
        %7473 = vmatpush1.msra.mxu0 %v7307
        %7474 = vmatprep.subr.mxu0 0.0
        %7475 = vmatpush1.msra.mxu0 %v7308
        %7476 = vmatprep.mubr.f32.mxu0 %v7262
        %7477 = vmatmul.mubr.f32.gmra.mrb[0].mxu0 %v7261
        %v7478 = vpop.f32.mrb[0].mxu0
        %v7479 = vadd.f32 %v7410, %v7478
        %v7480 = vpop.f32.mrb[0].mxu0
        %7481 = vmatprep.mubr.f32.mxu0 %v7270
        %7482 = vmatmul.mubr.f32.gmra.mrb[0].mxu0 %v7269
        %v7483 = vpop.f32.mrb[0].mxu0
        %v7484 = vadd.f32 %v7410, %v7483
        %v7485 = vpop.f32.mrb[0].mxu0
        %7486 = vdwg.mxu0
        %7487 = vmatprep.subr.mxu0 0.0
        %7488 = vmatpush1.msra.mxu0 %v7309
        %7489 = vmatprep.subr.mxu0 0.0
        %7490 = vmatpush1.msra.mxu0 %v7310
        %7491 = vmatprep.subr.mxu0 0.0
        %7492 = vmatpush1.msra.mxu0 %v7311
        %7493 = vmatprep.subr.mxu0 0.0
        %7494 = vmatpush1.msra.mxu0 %v7312
        %7495 = vmatprep.subr.mxu0 0.0
        %7496 = vmatpush1.msra.mxu0 %v7313
        %7497 = vmatprep.subr.mxu0 0.0
        %7498 = vmatpush1.msra.mxu0 %v7314
        %7499 = vmatprep.subr.mxu0 0.0
        %7500 = vmatpush1.msra.mxu0 %v7315
        %7501 = vmatprep.subr.mxu0 0.0
        %7502 = vmatpush1.msra.mxu0 %v7316
        %7503 = vmatprep.subr.mxu0 0.0
        %7504 = vmatpush1.msra.mxu0 %v7317
        %7505 = vmatprep.subr.mxu0 0.0
        %7506 = vmatpush1.msra.mxu0 %v7318
        %7507 = vmatprep.subr.mxu0 0.0
        %7508 = vmatpush1.msra.mxu0 %v7319
        %7509 = vmatprep.subr.mxu0 0.0
        %7510 = vmatpush1.msra.mxu0 %v7320
        %7511 = vmatprep.subr.mxu0 0.0
        %7512 = vmatpush1.msra.mxu0 %v7321
        %7513 = vmatprep.subr.mxu0 0.0
        %7514 = vmatpush1.msra.mxu0 %v7322
        %7515 = vmatprep.subr.mxu0 0.0
        %7516 = vmatpush1.msra.mxu0 %v7323
        %7517 = vmatprep.subr.mxu0 0.0
        %7518 = vmatpush1.msra.mxu0 %v7324
        %7519 = vmatprep.subr.mxu0 0.0
        %7520 = vmatpush1.msra.mxu0 %v7325
        %7521 = vmatprep.subr.mxu0 0.0
        %7522 = vmatpush1.msra.mxu0 %v7326
        %7523 = vmatprep.subr.mxu0 0.0
        %7524 = vmatpush1.msra.mxu0 %v7327
        %7525 = vmatprep.subr.mxu0 0.0
        %7526 = vmatpush1.msra.mxu0 %v7328
        %7527 = vmatprep.subr.mxu0 0.0
        %7528 = vmatpush1.msra.mxu0 %v7329
        %7529 = vmatprep.subr.mxu0 0.0
        %7530 = vmatpush1.msra.mxu0 %v7330
        %7531 = vmatprep.subr.mxu0 0.0
        %7532 = vmatpush1.msra.mxu0 %v7331
        %7533 = vmatprep.subr.mxu0 0.0
        %7534 = vmatpush1.msra.mxu0 %v7332
        %7535 = vmatprep.subr.mxu0 0.0
        %7536 = vmatpush1.msra.mxu0 %v7333
        %7537 = vmatprep.subr.mxu0 0.0
        %7538 = vmatpush1.msra.mxu0 %v7334
        %7539 = vmatprep.subr.mxu0 0.0
        %7540 = vmatpush1.msra.mxu0 %v7335
        %7541 = vmatprep.subr.mxu0 0.0
        %7542 = vmatpush1.msra.mxu0 %v7336
        %7543 = vmatprep.subr.mxu0 0.0
        %7544 = vmatpush1.msra.mxu0 %v7337
        %7545 = vmatprep.subr.mxu0 0.0
        %7546 = vmatpush1.msra.mxu0 %v7338
        %7547 = vmatprep.subr.mxu0 0.0
        %7548 = vmatpush1.msra.mxu0 %v7339
        %7549 = vmatprep.subr.mxu0 0.0
        %7550 = vmatpush1.msra.mxu0 %v7340
        %7551 = vmatprep.mubr.f32.mxu0 %v7264
        %7552 = vmatmul.mubr.f32.gmra.mrb[0].mxu0 %v7263
        %v7553 = vpop.f32.mrb[0].mxu0
        %v7554 = vadd.f32 %v7479, %v7553
        %v7555 = vpop.f32.mrb[0].mxu0
        %7556 = vmatprep.mubr.f32.mxu0 %v7272
        %7557 = vmatmul.mubr.f32.gmra.mrb[0].mxu0 %v7271
        %v7558 = vpop.f32.mrb[0].mxu0
        %v7559 = vadd.f32 %v7484, %v7558
        %v7560 = vpop.f32.mrb[0].mxu0
        %7561 = vdwg.mxu0
        %7562 = vmatprep.subr.mxu0 0.0
        %7563 = vmatpush1.msra.mxu0 %v7341
        %7564 = vmatprep.subr.mxu0 0.0
        %7565 = vmatpush1.msra.mxu0 %v7342
        %7566 = vmatprep.subr.mxu0 0.0
        %7567 = vmatpush1.msra.mxu0 %v7343
        %7568 = vmatprep.subr.mxu0 0.0
        %7569 = vmatpush1.msra.mxu0 %v7344
        %7570 = vmatprep.subr.mxu0 0.0
        %7571 = vmatpush1.msra.mxu0 %v7345
        %7572 = vmatprep.subr.mxu0 0.0
        %7573 = vmatpush1.msra.mxu0 %v7346
        %7574 = vmatprep.subr.mxu0 0.0
        %7575 = vmatpush1.msra.mxu0 %v7347
        %7576 = vmatprep.subr.mxu0 0.0
        %7577 = vmatpush1.msra.mxu0 %v7348
        %7578 = vmatprep.subr.mxu0 0.0
        %7579 = vmatpush1.msra.mxu0 %v7349
        %7580 = vmatprep.subr.mxu0 0.0
        %7581 = vmatpush1.msra.mxu0 %v7350
        %7582 = vmatprep.subr.mxu0 0.0
        %7583 = vmatpush1.msra.mxu0 %v7351
        %7584 = vmatprep.subr.mxu0 0.0
        %7585 = vmatpush1.msra.mxu0 %v7352
        %7586 = vmatprep.subr.mxu0 0.0
        %7587 = vmatpush1.msra.mxu0 %v7353
        %7588 = vmatprep.subr.mxu0 0.0
        %7589 = vmatpush1.msra.mxu0 %v7354
        %7590 = vmatprep.subr.mxu0 0.0
        %7591 = vmatpush1.msra.mxu0 %v7355
        %7592 = vmatprep.subr.mxu0 0.0
        %7593 = vmatpush1.msra.mxu0 %v7356
        %7594 = vmatprep.subr.mxu0 0.0
        %7595 = vmatpush1.msra.mxu0 %v7357
        %7596 = vmatprep.subr.mxu0 0.0
        %7597 = vmatpush1.msra.mxu0 %v7358
        %7598 = vmatprep.subr.mxu0 0.0
        %7599 = vmatpush1.msra.mxu0 %v7359
        %7600 = vmatprep.subr.mxu0 0.0
        %7601 = vmatpush1.msra.mxu0 %v7360
        %7602 = vmatprep.subr.mxu0 0.0
        %7603 = vmatpush1.msra.mxu0 %v7361
        %7604 = vmatprep.subr.mxu0 0.0
        %7605 = vmatpush1.msra.mxu0 %v7362
        %7606 = vmatprep.subr.mxu0 0.0
        %7607 = vmatpush1.msra.mxu0 %v7363
        %7608 = vmatprep.subr.mxu0 0.0
        %7609 = vmatpush1.msra.mxu0 %v7364
        %7610 = vmatprep.subr.mxu0 0.0
        %7611 = vmatpush1.msra.mxu0 %v7365
        %7612 = vmatprep.subr.mxu0 0.0
        %7613 = vmatpush1.msra.mxu0 %v7366
        %7614 = vmatprep.subr.mxu0 0.0
        %7615 = vmatpush1.msra.mxu0 %v7367
        %7616 = vmatprep.subr.mxu0 0.0
        %7617 = vmatpush1.msra.mxu0 %v7368
        %7618 = vmatprep.subr.mxu0 0.0
        %7619 = vmatpush1.msra.mxu0 %v7369
        %7620 = vmatprep.subr.mxu0 0.0
        %7621 = vmatpush1.msra.mxu0 %v7370
        %7622 = vmatprep.subr.mxu0 0.0
        %7623 = vmatpush1.msra.mxu0 %v7371
        %7624 = vmatprep.subr.mxu0 0.0
        %7625 = vmatpush1.msra.mxu0 %v7372
        %7626 = vmatprep.mubr.f32.mxu0 %v7266
        %7627 = vmatmul.mubr.f32.gmra.mrb[0].mxu0 %v7265
        %v7628 = vpop.f32.mrb[0].mxu0
        %v7629 = vadd.f32 %v7554, %v7628
        %v7630 = vpop.f32.mrb[0].mxu0
        %7631 = vmatprep.mubr.f32.mxu0 %v7274
        %7632 = vmatmul.mubr.f32.gmra.mrb[0].mxu0 %v7273
        %v7633 = vpop.f32.mrb[0].mxu0
        %v7634 = vadd.f32 %v7559, %v7633
        %v7635 = vpop.f32.mrb[0].mxu0
        %7636 = vdwg.mxu0
        %7637 = vmatprep.subr.mxu0 0.0
        %7638 = vmatpush1.msra.mxu0 %v7373
        %7639 = vmatprep.subr.mxu0 0.0
        %7640 = vmatpush1.msra.mxu0 %v7374
        %7641 = vmatprep.subr.mxu0 0.0
        %7642 = vmatpush1.msra.mxu0 %v7375
        %7643 = vmatprep.subr.mxu0 0.0
        %7644 = vmatpush1.msra.mxu0 %v7376
        %7645 = vmatprep.subr.mxu0 0.0
        %7646 = vmatpush1.msra.mxu0 %v7377
        %7647 = vmatprep.subr.mxu0 0.0
        %7648 = vmatpush1.msra.mxu0 %v7378
        %7649 = vmatprep.subr.mxu0 0.0
        %7650 = vmatpush1.msra.mxu0 %v7379
        %7651 = vmatprep.subr.mxu0 0.0
        %7652 = vmatpush1.msra.mxu0 %v7380
        %7653 = vmatprep.subr.mxu0 0.0
        %7654 = vmatpush1.msra.mxu0 %v7381
        %7655 = vmatprep.subr.mxu0 0.0
        %7656 = vmatpush1.msra.mxu0 %v7382
        %7657 = vmatprep.subr.mxu0 0.0
        %7658 = vmatpush1.msra.mxu0 %v7383
        %7659 = vmatprep.subr.mxu0 0.0
        %7660 = vmatpush1.msra.mxu0 %v7384
        %7661 = vmatprep.subr.mxu0 0.0
        %7662 = vmatpush1.msra.mxu0 %v7385
        %7663 = vmatprep.subr.mxu0 0.0
        %7664 = vmatpush1.msra.mxu0 %v7386
        %7665 = vmatprep.subr.mxu0 0.0
        %7666 = vmatpush1.msra.mxu0 %v7387
        %7667 = vmatprep.subr.mxu0 0.0
        %7668 = vmatpush1.msra.mxu0 %v7388
        %7669 = vmatprep.subr.mxu0 0.0
        %7670 = vmatpush1.msra.mxu0 %v7389
        %7671 = vmatprep.subr.mxu0 0.0
        %7672 = vmatpush1.msra.mxu0 %v7390
        %7673 = vmatprep.subr.mxu0 0.0
        %7674 = vmatpush1.msra.mxu0 %v7391
        %7675 = vmatprep.subr.mxu0 0.0
        %7676 = vmatpush1.msra.mxu0 %v7392
        %7677 = vmatprep.subr.mxu0 0.0
        %7678 = vmatpush1.msra.mxu0 %v7393
        %7679 = vmatprep.subr.mxu0 0.0
        %7680 = vmatpush1.msra.mxu0 %v7394
        %7681 = vmatprep.subr.mxu0 0.0
        %7682 = vmatpush1.msra.mxu0 %v7395
        %7683 = vmatprep.subr.mxu0 0.0
        %7684 = vmatpush1.msra.mxu0 %v7396
        %7685 = vmatprep.subr.mxu0 0.0
        %7686 = vmatpush1.msra.mxu0 %v7397
        %7687 = vmatprep.subr.mxu0 0.0
        %7688 = vmatpush1.msra.mxu0 %v7398
        %7689 = vmatprep.subr.mxu0 0.0
        %7690 = vmatpush1.msra.mxu0 %v7399
        %7691 = vmatprep.subr.mxu0 0.0
        %7692 = vmatpush1.msra.mxu0 %v7400
        %7693 = vmatprep.subr.mxu0 0.0
        %7694 = vmatpush1.msra.mxu0 %v7401
        %7695 = vmatprep.subr.mxu0 0.0
        %7696 = vmatpush1.msra.mxu0 %v7402
        %7697 = vmatprep.subr.mxu0 0.0
        %7698 = vmatpush1.msra.mxu0 %v7403
        %7699 = vmatprep.subr.mxu0 0.0
        %7700 = vmatpush1.msra.mxu0 %v7404
        %7701 = vmatprep.mubr.f32.mxu0 %v7268
        %7702 = vmatmul.mubr.f32.gmra.mrb[0].mxu0 %v7267
        %v7703 = vpop.f32.mrb[0].mxu0
        %v7704 = vadd.f32 %v7629, %v7703
        %v7705 = vpop.f32.mrb[0].mxu0
        %7706 = vmatprep.mubr.f32.mxu0 %v7276
        %7707 = vmatmul.mubr.f32.gmra.mrb[0].mxu0 %v7275
        %v7708 = vpop.f32.mrb[0].mxu0
        %v7709 = vadd.f32 %v7634, %v7708
        %v7710 = vpop.f32.mrb[0].mxu0
        %7711 = vdwg.mxu0
        %v7712 = vmul.f32 %v7704, %v1641
        %v7713 = vmul.f32 %v7709, %v1641
        %v7714 = vadd.f32 %v7712, %v1619
        %v7715 = vadd.f32 %v7713, %v1619
        %v7716 = vld [vmem:[%s25] sm:$0xff]
        %v7717 = vld [vmem:[%s25 + $0x8] sm:$0xff]
        %7719 = vset.pattern.permute.xlu0 0
        %7720 = vperm.xlu0 %7719, %v7714
        %v7721 = vpop.permute.xlu0 %7720
        %7724 = vset.pattern.permute.xlu0 0
        %7725 = vperm.xlu0 %7724, %v7715
        %v7726 = vpop.permute.xlu0 %7725
        %v7728 = vmul.f32 %v7721, %v7716
        %v7729 = vmul.f32 %v7726, %v7717
        %v7730 = vadd.f32 %v7728, 0.0
        %v7731 = vadd.f32 %v7729, 0.0
        %s7732 = scalar_lea.vmem %s25, 16
        %v7733 = vld [vmem:[%s7732] sm:$0xff]
        %v7734 = vld [vmem:[%s7732 + $0x8] sm:$0xff]
        %7735 = vset.pattern.permute.xlu0 1
        %7736 = vperm.xlu0 %7735, %v7714
        %v7737 = vpop.permute.xlu0 %7736
        %7739 = vset.pattern.permute.xlu0 1
        %7740 = vperm.xlu0 %7739, %v7715
        %v7741 = vpop.permute.xlu0 %7740
        %v7743 = vmul.f32 %v7737, %v7733
        %v7744 = vmul.f32 %v7741, %v7734
        %v7745 = vadd.f32 %v7730, %v7743
        %v7746 = vadd.f32 %v7731, %v7744
        %s7747 = scalar_lea.vmem %s25, 32
        %v7748 = vld [vmem:[%s7747] sm:$0xff]
        %v7749 = vld [vmem:[%s7747 + $0x8] sm:$0xff]
        %7750 = vset.pattern.permute.xlu0 2
        %7751 = vperm.xlu0 %7750, %v7714
        %v7752 = vpop.permute.xlu0 %7751
        %7754 = vset.pattern.permute.xlu0 2
        %7755 = vperm.xlu0 %7754, %v7715
        %v7756 = vpop.permute.xlu0 %7755
        %v7758 = vmul.f32 %v7752, %v7748
        %v7759 = vmul.f32 %v7756, %v7749
        %v7760 = vadd.f32 %v7745, %v7758
        %v7761 = vadd.f32 %v7746, %v7759
        %s7762 = scalar_lea.vmem %s25, 48
        %v7763 = vld [vmem:[%s7762] sm:$0xff]
        %v7764 = vld [vmem:[%s7762 + $0x8] sm:$0xff]
        %7765 = vset.pattern.permute.xlu0 3
        %7766 = vperm.xlu0 %7765, %v7714
        %v7767 = vpop.permute.xlu0 %7766
        %7769 = vset.pattern.permute.xlu0 3
        %7770 = vperm.xlu0 %7769, %v7715
        %v7771 = vpop.permute.xlu0 %7770
        %v7773 = vmul.f32 %v7767, %v7763
        %v7774 = vmul.f32 %v7771, %v7764
        %v7775 = vadd.f32 %v7760, %v7773
        %v7776 = vadd.f32 %v7761, %v7774
        %s7777 = scalar_lea.vmem %s25, 64
        %v7778 = vld [vmem:[%s7777] sm:$0xff]
        %v7779 = vld [vmem:[%s7777 + $0x8] sm:$0xff]
        %7780 = vset.pattern.permute.xlu0 4
        %7781 = vperm.xlu0 %7780, %v7714
        %v7782 = vpop.permute.xlu0 %7781
        %7784 = vset.pattern.permute.xlu0 4
        %7785 = vperm.xlu0 %7784, %v7715
        %v7786 = vpop.permute.xlu0 %7785
        %v7788 = vmul.f32 %v7782, %v7778
        %v7789 = vmul.f32 %v7786, %v7779
        %v7790 = vadd.f32 %v7775, %v7788
        %v7791 = vadd.f32 %v7776, %v7789
        %s7792 = scalar_lea.vmem %s25, 80
        %v7793 = vld [vmem:[%s7792] sm:$0xff]
        %v7794 = vld [vmem:[%s7792 + $0x8] sm:$0xff]
        %7795 = vset.pattern.permute.xlu0 5
        %7796 = vperm.xlu0 %7795, %v7714
        %v7797 = vpop.permute.xlu0 %7796
        %7799 = vset.pattern.permute.xlu0 5
        %7800 = vperm.xlu0 %7799, %v7715
        %v7801 = vpop.permute.xlu0 %7800
        %v7803 = vmul.f32 %v7797, %v7793
        %v7804 = vmul.f32 %v7801, %v7794
        %v7805 = vadd.f32 %v7790, %v7803
        %v7806 = vadd.f32 %v7791, %v7804
        %s7807 = scalar_lea.vmem %s25, 96
        %v7808 = vld [vmem:[%s7807] sm:$0xff]
        %v7809 = vld [vmem:[%s7807 + $0x8] sm:$0xff]
        %7810 = vset.pattern.permute.xlu0 6
        %7811 = vperm.xlu0 %7810, %v7714
        %v7812 = vpop.permute.xlu0 %7811
        %7814 = vset.pattern.permute.xlu0 6
        %7815 = vperm.xlu0 %7814, %v7715
        %v7816 = vpop.permute.xlu0 %7815
        %v7818 = vmul.f32 %v7812, %v7808
        %v7819 = vmul.f32 %v7816, %v7809
        %v7820 = vadd.f32 %v7805, %v7818
        %v7821 = vadd.f32 %v7806, %v7819
        %s7822 = scalar_lea.vmem %s25, 112
        %v7823 = vld [vmem:[%s7822] sm:$0xff]
        %v7824 = vld [vmem:[%s7822 + $0x8] sm:$0xff]
        %7825 = vset.pattern.permute.xlu0 7
        %7826 = vperm.xlu0 %7825, %v7714
        %v7827 = vpop.permute.xlu0 %7826
        %7829 = vset.pattern.permute.xlu0 7
        %7830 = vperm.xlu0 %7829, %v7715
        %v7831 = vpop.permute.xlu0 %7830
        %v7833 = vmul.f32 %v7827, %v7823
        %v7834 = vmul.f32 %v7831, %v7824
        %v7835 = vadd.f32 %v7820, %v7833
        %v7836 = vadd.f32 %v7821, %v7834
        %vm7837 = vcmask 31744
        %v7838 = vsel %vm7837, %v7835, 0.0
        %v7839 = vsel %vm7837, %v7836, 0.0
        %v7840 = vadd.f32 %v7838, %v7839
        %v7841 = vrot.slane %v7840, 4
        %v7842 = vadd.f32 %v7840, %v7841
        %v7843 = vrot.slane %v7842, 2
        %v7844 = vadd.f32 %v7842, %v7843
        %v7845 = vrot.slane %v7844, 1
        %v7846 = vadd.f32 %v7844, %v7845
        %v7847 = vld [vmem:[#allocation19] sm:$0x1]
        %v7848 = vadd.f32 %v7846, %v7847
        %vm7849 = vcmask 24576
        %7850 = vst.msk [vmem:[%s1600] sm:$0x1] %vm7849, %v7848
        %s7851 = sand.u32 %s985, 1
        %s7852 = scalar_lea.sflag [#allocation4], %s7851
        %s7853 = sand.u32 %s985, 1
        %s7854 = scalar_lea.vmem [#allocation43], %s7853
        // Predicated region
        $region289: #{forward.1} parent=183 // pred_check
          %p7855 = pneg %p995
        $region290: #{forward.1} parent=183 // pred_check_branch
          %7857 = sbr.rel (%p7855) target = $region292
        $region291: #{forward.1} parent=183 // pred_region
          %s7859 = ssub.s32 16, 16
          %7860 = vsyncadd %s7852, %s7859
          %s7861 = smul.addr %s111, 16
          %s7862 = scalar_lea.hbm %s83, %s7861
          %s7864 = sshll.u32 %s7854, 4
          %s7865 = int_to_ptr.vmem [resolvable:$true] %s7864
          %7867 = dma.vmem_to_hbm [thread:$0]  %s7865, 16, %s7862, %s7852
        $region292: #{forward.1} parent=183 // pred_fallthru
          _
      $region184: #{forward.1} parent=5 // pred_fallthru
        _
      %p7868 = scmp.le.s32.totalorder 2, %s106
      // Predicated region
      $region293: #{forward.1} parent=5 // pred_check
        %p7869 = pneg %p7868
      $region294: #{forward.1} parent=5 // pred_check_branch
        %7871 = sbr.rel (%p7869) target = $region296
      $region295: #{forward.1} parent=5 // pred_region
        %s7872 = ssub.s32 %s106, 2
        // Predicated region
        $region297: #{forward.1} parent=295 // pred_check
          %p7873 = pneg %p1001
        $region298: #{forward.1} parent=295 // pred_check_branch
          %7875 = sbr.rel (%p7873) target = $region300
        $region299: #{forward.1} parent=295 // pred_region
          %s7876 = sand.u32 %s986, 1
          %s7877 = scalar_lea.sflag [#allocation4], %s7876
          %s7878 = sand.u32 %s986, 1
          %s7879 = scalar_lea.vmem [#allocation43], %s7878
          %7880 = dma.done %s7877, 16
        $region300: #{forward.1} parent=295 // pred_fallthru
          _
      $region296: #{forward.1} parent=5 // pred_fallthru
        _
    $region6: #{forward.1} parent=1 // loop_footer
      %s110 = sadd.s32 1, %s106
    $region7: #{forward.1} parent=1 // loop_footer_branch
      %105 = sbr.rel target = $region3
    $region8: #{forward.1} parent=1 // loop_exit
      _
    %7881 = vsyncpa [#allocation3], 1
    %s7882 = scalar_lea.sflag [#allocation3], 1
    %7883 = vsyncpa %s7882, 1
    %7884 = vsyncpa [#allocation6], 1
    %7885 = vsyncpa [#allocation9], 1
    %7886 = vsyncpa [#allocation12], 1
    %7887 = vsyncpa [#allocation15], 1
    %7888 = vsyncpa [#allocation18], 1
    %7889 = vsyncpa [#allocation21], 1
    %7890 = vsyncpa [#allocation24], 1
    %7891 = vsyncpa [#allocation27], 1
    %7892 = vsyncpa [#allocation30], 1
    %7893 = vsyncpa [#allocation33], 1
    %7894 = vsyncpa [#allocation36], 1
    %7895 = vsyncpa [#allocation39], 1
    %7896 = vsyncpa [#allocation42], 1
    %7897 = vsyncpa [#allocation4], 1
    %s7898 = scalar_lea.sflag [#allocation4], 1
    %7899 = vsyncpa %s7898, 1

</llo_original>
